<compile_context>
chip_gen: v7x
topology: tpu7x:2x2x1
jax: 0.10.0
libtpu: 0.0.40
codegen_flags: <defaults>
</compile_context>

<pallas_src>
import numpy as np

import jax
import jax.numpy as jnp
from jax.experimental import pallas as pl
from jax.experimental.pallas import tpu as pltpu


def _vmem():
    return pl.BlockSpec(memory_space=pltpu.MemorySpace.VMEM)


# ----------------------------------------------------------------------------
# Kernel A: conv1+ReLU+pool -> conv2+ReLU+pool for a tile of BT samples.
# Row layout: global row = b*32 + h (then /2, /4 after each pool),
# lanes = (channel, width) packed as c*W + w.
# ----------------------------------------------------------------------------
def _conv_stack_kernel(x_ref, rhs1_ref, b1_ref, cs1_ref, rhs2_ref, b2_ref,
                       cs2_ref, out_ref, xscr, pscr, dscr):
    f32 = jnp.float32
    r1 = x_ref.shape[0]          # BT*32
    r2 = r1 // 2                 # BT*16
    r3 = r1 // 4                 # BT*8

    # Stage the (BT*32, 96) slab in scratch; zero the 8-row tail so the
    # shifted reads below stay in-bounds and finite.
    xscr[pl.ds(0, r1), :] = x_ref[...]
    xscr[pl.ds(r1, 8), :] = jnp.zeros((8, xscr.shape[1]), f32)

    # conv1: 5 row-shifted matmuls, M=BT*32, K=96, N=168.
    acc1 = jnp.dot(xscr[pl.ds(0, r1), :], rhs1_ref[0],
                   preferred_element_type=f32)
    for ki in range(1, 5):
        acc1 = acc1 + jnp.dot(xscr[pl.ds(ki, r1), :], rhs1_ref[ki],
                              preferred_element_type=f32)
    o1 = jnp.maximum(acc1 + b1_ref[...], 0.0)                        # (r1, 168)

    # 2x2 max-pool #1: even/odd column-selection matmuls, then strided-row max.
    dcol = jnp.maximum(
        jnp.dot(o1, cs1_ref[0], preferred_element_type=f32),
        jnp.dot(o1, cs1_ref[1], preferred_element_type=f32))         # (r1, 96)
    xscr[pl.ds(0, r1), :] = dcol
    p1 = jnp.maximum(xscr[pl.ds(0, r2, stride=2), :],
                     xscr[pl.ds(1, r2, stride=2), :])                # (r2, 96)

    pscr[pl.ds(0, r2), :] = p1
    pscr[pl.ds(r2, 8), :] = jnp.zeros((8, pscr.shape[1]), f32)

    # conv2: 5 row-shifted matmuls, M=BT*16, K=96, N=160.
    acc2 = jnp.dot(pscr[pl.ds(0, r2), :], rhs2_ref[0],
                   preferred_element_type=f32)
    for ki in range(1, 5):
        acc2 = acc2 + jnp.dot(pscr[pl.ds(ki, r2), :], rhs2_ref[ki],
                              preferred_element_type=f32)
    o2 = jnp.maximum(acc2 + b2_ref[...], 0.0)                        # (r2, 160)

    # 2x2 max-pool #2.
    dcol2 = jnp.maximum(
        jnp.dot(o2, cs2_ref[0], preferred_element_type=f32),
        jnp.dot(o2, cs2_ref[1], preferred_element_type=f32))         # (r2, 128)
    dscr[...] = dcol2
    p2 = jnp.maximum(dscr[pl.ds(0, r3, stride=2), :],
                     dscr[pl.ds(1, r3, stride=2), :])                # (r3, 128)

    # Zero the 3 per-sample padding rows (i2 in 5..7) so fc1's zero weight
    # rows never see junk, and store the lane-dense (BT*8, 128) feature slab.
    i2 = jax.lax.broadcasted_iota(jnp.int32, (r3, 1), 0) % 8
    out_ref[...] = jnp.where(i2 < 5, p2, 0.0)


def conv_stack(x2d, cp, n_pad, bt):
    flops = 2 * n_pad * (32 * 96 * 168 * 5 + 32 * 168 * 96 * 2
                         + 16 * 96 * 160 * 5 + 16 * 160 * 128 * 2)
    bytes_accessed = 4 * (n_pad * 32 * 96 + n_pad * 8 * 128
                          + 5 * 96 * 168 + 2 * 168 * 96
                          + 5 * 96 * 160 + 2 * 160 * 128 + 168 + 160)
    return pl.pallas_call(
        _conv_stack_kernel,
        out_shape=jax.ShapeDtypeStruct((n_pad * 8, 128), jnp.float32),
        grid=(n_pad // bt,),
        in_specs=[
            pl.BlockSpec((bt * 32, 96), lambda i: (i, 0)),   # activations
            _vmem(), _vmem(), _vmem(),                       # conv1 rhs/bias/pool-sel
            _vmem(), _vmem(), _vmem(),                       # conv2 rhs/bias/pool-sel
        ],
        out_specs=pl.BlockSpec((bt * 8, 128), lambda i: (i, 0)),
        scratch_shapes=[
            pltpu.VMEM((bt * 32 + 8, 96), jnp.float32),
            pltpu.VMEM((bt * 16 + 8, 96), jnp.float32),
            pltpu.VMEM((bt * 16, 128), jnp.float32),
        ],
        compiler_params=pltpu.CompilerParams(
            dimension_semantics=("parallel",)),
        cost_estimate=pl.CostEstimate(flops=int(flops), transcendentals=0,
                                      bytes_accessed=int(bytes_accessed)),
    )(x2d, cp["rhs1"], cp["b1e"], cp["cs1"], cp["rhs2"], cp["b2e"], cp["cs2"])


# ----------------------------------------------------------------------------
# Kernel B: fc1 -> fc2 -> fc3 -> softmax cross-entropy, gridded over batch.
# ----------------------------------------------------------------------------
def _fc_head_kernel(h_ref, lab_ref, w1_ref, b1_ref, w2_ref, b2_ref, w3_ref,
                    b3_ref, logits_ref, loss_ref):
    f32 = jnp.float32
    h = h_ref[...]                                                   # (BTF, 1024)
    a1 = jnp.maximum(jnp.dot(h, w1_ref[...], preferred_element_type=f32)
                     + b1_ref[...], 0.0)                             # (BTF, 128)
    a2 = jnp.maximum(jnp.dot(a1, w2_ref[...], preferred_element_type=f32)
                     + b2_ref[...], 0.0)                             # (BTF, 128)
    logits = jnp.dot(a2, w3_ref[...], preferred_element_type=f32) + b3_ref[...]
    logits_ref[...] = logits                                         # lane-dense store

    lab = lab_ref[...]                                               # (BTF, 1) int32
    lane = jax.lax.broadcasted_iota(jnp.int32, logits.shape, 1)
    z = jnp.where(lane < 10, logits, jnp.float32(-1e30))             # mask pad lanes
    m = jnp.max(z, axis=-1, keepdims=True)
    lse = m + jnp.log(jnp.sum(jnp.exp(z - m), axis=-1, keepdims=True))
    tgt = jnp.sum(jnp.where(lane == lab, logits, 0.0), axis=-1, keepdims=True)
    valid = (lab >= 0).astype(f32)                                   # 0 for padded rows
    loss_ref[...] = jnp.broadcast_to((lse - tgt) * valid, logits.shape)


def fc_head(h, labels2d, fp, n_pad, btf):
    flops = 2 * n_pad * (1024 * 128 + 128 * 128 + 128 * 128)
    bytes_accessed = 4 * (n_pad * (1024 + 1 + 128 + 128)
                          + 1024 * 128 + 2 * 128 * 128 + 3 * 128)
    return pl.pallas_call(
        _fc_head_kernel,
        out_shape=(jax.ShapeDtypeStruct((n_pad, 128), jnp.float32),
                   jax.ShapeDtypeStruct((n_pad, 128), jnp.float32)),
        grid=(n_pad // btf,),
        in_specs=[
            pl.BlockSpec((btf, 1024), lambda i: (i, 0)),             # features
            pl.BlockSpec((btf, 1), lambda i: (i, 0)),                # labels
            _vmem(), _vmem(), _vmem(), _vmem(), _vmem(), _vmem(),    # fc weights
        ],
        out_specs=(pl.BlockSpec((btf, 128), lambda i: (i, 0)),
                   pl.BlockSpec((btf, 128), lambda i: (i, 0))),
        compiler_params=pltpu.CompilerParams(
            dimension_semantics=("parallel",)),
        cost_estimate=pl.CostEstimate(flops=int(flops),
                                      transcendentals=int(n_pad * 129),
                                      bytes_accessed=int(bytes_accessed)),
    )(h, labels2d, fp["w1"], fp["b1"], fp["w2"], fp["b2"], fp["w3"], fp["b3"])


# ----------------------------------------------------------------------------
# Static parameter preprocessing (run once, OUTSIDE the jitted forward).
# ----------------------------------------------------------------------------
def prepare_params(params):
    f32 = jnp.float32
    w1, b1 = params["conv1_w"], params["conv1_b"]   # (6,3,5,5), (6,)
    w2, b2 = params["conv2_w"], params["conv2_b"]   # (16,6,5,5), (16,)

    # conv1 RHS: rhs1[ki, c*32+J, oc*28+j] = w1[oc,c,ki,J-j] for 0 <= J-j < 5
    m1 = (jnp.arange(32)[None, :, None]
          == (jnp.arange(28)[None, None, :]
              + jnp.arange(5)[:, None, None])).astype(f32)           # (5,32,28)
    rhs1 = jnp.einsum("ocik,kJj->icJoj", w1, m1).reshape(5, 3 * 32, 6 * 28)
    b1e = jnp.repeat(b1, 28).reshape(1, 168)

    # conv2 RHS: rhs2[ki, c*16+J, oc*10+j] = w2[oc,c,ki,J-j]
    m2 = (jnp.arange(16)[None, :, None]
          == (jnp.arange(10)[None, None, :]
              + jnp.arange(5)[:, None, None])).astype(f32)           # (5,16,10)
    rhs2 = jnp.einsum("ocik,kJj->icJoj", w2, m2).reshape(5, 6 * 16, 16 * 10)
    b2e = jnp.repeat(b2, 10).reshape(1, 160)

    # pool column-selection matrices (constants)
    cs1 = np.zeros((2, 168, 96), np.float32)
    for oc in range(6):
        for j2 in range(14):
            cs1[0, oc * 28 + 2 * j2, oc * 16 + j2] = 1.0
            cs1[1, oc * 28 + 2 * j2 + 1, oc * 16 + j2] = 1.0
    cs2 = np.zeros((2, 160, 128), np.float32)
    for oc in range(16):
        for j2 in range(5):
            cs2[0, oc * 10 + 2 * j2, oc * 8 + j2] = 1.0
            cs2[1, oc * 10 + 2 * j2 + 1, oc * 8 + j2] = 1.0

    # fc1 rows permuted into the kernel-A feature layout
    # h[b, i2*128 + oc2*8 + j2]; torch .view(-1, 400) order is (oc2, i2, j2).
    oc2g, i2g, j2g = np.meshgrid(np.arange(16), np.arange(5), np.arange(5),
                                 indexing="ij")
    dst_rows = (i2g * 128 + oc2g * 8 + j2g).reshape(-1)              # (400,)
    w1p = jnp.zeros((1024, 128), f32).at[dst_rows].set(
        jnp.pad(params["fc1_w"], ((0, 0), (0, 8))))
    b1p = jnp.pad(params["fc1_b"], (0, 8)).reshape(1, 128)
    w2p = jnp.pad(params["fc2_w"], ((0, 8), (0, 44)))                # (128,128)
    b2p = jnp.pad(params["fc2_b"], (0, 44)).reshape(1, 128)
    w3p = jnp.pad(params["fc3_w"], ((0, 44), (0, 118)))              # (128,128)
    b3p = jnp.pad(params["fc3_b"], (0, 118)).reshape(1, 128)

    return {
        "rhs1": rhs1, "b1e": b1e, "cs1": jnp.asarray(cs1),
        "rhs2": rhs2, "b2e": b2e, "cs2": jnp.asarray(cs2),
        "w1": w1p, "b1": b1p, "w2": w2p, "b2": b2p, "w3": w3p, "b3": b3p,
    }


# ----------------------------------------------------------------------------
# Forward pass (jitted).  Mirrors PyTorch Net.forward(x, labels).
# ----------------------------------------------------------------------------
def _pick_fc_tile(n):
    for t in (256, 128, 64, 32, 16, 8):
        if t <= n and n % t == 0:
            return t
    return n


def net_forward(prep, x, labels):
    B = x.shape[0]
    BT = 8 if B < 64 else 32                      # samples per kernel-A grid step
    n_pad = ((B + BT - 1) // BT) * BT
    xp = jnp.pad(x.astype(jnp.float32),
                 ((0, n_pad - B), (0, 0), (0, 0), (0, 0)))
    labp = jnp.pad(labels.astype(jnp.int32), (0, n_pad - B),
                   constant_values=-1)

    # (B, C, H, W) -> (B, H, C, W) -> (B*H, C*W): rows = height, lanes = (c, w).
    x2d = jnp.transpose(xp, (0, 2, 1, 3)).reshape(n_pad * 32, 3 * 32)
    feat = conv_stack(x2d, prep, n_pad, BT)       # (n_pad*8, 128), lane-dense
    h = feat.reshape(n_pad, 8 * 128)              # row-major: (b, i2*128 + lane)

    btf = _pick_fc_tile(n_pad)
    logits_p, losses = fc_head(h, labp.reshape(n_pad, 1), prep, n_pad, btf)
    logits = logits_p[:B, :10]
    loss = jnp.sum(losses[:, 0]) * (1.0 / B)      # mean CE over real samples
    return logits, loss


def init_params(key):
    ks = jax.random.split(key, 8)
    s = 0.05
    return {
        "conv1_w": s * jax.random.normal(ks[0], (6, 3, 5, 5), jnp.float32),
        "conv1_b": s * jax.random.normal(ks[1], (6,), jnp.float32),
        "conv2_w": s * jax.random.normal(ks[2], (16, 6, 5, 5), jnp.float32),
        "conv2_b": s * jax.random.normal(ks[3], (16,), jnp.float32),
        "fc1_w": s * jax.random.normal(ks[4], (400, 120), jnp.float32),
        "fc1_b": jnp.zeros((120,), jnp.float32),
        "fc2_w": s * jax.random.normal(ks[5], (120, 84), jnp.float32),
        "fc2_b": jnp.zeros((84,), jnp.float32),
        "fc3_w": s * jax.random.normal(ks[6], (84, 10), jnp.float32),
        "fc3_b": jnp.zeros((10,), jnp.float32),
    }


if __name__ == "__main__":
    key = jax.random.PRNGKey(0)
    pkey, xkey = jax.random.split(key)
    params = init_params(pkey)
    prep = prepare_params(params)        # static weight prep, outside jit

    B = 2
    x = jax.random.normal(xkey, (B, 3, 32, 32), jnp.float32)
    labels = jnp.array([3, 7], dtype=jnp.int32)

    fwd = jax.jit(net_forward)
    logits, loss = fwd(prep, x, labels)
    jax.block_until_ready((logits, loss))
    assert logits.shape == (B, 10)
    assert loss.shape == ()
    assert bool(jnp.isfinite(loss))
    print("KERNEL_OK")
</pallas_src>

<mosaic_0001>
module attributes {stable_mosaic.version = 11 : i64} {
  func.func @_conv_stack_kernel(%arg0: i32, %arg1: memref<256x96xf32, #tpu.memory_space<vmem>>, %arg2: memref<5x96x168xf32, #tpu.memory_space<vmem>>, %arg3: memref<1x168xf32, #tpu.memory_space<vmem>>, %arg4: memref<2x168x96xf32, #tpu.memory_space<vmem>>, %arg5: memref<5x96x160xf32, #tpu.memory_space<vmem>>, %arg6: memref<1x160xf32, #tpu.memory_space<vmem>>, %arg7: memref<2x160x128xf32, #tpu.memory_space<vmem>>, %arg8: memref<64x128xf32, #tpu.memory_space<vmem>>, %arg9: memref<264x96xf32, #tpu.memory_space<vmem>>, %arg10: memref<136x96xf32, #tpu.memory_space<vmem>>, %arg11: memref<128x128xf32, #tpu.memory_space<vmem>>) attributes {dimension_semantics = [#tpu.dimension_semantics<parallel>], iteration_bounds = array<i64: 1>, scalar_prefetch = 0 : i64, scratch_operands = 3 : i64, tpu.core_type = #tpu.core_type<tc>, window_params = [{transform_indices = @transform_0, window_bounds = array<i64: 256, 96>}, {pipeline_mode = #tpu.pipeline_mode<synchronous>, transform_indices = @transform_1, window_bounds = array<i64: 5, 96, 168>}, {pipeline_mode = #tpu.pipeline_mode<synchronous>, transform_indices = @transform_2, window_bounds = array<i64: 1, 168>}, {pipeline_mode = #tpu.pipeline_mode<synchronous>, transform_indices = @transform_3, window_bounds = array<i64: 2, 168, 96>}, {pipeline_mode = #tpu.pipeline_mode<synchronous>, transform_indices = @transform_4, window_bounds = array<i64: 5, 96, 160>}, {pipeline_mode = #tpu.pipeline_mode<synchronous>, transform_indices = @transform_5, window_bounds = array<i64: 1, 160>}, {pipeline_mode = #tpu.pipeline_mode<synchronous>, transform_indices = @transform_6, window_bounds = array<i64: 2, 160, 128>}, {transform_indices = @transform_7, window_bounds = array<i64: 64, 128>}]} {
    %c0 = arith.constant 0 : index
    %c0_0 = arith.constant 0 : index
    %0 = vector.load %arg1[%c0, %c0_0] : memref<256x96xf32, #tpu.memory_space<vmem>>, vector<256x96xf32>
    %c0_1 = arith.constant 0 : index
    %c0_2 = arith.constant 0 : index
    %1 = vector.load %arg9[%c0_1, %c0_2] : memref<264x96xf32, #tpu.memory_space<vmem>>, vector<256x96xf32>
    tpu.vector_store %arg9[%c0_1, %c0_2], %0 {strides = array<i32>} : memref<264x96xf32, #tpu.memory_space<vmem>>, vector<256x96xf32>,
    %cst = arith.constant 0.000000e+00 : f32
    %2 = vector.broadcast %cst : f32 to vector<8x96xf32>
    %c256 = arith.constant 256 : index
    %c0_3 = arith.constant 0 : index
    %3 = vector.load %arg9[%c256, %c0_3] : memref<264x96xf32, #tpu.memory_space<vmem>>, vector<8x96xf32>
    tpu.vector_store %arg9[%c256, %c0_3], %2 {strides = array<i32>} : memref<264x96xf32, #tpu.memory_space<vmem>>, vector<8x96xf32>,
    %c0_4 = arith.constant 0 : index
    %c0_5 = arith.constant 0 : index
    %4 = vector.load %arg9[%c0_4, %c0_5] : memref<264x96xf32, #tpu.memory_space<vmem>>, vector<256x96xf32>
    %c0_6 = arith.constant 0 : index
    %c0_7 = arith.constant 0 : index
    %c0_8 = arith.constant 0 : index
    %5 = vector.load %arg2[%c0_6, %c0_7, %c0_8] : memref<5x96x168xf32, #tpu.memory_space<vmem>>, vector<1x96x168xf32>
    %6 = vector.shape_cast %5 : vector<1x96x168xf32> to vector<96x168xf32>
    %cst_9 = arith.constant dense<0.000000e+00> : vector<256x168xf32>
    %7 = tpu.matmul %4, %6, %cst_9 {dimension_numbers = #tpu.dot_dimension_numbers<[1], [0], [0], [1], [0, 0, 1, 1], [], []>} : vector<256x96xf32>, vector<96x168xf32>, vector<256x168xf32> -> vector<256x168xf32>
    %c1 = arith.constant 1 : index
    %c0_10 = arith.constant 0 : index
    %8 = vector.load %arg9[%c1, %c0_10] : memref<264x96xf32, #tpu.memory_space<vmem>>, vector<256x96xf32>
    %c1_11 = arith.constant 1 : index
    %c0_12 = arith.constant 0 : index
    %c0_13 = arith.constant 0 : index
    %9 = vector.load %arg2[%c1_11, %c0_12, %c0_13] : memref<5x96x168xf32, #tpu.memory_space<vmem>>, vector<1x96x168xf32>
    %10 = vector.shape_cast %9 : vector<1x96x168xf32> to vector<96x168xf32>
    %cst_14 = arith.constant dense<0.000000e+00> : vector<256x168xf32>
    %11 = tpu.matmul %8, %10, %cst_14 {dimension_numbers = #tpu.dot_dimension_numbers<[1], [0], [0], [1], [0, 0, 1, 1], [], []>} : vector<256x96xf32>, vector<96x168xf32>, vector<256x168xf32> -> vector<256x168xf32>
    %12 = arith.addf %7, %11 : vector<256x168xf32>
    %c2 = arith.constant 2 : index
    %c0_15 = arith.constant 0 : index
    %13 = vector.load %arg9[%c2, %c0_15] : memref<264x96xf32, #tpu.memory_space<vmem>>, vector<256x96xf32>
    %c2_16 = arith.constant 2 : index
    %c0_17 = arith.constant 0 : index
    %c0_18 = arith.constant 0 : index
    %14 = vector.load %arg2[%c2_16, %c0_17, %c0_18] : memref<5x96x168xf32, #tpu.memory_space<vmem>>, vector<1x96x168xf32>
    %15 = vector.shape_cast %14 : vector<1x96x168xf32> to vector<96x168xf32>
    %cst_19 = arith.constant dense<0.000000e+00> : vector<256x168xf32>
    %16 = tpu.matmul %13, %15, %cst_19 {dimension_numbers = #tpu.dot_dimension_numbers<[1], [0], [0], [1], [0, 0, 1, 1], [], []>} : vector<256x96xf32>, vector<96x168xf32>, vector<256x168xf32> -> vector<256x168xf32>
    %17 = arith.addf %12, %16 : vector<256x168xf32>
    %c3 = arith.constant 3 : index
    %c0_20 = arith.constant 0 : index
    %18 = vector.load %arg9[%c3, %c0_20] : memref<264x96xf32, #tpu.memory_space<vmem>>, vector<256x96xf32>
    %c3_21 = arith.constant 3 : index
    %c0_22 = arith.constant 0 : index
    %c0_23 = arith.constant 0 : index
    %19 = vector.load %arg2[%c3_21, %c0_22, %c0_23] : memref<5x96x168xf32, #tpu.memory_space<vmem>>, vector<1x96x168xf32>
    %20 = vector.shape_cast %19 : vector<1x96x168xf32> to vector<96x168xf32>
    %cst_24 = arith.constant dense<0.000000e+00> : vector<256x168xf32>
    %21 = tpu.matmul %18, %20, %cst_24 {dimension_numbers = #tpu.dot_dimension_numbers<[1], [0], [0], [1], [0, 0, 1, 1], [], []>} : vector<256x96xf32>, vector<96x168xf32>, vector<256x168xf32> -> vector<256x168xf32>
    %22 = arith.addf %17, %21 : vector<256x168xf32>
    %c4 = arith.constant 4 : index
    %c0_25 = arith.constant 0 : index
    %23 = vector.load %arg9[%c4, %c0_25] : memref<264x96xf32, #tpu.memory_space<vmem>>, vector<256x96xf32>
    %c4_26 = arith.constant 4 : index
    %c0_27 = arith.constant 0 : index
    %c0_28 = arith.constant 0 : index
    %24 = vector.load %arg2[%c4_26, %c0_27, %c0_28] : memref<5x96x168xf32, #tpu.memory_space<vmem>>, vector<1x96x168xf32>
    %25 = vector.shape_cast %24 : vector<1x96x168xf32> to vector<96x168xf32>
    %cst_29 = arith.constant dense<0.000000e+00> : vector<256x168xf32>
    %26 = tpu.matmul %23, %25, %cst_29 {dimension_numbers = #tpu.dot_dimension_numbers<[1], [0], [0], [1], [0, 0, 1, 1], [], []>} : vector<256x96xf32>, vector<96x168xf32>, vector<256x168xf32> -> vector<256x168xf32>
    %27 = arith.addf %22, %26 : vector<256x168xf32>
    %c0_30 = arith.constant 0 : index
    %c0_31 = arith.constant 0 : index
    %28 = vector.load %arg3[%c0_30, %c0_31] : memref<1x168xf32, #tpu.memory_space<vmem>>, vector<1x168xf32>
    %29 = vector.broadcast %28 : vector<1x168xf32> to vector<256x168xf32>
    %30 = arith.addf %27, %29 : vector<256x168xf32>
    %cst_32 = arith.constant 0.000000e+00 : f32
    %31 = vector.broadcast %cst_32 : f32 to vector<256x168xf32>
    %32 = arith.maximumf %30, %31 : vector<256x168xf32>
    %c0_33 = arith.constant 0 : index
    %c0_34 = arith.constant 0 : index
    %c0_35 = arith.constant 0 : index
    %33 = vector.load %arg4[%c0_33, %c0_34, %c0_35] : memref<2x168x96xf32, #tpu.memory_space<vmem>>, vector<1x168x96xf32>
    %34 = vector.shape_cast %33 : vector<1x168x96xf32> to vector<168x96xf32>
    %cst_36 = arith.constant dense<0.000000e+00> : vector<256x96xf32>
    %35 = tpu.matmul %32, %34, %cst_36 {dimension_numbers = #tpu.dot_dimension_numbers<[1], [0], [0], [1], [0, 0, 1, 1], [], []>} : vector<256x168xf32>, vector<168x96xf32>, vector<256x96xf32> -> vector<256x96xf32>
    %c1_37 = arith.constant 1 : index
    %c0_38 = arith.constant 0 : index
    %c0_39 = arith.constant 0 : index
    %36 = vector.load %arg4[%c1_37, %c0_38, %c0_39] : memref<2x168x96xf32, #tpu.memory_space<vmem>>, vector<1x168x96xf32>
    %37 = vector.shape_cast %36 : vector<1x168x96xf32> to vector<168x96xf32>
    %cst_40 = arith.constant dense<0.000000e+00> : vector<256x96xf32>
    %38 = tpu.matmul %32, %37, %cst_40 {dimension_numbers = #tpu.dot_dimension_numbers<[1], [0], [0], [1], [0, 0, 1, 1], [], []>} : vector<256x168xf32>, vector<168x96xf32>, vector<256x96xf32> -> vector<256x96xf32>
    %39 = arith.maximumf %35, %38 : vector<256x96xf32>
    %c0_41 = arith.constant 0 : index
    %c0_42 = arith.constant 0 : index
    %40 = vector.load %arg9[%c0_41, %c0_42] : memref<264x96xf32, #tpu.memory_space<vmem>>, vector<256x96xf32>
    tpu.vector_store %arg9[%c0_41, %c0_42], %39 {strides = array<i32>} : memref<264x96xf32, #tpu.memory_space<vmem>>, vector<256x96xf32>,
    %c0_43 = arith.constant 0 : index
    %c0_44 = arith.constant 0 : index
    %41 = tpu.strided_load %arg9[%c0_43, %c0_44] {strides = array<i32: 2, 1>} : memref<264x96xf32, #tpu.memory_space<vmem>>, vector<128x96xf32>
    %c1_45 = arith.constant 1 : index
    %c0_46 = arith.constant 0 : index
    %42 = tpu.strided_load %arg9[%c1_45, %c0_46] {strides = array<i32: 2, 1>} : memref<264x96xf32, #tpu.memory_space<vmem>>, vector<128x96xf32>
    %43 = arith.maximumf %41, %42 : vector<128x96xf32>
    %c0_47 = arith.constant 0 : index
    %c0_48 = arith.constant 0 : index
    %44 = vector.load %arg10[%c0_47, %c0_48] : memref<136x96xf32, #tpu.memory_space<vmem>>, vector<128x96xf32>
    tpu.vector_store %arg10[%c0_47, %c0_48], %43 {strides = array<i32>} : memref<136x96xf32, #tpu.memory_space<vmem>>, vector<128x96xf32>,
    %cst_49 = arith.constant 0.000000e+00 : f32
    %45 = vector.broadcast %cst_49 : f32 to vector<8x96xf32>
    %c128 = arith.constant 128 : index
    %c0_50 = arith.constant 0 : index
    %46 = vector.load %arg10[%c128, %c0_50] : memref<136x96xf32, #tpu.memory_space<vmem>>, vector<8x96xf32>
    tpu.vector_store %arg10[%c128, %c0_50], %45 {strides = array<i32>} : memref<136x96xf32, #tpu.memory_space<vmem>>, vector<8x96xf32>,
    %c0_51 = arith.constant 0 : index
    %c0_52 = arith.constant 0 : index
    %47 = vector.load %arg10[%c0_51, %c0_52] : memref<136x96xf32, #tpu.memory_space<vmem>>, vector<128x96xf32>
    %c0_53 = arith.constant 0 : index
    %c0_54 = arith.constant 0 : index
    %c0_55 = arith.constant 0 : index
    %48 = vector.load %arg5[%c0_53, %c0_54, %c0_55] : memref<5x96x160xf32, #tpu.memory_space<vmem>>, vector<1x96x160xf32>
    %49 = vector.shape_cast %48 : vector<1x96x160xf32> to vector<96x160xf32>
    %cst_56 = arith.constant dense<0.000000e+00> : vector<128x160xf32>
    %50 = tpu.matmul %47, %49, %cst_56 {dimension_numbers = #tpu.dot_dimension_numbers<[1], [0], [0], [1], [0, 0, 1, 1], [], []>} : vector<128x96xf32>, vector<96x160xf32>, vector<128x160xf32> -> vector<128x160xf32>
    %c1_57 = arith.constant 1 : index
    %c0_58 = arith.constant 0 : index
    %51 = vector.load %arg10[%c1_57, %c0_58] : memref<136x96xf32, #tpu.memory_space<vmem>>, vector<128x96xf32>
    %c1_59 = arith.constant 1 : index
    %c0_60 = arith.constant 0 : index
    %c0_61 = arith.constant 0 : index
    %52 = vector.load %arg5[%c1_59, %c0_60, %c0_61] : memref<5x96x160xf32, #tpu.memory_space<vmem>>, vector<1x96x160xf32>
    %53 = vector.shape_cast %52 : vector<1x96x160xf32> to vector<96x160xf32>
    %cst_62 = arith.constant dense<0.000000e+00> : vector<128x160xf32>
    %54 = tpu.matmul %51, %53, %cst_62 {dimension_numbers = #tpu.dot_dimension_numbers<[1], [0], [0], [1], [0, 0, 1, 1], [], []>} : vector<128x96xf32>, vector<96x160xf32>, vector<128x160xf32> -> vector<128x160xf32>
    %55 = arith.addf %50, %54 : vector<128x160xf32>
    %c2_63 = arith.constant 2 : index
    %c0_64 = arith.constant 0 : index
    %56 = vector.load %arg10[%c2_63, %c0_64] : memref<136x96xf32, #tpu.memory_space<vmem>>, vector<128x96xf32>
    %c2_65 = arith.constant 2 : index
    %c0_66 = arith.constant 0 : index
    %c0_67 = arith.constant 0 : index
    %57 = vector.load %arg5[%c2_65, %c0_66, %c0_67] : memref<5x96x160xf32, #tpu.memory_space<vmem>>, vector<1x96x160xf32>
    %58 = vector.shape_cast %57 : vector<1x96x160xf32> to vector<96x160xf32>
    %cst_68 = arith.constant dense<0.000000e+00> : vector<128x160xf32>
    %59 = tpu.matmul %56, %58, %cst_68 {dimension_numbers = #tpu.dot_dimension_numbers<[1], [0], [0], [1], [0, 0, 1, 1], [], []>} : vector<128x96xf32>, vector<96x160xf32>, vector<128x160xf32> -> vector<128x160xf32>
    %60 = arith.addf %55, %59 : vector<128x160xf32>
    %c3_69 = arith.constant 3 : index
    %c0_70 = arith.constant 0 : index
    %61 = vector.load %arg10[%c3_69, %c0_70] : memref<136x96xf32, #tpu.memory_space<vmem>>, vector<128x96xf32>
    %c3_71 = arith.constant 3 : index
    %c0_72 = arith.constant 0 : index
    %c0_73 = arith.constant 0 : index
    %62 = vector.load %arg5[%c3_71, %c0_72, %c0_73] : memref<5x96x160xf32, #tpu.memory_space<vmem>>, vector<1x96x160xf32>
    %63 = vector.shape_cast %62 : vector<1x96x160xf32> to vector<96x160xf32>
    %cst_74 = arith.constant dense<0.000000e+00> : vector<128x160xf32>
    %64 = tpu.matmul %61, %63, %cst_74 {dimension_numbers = #tpu.dot_dimension_numbers<[1], [0], [0], [1], [0, 0, 1, 1], [], []>} : vector<128x96xf32>, vector<96x160xf32>, vector<128x160xf32> -> vector<128x160xf32>
    %65 = arith.addf %60, %64 : vector<128x160xf32>
    %c4_75 = arith.constant 4 : index
    %c0_76 = arith.constant 0 : index
    %66 = vector.load %arg10[%c4_75, %c0_76] : memref<136x96xf32, #tpu.memory_space<vmem>>, vector<128x96xf32>
    %c4_77 = arith.constant 4 : index
    %c0_78 = arith.constant 0 : index
    %c0_79 = arith.constant 0 : index
    %67 = vector.load %arg5[%c4_77, %c0_78, %c0_79] : memref<5x96x160xf32, #tpu.memory_space<vmem>>, vector<1x96x160xf32>
    %68 = vector.shape_cast %67 : vector<1x96x160xf32> to vector<96x160xf32>
    %cst_80 = arith.constant dense<0.000000e+00> : vector<128x160xf32>
    %69 = tpu.matmul %66, %68, %cst_80 {dimension_numbers = #tpu.dot_dimension_numbers<[1], [0], [0], [1], [0, 0, 1, 1], [], []>} : vector<128x96xf32>, vector<96x160xf32>, vector<128x160xf32> -> vector<128x160xf32>
    %70 = arith.addf %65, %69 : vector<128x160xf32>
    %c0_81 = arith.constant 0 : index
    %c0_82 = arith.constant 0 : index
    %71 = vector.load %arg6[%c0_81, %c0_82] : memref<1x160xf32, #tpu.memory_space<vmem>>, vector<1x160xf32>
    %72 = vector.broadcast %71 : vector<1x160xf32> to vector<128x160xf32>
    %73 = arith.addf %70, %72 : vector<128x160xf32>
    %cst_83 = arith.constant 0.000000e+00 : f32
    %74 = vector.broadcast %cst_83 : f32 to vector<128x160xf32>
    %75 = arith.maximumf %73, %74 : vector<128x160xf32>
    %c0_84 = arith.constant 0 : index
    %c0_85 = arith.constant 0 : index
    %c0_86 = arith.constant 0 : index
    %76 = vector.load %arg7[%c0_84, %c0_85, %c0_86] : memref<2x160x128xf32, #tpu.memory_space<vmem>>, vector<1x160x128xf32>
    %77 = vector.shape_cast %76 : vector<1x160x128xf32> to vector<160x128xf32>
    %cst_87 = arith.constant dense<0.000000e+00> : vector<128x128xf32>
    %78 = tpu.matmul %75, %77, %cst_87 {dimension_numbers = #tpu.dot_dimension_numbers<[1], [0], [0], [1], [0, 0, 1, 1], [], []>} : vector<128x160xf32>, vector<160x128xf32>, vector<128x128xf32> -> vector<128x128xf32>
    %c1_88 = arith.constant 1 : index
    %c0_89 = arith.constant 0 : index
    %c0_90 = arith.constant 0 : index
    %79 = vector.load %arg7[%c1_88, %c0_89, %c0_90] : memref<2x160x128xf32, #tpu.memory_space<vmem>>, vector<1x160x128xf32>
    %80 = vector.shape_cast %79 : vector<1x160x128xf32> to vector<160x128xf32>
    %cst_91 = arith.constant dense<0.000000e+00> : vector<128x128xf32>
    %81 = tpu.matmul %75, %80, %cst_91 {dimension_numbers = #tpu.dot_dimension_numbers<[1], [0], [0], [1], [0, 0, 1, 1], [], []>} : vector<128x160xf32>, vector<160x128xf32>, vector<128x128xf32> -> vector<128x128xf32>
    %82 = arith.maximumf %78, %81 : vector<128x128xf32>
    %c0_92 = arith.constant 0 : index
    %c0_93 = arith.constant 0 : index
    %83 = vector.load %arg11[%c0_92, %c0_93] : memref<128x128xf32, #tpu.memory_space<vmem>>, vector<128x128xf32>
    tpu.vector_store %arg11[%c0_92, %c0_93], %82 {strides = array<i32>} : memref<128x128xf32, #tpu.memory_space<vmem>>, vector<128x128xf32>,
    %c0_94 = arith.constant 0 : index
    %c0_95 = arith.constant 0 : index
    %84 = tpu.strided_load %arg11[%c0_94, %c0_95] {strides = array<i32: 2, 1>} : memref<128x128xf32, #tpu.memory_space<vmem>>, vector<64x128xf32>
    %c1_96 = arith.constant 1 : index
    %c0_97 = arith.constant 0 : index
    %85 = tpu.strided_load %arg11[%c1_96, %c0_97] {strides = array<i32: 2, 1>} : memref<128x128xf32, #tpu.memory_space<vmem>>, vector<64x128xf32>
    %86 = arith.maximumf %84, %85 : vector<64x128xf32>
    %87 = tpu.iota {dimensions = array<i32: 0>} : vector<64x1xi32>
    %c8_i32 = arith.constant 8 : i32
    %c0_i32 = arith.constant 0 : i32
    %88 = arith.cmpi eq, %c8_i32, %c0_i32 : i32
    %c1_i32 = arith.constant 1 : i32
    %89 = arith.select %88, %c1_i32, %c8_i32 : i32
    %90 = vector.broadcast %89 : i32 to vector<64x1xi32>
    %91 = arith.remsi %87, %90 : vector<64x1xi32>
    %c0_i32_98 = arith.constant 0 : i32
    %92 = vector.broadcast %c0_i32_98 : i32 to vector<64x1xi32>
    %93 = arith.cmpi ne, %91, %92 : vector<64x1xi32>
    %c0_i32_99 = arith.constant 0 : i32
    %94 = vector.broadcast %c0_i32_99 : i32 to vector<64x1xi32>
    %95 = arith.cmpi slt, %91, %94 : vector<64x1xi32>
    %c0_i32_100 = arith.constant 0 : i32
    %96 = arith.cmpi slt, %89, %c0_i32_100 : i32
    %97 = vector.broadcast %96 : i1 to vector<64x1xi1>
    %98 = vector.broadcast %97 : vector<64x1xi1> to vector<64x1xi1>
    %99 = arith.xori %95, %98 : vector<64x1xi1>
    %100 = arith.andi %99, %93 : vector<64x1xi1>
    %101 = vector.broadcast %89 : i32 to vector<64x1xi32>
    %102 = arith.addi %91, %101 : vector<64x1xi32>
    %103 = arith.select %100, %102, %91 : vector<64x1xi1>, vector<64x1xi32>
    %c5_i32 = arith.constant 5 : i32
    %104 = vector.broadcast %c5_i32 : i32 to vector<64x1xi32>
    %105 = arith.cmpi slt, %103, %104 : vector<64x1xi32>
    %cst_101 = arith.constant 0.000000e+00 : f32
    %106 = vector.shape_cast %105 : vector<64x1xi1> to vector<64x1xi1>
    %107 = vector.broadcast %106 : vector<64x1xi1> to vector<64x128xi1>
    %108 = vector.broadcast %cst_101 : f32 to vector<64x128xf32>
    %109 = arith.select %107, %86, %108 : vector<64x128xi1>, vector<64x128xf32>
    %c0_102 = arith.constant 0 : index
    %c0_103 = arith.constant 0 : index
    %110 = vector.load %arg8[%c0_102, %c0_103] : memref<64x128xf32, #tpu.memory_space<vmem>>, vector<64x128xf32>
    tpu.vector_store %arg8[%c0_102, %c0_103], %109 {strides = array<i32>} : memref<64x128xf32, #tpu.memory_space<vmem>>, vector<64x128xf32>,
    return
  }
  func.func @transform_0(%arg0: i32) -> (i32, i32) {
    %c0_i32 = arith.constant 0 : i32
    %c0_i32_0 = arith.constant 0 : i32
    return %arg0, %c0_i32 : i32, i32
  }
  func.func @transform_1(%arg0: i32) -> (i32, i32, i32) {
    %c0_i32 = arith.constant 0 : i32
    %c0_i32_0 = arith.constant 0 : i32
    %c0_i32_1 = arith.constant 0 : i32
    %c0_i32_2 = arith.constant 0 : i32
    return %c0_i32, %c0_i32_0, %c0_i32_1 : i32, i32, i32
  }
  func.func @transform_2(%arg0: i32) -> (i32, i32) {
    %c0_i32 = arith.constant 0 : i32
    %c0_i32_0 = arith.constant 0 : i32
    %c0_i32_1 = arith.constant 0 : i32
    return %c0_i32, %c0_i32_0 : i32, i32
  }
  func.func @transform_3(%arg0: i32) -> (i32, i32, i32) {
    %c0_i32 = arith.constant 0 : i32
    %c0_i32_0 = arith.constant 0 : i32
    %c0_i32_1 = arith.constant 0 : i32
    %c0_i32_2 = arith.constant 0 : i32
    return %c0_i32, %c0_i32_0, %c0_i32_1 : i32, i32, i32
  }
  func.func @transform_4(%arg0: i32) -> (i32, i32, i32) {
    %c0_i32 = arith.constant 0 : i32
    %c0_i32_0 = arith.constant 0 : i32
    %c0_i32_1 = arith.constant 0 : i32
    %c0_i32_2 = arith.constant 0 : i32
    return %c0_i32, %c0_i32_0, %c0_i32_1 : i32, i32, i32
  }
  func.func @transform_5(%arg0: i32) -> (i32, i32) {
    %c0_i32 = arith.constant 0 : i32
    %c0_i32_0 = arith.constant 0 : i32
    %c0_i32_1 = arith.constant 0 : i32
    return %c0_i32, %c0_i32_0 : i32, i32
  }
  func.func @transform_6(%arg0: i32) -> (i32, i32, i32) {
    %c0_i32 = arith.constant 0 : i32
    %c0_i32_0 = arith.constant 0 : i32
    %c0_i32_1 = arith.constant 0 : i32
    %c0_i32_2 = arith.constant 0 : i32
    return %c0_i32, %c0_i32_0, %c0_i32_1 : i32, i32, i32
  }
  func.func @transform_7(%arg0: i32) -> (i32, i32) {
    %c0_i32 = arith.constant 0 : i32
    %c0_i32_0 = arith.constant 0 : i32
    return %arg0, %c0_i32 : i32, i32
  }
}

module attributes {stable_mosaic.version = 11 : i64} {
  func.func @_fc_head_kernel(%arg0: i32, %arg1: memref<8x1024xf32, #tpu.memory_space<vmem>>, %arg2: memref<8x1xi32, #tpu.memory_space<vmem>>, %arg3: memref<1024x128xf32, #tpu.memory_space<vmem>>, %arg4: memref<1x128xf32, #tpu.memory_space<vmem>>, %arg5: memref<128x128xf32, #tpu.memory_space<vmem>>, %arg6: memref<1x128xf32, #tpu.memory_space<vmem>>, %arg7: memref<128x128xf32, #tpu.memory_space<vmem>>, %arg8: memref<1x128xf32, #tpu.memory_space<vmem>>, %arg9: memref<8x128xf32, #tpu.memory_space<vmem>>, %arg10: memref<8x128xf32, #tpu.memory_space<vmem>>) attributes {dimension_semantics = [#tpu.dimension_semantics<parallel>], iteration_bounds = array<i64: 1>, scalar_prefetch = 0 : i64, scratch_operands = 0 : i64, tpu.core_type = #tpu.core_type<tc>, window_params = [{transform_indices = @transform_0, window_bounds = array<i64: 8, 1024>}, {transform_indices = @transform_1, window_bounds = array<i64: 8, 1>}, {pipeline_mode = #tpu.pipeline_mode<synchronous>, transform_indices = @transform_2, window_bounds = array<i64: 1024, 128>}, {pipeline_mode = #tpu.pipeline_mode<synchronous>, transform_indices = @transform_3, window_bounds = array<i64: 1, 128>}, {pipeline_mode = #tpu.pipeline_mode<synchronous>, transform_indices = @transform_4, window_bounds = array<i64: 128, 128>}, {pipeline_mode = #tpu.pipeline_mode<synchronous>, transform_indices = @transform_5, window_bounds = array<i64: 1, 128>}, {pipeline_mode = #tpu.pipeline_mode<synchronous>, transform_indices = @transform_6, window_bounds = array<i64: 128, 128>}, {pipeline_mode = #tpu.pipeline_mode<synchronous>, transform_indices = @transform_7, window_bounds = array<i64: 1, 128>}, {transform_indices = @transform_8, window_bounds = array<i64: 8, 128>}, {transform_indices = @transform_9, window_bounds = array<i64: 8, 128>}]} {
    %c0 = arith.constant 0 : index
    %c0_0 = arith.constant 0 : index
    %0 = vector.load %arg1[%c0, %c0_0] : memref<8x1024xf32, #tpu.memory_space<vmem>>, vector<8x1024xf32>
    %c0_1 = arith.constant 0 : index
    %c0_2 = arith.constant 0 : index
    %1 = vector.load %arg3[%c0_1, %c0_2] : memref<1024x128xf32, #tpu.memory_space<vmem>>, vector<1024x128xf32>
    %cst = arith.constant dense<0.000000e+00> : vector<8x128xf32>
    %2 = tpu.matmul %0, %1, %cst {dimension_numbers = #tpu.dot_dimension_numbers<[1], [0], [0], [1], [0, 0, 1, 1], [], []>} : vector<8x1024xf32>, vector<1024x128xf32>, vector<8x128xf32> -> vector<8x128xf32>
    %c0_3 = arith.constant 0 : index
    %c0_4 = arith.constant 0 : index
    %3 = vector.load %arg4[%c0_3, %c0_4] : memref<1x128xf32, #tpu.memory_space<vmem>>, vector<1x128xf32>
    %4 = vector.broadcast %3 : vector<1x128xf32> to vector<8x128xf32>
    %5 = arith.addf %2, %4 : vector<8x128xf32>
    %cst_5 = arith.constant 0.000000e+00 : f32
    %6 = vector.broadcast %cst_5 : f32 to vector<8x128xf32>
    %7 = arith.maximumf %5, %6 : vector<8x128xf32>
    %c0_6 = arith.constant 0 : index
    %c0_7 = arith.constant 0 : index
    %8 = vector.load %arg5[%c0_6, %c0_7] : memref<128x128xf32, #tpu.memory_space<vmem>>, vector<128x128xf32>
    %cst_8 = arith.constant dense<0.000000e+00> : vector<8x128xf32>
    %9 = tpu.matmul %7, %8, %cst_8 {dimension_numbers = #tpu.dot_dimension_numbers<[1], [0], [0], [1], [0, 0, 1, 1], [], []>} : vector<8x128xf32>, vector<128x128xf32>, vector<8x128xf32> -> vector<8x128xf32>
    %c0_9 = arith.constant 0 : index
    %c0_10 = arith.constant 0 : index
    %10 = vector.load %arg6[%c0_9, %c0_10] : memref<1x128xf32, #tpu.memory_space<vmem>>, vector<1x128xf32>
    %11 = vector.broadcast %10 : vector<1x128xf32> to vector<8x128xf32>
    %12 = arith.addf %9, %11 : vector<8x128xf32>
    %cst_11 = arith.constant 0.000000e+00 : f32
    %13 = vector.broadcast %cst_11 : f32 to vector<8x128xf32>
    %14 = arith.maximumf %12, %13 : vector<8x128xf32>
    %c0_12 = arith.constant 0 : index
    %c0_13 = arith.constant 0 : index
    %15 = vector.load %arg7[%c0_12, %c0_13] : memref<128x128xf32, #tpu.memory_space<vmem>>, vector<128x128xf32>
    %cst_14 = arith.constant dense<0.000000e+00> : vector<8x128xf32>
    %16 = tpu.matmul %14, %15, %cst_14 {dimension_numbers = #tpu.dot_dimension_numbers<[1], [0], [0], [1], [0, 0, 1, 1], [], []>} : vector<8x128xf32>, vector<128x128xf32>, vector<8x128xf32> -> vector<8x128xf32>
    %c0_15 = arith.constant 0 : index
    %c0_16 = arith.constant 0 : index
    %17 = vector.load %arg8[%c0_15, %c0_16] : memref<1x128xf32, #tpu.memory_space<vmem>>, vector<1x128xf32>
    %18 = vector.broadcast %17 : vector<1x128xf32> to vector<8x128xf32>
    %19 = arith.addf %16, %18 : vector<8x128xf32>
    %c0_17 = arith.constant 0 : index
    %c0_18 = arith.constant 0 : index
    %20 = vector.load %arg9[%c0_17, %c0_18] : memref<8x128xf32, #tpu.memory_space<vmem>>, vector<8x128xf32>
    tpu.vector_store %arg9[%c0_17, %c0_18], %19 {strides = array<i32>} : memref<8x128xf32, #tpu.memory_space<vmem>>, vector<8x128xf32>,
    %c0_19 = arith.constant 0 : index
    %c0_20 = arith.constant 0 : index
    %21 = vector.load %arg2[%c0_19, %c0_20] : memref<8x1xi32, #tpu.memory_space<vmem>>, vector<8x1xi32>
    %22 = tpu.iota {dimensions = array<i32: 1>} : vector<8x128xi32>
    %c10_i32 = arith.constant 10 : i32
    %23 = vector.broadcast %c10_i32 : i32 to vector<8x128xi32>
    %24 = arith.cmpi slt, %22, %23 : vector<8x128xi32>
    %cst_21 = arith.constant -1.000000e+30 : f32
    %25 = vector.broadcast %cst_21 : f32 to vector<8x128xf32>
    %26 = arith.select %24, %19, %25 : vector<8x128xi1>, vector<8x128xf32>
    %cst_22 = arith.constant dense<0xFF800000> : vector<8xf32>
    %27 = vector.multi_reduction <maximumf>, %26, %cst_22 [1] : vector<8x128xf32> to vector<8xf32>
    %28 = vector.shape_cast %27 : vector<8xf32> to vector<8x1xf32>
    %29 = vector.broadcast %28 : vector<8x1xf32> to vector<8x128xf32>
    %30 = arith.subf %26, %29 : vector<8x128xf32>
    %31 = math.exp %30 : vector<8x128xf32>
    %cst_23 = arith.constant dense<0.000000e+00> : vector<8xf32>
    %32 = vector.multi_reduction <add>, %31, %cst_23 [1] : vector<8x128xf32> to vector<8xf32>
    %33 = vector.shape_cast %32 : vector<8xf32> to vector<8x1xf32>
    %34 = math.log %33 : vector<8x1xf32>
    %35 = arith.addf %28, %34 : vector<8x1xf32>
    %36 = vector.broadcast %21 : vector<8x1xi32> to vector<8x128xi32>
    %37 = arith.cmpi eq, %22, %36 : vector<8x128xi32>
    %cst_24 = arith.constant 0.000000e+00 : f32
    %38 = vector.broadcast %cst_24 : f32 to vector<8x128xf32>
    %39 = arith.select %37, %19, %38 : vector<8x128xi1>, vector<8x128xf32>
    %cst_25 = arith.constant dense<0.000000e+00> : vector<8xf32>
    %40 = vector.multi_reduction <add>, %39, %cst_25 [1] : vector<8x128xf32> to vector<8xf32>
    %41 = vector.shape_cast %40 : vector<8xf32> to vector<8x1xf32>
    %c0_i32 = arith.constant 0 : i32
    %42 = vector.broadcast %c0_i32 : i32 to vector<8x1xi32>
    %43 = arith.cmpi sge, %21, %42 : vector<8x1xi32>
    %44 = arith.extui %43 : vector<8x1xi1> to vector<8x1xi32>
    %45 = arith.sitofp %44 : vector<8x1xi32> to vector<8x1xf32>
    %46 = arith.subf %35, %41 : vector<8x1xf32>
    %47 = arith.mulf %46, %45 : vector<8x1xf32>
    %48 = vector.shape_cast %47 : vector<8x1xf32> to vector<8x1xf32>
    %49 = vector.broadcast %48 : vector<8x1xf32> to vector<8x128xf32>
    %c0_26 = arith.constant 0 : index
    %c0_27 = arith.constant 0 : index
    %50 = vector.load %arg10[%c0_26, %c0_27] : memref<8x128xf32, #tpu.memory_space<vmem>>, vector<8x128xf32>
    tpu.vector_store %arg10[%c0_26, %c0_27], %49 {strides = array<i32>} : memref<8x128xf32, #tpu.memory_space<vmem>>, vector<8x128xf32>,
    return
  }
  func.func @transform_0(%arg0: i32) -> (i32, i32) {
    %c0_i32 = arith.constant 0 : i32
    %c0_i32_0 = arith.constant 0 : i32
    return %arg0, %c0_i32 : i32, i32
  }
  func.func @transform_1(%arg0: i32) -> (i32, i32) {
    %c0_i32 = arith.constant 0 : i32
    %c0_i32_0 = arith.constant 0 : i32
    return %arg0, %c0_i32 : i32, i32
  }
  func.func @transform_2(%arg0: i32) -> (i32, i32) {
    %c0_i32 = arith.constant 0 : i32
    %c0_i32_0 = arith.constant 0 : i32
    %c0_i32_1 = arith.constant 0 : i32
    return %c0_i32, %c0_i32_0 : i32, i32
  }
  func.func @transform_3(%arg0: i32) -> (i32, i32) {
    %c0_i32 = arith.constant 0 : i32
    %c0_i32_0 = arith.constant 0 : i32
    %c0_i32_1 = arith.constant 0 : i32
    return %c0_i32, %c0_i32_0 : i32, i32
  }
  func.func @transform_4(%arg0: i32) -> (i32, i32) {
    %c0_i32 = arith.constant 0 : i32
    %c0_i32_0 = arith.constant 0 : i32
    %c0_i32_1 = arith.constant 0 : i32
    return %c0_i32, %c0_i32_0 : i32, i32
  }
  func.func @transform_5(%arg0: i32) -> (i32, i32) {
    %c0_i32 = arith.constant 0 : i32
    %c0_i32_0 = arith.constant 0 : i32
    %c0_i32_1 = arith.constant 0 : i32
    return %c0_i32, %c0_i32_0 : i32, i32
  }
  func.func @transform_6(%arg0: i32) -> (i32, i32) {
    %c0_i32 = arith.constant 0 : i32
    %c0_i32_0 = arith.constant 0 : i32
    %c0_i32_1 = arith.constant 0 : i32
    return %c0_i32, %c0_i32_0 : i32, i32
  }
  func.func @transform_7(%arg0: i32) -> (i32, i32) {
    %c0_i32 = arith.constant 0 : i32
    %c0_i32_0 = arith.constant 0 : i32
    %c0_i32_1 = arith.constant 0 : i32
    return %c0_i32, %c0_i32_0 : i32, i32
  }
  func.func @transform_8(%arg0: i32) -> (i32, i32) {
    %c0_i32 = arith.constant 0 : i32
    %c0_i32_0 = arith.constant 0 : i32
    return %arg0, %c0_i32 : i32, i32
  }
  func.func @transform_9(%arg0: i32) -> (i32, i32) {
    %c0_i32 = arith.constant 0 : i32
    %c0_i32_0 = arith.constant 0 : i32
    return %arg0, %c0_i32 : i32, i32
  }
}

</mosaic_0001>

<llo_original>
// kernel: net_forward.3
$region0: #{net_forward.3}
  #allocation0 [shape = 'u32[]', space=smem, size = 0x4, offset = 0x4, fixed_abs, tag = 'smem constant byte address 0x4 - core index']
  #allocation1 [shape = 'u32[144,128]{1,0:T(1,128)}', space=vmem, size = 0x12000, scoped, tag = 'internal scratch']
  %s0 = inlined_call_operand.vmem [shape: f32[8,1024], index: 0, kind: input, shape index: {}]
  %s1 = inlined_call_operand.vmem [shape: s32[8,1], index: 1, kind: input, shape index: {}]
  %s2 = inlined_call_operand.vmem [shape: f32[1024,128], index: 2, kind: input, shape index: {}]
  %s3 = inlined_call_operand.vmem [shape: f32[1,128], index: 3, kind: input, shape index: {}]
  %s4 = inlined_call_operand.vmem [shape: f32[128,128], index: 4, kind: input, shape index: {}]
  %s5 = inlined_call_operand.vmem [shape: f32[1,128], index: 5, kind: input, shape index: {}]
  %s6 = inlined_call_operand.vmem [shape: f32[128,128], index: 6, kind: input, shape index: {}]
  %s7 = inlined_call_operand.vmem [shape: f32[1,128], index: 7, kind: input, shape index: {}]
  %s8 = inlined_call_operand.vmem [shape: f32[8,128], index: 8, kind: output, shape index: {0}]
  %s9 = inlined_call_operand.vmem [shape: f32[8,128], index: 9, kind: output, shape index: {1}]
  %10 = xla_tuple %s8, %s9
  %s11 = sld [smem:[#allocation0]]
  $region50: #{net_forward.3} parent=0
    _
  %s13 = ssub.s32 1, %s11
  %s14 = scalar_select 0, %s13, %s11
  // Predicated region
  $region2: #{net_forward.3} parent=0 // pred_check
    _
  $region3: #{net_forward.3} parent=0 // pred_check_branch
    %16 = sbr.rel (0) target = $region5
  $region4: #{net_forward.3} parent=0 // pred_region
    _
  $region5: #{net_forward.3} parent=0 // pred_fallthru
    _
  // Predicated region
  $region6: #{net_forward.3} parent=0 // pred_check
    _
  $region7: #{net_forward.3} parent=0 // pred_check_branch
    %18 = sbr.rel (0) target = $region9
  $region8: #{net_forward.3} parent=0 // pred_region
    _
  $region9: #{net_forward.3} parent=0 // pred_fallthru
    _
  // Predicated region
  $region10: #{net_forward.3} parent=0 // pred_check
    _
  $region11: #{net_forward.3} parent=0 // pred_check_branch
    %20 = sbr.rel (0) target = $region13
  $region12: #{net_forward.3} parent=0 // pred_region
    _
  $region13: #{net_forward.3} parent=0 // pred_fallthru
    _
  // Predicated region
  $region14: #{net_forward.3} parent=0 // pred_check
    _
  $region15: #{net_forward.3} parent=0 // pred_check_branch
    %22 = sbr.rel (0) target = $region17
  $region16: #{net_forward.3} parent=0 // pred_region
    _
  $region17: #{net_forward.3} parent=0 // pred_fallthru
    _
  // Predicated region
  $region18: #{net_forward.3} parent=0 // pred_check
    _
  $region19: #{net_forward.3} parent=0 // pred_check_branch
    %24 = sbr.rel (0) target = $region21
  $region20: #{net_forward.3} parent=0 // pred_region
    _
  $region21: #{net_forward.3} parent=0 // pred_fallthru
    _
  // Predicated region
  $region22: #{net_forward.3} parent=0 // pred_check
    _
  $region23: #{net_forward.3} parent=0 // pred_check_branch
    %26 = sbr.rel (0) target = $region25
  $region24: #{net_forward.3} parent=0 // pred_region
    _
  $region25: #{net_forward.3} parent=0 // pred_fallthru
    _
  // Predicated region
  $region26: #{net_forward.3} parent=0 // pred_check
    _
  $region27: #{net_forward.3} parent=0 // pred_check_branch
    %28 = sbr.rel (0) target = $region29
  $region28: #{net_forward.3} parent=0 // pred_region
    _
  $region29: #{net_forward.3} parent=0 // pred_fallthru
    _
  // Predicated region
  $region30: #{net_forward.3} parent=0 // pred_check
    _
  $region31: #{net_forward.3} parent=0 // pred_check_branch
    %30 = sbr.rel (0) target = $region33
  $region32: #{net_forward.3} parent=0 // pred_region
    _
  $region33: #{net_forward.3} parent=0 // pred_fallthru
    _
  %v31 = vld [vmem:[%s0] sm:$0xff]
  %v32 = vld [vmem:[%s0 + $0x8] sm:$0xff]
  %v33 = vld [vmem:[%s0 + $0x10] sm:$0xff]
  %v34 = vld [vmem:[%s0 + $0x18] sm:$0xff]
  %v35 = vld [vmem:[%s0 + $0x20] sm:$0xff]
  %v36 = vld [vmem:[%s0 + $0x28] sm:$0xff]
  %v37 = vld [vmem:[%s0 + $0x30] sm:$0xff]
  %v38 = vld [vmem:[%s0 + $0x38] sm:$0xff]
  %v39 = vld [vmem:[%s2] sm:$0xff]
  %v40 = vld [vmem:[%s2 + $0x8] sm:$0xff]
  %v41 = vld [vmem:[%s2 + $0x10] sm:$0xff]
  %v42 = vld [vmem:[%s2 + $0x18] sm:$0xff]
  %v43 = vld [vmem:[%s2 + $0x20] sm:$0xff]
  %v44 = vld [vmem:[%s2 + $0x28] sm:$0xff]
  %v45 = vld [vmem:[%s2 + $0x30] sm:$0xff]
  %v46 = vld [vmem:[%s2 + $0x38] sm:$0xff]
  %v47 = vld [vmem:[%s2 + $0x40] sm:$0xff]
  %v48 = vld [vmem:[%s2 + $0x48] sm:$0xff]
  %v49 = vld [vmem:[%s2 + $0x50] sm:$0xff]
  %v50 = vld [vmem:[%s2 + $0x58] sm:$0xff]
  %v51 = vld [vmem:[%s2 + $0x60] sm:$0xff]
  %v52 = vld [vmem:[%s2 + $0x68] sm:$0xff]
  %v53 = vld [vmem:[%s2 + $0x70] sm:$0xff]
  %v54 = vld [vmem:[%s2 + $0x78] sm:$0xff]
  %v55 = vld [vmem:[%s2 + $0x80] sm:$0xff]
  %v56 = vld [vmem:[%s2 + $0x88] sm:$0xff]
  %v57 = vld [vmem:[%s2 + $0x90] sm:$0xff]
  %v58 = vld [vmem:[%s2 + $0x98] sm:$0xff]
  %v59 = vld [vmem:[%s2 + $0xa0] sm:$0xff]
  %v60 = vld [vmem:[%s2 + $0xa8] sm:$0xff]
  %v61 = vld [vmem:[%s2 + $0xb0] sm:$0xff]
  %v62 = vld [vmem:[%s2 + $0xb8] sm:$0xff]
  %v63 = vld [vmem:[%s2 + $0xc0] sm:$0xff]
  %v64 = vld [vmem:[%s2 + $0xc8] sm:$0xff]
  %v65 = vld [vmem:[%s2 + $0xd0] sm:$0xff]
  %v66 = vld [vmem:[%s2 + $0xd8] sm:$0xff]
  %v67 = vld [vmem:[%s2 + $0xe0] sm:$0xff]
  %v68 = vld [vmem:[%s2 + $0xe8] sm:$0xff]
  %v69 = vld [vmem:[%s2 + $0xf0] sm:$0xff]
  %v70 = vld [vmem:[%s2 + $0xf8] sm:$0xff]
  %v71 = vld [vmem:[%s2 + $0x100] sm:$0xff]
  %v72 = vld [vmem:[%s2 + $0x108] sm:$0xff]
  %v73 = vld [vmem:[%s2 + $0x110] sm:$0xff]
  %v74 = vld [vmem:[%s2 + $0x118] sm:$0xff]
  %v75 = vld [vmem:[%s2 + $0x120] sm:$0xff]
  %v76 = vld [vmem:[%s2 + $0x128] sm:$0xff]
  %v77 = vld [vmem:[%s2 + $0x130] sm:$0xff]
  %v78 = vld [vmem:[%s2 + $0x138] sm:$0xff]
  %v79 = vld [vmem:[%s2 + $0x140] sm:$0xff]
  %v80 = vld [vmem:[%s2 + $0x148] sm:$0xff]
  %v81 = vld [vmem:[%s2 + $0x150] sm:$0xff]
  %v82 = vld [vmem:[%s2 + $0x158] sm:$0xff]
  %v83 = vld [vmem:[%s2 + $0x160] sm:$0xff]
  %v84 = vld [vmem:[%s2 + $0x168] sm:$0xff]
  %v85 = vld [vmem:[%s2 + $0x170] sm:$0xff]
  %v86 = vld [vmem:[%s2 + $0x178] sm:$0xff]
  %v87 = vld [vmem:[%s2 + $0x180] sm:$0xff]
  %v88 = vld [vmem:[%s2 + $0x188] sm:$0xff]
  %v89 = vld [vmem:[%s2 + $0x190] sm:$0xff]
  %v90 = vld [vmem:[%s2 + $0x198] sm:$0xff]
  %v91 = vld [vmem:[%s2 + $0x1a0] sm:$0xff]
  %v92 = vld [vmem:[%s2 + $0x1a8] sm:$0xff]
  %v93 = vld [vmem:[%s2 + $0x1b0] sm:$0xff]
  %v94 = vld [vmem:[%s2 + $0x1b8] sm:$0xff]
  %v95 = vld [vmem:[%s2 + $0x1c0] sm:$0xff]
  %v96 = vld [vmem:[%s2 + $0x1c8] sm:$0xff]
  %v97 = vld [vmem:[%s2 + $0x1d0] sm:$0xff]
  %v98 = vld [vmem:[%s2 + $0x1d8] sm:$0xff]
  %v99 = vld [vmem:[%s2 + $0x1e0] sm:$0xff]
  %v100 = vld [vmem:[%s2 + $0x1e8] sm:$0xff]
  %v101 = vld [vmem:[%s2 + $0x1f0] sm:$0xff]
  %v102 = vld [vmem:[%s2 + $0x1f8] sm:$0xff]
  %v103 = vld [vmem:[%s2 + $0x200] sm:$0xff]
  %v104 = vld [vmem:[%s2 + $0x208] sm:$0xff]
  %v105 = vld [vmem:[%s2 + $0x210] sm:$0xff]
  %v106 = vld [vmem:[%s2 + $0x218] sm:$0xff]
  %v107 = vld [vmem:[%s2 + $0x220] sm:$0xff]
  %v108 = vld [vmem:[%s2 + $0x228] sm:$0xff]
  %v109 = vld [vmem:[%s2 + $0x230] sm:$0xff]
  %v110 = vld [vmem:[%s2 + $0x238] sm:$0xff]
  %v111 = vld [vmem:[%s2 + $0x240] sm:$0xff]
  %v112 = vld [vmem:[%s2 + $0x248] sm:$0xff]
  %v113 = vld [vmem:[%s2 + $0x250] sm:$0xff]
  %v114 = vld [vmem:[%s2 + $0x258] sm:$0xff]
  %v115 = vld [vmem:[%s2 + $0x260] sm:$0xff]
  %v116 = vld [vmem:[%s2 + $0x268] sm:$0xff]
  %v117 = vld [vmem:[%s2 + $0x270] sm:$0xff]
  %v118 = vld [vmem:[%s2 + $0x278] sm:$0xff]
  %v119 = vld [vmem:[%s2 + $0x280] sm:$0xff]
  %v120 = vld [vmem:[%s2 + $0x288] sm:$0xff]
  %v121 = vld [vmem:[%s2 + $0x290] sm:$0xff]
  %v122 = vld [vmem:[%s2 + $0x298] sm:$0xff]
  %v123 = vld [vmem:[%s2 + $0x2a0] sm:$0xff]
  %v124 = vld [vmem:[%s2 + $0x2a8] sm:$0xff]
  %v125 = vld [vmem:[%s2 + $0x2b0] sm:$0xff]
  %v126 = vld [vmem:[%s2 + $0x2b8] sm:$0xff]
  %v127 = vld [vmem:[%s2 + $0x2c0] sm:$0xff]
  %v128 = vld [vmem:[%s2 + $0x2c8] sm:$0xff]
  %v129 = vld [vmem:[%s2 + $0x2d0] sm:$0xff]
  %v130 = vld [vmem:[%s2 + $0x2d8] sm:$0xff]
  %v131 = vld [vmem:[%s2 + $0x2e0] sm:$0xff]
  %v132 = vld [vmem:[%s2 + $0x2e8] sm:$0xff]
  %v133 = vld [vmem:[%s2 + $0x2f0] sm:$0xff]
  %v134 = vld [vmem:[%s2 + $0x2f8] sm:$0xff]
  %v135 = vld [vmem:[%s2 + $0x300] sm:$0xff]
  %v136 = vld [vmem:[%s2 + $0x308] sm:$0xff]
  %v137 = vld [vmem:[%s2 + $0x310] sm:$0xff]
  %v138 = vld [vmem:[%s2 + $0x318] sm:$0xff]
  %v139 = vld [vmem:[%s2 + $0x320] sm:$0xff]
  %v140 = vld [vmem:[%s2 + $0x328] sm:$0xff]
  %v141 = vld [vmem:[%s2 + $0x330] sm:$0xff]
  %v142 = vld [vmem:[%s2 + $0x338] sm:$0xff]
  %v143 = vld [vmem:[%s2 + $0x340] sm:$0xff]
  %v144 = vld [vmem:[%s2 + $0x348] sm:$0xff]
  %v145 = vld [vmem:[%s2 + $0x350] sm:$0xff]
  %v146 = vld [vmem:[%s2 + $0x358] sm:$0xff]
  %v147 = vld [vmem:[%s2 + $0x360] sm:$0xff]
  %v148 = vld [vmem:[%s2 + $0x368] sm:$0xff]
  %v149 = vld [vmem:[%s2 + $0x370] sm:$0xff]
  %v150 = vld [vmem:[%s2 + $0x378] sm:$0xff]
  %v151 = vld [vmem:[%s2 + $0x380] sm:$0xff]
  %v152 = vld [vmem:[%s2 + $0x388] sm:$0xff]
  %v153 = vld [vmem:[%s2 + $0x390] sm:$0xff]
  %v154 = vld [vmem:[%s2 + $0x398] sm:$0xff]
  %v155 = vld [vmem:[%s2 + $0x3a0] sm:$0xff]
  %v156 = vld [vmem:[%s2 + $0x3a8] sm:$0xff]
  %v157 = vld [vmem:[%s2 + $0x3b0] sm:$0xff]
  %v158 = vld [vmem:[%s2 + $0x3b8] sm:$0xff]
  %v159 = vld [vmem:[%s2 + $0x3c0] sm:$0xff]
  %v160 = vld [vmem:[%s2 + $0x3c8] sm:$0xff]
  %v161 = vld [vmem:[%s2 + $0x3d0] sm:$0xff]
  %v162 = vld [vmem:[%s2 + $0x3d8] sm:$0xff]
  %v163 = vld [vmem:[%s2 + $0x3e0] sm:$0xff]
  %v164 = vld [vmem:[%s2 + $0x3e8] sm:$0xff]
  %v165 = vld [vmem:[%s2 + $0x3f0] sm:$0xff]
  %v166 = vld [vmem:[%s2 + $0x3f8] sm:$0xff]
  %v167 = vld [vmem:[%s3] sm:$0x1]
  %v169 = vlaneseq
  %v170 = vshrl.u32 %v169, 7
  %v171 = vsub.s32 0, %v170
  %v172 = vrot.slane %v167, %v171
  %174 = vmatprep.subr.mxu0 0.0
  %175 = vmatpush1.msra.mxu0 %v39
  %176 = vmatprep.subr.mxu0 0.0
  %177 = vmatpush1.msra.mxu0 %v40
  %178 = vmatprep.subr.mxu0 0.0
  %179 = vmatpush1.msra.mxu0 %v41
  %180 = vmatprep.subr.mxu0 0.0
  %181 = vmatpush1.msra.mxu0 %v42
  %182 = vmatprep.subr.mxu0 0.0
  %183 = vmatpush1.msra.mxu0 %v43
  %184 = vmatprep.subr.mxu0 0.0
  %185 = vmatpush1.msra.mxu0 %v44
  %186 = vmatprep.subr.mxu0 0.0
  %187 = vmatpush1.msra.mxu0 %v45
  %188 = vmatprep.subr.mxu0 0.0
  %189 = vmatpush1.msra.mxu0 %v46
  %190 = vmatprep.subr.mxu0 0.0
  %191 = vmatpush1.msra.mxu0 %v47
  %192 = vmatprep.subr.mxu0 0.0
  %193 = vmatpush1.msra.mxu0 %v48
  %194 = vmatprep.subr.mxu0 0.0
  %195 = vmatpush1.msra.mxu0 %v49
  %196 = vmatprep.subr.mxu0 0.0
  %197 = vmatpush1.msra.mxu0 %v50
  %198 = vmatprep.subr.mxu0 0.0
  %199 = vmatpush1.msra.mxu0 %v51
  %200 = vmatprep.subr.mxu0 0.0
  %201 = vmatpush1.msra.mxu0 %v52
  %202 = vmatprep.subr.mxu0 0.0
  %203 = vmatpush1.msra.mxu0 %v53
  %204 = vmatprep.subr.mxu0 0.0
  %205 = vmatpush1.msra.mxu0 %v54
  %206 = vmatprep.subr.mxu0 0.0
  %207 = vmatpush1.msra.mxu0 %v55
  %208 = vmatprep.subr.mxu0 0.0
  %209 = vmatpush1.msra.mxu0 %v56
  %210 = vmatprep.subr.mxu0 0.0
  %211 = vmatpush1.msra.mxu0 %v57
  %212 = vmatprep.subr.mxu0 0.0
  %213 = vmatpush1.msra.mxu0 %v58
  %214 = vmatprep.subr.mxu0 0.0
  %215 = vmatpush1.msra.mxu0 %v59
  %216 = vmatprep.subr.mxu0 0.0
  %217 = vmatpush1.msra.mxu0 %v60
  %218 = vmatprep.subr.mxu0 0.0
  %219 = vmatpush1.msra.mxu0 %v61
  %220 = vmatprep.subr.mxu0 0.0
  %221 = vmatpush1.msra.mxu0 %v62
  %222 = vmatprep.subr.mxu0 0.0
  %223 = vmatpush1.msra.mxu0 %v63
  %224 = vmatprep.subr.mxu0 0.0
  %225 = vmatpush1.msra.mxu0 %v64
  %226 = vmatprep.subr.mxu0 0.0
  %227 = vmatpush1.msra.mxu0 %v65
  %228 = vmatprep.subr.mxu0 0.0
  %229 = vmatpush1.msra.mxu0 %v66
  %230 = vmatprep.subr.mxu0 0.0
  %231 = vmatpush1.msra.mxu0 %v67
  %232 = vmatprep.subr.mxu0 0.0
  %233 = vmatpush1.msra.mxu0 %v68
  %234 = vmatprep.subr.mxu0 0.0
  %235 = vmatpush1.msra.mxu0 %v69
  %236 = vmatprep.subr.mxu0 0.0
  %237 = vmatpush1.msra.mxu0 %v70
  %238 = vmatprep.mubr.f32.mxu0 %v32
  %239 = vmatmul.mubr.f32.gmra.mrb[0].mxu0 %v31
  %v240 = vpop.f32.mrb[0].mxu0
  %v241 = vadd.f32 %v172, %v240
  %v242 = vpop.f32.mrb[0].mxu0
  %243 = vdwg.mxu0
  %244 = vmatprep.subr.mxu0 0.0
  %245 = vmatpush1.msra.mxu0 %v71
  %246 = vmatprep.subr.mxu0 0.0
  %247 = vmatpush1.msra.mxu0 %v72
  %248 = vmatprep.subr.mxu0 0.0
  %249 = vmatpush1.msra.mxu0 %v73
  %250 = vmatprep.subr.mxu0 0.0
  %251 = vmatpush1.msra.mxu0 %v74
  %252 = vmatprep.subr.mxu0 0.0
  %253 = vmatpush1.msra.mxu0 %v75
  %254 = vmatprep.subr.mxu0 0.0
  %255 = vmatpush1.msra.mxu0 %v76
  %256 = vmatprep.subr.mxu0 0.0
  %257 = vmatpush1.msra.mxu0 %v77
  %258 = vmatprep.subr.mxu0 0.0
  %259 = vmatpush1.msra.mxu0 %v78
  %260 = vmatprep.subr.mxu0 0.0
  %261 = vmatpush1.msra.mxu0 %v79
  %262 = vmatprep.subr.mxu0 0.0
  %263 = vmatpush1.msra.mxu0 %v80
  %264 = vmatprep.subr.mxu0 0.0
  %265 = vmatpush1.msra.mxu0 %v81
  %266 = vmatprep.subr.mxu0 0.0
  %267 = vmatpush1.msra.mxu0 %v82
  %268 = vmatprep.subr.mxu0 0.0
  %269 = vmatpush1.msra.mxu0 %v83
  %270 = vmatprep.subr.mxu0 0.0
  %271 = vmatpush1.msra.mxu0 %v84
  %272 = vmatprep.subr.mxu0 0.0
  %273 = vmatpush1.msra.mxu0 %v85
  %274 = vmatprep.subr.mxu0 0.0
  %275 = vmatpush1.msra.mxu0 %v86
  %276 = vmatprep.subr.mxu0 0.0
  %277 = vmatpush1.msra.mxu0 %v87
  %278 = vmatprep.subr.mxu0 0.0
  %279 = vmatpush1.msra.mxu0 %v88
  %280 = vmatprep.subr.mxu0 0.0
  %281 = vmatpush1.msra.mxu0 %v89
  %282 = vmatprep.subr.mxu0 0.0
  %283 = vmatpush1.msra.mxu0 %v90
  %284 = vmatprep.subr.mxu0 0.0
  %285 = vmatpush1.msra.mxu0 %v91
  %286 = vmatprep.subr.mxu0 0.0
  %287 = vmatpush1.msra.mxu0 %v92
  %288 = vmatprep.subr.mxu0 0.0
  %289 = vmatpush1.msra.mxu0 %v93
  %290 = vmatprep.subr.mxu0 0.0
  %291 = vmatpush1.msra.mxu0 %v94
  %292 = vmatprep.subr.mxu0 0.0
  %293 = vmatpush1.msra.mxu0 %v95
  %294 = vmatprep.subr.mxu0 0.0
  %295 = vmatpush1.msra.mxu0 %v96
  %296 = vmatprep.subr.mxu0 0.0
  %297 = vmatpush1.msra.mxu0 %v97
  %298 = vmatprep.subr.mxu0 0.0
  %299 = vmatpush1.msra.mxu0 %v98
  %300 = vmatprep.subr.mxu0 0.0
  %301 = vmatpush1.msra.mxu0 %v99
  %302 = vmatprep.subr.mxu0 0.0
  %303 = vmatpush1.msra.mxu0 %v100
  %304 = vmatprep.subr.mxu0 0.0
  %305 = vmatpush1.msra.mxu0 %v101
  %306 = vmatprep.subr.mxu0 0.0
  %307 = vmatpush1.msra.mxu0 %v102
  %308 = vmatprep.mubr.f32.mxu0 %v34
  %309 = vmatmul.mubr.f32.gmra.mrb[0].mxu0 %v33
  %v310 = vpop.f32.mrb[0].mxu0
  %v311 = vadd.f32 %v241, %v310
  %v312 = vpop.f32.mrb[0].mxu0
  %313 = vdwg.mxu0
  %314 = vmatprep.subr.mxu0 0.0
  %315 = vmatpush1.msra.mxu0 %v103
  %316 = vmatprep.subr.mxu0 0.0
  %317 = vmatpush1.msra.mxu0 %v104
  %318 = vmatprep.subr.mxu0 0.0
  %319 = vmatpush1.msra.mxu0 %v105
  %320 = vmatprep.subr.mxu0 0.0
  %321 = vmatpush1.msra.mxu0 %v106
  %322 = vmatprep.subr.mxu0 0.0
  %323 = vmatpush1.msra.mxu0 %v107
  %324 = vmatprep.subr.mxu0 0.0
  %325 = vmatpush1.msra.mxu0 %v108
  %326 = vmatprep.subr.mxu0 0.0
  %327 = vmatpush1.msra.mxu0 %v109
  %328 = vmatprep.subr.mxu0 0.0
  %329 = vmatpush1.msra.mxu0 %v110
  %330 = vmatprep.subr.mxu0 0.0
  %331 = vmatpush1.msra.mxu0 %v111
  %332 = vmatprep.subr.mxu0 0.0
  %333 = vmatpush1.msra.mxu0 %v112
  %334 = vmatprep.subr.mxu0 0.0
  %335 = vmatpush1.msra.mxu0 %v113
  %336 = vmatprep.subr.mxu0 0.0
  %337 = vmatpush1.msra.mxu0 %v114
  %338 = vmatprep.subr.mxu0 0.0
  %339 = vmatpush1.msra.mxu0 %v115
  %340 = vmatprep.subr.mxu0 0.0
  %341 = vmatpush1.msra.mxu0 %v116
  %342 = vmatprep.subr.mxu0 0.0
  %343 = vmatpush1.msra.mxu0 %v117
  %344 = vmatprep.subr.mxu0 0.0
  %345 = vmatpush1.msra.mxu0 %v118
  %346 = vmatprep.subr.mxu0 0.0
  %347 = vmatpush1.msra.mxu0 %v119
  %348 = vmatprep.subr.mxu0 0.0
  %349 = vmatpush1.msra.mxu0 %v120
  %350 = vmatprep.subr.mxu0 0.0
  %351 = vmatpush1.msra.mxu0 %v121
  %352 = vmatprep.subr.mxu0 0.0
  %353 = vmatpush1.msra.mxu0 %v122
  %354 = vmatprep.subr.mxu0 0.0
  %355 = vmatpush1.msra.mxu0 %v123
  %356 = vmatprep.subr.mxu0 0.0
  %357 = vmatpush1.msra.mxu0 %v124
  %358 = vmatprep.subr.mxu0 0.0
  %359 = vmatpush1.msra.mxu0 %v125
  %360 = vmatprep.subr.mxu0 0.0
  %361 = vmatpush1.msra.mxu0 %v126
  %362 = vmatprep.subr.mxu0 0.0
  %363 = vmatpush1.msra.mxu0 %v127
  %364 = vmatprep.subr.mxu0 0.0
  %365 = vmatpush1.msra.mxu0 %v128
  %366 = vmatprep.subr.mxu0 0.0
  %367 = vmatpush1.msra.mxu0 %v129
  %368 = vmatprep.subr.mxu0 0.0
  %369 = vmatpush1.msra.mxu0 %v130
  %370 = vmatprep.subr.mxu0 0.0
  %371 = vmatpush1.msra.mxu0 %v131
  %372 = vmatprep.subr.mxu0 0.0
  %373 = vmatpush1.msra.mxu0 %v132
  %374 = vmatprep.subr.mxu0 0.0
  %375 = vmatpush1.msra.mxu0 %v133
  %376 = vmatprep.subr.mxu0 0.0
  %377 = vmatpush1.msra.mxu0 %v134
  %378 = vmatprep.mubr.f32.mxu0 %v36
  %379 = vmatmul.mubr.f32.gmra.mrb[0].mxu0 %v35
  %v380 = vpop.f32.mrb[0].mxu0
  %v381 = vadd.f32 %v311, %v380
  %v382 = vpop.f32.mrb[0].mxu0
  %383 = vdwg.mxu0
  %384 = vmatprep.subr.mxu0 0.0
  %385 = vmatpush1.msra.mxu0 %v135
  %386 = vmatprep.subr.mxu0 0.0
  %387 = vmatpush1.msra.mxu0 %v136
  %388 = vmatprep.subr.mxu0 0.0
  %389 = vmatpush1.msra.mxu0 %v137
  %390 = vmatprep.subr.mxu0 0.0
  %391 = vmatpush1.msra.mxu0 %v138
  %392 = vmatprep.subr.mxu0 0.0
  %393 = vmatpush1.msra.mxu0 %v139
  %394 = vmatprep.subr.mxu0 0.0
  %395 = vmatpush1.msra.mxu0 %v140
  %396 = vmatprep.subr.mxu0 0.0
  %397 = vmatpush1.msra.mxu0 %v141
  %398 = vmatprep.subr.mxu0 0.0
  %399 = vmatpush1.msra.mxu0 %v142
  %400 = vmatprep.subr.mxu0 0.0
  %401 = vmatpush1.msra.mxu0 %v143
  %402 = vmatprep.subr.mxu0 0.0
  %403 = vmatpush1.msra.mxu0 %v144
  %404 = vmatprep.subr.mxu0 0.0
  %405 = vmatpush1.msra.mxu0 %v145
  %406 = vmatprep.subr.mxu0 0.0
  %407 = vmatpush1.msra.mxu0 %v146
  %408 = vmatprep.subr.mxu0 0.0
  %409 = vmatpush1.msra.mxu0 %v147
  %410 = vmatprep.subr.mxu0 0.0
  %411 = vmatpush1.msra.mxu0 %v148
  %412 = vmatprep.subr.mxu0 0.0
  %413 = vmatpush1.msra.mxu0 %v149
  %414 = vmatprep.subr.mxu0 0.0
  %415 = vmatpush1.msra.mxu0 %v150
  %416 = vmatprep.subr.mxu0 0.0
  %417 = vmatpush1.msra.mxu0 %v151
  %418 = vmatprep.subr.mxu0 0.0
  %419 = vmatpush1.msra.mxu0 %v152
  %420 = vmatprep.subr.mxu0 0.0
  %421 = vmatpush1.msra.mxu0 %v153
  %422 = vmatprep.subr.mxu0 0.0
  %423 = vmatpush1.msra.mxu0 %v154
  %424 = vmatprep.subr.mxu0 0.0
  %425 = vmatpush1.msra.mxu0 %v155
  %426 = vmatprep.subr.mxu0 0.0
  %427 = vmatpush1.msra.mxu0 %v156
  %428 = vmatprep.subr.mxu0 0.0
  %429 = vmatpush1.msra.mxu0 %v157
  %430 = vmatprep.subr.mxu0 0.0
  %431 = vmatpush1.msra.mxu0 %v158
  %432 = vmatprep.subr.mxu0 0.0
  %433 = vmatpush1.msra.mxu0 %v159
  %434 = vmatprep.subr.mxu0 0.0
  %435 = vmatpush1.msra.mxu0 %v160
  %436 = vmatprep.subr.mxu0 0.0
  %437 = vmatpush1.msra.mxu0 %v161
  %438 = vmatprep.subr.mxu0 0.0
  %439 = vmatpush1.msra.mxu0 %v162
  %440 = vmatprep.subr.mxu0 0.0
  %441 = vmatpush1.msra.mxu0 %v163
  %442 = vmatprep.subr.mxu0 0.0
  %443 = vmatpush1.msra.mxu0 %v164
  %444 = vmatprep.subr.mxu0 0.0
  %445 = vmatpush1.msra.mxu0 %v165
  %446 = vmatprep.subr.mxu0 0.0
  %447 = vmatpush1.msra.mxu0 %v166
  %448 = vmatprep.mubr.f32.mxu0 %v38
  %449 = vmatmul.mubr.f32.gmra.mrb[0].mxu0 %v37
  %v450 = vpop.f32.mrb[0].mxu0
  %v451 = vadd.f32 %v381, %v450
  %v452 = vpop.f32.mrb[0].mxu0
  %453 = vdwg.mxu0
  %v454 = vmax.f32 %v451, 0.0
  %v455 = vld [vmem:[%s4] sm:$0xff]
  %v456 = vld [vmem:[%s4 + $0x8] sm:$0xff]
  %v457 = vld [vmem:[%s4 + $0x10] sm:$0xff]
  %v458 = vld [vmem:[%s4 + $0x18] sm:$0xff]
  %v459 = vld [vmem:[%s4 + $0x20] sm:$0xff]
  %v460 = vld [vmem:[%s4 + $0x28] sm:$0xff]
  %v461 = vld [vmem:[%s4 + $0x30] sm:$0xff]
  %v462 = vld [vmem:[%s4 + $0x38] sm:$0xff]
  %v463 = vld [vmem:[%s4 + $0x40] sm:$0xff]
  %v464 = vld [vmem:[%s4 + $0x48] sm:$0xff]
  %v465 = vld [vmem:[%s4 + $0x50] sm:$0xff]
  %v466 = vld [vmem:[%s4 + $0x58] sm:$0xff]
  %v467 = vld [vmem:[%s4 + $0x60] sm:$0xff]
  %v468 = vld [vmem:[%s4 + $0x68] sm:$0xff]
  %v469 = vld [vmem:[%s4 + $0x70] sm:$0xff]
  %v470 = vld [vmem:[%s4 + $0x78] sm:$0xff]
  %v471 = vld [vmem:[%s5] sm:$0x1]
  %v473 = vlaneseq
  %v474 = vshrl.u32 %v473, 7
  %v475 = vsub.s32 0, %v474
  %v476 = vrot.slane %v471, %v475
  %478 = vmatprep.subr.mxu0 0.0
  %479 = vmatpush1.msra.mxu0 %v455
  %480 = vmatprep.subr.mxu0 0.0
  %481 = vmatpush1.msra.mxu0 %v456
  %482 = vmatprep.subr.mxu0 0.0
  %483 = vmatpush1.msra.mxu0 %v457
  %484 = vmatprep.subr.mxu0 0.0
  %485 = vmatpush1.msra.mxu0 %v458
  %486 = vmatprep.subr.mxu0 0.0
  %487 = vmatpush1.msra.mxu0 %v459
  %488 = vmatprep.subr.mxu0 0.0
  %489 = vmatpush1.msra.mxu0 %v460
  %490 = vmatprep.subr.mxu0 0.0
  %491 = vmatpush1.msra.mxu0 %v461
  %492 = vmatprep.subr.mxu0 0.0
  %493 = vmatpush1.msra.mxu0 %v462
  %494 = vmatprep.subr.mxu0 0.0
  %495 = vmatpush1.msra.mxu0 %v463
  %496 = vmatprep.subr.mxu0 0.0
  %497 = vmatpush1.msra.mxu0 %v464
  %498 = vmatprep.subr.mxu0 0.0
  %499 = vmatpush1.msra.mxu0 %v465
  %500 = vmatprep.subr.mxu0 0.0
  %501 = vmatpush1.msra.mxu0 %v466
  %502 = vmatprep.subr.mxu0 0.0
  %503 = vmatpush1.msra.mxu0 %v467
  %504 = vmatprep.subr.mxu0 0.0
  %505 = vmatpush1.msra.mxu0 %v468
  %506 = vmatprep.subr.mxu0 0.0
  %507 = vmatpush1.msra.mxu0 %v469
  %508 = vmatprep.subr.mxu0 0.0
  %509 = vmatpush1.msra.mxu0 %v470
  %510 = vmatprep.subr.mxu0 0.0
  %511 = vmatpush1.msra.mxu0 0.0
  %512 = vmatprep.subr.mxu0 0.0
  %513 = vmatpush1.msra.mxu0 0.0
  %514 = vmatprep.subr.mxu0 0.0
  %515 = vmatpush1.msra.mxu0 0.0
  %516 = vmatprep.subr.mxu0 0.0
  %517 = vmatpush1.msra.mxu0 0.0
  %518 = vmatprep.subr.mxu0 0.0
  %519 = vmatpush1.msra.mxu0 0.0
  %520 = vmatprep.subr.mxu0 0.0
  %521 = vmatpush1.msra.mxu0 0.0
  %522 = vmatprep.subr.mxu0 0.0
  %523 = vmatpush1.msra.mxu0 0.0
  %524 = vmatprep.subr.mxu0 0.0
  %525 = vmatpush1.msra.mxu0 0.0
  %526 = vmatprep.subr.mxu0 0.0
  %527 = vmatpush1.msra.mxu0 0.0
  %528 = vmatprep.subr.mxu0 0.0
  %529 = vmatpush1.msra.mxu0 0.0
  %530 = vmatprep.subr.mxu0 0.0
  %531 = vmatpush1.msra.mxu0 0.0
  %532 = vmatprep.subr.mxu0 0.0
  %533 = vmatpush1.msra.mxu0 0.0
  %534 = vmatprep.subr.mxu0 0.0
  %535 = vmatpush1.msra.mxu0 0.0
  %536 = vmatprep.subr.mxu0 0.0
  %537 = vmatpush1.msra.mxu0 0.0
  %538 = vmatprep.subr.mxu0 0.0
  %539 = vmatpush1.msra.mxu0 0.0
  %540 = vmatprep.subr.mxu0 0.0
  %541 = vmatpush1.msra.mxu0 0.0
  %542 = vmatprep.mubr.f32.mxu0 0.0
  %543 = vmatmul.mubr.f32.gmra.mrb[0].mxu0 %v454
  %v544 = vpop.f32.mrb[0].mxu0
  %v545 = vadd.f32 %v476, %v544
  %v546 = vpop.f32.mrb[0].mxu0
  %547 = vdwg.mxu0
  %v548 = vmax.f32 %v545, 0.0
  %v549 = vld [vmem:[%s6] sm:$0xff]
  %v550 = vld [vmem:[%s6 + $0x8] sm:$0xff]
  %v551 = vld [vmem:[%s6 + $0x10] sm:$0xff]
  %v552 = vld [vmem:[%s6 + $0x18] sm:$0xff]
  %v553 = vld [vmem:[%s6 + $0x20] sm:$0xff]
  %v554 = vld [vmem:[%s6 + $0x28] sm:$0xff]
  %v555 = vld [vmem:[%s6 + $0x30] sm:$0xff]
  %v556 = vld [vmem:[%s6 + $0x38] sm:$0xff]
  %v557 = vld [vmem:[%s6 + $0x40] sm:$0xff]
  %v558 = vld [vmem:[%s6 + $0x48] sm:$0xff]
  %v559 = vld [vmem:[%s6 + $0x50] sm:$0xff]
  %v560 = vld [vmem:[%s6 + $0x58] sm:$0xff]
  %v561 = vld [vmem:[%s6 + $0x60] sm:$0xff]
  %v562 = vld [vmem:[%s6 + $0x68] sm:$0xff]
  %v563 = vld [vmem:[%s6 + $0x70] sm:$0xff]
  %v564 = vld [vmem:[%s6 + $0x78] sm:$0xff]
  %v565 = vld [vmem:[%s7] sm:$0x1]
  %v567 = vlaneseq
  %v568 = vshrl.u32 %v567, 7
  %v569 = vsub.s32 0, %v568
  %v570 = vrot.slane %v565, %v569
  %572 = vmatprep.subr.mxu0 0.0
  %573 = vmatpush1.msra.mxu0 %v549
  %574 = vmatprep.subr.mxu0 0.0
  %575 = vmatpush1.msra.mxu0 %v550
  %576 = vmatprep.subr.mxu0 0.0
  %577 = vmatpush1.msra.mxu0 %v551
  %578 = vmatprep.subr.mxu0 0.0
  %579 = vmatpush1.msra.mxu0 %v552
  %580 = vmatprep.subr.mxu0 0.0
  %581 = vmatpush1.msra.mxu0 %v553
  %582 = vmatprep.subr.mxu0 0.0
  %583 = vmatpush1.msra.mxu0 %v554
  %584 = vmatprep.subr.mxu0 0.0
  %585 = vmatpush1.msra.mxu0 %v555
  %586 = vmatprep.subr.mxu0 0.0
  %587 = vmatpush1.msra.mxu0 %v556
  %588 = vmatprep.subr.mxu0 0.0
  %589 = vmatpush1.msra.mxu0 %v557
  %590 = vmatprep.subr.mxu0 0.0
  %591 = vmatpush1.msra.mxu0 %v558
  %592 = vmatprep.subr.mxu0 0.0
  %593 = vmatpush1.msra.mxu0 %v559
  %594 = vmatprep.subr.mxu0 0.0
  %595 = vmatpush1.msra.mxu0 %v560
  %596 = vmatprep.subr.mxu0 0.0
  %597 = vmatpush1.msra.mxu0 %v561
  %598 = vmatprep.subr.mxu0 0.0
  %599 = vmatpush1.msra.mxu0 %v562
  %600 = vmatprep.subr.mxu0 0.0
  %601 = vmatpush1.msra.mxu0 %v563
  %602 = vmatprep.subr.mxu0 0.0
  %603 = vmatpush1.msra.mxu0 %v564
  %604 = vmatprep.subr.mxu0 0.0
  %605 = vmatpush1.msra.mxu0 0.0
  %606 = vmatprep.subr.mxu0 0.0
  %607 = vmatpush1.msra.mxu0 0.0
  %608 = vmatprep.subr.mxu0 0.0
  %609 = vmatpush1.msra.mxu0 0.0
  %610 = vmatprep.subr.mxu0 0.0
  %611 = vmatpush1.msra.mxu0 0.0
  %612 = vmatprep.subr.mxu0 0.0
  %613 = vmatpush1.msra.mxu0 0.0
  %614 = vmatprep.subr.mxu0 0.0
  %615 = vmatpush1.msra.mxu0 0.0
  %616 = vmatprep.subr.mxu0 0.0
  %617 = vmatpush1.msra.mxu0 0.0
  %618 = vmatprep.subr.mxu0 0.0
  %619 = vmatpush1.msra.mxu0 0.0
  %620 = vmatprep.subr.mxu0 0.0
  %621 = vmatpush1.msra.mxu0 0.0
  %622 = vmatprep.subr.mxu0 0.0
  %623 = vmatpush1.msra.mxu0 0.0
  %624 = vmatprep.subr.mxu0 0.0
  %625 = vmatpush1.msra.mxu0 0.0
  %626 = vmatprep.subr.mxu0 0.0
  %627 = vmatpush1.msra.mxu0 0.0
  %628 = vmatprep.subr.mxu0 0.0
  %629 = vmatpush1.msra.mxu0 0.0
  %630 = vmatprep.subr.mxu0 0.0
  %631 = vmatpush1.msra.mxu0 0.0
  %632 = vmatprep.subr.mxu0 0.0
  %633 = vmatpush1.msra.mxu0 0.0
  %634 = vmatprep.subr.mxu0 0.0
  %635 = vmatpush1.msra.mxu0 0.0
  %636 = vmatprep.mubr.f32.mxu0 0.0
  %637 = vmatmul.mubr.f32.gmra.mrb[0].mxu0 %v548
  %v638 = vpop.f32.mrb[0].mxu0
  %v639 = vadd.f32 %v570, %v638
  %v640 = vpop.f32.mrb[0].mxu0
  %641 = vdwg.mxu0
  %642 = vst [vmem:[%s8] sm:$0xff] %v639
  %v643 = vld [vmem:[%s1] sm:$0xff]
  %v644 = vlaneseq
  %v645 = vand.u32 %v644, 127
  %vm646 = vcmp.lt.s32.totalorder %v645, 10
  %v647 = vsel %vm646, %v639, -1e+30
  %648 = vmax.xlane.f32.xlu0 %v647
  %v649 = vpop.xlane.xlu0 %648
  %v650 = vsub.f32 %v647, %v649
  %v651 = vmul.f32 %v650, 1.442695
  %v652 = vpow.pop %v651
  %653 = vadd.xlane.f32.xlu0 %v652
  %v654 = vpop.xlane.xlu0 %653
  %v655 = vlog2.pop %v654
  %v656 = vmul.f32 %v655, 0.6931472
  %v657 = vadd.f32 %v649, %v656
  %658 = vset.pattern.permute.xlu0 0
  %659 = vperm.xlu0 %658, %v643
  %v660 = vpop.permute.xlu0 %659
  %vm661 = vcmp.eq.s32.totalorder %v645, %v660
  %v662 = vsel %vm661, %v639, 0.0
  %663 = vadd.xlane.f32.xlu0 %v662
  %v664 = vpop.xlane.xlu0 %663
  %vm665 = vcmp.ge.s32.totalorder %v643, 0
  %v666 = vsel %vm665, 1, 0
  %v667 = vcvt.s32.f32 %v666
  %v668 = vsub.f32 %v657, %v664
  %v669 = vmul.f32 %v668, %v667
  %671 = vset.pattern.permute.xlu0 0
  %672 = vperm.xlu0 %671, %v669
  %v673 = vpop.permute.xlu0 %672
  %675 = vst [vmem:[%s9] sm:$0xff] %v673
  // Predicated region
  $region34: #{net_forward.3} parent=0 // pred_check
    _
  $region35: #{net_forward.3} parent=0 // pred_check_branch
    %677 = sbr.rel (0) target = $region37
  $region36: #{net_forward.3} parent=0 // pred_region
    _
  $region37: #{net_forward.3} parent=0 // pred_fallthru
    _
  // Predicated region
  $region38: #{net_forward.3} parent=0 // pred_check
    _
  $region39: #{net_forward.3} parent=0 // pred_check_branch
    %679 = sbr.rel (0) target = $region41
  $region40: #{net_forward.3} parent=0 // pred_region
    _
  $region41: #{net_forward.3} parent=0 // pred_fallthru
    _
  // Predicated region
  $region42: #{net_forward.3} parent=0 // pred_check
    _
  $region43: #{net_forward.3} parent=0 // pred_check_branch
    %681 = sbr.rel (0) target = $region45
  $region44: #{net_forward.3} parent=0 // pred_region
    _
  $region45: #{net_forward.3} parent=0 // pred_fallthru
    _
  // Predicated region
  $region46: #{net_forward.3} parent=0 // pred_check
    _
  $region47: #{net_forward.3} parent=0 // pred_check_branch
    %683 = sbr.rel (0) target = $region49
  $region48: #{net_forward.3} parent=0 // pred_region
    _
  $region49: #{net_forward.3} parent=0 // pred_fallthru
    _

// kernel: net_forward.2
$region0: #{net_forward.2}
  #allocation0 [shape = 'u32[]', space=smem, size = 0x4, offset = 0x4, fixed_abs, tag = 'smem constant byte address 0x4 - core index']
  #allocation1 [shape = 'u32[144,128]{1,0:T(1,128)}', space=vmem, size = 0x12000, scoped, tag = 'internal scratch']
  #allocation2 [shape = 'f32[264,96]{1,0:T(8,128)}', space=vmem, size = 0x21000, scoped, tag = 'scratch operand']
  #allocation3 [shape = 'f32[136,96]{1,0:T(8,128)}', space=vmem, size = 0x11000, scoped, tag = 'scratch operand']
  #allocation4 [shape = 'f32[128,128]{1,0:T(8,128)}', space=vmem, size = 0x10000, scoped, tag = 'scratch operand']
  %s0 = inlined_call_operand.vmem [shape: f32[256,96], index: 0, kind: input, shape index: {}]
  %s1 = inlined_call_operand.vmem [shape: f32[5,96,168], index: 1, kind: input, shape index: {}]
  %s2 = inlined_call_operand.vmem [shape: f32[1,168], index: 2, kind: input, shape index: {}]
  %s3 = inlined_call_operand.vmem [shape: f32[2,168,96], index: 3, kind: input, shape index: {}]
  %s4 = inlined_call_operand.vmem [shape: f32[5,96,160], index: 4, kind: input, shape index: {}]
  %s5 = inlined_call_operand.vmem [shape: f32[1,160], index: 5, kind: input, shape index: {}]
  %s6 = inlined_call_operand.vmem [shape: f32[2,160,128], index: 6, kind: input, shape index: {}]
  %s7 = inlined_call_operand.vmem [shape: f32[64,128], index: 7, kind: output, shape index: {}]
  %s8 = sld [smem:[#allocation0]]
  $region38: #{net_forward.2} parent=0
    _
  %s10 = ssub.s32 1, %s8
  %s11 = scalar_select 0, %s10, %s8
  // Predicated region
  $region2: #{net_forward.2} parent=0 // pred_check
    _
  $region3: #{net_forward.2} parent=0 // pred_check_branch
    %13 = sbr.rel (0) target = $region5
  $region4: #{net_forward.2} parent=0 // pred_region
    _
  $region5: #{net_forward.2} parent=0 // pred_fallthru
    _
  // Predicated region
  $region6: #{net_forward.2} parent=0 // pred_check
    _
  $region7: #{net_forward.2} parent=0 // pred_check_branch
    %15 = sbr.rel (0) target = $region9
  $region8: #{net_forward.2} parent=0 // pred_region
    _
  $region9: #{net_forward.2} parent=0 // pred_fallthru
    _
  // Predicated region
  $region10: #{net_forward.2} parent=0 // pred_check
    _
  $region11: #{net_forward.2} parent=0 // pred_check_branch
    %17 = sbr.rel (0) target = $region13
  $region12: #{net_forward.2} parent=0 // pred_region
    _
  $region13: #{net_forward.2} parent=0 // pred_fallthru
    _
  // Predicated region
  $region14: #{net_forward.2} parent=0 // pred_check
    _
  $region15: #{net_forward.2} parent=0 // pred_check_branch
    %19 = sbr.rel (0) target = $region17
  $region16: #{net_forward.2} parent=0 // pred_region
    _
  $region17: #{net_forward.2} parent=0 // pred_fallthru
    _
  // Predicated region
  $region18: #{net_forward.2} parent=0 // pred_check
    _
  $region19: #{net_forward.2} parent=0 // pred_check_branch
    %21 = sbr.rel (0) target = $region21
  $region20: #{net_forward.2} parent=0 // pred_region
    _
  $region21: #{net_forward.2} parent=0 // pred_fallthru
    _
  // Predicated region
  $region22: #{net_forward.2} parent=0 // pred_check
    _
  $region23: #{net_forward.2} parent=0 // pred_check_branch
    %23 = sbr.rel (0) target = $region25
  $region24: #{net_forward.2} parent=0 // pred_region
    _
  $region25: #{net_forward.2} parent=0 // pred_fallthru
    _
  // Predicated region
  $region26: #{net_forward.2} parent=0 // pred_check
    _
  $region27: #{net_forward.2} parent=0 // pred_check_branch
    %25 = sbr.rel (0) target = $region29
  $region28: #{net_forward.2} parent=0 // pred_region
    _
  $region29: #{net_forward.2} parent=0 // pred_fallthru
    _
  %v26 = vld [vmem:[%s0] sm:$0xff]
  %v27 = vld [vmem:[%s0 + $0x8] sm:$0xff]
  %v28 = vld [vmem:[%s0 + $0x10] sm:$0xff]
  %v29 = vld [vmem:[%s0 + $0x18] sm:$0xff]
  %v30 = vld [vmem:[%s0 + $0x20] sm:$0xff]
  %v31 = vld [vmem:[%s0 + $0x28] sm:$0xff]
  %v32 = vld [vmem:[%s0 + $0x30] sm:$0xff]
  %v33 = vld [vmem:[%s0 + $0x38] sm:$0xff]
  %v34 = vld [vmem:[%s0 + $0x40] sm:$0xff]
  %v35 = vld [vmem:[%s0 + $0x48] sm:$0xff]
  %v36 = vld [vmem:[%s0 + $0x50] sm:$0xff]
  %v37 = vld [vmem:[%s0 + $0x58] sm:$0xff]
  %v38 = vld [vmem:[%s0 + $0x60] sm:$0xff]
  %v39 = vld [vmem:[%s0 + $0x68] sm:$0xff]
  %v40 = vld [vmem:[%s0 + $0x70] sm:$0xff]
  %v41 = vld [vmem:[%s0 + $0x78] sm:$0xff]
  %v42 = vld [vmem:[%s0 + $0x80] sm:$0xff]
  %v43 = vld [vmem:[%s0 + $0x88] sm:$0xff]
  %v44 = vld [vmem:[%s0 + $0x90] sm:$0xff]
  %v45 = vld [vmem:[%s0 + $0x98] sm:$0xff]
  %v46 = vld [vmem:[%s0 + $0xa0] sm:$0xff]
  %v47 = vld [vmem:[%s0 + $0xa8] sm:$0xff]
  %v48 = vld [vmem:[%s0 + $0xb0] sm:$0xff]
  %v49 = vld [vmem:[%s0 + $0xb8] sm:$0xff]
  %v50 = vld [vmem:[%s0 + $0xc0] sm:$0xff]
  %v51 = vld [vmem:[%s0 + $0xc8] sm:$0xff]
  %v52 = vld [vmem:[%s0 + $0xd0] sm:$0xff]
  %v53 = vld [vmem:[%s0 + $0xd8] sm:$0xff]
  %v54 = vld [vmem:[%s0 + $0xe0] sm:$0xff]
  %v55 = vld [vmem:[%s0 + $0xe8] sm:$0xff]
  %v56 = vld [vmem:[%s0 + $0xf0] sm:$0xff]
  %v57 = vld [vmem:[%s0 + $0xf8] sm:$0xff]
  %vm58 = vcmask 785408
  %59 = vst.msk [vmem:[#allocation2] sm:$0xff] %vm58, %v26
  %60 = vst.msk [vmem:[#allocation2 + $0x8] sm:$0xff] %vm58, %v27
  %61 = vst.msk [vmem:[#allocation2 + $0x10] sm:$0xff] %vm58, %v28
  %62 = vst.msk [vmem:[#allocation2 + $0x18] sm:$0xff] %vm58, %v29
  %63 = vst.msk [vmem:[#allocation2 + $0x20] sm:$0xff] %vm58, %v30
  %64 = vst.msk [vmem:[#allocation2 + $0x28] sm:$0xff] %vm58, %v31
  %65 = vst.msk [vmem:[#allocation2 + $0x30] sm:$0xff] %vm58, %v32
  %66 = vst.msk [vmem:[#allocation2 + $0x38] sm:$0xff] %vm58, %v33
  %67 = vst.msk [vmem:[#allocation2 + $0x40] sm:$0xff] %vm58, %v34
  %68 = vst.msk [vmem:[#allocation2 + $0x48] sm:$0xff] %vm58, %v35
  %69 = vst.msk [vmem:[#allocation2 + $0x50] sm:$0xff] %vm58, %v36
  %70 = vst.msk [vmem:[#allocation2 + $0x58] sm:$0xff] %vm58, %v37
  %71 = vst.msk [vmem:[#allocation2 + $0x60] sm:$0xff] %vm58, %v38
  %72 = vst.msk [vmem:[#allocation2 + $0x68] sm:$0xff] %vm58, %v39
  %73 = vst.msk [vmem:[#allocation2 + $0x70] sm:$0xff] %vm58, %v40
  %74 = vst.msk [vmem:[#allocation2 + $0x78] sm:$0xff] %vm58, %v41
  %75 = vst.msk [vmem:[#allocation2 + $0x80] sm:$0xff] %vm58, %v42
  %76 = vst.msk [vmem:[#allocation2 + $0x88] sm:$0xff] %vm58, %v43
  %77 = vst.msk [vmem:[#allocation2 + $0x90] sm:$0xff] %vm58, %v44
  %78 = vst.msk [vmem:[#allocation2 + $0x98] sm:$0xff] %vm58, %v45
  %79 = vst.msk [vmem:[#allocation2 + $0xa0] sm:$0xff] %vm58, %v46
  %80 = vst.msk [vmem:[#allocation2 + $0xa8] sm:$0xff] %vm58, %v47
  %81 = vst.msk [vmem:[#allocation2 + $0xb0] sm:$0xff] %vm58, %v48
  %82 = vst.msk [vmem:[#allocation2 + $0xb8] sm:$0xff] %vm58, %v49
  %83 = vst.msk [vmem:[#allocation2 + $0xc0] sm:$0xff] %vm58, %v50
  %84 = vst.msk [vmem:[#allocation2 + $0xc8] sm:$0xff] %vm58, %v51
  %85 = vst.msk [vmem:[#allocation2 + $0xd0] sm:$0xff] %vm58, %v52
  %86 = vst.msk [vmem:[#allocation2 + $0xd8] sm:$0xff] %vm58, %v53
  %87 = vst.msk [vmem:[#allocation2 + $0xe0] sm:$0xff] %vm58, %v54
  %88 = vst.msk [vmem:[#allocation2 + $0xe8] sm:$0xff] %vm58, %v55
  %89 = vst.msk [vmem:[#allocation2 + $0xf0] sm:$0xff] %vm58, %v56
  %90 = vst.msk [vmem:[#allocation2 + $0xf8] sm:$0xff] %vm58, %v57
  %91 = vst.msk [vmem:[#allocation2 + $0x100] sm:$0xff] %vm58, 0.0
  %v92 = vld [vmem:[#allocation2] sm:$0xff]
  %v93 = vld [vmem:[#allocation2 + $0x8] sm:$0xff]
  %v94 = vld [vmem:[#allocation2 + $0x10] sm:$0xff]
  %v95 = vld [vmem:[#allocation2 + $0x18] sm:$0xff]
  %v96 = vld [vmem:[#allocation2 + $0x20] sm:$0xff]
  %v97 = vld [vmem:[#allocation2 + $0x28] sm:$0xff]
  %v98 = vld [vmem:[#allocation2 + $0x30] sm:$0xff]
  %v99 = vld [vmem:[#allocation2 + $0x38] sm:$0xff]
  %v100 = vld [vmem:[#allocation2 + $0x40] sm:$0xff]
  %v101 = vld [vmem:[#allocation2 + $0x48] sm:$0xff]
  %v102 = vld [vmem:[#allocation2 + $0x50] sm:$0xff]
  %v103 = vld [vmem:[#allocation2 + $0x58] sm:$0xff]
  %v104 = vld [vmem:[#allocation2 + $0x60] sm:$0xff]
  %v105 = vld [vmem:[#allocation2 + $0x68] sm:$0xff]
  %v106 = vld [vmem:[#allocation2 + $0x70] sm:$0xff]
  %v107 = vld [vmem:[#allocation2 + $0x78] sm:$0xff]
  %v108 = vld [vmem:[#allocation2 + $0x80] sm:$0xff]
  %v109 = vld [vmem:[#allocation2 + $0x88] sm:$0xff]
  %v110 = vld [vmem:[#allocation2 + $0x90] sm:$0xff]
  %v111 = vld [vmem:[#allocation2 + $0x98] sm:$0xff]
  %v112 = vld [vmem:[#allocation2 + $0xa0] sm:$0xff]
  %v113 = vld [vmem:[#allocation2 + $0xa8] sm:$0xff]
  %v114 = vld [vmem:[#allocation2 + $0xb0] sm:$0xff]
  %v115 = vld [vmem:[#allocation2 + $0xb8] sm:$0xff]
  %v116 = vld [vmem:[#allocation2 + $0xc0] sm:$0xff]
  %v117 = vld [vmem:[#allocation2 + $0xc8] sm:$0xff]
  %v118 = vld [vmem:[#allocation2 + $0xd0] sm:$0xff]
  %v119 = vld [vmem:[#allocation2 + $0xd8] sm:$0xff]
  %v120 = vld [vmem:[#allocation2 + $0xe0] sm:$0xff]
  %v121 = vld [vmem:[#allocation2 + $0xe8] sm:$0xff]
  %v122 = vld [vmem:[#allocation2 + $0xf0] sm:$0xff]
  %v123 = vld [vmem:[#allocation2 + $0xf8] sm:$0xff]
  %v124 = vld [vmem:[%s1] sm:$0xff]
  %v125 = vld [vmem:[%s1 + $0x8] sm:$0xff]
  %v126 = vld [vmem:[%s1 + $0x10] sm:$0xff]
  %v127 = vld [vmem:[%s1 + $0x18] sm:$0xff]
  %v128 = vld [vmem:[%s1 + $0x20] sm:$0xff]
  %v129 = vld [vmem:[%s1 + $0x28] sm:$0xff]
  %v130 = vld [vmem:[%s1 + $0x30] sm:$0xff]
  %v131 = vld [vmem:[%s1 + $0x38] sm:$0xff]
  %v132 = vld [vmem:[%s1 + $0x40] sm:$0xff]
  %v133 = vld [vmem:[%s1 + $0x48] sm:$0xff]
  %v134 = vld [vmem:[%s1 + $0x50] sm:$0xff]
  %v135 = vld [vmem:[%s1 + $0x58] sm:$0xff]
  %v136 = vld [vmem:[%s1 + $0x60] sm:$0xff]
  %v137 = vld [vmem:[%s1 + $0x68] sm:$0xff]
  %v138 = vld [vmem:[%s1 + $0x70] sm:$0xff]
  %v139 = vld [vmem:[%s1 + $0x78] sm:$0xff]
  %v140 = vld [vmem:[%s1 + $0x80] sm:$0xff]
  %v141 = vld [vmem:[%s1 + $0x88] sm:$0xff]
  %v142 = vld [vmem:[%s1 + $0x90] sm:$0xff]
  %v143 = vld [vmem:[%s1 + $0x98] sm:$0xff]
  %v144 = vld [vmem:[%s1 + $0xa0] sm:$0xff]
  %v145 = vld [vmem:[%s1 + $0xa8] sm:$0xff]
  %v146 = vld [vmem:[%s1 + $0xb0] sm:$0xff]
  %v147 = vld [vmem:[%s1 + $0xb8] sm:$0xff]
  %v148 = vld [vmem:[#allocation2 + $0x1] sm:$0xff]
  %v149 = vld [vmem:[#allocation2 + $0x9] sm:$0xff]
  %v150 = vld [vmem:[#allocation2 + $0x11] sm:$0xff]
  %v151 = vld [vmem:[#allocation2 + $0x19] sm:$0xff]
  %v152 = vld [vmem:[#allocation2 + $0x21] sm:$0xff]
  %v153 = vld [vmem:[#allocation2 + $0x29] sm:$0xff]
  %v154 = vld [vmem:[#allocation2 + $0x31] sm:$0xff]
  %v155 = vld [vmem:[#allocation2 + $0x39] sm:$0xff]
  %v156 = vld [vmem:[#allocation2 + $0x41] sm:$0xff]
  %v157 = vld [vmem:[#allocation2 + $0x49] sm:$0xff]
  %v158 = vld [vmem:[#allocation2 + $0x51] sm:$0xff]
  %v159 = vld [vmem:[#allocation2 + $0x59] sm:$0xff]
  %v160 = vld [vmem:[#allocation2 + $0x61] sm:$0xff]
  %v161 = vld [vmem:[#allocation2 + $0x69] sm:$0xff]
  %v162 = vld [vmem:[#allocation2 + $0x71] sm:$0xff]
  %v163 = vld [vmem:[#allocation2 + $0x79] sm:$0xff]
  %v164 = vld [vmem:[#allocation2 + $0x81] sm:$0xff]
  %v165 = vld [vmem:[#allocation2 + $0x89] sm:$0xff]
  %v166 = vld [vmem:[#allocation2 + $0x91] sm:$0xff]
  %v167 = vld [vmem:[#allocation2 + $0x99] sm:$0xff]
  %v168 = vld [vmem:[#allocation2 + $0xa1] sm:$0xff]
  %v169 = vld [vmem:[#allocation2 + $0xa9] sm:$0xff]
  %v170 = vld [vmem:[#allocation2 + $0xb1] sm:$0xff]
  %v171 = vld [vmem:[#allocation2 + $0xb9] sm:$0xff]
  %v172 = vld [vmem:[#allocation2 + $0xc1] sm:$0xff]
  %v173 = vld [vmem:[#allocation2 + $0xc9] sm:$0xff]
  %v174 = vld [vmem:[#allocation2 + $0xd1] sm:$0xff]
  %v175 = vld [vmem:[#allocation2 + $0xd9] sm:$0xff]
  %v176 = vld [vmem:[#allocation2 + $0xe1] sm:$0xff]
  %v177 = vld [vmem:[#allocation2 + $0xe9] sm:$0xff]
  %v178 = vld [vmem:[#allocation2 + $0xf1] sm:$0xff]
  %v179 = vld [vmem:[#allocation2 + $0xf9] sm:$0xff]
  %s180 = scalar_lea.vmem %s1, 192
  %v181 = vld [vmem:[%s180] sm:$0xff]
  %v182 = vld [vmem:[%s180 + $0x8] sm:$0xff]
  %v183 = vld [vmem:[%s180 + $0x10] sm:$0xff]
  %v184 = vld [vmem:[%s180 + $0x18] sm:$0xff]
  %v185 = vld [vmem:[%s180 + $0x20] sm:$0xff]
  %v186 = vld [vmem:[%s180 + $0x28] sm:$0xff]
  %v187 = vld [vmem:[%s180 + $0x30] sm:$0xff]
  %v188 = vld [vmem:[%s180 + $0x38] sm:$0xff]
  %v189 = vld [vmem:[%s180 + $0x40] sm:$0xff]
  %v190 = vld [vmem:[%s180 + $0x48] sm:$0xff]
  %v191 = vld [vmem:[%s180 + $0x50] sm:$0xff]
  %v192 = vld [vmem:[%s180 + $0x58] sm:$0xff]
  %v193 = vld [vmem:[%s180 + $0x60] sm:$0xff]
  %v194 = vld [vmem:[%s180 + $0x68] sm:$0xff]
  %v195 = vld [vmem:[%s180 + $0x70] sm:$0xff]
  %v196 = vld [vmem:[%s180 + $0x78] sm:$0xff]
  %v197 = vld [vmem:[%s180 + $0x80] sm:$0xff]
  %v198 = vld [vmem:[%s180 + $0x88] sm:$0xff]
  %v199 = vld [vmem:[%s180 + $0x90] sm:$0xff]
  %v200 = vld [vmem:[%s180 + $0x98] sm:$0xff]
  %v201 = vld [vmem:[%s180 + $0xa0] sm:$0xff]
  %v202 = vld [vmem:[%s180 + $0xa8] sm:$0xff]
  %v203 = vld [vmem:[%s180 + $0xb0] sm:$0xff]
  %v204 = vld [vmem:[%s180 + $0xb8] sm:$0xff]
  %v206 = vsel %vm58, %v148, 0
  %v209 = vsel %vm58, %v149, 0
  %v212 = vsel %vm58, %v150, 0
  %v215 = vsel %vm58, %v151, 0
  %v218 = vsel %vm58, %v152, 0
  %v221 = vsel %vm58, %v153, 0
  %v224 = vsel %vm58, %v154, 0
  %v227 = vsel %vm58, %v155, 0
  %v230 = vsel %vm58, %v156, 0
  %v233 = vsel %vm58, %v157, 0
  %v236 = vsel %vm58, %v158, 0
  %v239 = vsel %vm58, %v159, 0
  %v242 = vsel %vm58, %v160, 0
  %v245 = vsel %vm58, %v161, 0
  %v248 = vsel %vm58, %v162, 0
  %v251 = vsel %vm58, %v163, 0
  %v254 = vsel %vm58, %v164, 0
  %v257 = vsel %vm58, %v165, 0
  %v260 = vsel %vm58, %v166, 0
  %v263 = vsel %vm58, %v167, 0
  %v266 = vsel %vm58, %v168, 0
  %v269 = vsel %vm58, %v169, 0
  %v272 = vsel %vm58, %v170, 0
  %v275 = vsel %vm58, %v171, 0
  %v278 = vsel %vm58, %v172, 0
  %v281 = vsel %vm58, %v173, 0
  %v284 = vsel %vm58, %v174, 0
  %v287 = vsel %vm58, %v175, 0
  %v290 = vsel %vm58, %v176, 0
  %v293 = vsel %vm58, %v177, 0
  %v296 = vsel %vm58, %v178, 0
  %v299 = vsel %vm58, %v179, 0
  %301 = vmatprep.subr.mxu0 %v182
  %302 = vmatpush1.msra.mxu0 %v181
  %303 = vmatprep.subr.mxu0 %v184
  %304 = vmatpush1.msra.mxu0 %v183
  %305 = vmatprep.subr.mxu0 %v186
  %306 = vmatpush1.msra.mxu0 %v185
  %307 = vmatprep.subr.mxu0 %v188
  %308 = vmatpush1.msra.mxu0 %v187
  %309 = vmatprep.subr.mxu0 %v190
  %310 = vmatpush1.msra.mxu0 %v189
  %311 = vmatprep.subr.mxu0 %v192
  %312 = vmatpush1.msra.mxu0 %v191
  %313 = vmatprep.subr.mxu0 %v194
  %314 = vmatpush1.msra.mxu0 %v193
  %315 = vmatprep.subr.mxu0 %v196
  %316 = vmatpush1.msra.mxu0 %v195
  %317 = vmatprep.subr.mxu0 %v198
  %318 = vmatpush1.msra.mxu0 %v197
  %319 = vmatprep.subr.mxu0 %v200
  %320 = vmatpush1.msra.mxu0 %v199
  %321 = vmatprep.subr.mxu0 %v202
  %322 = vmatpush1.msra.mxu0 %v201
  %323 = vmatprep.subr.mxu0 %v204
  %324 = vmatpush1.msra.mxu0 %v203
  %325 = vmatprep.subr.mxu0 0.0
  %326 = vmatpush1.msra.mxu0 0.0
  %327 = vmatprep.subr.mxu0 0.0
  %328 = vmatpush1.msra.mxu0 0.0
  %329 = vmatprep.subr.mxu0 0.0
  %330 = vmatpush1.msra.mxu0 0.0
  %331 = vmatprep.subr.mxu0 0.0
  %332 = vmatpush1.msra.mxu0 0.0
  %333 = vmatprep.subr.mxu0 0.0
  %334 = vmatpush1.msra.mxu0 0.0
  %335 = vmatprep.subr.mxu0 0.0
  %336 = vmatpush1.msra.mxu0 0.0
  %337 = vmatprep.subr.mxu0 0.0
  %338 = vmatpush1.msra.mxu0 0.0
  %339 = vmatprep.subr.mxu0 0.0
  %340 = vmatpush1.msra.mxu0 0.0
  %341 = vmatprep.subr.mxu0 0.0
  %342 = vmatpush1.msra.mxu0 0.0
  %343 = vmatprep.subr.mxu0 0.0
  %344 = vmatpush1.msra.mxu0 0.0
  %345 = vmatprep.subr.mxu0 0.0
  %346 = vmatpush1.msra.mxu0 0.0
  %347 = vmatprep.subr.mxu0 0.0
  %348 = vmatpush1.msra.mxu0 0.0
  %349 = vmatprep.subr.mxu0 0.0
  %350 = vmatpush1.msra.mxu0 0.0
  %351 = vmatprep.subr.mxu0 0.0
  %352 = vmatpush1.msra.mxu0 0.0
  %353 = vmatprep.subr.mxu0 0.0
  %354 = vmatpush1.msra.mxu0 0.0
  %355 = vmatprep.subr.mxu0 0.0
  %356 = vmatpush1.msra.mxu0 0.0
  %357 = vmatprep.subr.mxu0 0.0
  %358 = vmatpush1.msra.mxu0 0.0
  %359 = vmatprep.subr.mxu0 0.0
  %360 = vmatpush1.msra.mxu0 0.0
  %361 = vmatprep.subr.mxu0 0.0
  %362 = vmatpush1.msra.mxu0 0.0
  %363 = vmatprep.subr.mxu0 0.0
  %364 = vmatpush1.msra.mxu0 0.0
  %365 = vmatprep.mubr.f32.mxu0 0.0
  %366 = vmatmul.mubr.f32.gmra.mrb[0].mxu0 %v206
  %v367 = vpop.f32.mrb[0].mxu0
  %v368 = vadd.f32 0.0, %v367
  %v369 = vpop.f32.mrb[0].mxu0
  %v370 = vadd.f32 0.0, %v369
  %371 = vmatprep.mubr.f32.mxu0 0.0
  %372 = vmatmul.mubr.f32.gmra.mrb[0].mxu0 %v209
  %v373 = vpop.f32.mrb[0].mxu0
  %v374 = vadd.f32 0.0, %v373
  %v375 = vpop.f32.mrb[0].mxu0
  %v376 = vadd.f32 0.0, %v375
  %377 = vmatprep.mubr.f32.mxu0 0.0
  %378 = vmatmul.mubr.f32.gmra.mrb[0].mxu0 %v212
  %v379 = vpop.f32.mrb[0].mxu0
  %v380 = vadd.f32 0.0, %v379
  %v381 = vpop.f32.mrb[0].mxu0
  %v382 = vadd.f32 0.0, %v381
  %383 = vmatprep.mubr.f32.mxu0 0.0
  %384 = vmatmul.mubr.f32.gmra.mrb[0].mxu0 %v215
  %v385 = vpop.f32.mrb[0].mxu0
  %v386 = vadd.f32 0.0, %v385
  %v387 = vpop.f32.mrb[0].mxu0
  %v388 = vadd.f32 0.0, %v387
  %389 = vmatprep.mubr.f32.mxu0 0.0
  %390 = vmatmul.mubr.f32.gmra.mrb[0].mxu0 %v218
  %v391 = vpop.f32.mrb[0].mxu0
  %v392 = vadd.f32 0.0, %v391
  %v393 = vpop.f32.mrb[0].mxu0
  %v394 = vadd.f32 0.0, %v393
  %395 = vmatprep.mubr.f32.mxu0 0.0
  %396 = vmatmul.mubr.f32.gmra.mrb[0].mxu0 %v221
  %v397 = vpop.f32.mrb[0].mxu0
  %v398 = vadd.f32 0.0, %v397
  %v399 = vpop.f32.mrb[0].mxu0
  %v400 = vadd.f32 0.0, %v399
  %401 = vmatprep.mubr.f32.mxu0 0.0
  %402 = vmatmul.mubr.f32.gmra.mrb[0].mxu0 %v224
  %v403 = vpop.f32.mrb[0].mxu0
  %v404 = vadd.f32 0.0, %v403
  %v405 = vpop.f32.mrb[0].mxu0
  %v406 = vadd.f32 0.0, %v405
  %407 = vmatprep.mubr.f32.mxu0 0.0
  %408 = vmatmul.mubr.f32.gmra.mrb[0].mxu0 %v227
  %v409 = vpop.f32.mrb[0].mxu0
  %v410 = vadd.f32 0.0, %v409
  %v411 = vpop.f32.mrb[0].mxu0
  %v412 = vadd.f32 0.0, %v411
  %413 = vmatprep.mubr.f32.mxu0 0.0
  %414 = vmatmul.mubr.f32.gmra.mrb[0].mxu0 %v230
  %v415 = vpop.f32.mrb[0].mxu0
  %v416 = vadd.f32 0.0, %v415
  %v417 = vpop.f32.mrb[0].mxu0
  %v418 = vadd.f32 0.0, %v417
  %419 = vmatprep.mubr.f32.mxu0 0.0
  %420 = vmatmul.mubr.f32.gmra.mrb[0].mxu0 %v233
  %v421 = vpop.f32.mrb[0].mxu0
  %v422 = vadd.f32 0.0, %v421
  %v423 = vpop.f32.mrb[0].mxu0
  %v424 = vadd.f32 0.0, %v423
  %425 = vmatprep.mubr.f32.mxu0 0.0
  %426 = vmatmul.mubr.f32.gmra.mrb[0].mxu0 %v236
  %v427 = vpop.f32.mrb[0].mxu0
  %v428 = vadd.f32 0.0, %v427
  %v429 = vpop.f32.mrb[0].mxu0
  %v430 = vadd.f32 0.0, %v429
  %431 = vmatprep.mubr.f32.mxu0 0.0
  %432 = vmatmul.mubr.f32.gmra.mrb[0].mxu0 %v239
  %v433 = vpop.f32.mrb[0].mxu0
  %v434 = vadd.f32 0.0, %v433
  %v435 = vpop.f32.mrb[0].mxu0
  %v436 = vadd.f32 0.0, %v435
  %437 = vmatprep.mubr.f32.mxu0 0.0
  %438 = vmatmul.mubr.f32.gmra.mrb[0].mxu0 %v242
  %v439 = vpop.f32.mrb[0].mxu0
  %v440 = vadd.f32 0.0, %v439
  %v441 = vpop.f32.mrb[0].mxu0
  %v442 = vadd.f32 0.0, %v441
  %443 = vmatprep.mubr.f32.mxu0 0.0
  %444 = vmatmul.mubr.f32.gmra.mrb[0].mxu0 %v245
  %v445 = vpop.f32.mrb[0].mxu0
  %v446 = vadd.f32 0.0, %v445
  %v447 = vpop.f32.mrb[0].mxu0
  %v448 = vadd.f32 0.0, %v447
  %449 = vmatprep.mubr.f32.mxu0 0.0
  %450 = vmatmul.mubr.f32.gmra.mrb[0].mxu0 %v248
  %v451 = vpop.f32.mrb[0].mxu0
  %v452 = vadd.f32 0.0, %v451
  %v453 = vpop.f32.mrb[0].mxu0
  %v454 = vadd.f32 0.0, %v453
  %455 = vmatprep.mubr.f32.mxu0 0.0
  %456 = vmatmul.mubr.f32.gmra.mrb[0].mxu0 %v251
  %v457 = vpop.f32.mrb[0].mxu0
  %v458 = vadd.f32 0.0, %v457
  %v459 = vpop.f32.mrb[0].mxu0
  %v460 = vadd.f32 0.0, %v459
  %461 = vmatprep.mubr.f32.mxu0 0.0
  %462 = vmatmul.mubr.f32.gmra.mrb[0].mxu0 %v254
  %v463 = vpop.f32.mrb[0].mxu0
  %v464 = vadd.f32 0.0, %v463
  %v465 = vpop.f32.mrb[0].mxu0
  %v466 = vadd.f32 0.0, %v465
  %467 = vmatprep.mubr.f32.mxu0 0.0
  %468 = vmatmul.mubr.f32.gmra.mrb[0].mxu0 %v257
  %v469 = vpop.f32.mrb[0].mxu0
  %v470 = vadd.f32 0.0, %v469
  %v471 = vpop.f32.mrb[0].mxu0
  %v472 = vadd.f32 0.0, %v471
  %473 = vmatprep.mubr.f32.mxu0 0.0
  %474 = vmatmul.mubr.f32.gmra.mrb[0].mxu0 %v260
  %v475 = vpop.f32.mrb[0].mxu0
  %v476 = vadd.f32 0.0, %v475
  %v477 = vpop.f32.mrb[0].mxu0
  %v478 = vadd.f32 0.0, %v477
  %479 = vmatprep.mubr.f32.mxu0 0.0
  %480 = vmatmul.mubr.f32.gmra.mrb[0].mxu0 %v263
  %v481 = vpop.f32.mrb[0].mxu0
  %v482 = vadd.f32 0.0, %v481
  %v483 = vpop.f32.mrb[0].mxu0
  %v484 = vadd.f32 0.0, %v483
  %485 = vmatprep.mubr.f32.mxu0 0.0
  %486 = vmatmul.mubr.f32.gmra.mrb[0].mxu0 %v266
  %v487 = vpop.f32.mrb[0].mxu0
  %v488 = vadd.f32 0.0, %v487
  %v489 = vpop.f32.mrb[0].mxu0
  %v490 = vadd.f32 0.0, %v489
  %491 = vmatprep.mubr.f32.mxu0 0.0
  %492 = vmatmul.mubr.f32.gmra.mrb[0].mxu0 %v269
  %v493 = vpop.f32.mrb[0].mxu0
  %v494 = vadd.f32 0.0, %v493
  %v495 = vpop.f32.mrb[0].mxu0
  %v496 = vadd.f32 0.0, %v495
  %497 = vmatprep.mubr.f32.mxu0 0.0
  %498 = vmatmul.mubr.f32.gmra.mrb[0].mxu0 %v272
  %v499 = vpop.f32.mrb[0].mxu0
  %v500 = vadd.f32 0.0, %v499
  %v501 = vpop.f32.mrb[0].mxu0
  %v502 = vadd.f32 0.0, %v501
  %503 = vmatprep.mubr.f32.mxu0 0.0
  %504 = vmatmul.mubr.f32.gmra.mrb[0].mxu0 %v275
  %v505 = vpop.f32.mrb[0].mxu0
  %v506 = vadd.f32 0.0, %v505
  %v507 = vpop.f32.mrb[0].mxu0
  %v508 = vadd.f32 0.0, %v507
  %509 = vmatprep.mubr.f32.mxu0 0.0
  %510 = vmatmul.mubr.f32.gmra.mrb[0].mxu0 %v278
  %v511 = vpop.f32.mrb[0].mxu0
  %v512 = vadd.f32 0.0, %v511
  %v513 = vpop.f32.mrb[0].mxu0
  %v514 = vadd.f32 0.0, %v513
  %515 = vmatprep.mubr.f32.mxu0 0.0
  %516 = vmatmul.mubr.f32.gmra.mrb[0].mxu0 %v281
  %v517 = vpop.f32.mrb[0].mxu0
  %v518 = vadd.f32 0.0, %v517
  %v519 = vpop.f32.mrb[0].mxu0
  %v520 = vadd.f32 0.0, %v519
  %521 = vmatprep.mubr.f32.mxu0 0.0
  %522 = vmatmul.mubr.f32.gmra.mrb[0].mxu0 %v284
  %v523 = vpop.f32.mrb[0].mxu0
  %v524 = vadd.f32 0.0, %v523
  %v525 = vpop.f32.mrb[0].mxu0
  %v526 = vadd.f32 0.0, %v525
  %527 = vmatprep.mubr.f32.mxu0 0.0
  %528 = vmatmul.mubr.f32.gmra.mrb[0].mxu0 %v287
  %v529 = vpop.f32.mrb[0].mxu0
  %v530 = vadd.f32 0.0, %v529
  %v531 = vpop.f32.mrb[0].mxu0
  %v532 = vadd.f32 0.0, %v531
  %533 = vmatprep.mubr.f32.mxu0 0.0
  %534 = vmatmul.mubr.f32.gmra.mrb[0].mxu0 %v290
  %v535 = vpop.f32.mrb[0].mxu0
  %v536 = vadd.f32 0.0, %v535
  %v537 = vpop.f32.mrb[0].mxu0
  %v538 = vadd.f32 0.0, %v537
  %539 = vmatprep.mubr.f32.mxu0 0.0
  %540 = vmatmul.mubr.f32.gmra.mrb[0].mxu0 %v293
  %v541 = vpop.f32.mrb[0].mxu0
  %v542 = vadd.f32 0.0, %v541
  %v543 = vpop.f32.mrb[0].mxu0
  %v544 = vadd.f32 0.0, %v543
  %545 = vmatprep.mubr.f32.mxu0 0.0
  %546 = vmatmul.mubr.f32.gmra.mrb[0].mxu0 %v296
  %v547 = vpop.f32.mrb[0].mxu0
  %v548 = vadd.f32 0.0, %v547
  %v549 = vpop.f32.mrb[0].mxu0
  %v550 = vadd.f32 0.0, %v549
  %551 = vmatprep.mubr.f32.mxu0 0.0
  %552 = vmatmul.mubr.f32.gmra.mrb[0].mxu0 %v299
  %v553 = vpop.f32.mrb[0].mxu0
  %v554 = vadd.f32 0.0, %v553
  %v555 = vpop.f32.mrb[0].mxu0
  %v556 = vadd.f32 0.0, %v555
  %557 = vdwg.mxu0
  %v559 = vsel %vm58, %v92, 0
  %v562 = vsel %vm58, %v93, 0
  %v565 = vsel %vm58, %v94, 0
  %v568 = vsel %vm58, %v95, 0
  %v571 = vsel %vm58, %v96, 0
  %v574 = vsel %vm58, %v97, 0
  %v577 = vsel %vm58, %v98, 0
  %v580 = vsel %vm58, %v99, 0
  %v583 = vsel %vm58, %v100, 0
  %v586 = vsel %vm58, %v101, 0
  %v589 = vsel %vm58, %v102, 0
  %v592 = vsel %vm58, %v103, 0
  %v595 = vsel %vm58, %v104, 0
  %v598 = vsel %vm58, %v105, 0
  %v601 = vsel %vm58, %v106, 0
  %v604 = vsel %vm58, %v107, 0
  %v607 = vsel %vm58, %v108, 0
  %v610 = vsel %vm58, %v109, 0
  %v613 = vsel %vm58, %v110, 0
  %v616 = vsel %vm58, %v111, 0
  %v619 = vsel %vm58, %v112, 0
  %v622 = vsel %vm58, %v113, 0
  %v625 = vsel %vm58, %v114, 0
  %v628 = vsel %vm58, %v115, 0
  %v631 = vsel %vm58, %v116, 0
  %v634 = vsel %vm58, %v117, 0
  %v637 = vsel %vm58, %v118, 0
  %v640 = vsel %vm58, %v119, 0
  %v643 = vsel %vm58, %v120, 0
  %v646 = vsel %vm58, %v121, 0
  %v649 = vsel %vm58, %v122, 0
  %v652 = vsel %vm58, %v123, 0
  %654 = vmatprep.subr.mxu0 %v125
  %655 = vmatpush1.msra.mxu0 %v124
  %656 = vmatprep.subr.mxu0 %v127
  %657 = vmatpush1.msra.mxu0 %v126
  %658 = vmatprep.subr.mxu0 %v129
  %659 = vmatpush1.msra.mxu0 %v128
  %660 = vmatprep.subr.mxu0 %v131
  %661 = vmatpush1.msra.mxu0 %v130
  %662 = vmatprep.subr.mxu0 %v133
  %663 = vmatpush1.msra.mxu0 %v132
  %664 = vmatprep.subr.mxu0 %v135
  %665 = vmatpush1.msra.mxu0 %v134
  %666 = vmatprep.subr.mxu0 %v137
  %667 = vmatpush1.msra.mxu0 %v136
  %668 = vmatprep.subr.mxu0 %v139
  %669 = vmatpush1.msra.mxu0 %v138
  %670 = vmatprep.subr.mxu0 %v141
  %671 = vmatpush1.msra.mxu0 %v140
  %672 = vmatprep.subr.mxu0 %v143
  %673 = vmatpush1.msra.mxu0 %v142
  %674 = vmatprep.subr.mxu0 %v145
  %675 = vmatpush1.msra.mxu0 %v144
  %676 = vmatprep.subr.mxu0 %v147
  %677 = vmatpush1.msra.mxu0 %v146
  %678 = vmatprep.subr.mxu0 0.0
  %679 = vmatpush1.msra.mxu0 0.0
  %680 = vmatprep.subr.mxu0 0.0
  %681 = vmatpush1.msra.mxu0 0.0
  %682 = vmatprep.subr.mxu0 0.0
  %683 = vmatpush1.msra.mxu0 0.0
  %684 = vmatprep.subr.mxu0 0.0
  %685 = vmatpush1.msra.mxu0 0.0
  %686 = vmatprep.subr.mxu0 0.0
  %687 = vmatpush1.msra.mxu0 0.0
  %688 = vmatprep.subr.mxu0 0.0
  %689 = vmatpush1.msra.mxu0 0.0
  %690 = vmatprep.subr.mxu0 0.0
  %691 = vmatpush1.msra.mxu0 0.0
  %692 = vmatprep.subr.mxu0 0.0
  %693 = vmatpush1.msra.mxu0 0.0
  %694 = vmatprep.subr.mxu0 0.0
  %695 = vmatpush1.msra.mxu0 0.0
  %696 = vmatprep.subr.mxu0 0.0
  %697 = vmatpush1.msra.mxu0 0.0
  %698 = vmatprep.subr.mxu0 0.0
  %699 = vmatpush1.msra.mxu0 0.0
  %700 = vmatprep.subr.mxu0 0.0
  %701 = vmatpush1.msra.mxu0 0.0
  %702 = vmatprep.subr.mxu0 0.0
  %703 = vmatpush1.msra.mxu0 0.0
  %704 = vmatprep.subr.mxu0 0.0
  %705 = vmatpush1.msra.mxu0 0.0
  %706 = vmatprep.subr.mxu0 0.0
  %707 = vmatpush1.msra.mxu0 0.0
  %708 = vmatprep.subr.mxu0 0.0
  %709 = vmatpush1.msra.mxu0 0.0
  %710 = vmatprep.subr.mxu0 0.0
  %711 = vmatpush1.msra.mxu0 0.0
  %712 = vmatprep.subr.mxu0 0.0
  %713 = vmatpush1.msra.mxu0 0.0
  %714 = vmatprep.subr.mxu0 0.0
  %715 = vmatpush1.msra.mxu0 0.0
  %716 = vmatprep.subr.mxu0 0.0
  %717 = vmatpush1.msra.mxu0 0.0
  %718 = vmatprep.mubr.f32.mxu0 0.0
  %719 = vmatmul.mubr.f32.gmra.mrb[0].mxu0 %v559
  %v720 = vpop.f32.mrb[0].mxu0
  %v721 = vadd.f32 %v368, %v720
  %v722 = vpop.f32.mrb[0].mxu0
  %v723 = vadd.f32 %v370, %v722
  %724 = vmatprep.mubr.f32.mxu0 0.0
  %725 = vmatmul.mubr.f32.gmra.mrb[0].mxu0 %v562
  %v726 = vpop.f32.mrb[0].mxu0
  %v727 = vadd.f32 %v374, %v726
  %v728 = vpop.f32.mrb[0].mxu0
  %v729 = vadd.f32 %v376, %v728
  %730 = vmatprep.mubr.f32.mxu0 0.0
  %731 = vmatmul.mubr.f32.gmra.mrb[0].mxu0 %v565
  %v732 = vpop.f32.mrb[0].mxu0
  %v733 = vadd.f32 %v380, %v732
  %v734 = vpop.f32.mrb[0].mxu0
  %v735 = vadd.f32 %v382, %v734
  %736 = vmatprep.mubr.f32.mxu0 0.0
  %737 = vmatmul.mubr.f32.gmra.mrb[0].mxu0 %v568
  %v738 = vpop.f32.mrb[0].mxu0
  %v739 = vadd.f32 %v386, %v738
  %v740 = vpop.f32.mrb[0].mxu0
  %v741 = vadd.f32 %v388, %v740
  %742 = vmatprep.mubr.f32.mxu0 0.0
  %743 = vmatmul.mubr.f32.gmra.mrb[0].mxu0 %v571
  %v744 = vpop.f32.mrb[0].mxu0
  %v745 = vadd.f32 %v392, %v744
  %v746 = vpop.f32.mrb[0].mxu0
  %v747 = vadd.f32 %v394, %v746
  %748 = vmatprep.mubr.f32.mxu0 0.0
  %749 = vmatmul.mubr.f32.gmra.mrb[0].mxu0 %v574
  %v750 = vpop.f32.mrb[0].mxu0
  %v751 = vadd.f32 %v398, %v750
  %v752 = vpop.f32.mrb[0].mxu0
  %v753 = vadd.f32 %v400, %v752
  %754 = vmatprep.mubr.f32.mxu0 0.0
  %755 = vmatmul.mubr.f32.gmra.mrb[0].mxu0 %v577
  %v756 = vpop.f32.mrb[0].mxu0
  %v757 = vadd.f32 %v404, %v756
  %v758 = vpop.f32.mrb[0].mxu0
  %v759 = vadd.f32 %v406, %v758
  %760 = vmatprep.mubr.f32.mxu0 0.0
  %761 = vmatmul.mubr.f32.gmra.mrb[0].mxu0 %v580
  %v762 = vpop.f32.mrb[0].mxu0
  %v763 = vadd.f32 %v410, %v762
  %v764 = vpop.f32.mrb[0].mxu0
  %v765 = vadd.f32 %v412, %v764
  %766 = vmatprep.mubr.f32.mxu0 0.0
  %767 = vmatmul.mubr.f32.gmra.mrb[0].mxu0 %v583
  %v768 = vpop.f32.mrb[0].mxu0
  %v769 = vadd.f32 %v416, %v768
  %v770 = vpop.f32.mrb[0].mxu0
  %v771 = vadd.f32 %v418, %v770
  %772 = vmatprep.mubr.f32.mxu0 0.0
  %773 = vmatmul.mubr.f32.gmra.mrb[0].mxu0 %v586
  %v774 = vpop.f32.mrb[0].mxu0
  %v775 = vadd.f32 %v422, %v774
  %v776 = vpop.f32.mrb[0].mxu0
  %v777 = vadd.f32 %v424, %v776
  %778 = vmatprep.mubr.f32.mxu0 0.0
  %779 = vmatmul.mubr.f32.gmra.mrb[0].mxu0 %v589
  %v780 = vpop.f32.mrb[0].mxu0
  %v781 = vadd.f32 %v428, %v780
  %v782 = vpop.f32.mrb[0].mxu0
  %v783 = vadd.f32 %v430, %v782
  %784 = vmatprep.mubr.f32.mxu0 0.0
  %785 = vmatmul.mubr.f32.gmra.mrb[0].mxu0 %v592
  %v786 = vpop.f32.mrb[0].mxu0
  %v787 = vadd.f32 %v434, %v786
  %v788 = vpop.f32.mrb[0].mxu0
  %v789 = vadd.f32 %v436, %v788
  %790 = vmatprep.mubr.f32.mxu0 0.0
  %791 = vmatmul.mubr.f32.gmra.mrb[0].mxu0 %v595
  %v792 = vpop.f32.mrb[0].mxu0
  %v793 = vadd.f32 %v440, %v792
  %v794 = vpop.f32.mrb[0].mxu0
  %v795 = vadd.f32 %v442, %v794
  %796 = vmatprep.mubr.f32.mxu0 0.0
  %797 = vmatmul.mubr.f32.gmra.mrb[0].mxu0 %v598
  %v798 = vpop.f32.mrb[0].mxu0
  %v799 = vadd.f32 %v446, %v798
  %v800 = vpop.f32.mrb[0].mxu0
  %v801 = vadd.f32 %v448, %v800
  %802 = vmatprep.mubr.f32.mxu0 0.0
  %803 = vmatmul.mubr.f32.gmra.mrb[0].mxu0 %v601
  %v804 = vpop.f32.mrb[0].mxu0
  %v805 = vadd.f32 %v452, %v804
  %v806 = vpop.f32.mrb[0].mxu0
  %v807 = vadd.f32 %v454, %v806
  %808 = vmatprep.mubr.f32.mxu0 0.0
  %809 = vmatmul.mubr.f32.gmra.mrb[0].mxu0 %v604
  %v810 = vpop.f32.mrb[0].mxu0
  %v811 = vadd.f32 %v458, %v810
  %v812 = vpop.f32.mrb[0].mxu0
  %v813 = vadd.f32 %v460, %v812
  %814 = vmatprep.mubr.f32.mxu0 0.0
  %815 = vmatmul.mubr.f32.gmra.mrb[0].mxu0 %v607
  %v816 = vpop.f32.mrb[0].mxu0
  %v817 = vadd.f32 %v464, %v816
  %v818 = vpop.f32.mrb[0].mxu0
  %v819 = vadd.f32 %v466, %v818
  %820 = vmatprep.mubr.f32.mxu0 0.0
  %821 = vmatmul.mubr.f32.gmra.mrb[0].mxu0 %v610
  %v822 = vpop.f32.mrb[0].mxu0
  %v823 = vadd.f32 %v470, %v822
  %v824 = vpop.f32.mrb[0].mxu0
  %v825 = vadd.f32 %v472, %v824
  %826 = vmatprep.mubr.f32.mxu0 0.0
  %827 = vmatmul.mubr.f32.gmra.mrb[0].mxu0 %v613
  %v828 = vpop.f32.mrb[0].mxu0
  %v829 = vadd.f32 %v476, %v828
  %v830 = vpop.f32.mrb[0].mxu0
  %v831 = vadd.f32 %v478, %v830
  %832 = vmatprep.mubr.f32.mxu0 0.0
  %833 = vmatmul.mubr.f32.gmra.mrb[0].mxu0 %v616
  %v834 = vpop.f32.mrb[0].mxu0
  %v835 = vadd.f32 %v482, %v834
  %v836 = vpop.f32.mrb[0].mxu0
  %v837 = vadd.f32 %v484, %v836
  %838 = vmatprep.mubr.f32.mxu0 0.0
  %839 = vmatmul.mubr.f32.gmra.mrb[0].mxu0 %v619
  %v840 = vpop.f32.mrb[0].mxu0
  %v841 = vadd.f32 %v488, %v840
  %v842 = vpop.f32.mrb[0].mxu0
  %v843 = vadd.f32 %v490, %v842
  %844 = vmatprep.mubr.f32.mxu0 0.0
  %845 = vmatmul.mubr.f32.gmra.mrb[0].mxu0 %v622
  %v846 = vpop.f32.mrb[0].mxu0
  %v847 = vadd.f32 %v494, %v846
  %v848 = vpop.f32.mrb[0].mxu0
  %v849 = vadd.f32 %v496, %v848
  %850 = vmatprep.mubr.f32.mxu0 0.0
  %851 = vmatmul.mubr.f32.gmra.mrb[0].mxu0 %v625
  %v852 = vpop.f32.mrb[0].mxu0
  %v853 = vadd.f32 %v500, %v852
  %v854 = vpop.f32.mrb[0].mxu0
  %v855 = vadd.f32 %v502, %v854
  %856 = vmatprep.mubr.f32.mxu0 0.0
  %857 = vmatmul.mubr.f32.gmra.mrb[0].mxu0 %v628
  %v858 = vpop.f32.mrb[0].mxu0
  %v859 = vadd.f32 %v506, %v858
  %v860 = vpop.f32.mrb[0].mxu0
  %v861 = vadd.f32 %v508, %v860
  %862 = vmatprep.mubr.f32.mxu0 0.0
  %863 = vmatmul.mubr.f32.gmra.mrb[0].mxu0 %v631
  %v864 = vpop.f32.mrb[0].mxu0
  %v865 = vadd.f32 %v512, %v864
  %v866 = vpop.f32.mrb[0].mxu0
  %v867 = vadd.f32 %v514, %v866
  %868 = vmatprep.mubr.f32.mxu0 0.0
  %869 = vmatmul.mubr.f32.gmra.mrb[0].mxu0 %v634
  %v870 = vpop.f32.mrb[0].mxu0
  %v871 = vadd.f32 %v518, %v870
  %v872 = vpop.f32.mrb[0].mxu0
  %v873 = vadd.f32 %v520, %v872
  %874 = vmatprep.mubr.f32.mxu0 0.0
  %875 = vmatmul.mubr.f32.gmra.mrb[0].mxu0 %v637
  %v876 = vpop.f32.mrb[0].mxu0
  %v877 = vadd.f32 %v524, %v876
  %v878 = vpop.f32.mrb[0].mxu0
  %v879 = vadd.f32 %v526, %v878
  %880 = vmatprep.mubr.f32.mxu0 0.0
  %881 = vmatmul.mubr.f32.gmra.mrb[0].mxu0 %v640
  %v882 = vpop.f32.mrb[0].mxu0
  %v883 = vadd.f32 %v530, %v882
  %v884 = vpop.f32.mrb[0].mxu0
  %v885 = vadd.f32 %v532, %v884
  %886 = vmatprep.mubr.f32.mxu0 0.0
  %887 = vmatmul.mubr.f32.gmra.mrb[0].mxu0 %v643
  %v888 = vpop.f32.mrb[0].mxu0
  %v889 = vadd.f32 %v536, %v888
  %v890 = vpop.f32.mrb[0].mxu0
  %v891 = vadd.f32 %v538, %v890
  %892 = vmatprep.mubr.f32.mxu0 0.0
  %893 = vmatmul.mubr.f32.gmra.mrb[0].mxu0 %v646
  %v894 = vpop.f32.mrb[0].mxu0
  %v895 = vadd.f32 %v542, %v894
  %v896 = vpop.f32.mrb[0].mxu0
  %v897 = vadd.f32 %v544, %v896
  %898 = vmatprep.mubr.f32.mxu0 0.0
  %899 = vmatmul.mubr.f32.gmra.mrb[0].mxu0 %v649
  %v900 = vpop.f32.mrb[0].mxu0
  %v901 = vadd.f32 %v548, %v900
  %v902 = vpop.f32.mrb[0].mxu0
  %v903 = vadd.f32 %v550, %v902
  %904 = vmatprep.mubr.f32.mxu0 0.0
  %905 = vmatmul.mubr.f32.gmra.mrb[0].mxu0 %v652
  %v906 = vpop.f32.mrb[0].mxu0
  %v907 = vadd.f32 %v554, %v906
  %v908 = vpop.f32.mrb[0].mxu0
  %v909 = vadd.f32 %v556, %v908
  %910 = vdwg.mxu0
  %v911 = vld [vmem:[#allocation2 + $0x2] sm:$0xff]
  %v912 = vld [vmem:[#allocation2 + $0xa] sm:$0xff]
  %v913 = vld [vmem:[#allocation2 + $0x12] sm:$0xff]
  %v914 = vld [vmem:[#allocation2 + $0x1a] sm:$0xff]
  %v915 = vld [vmem:[#allocation2 + $0x22] sm:$0xff]
  %v916 = vld [vmem:[#allocation2 + $0x2a] sm:$0xff]
  %v917 = vld [vmem:[#allocation2 + $0x32] sm:$0xff]
  %v918 = vld [vmem:[#allocation2 + $0x3a] sm:$0xff]
  %v919 = vld [vmem:[#allocation2 + $0x42] sm:$0xff]
  %v920 = vld [vmem:[#allocation2 + $0x4a] sm:$0xff]
  %v921 = vld [vmem:[#allocation2 + $0x52] sm:$0xff]
  %v922 = vld [vmem:[#allocation2 + $0x5a] sm:$0xff]
  %v923 = vld [vmem:[#allocation2 + $0x62] sm:$0xff]
  %v924 = vld [vmem:[#allocation2 + $0x6a] sm:$0xff]
  %v925 = vld [vmem:[#allocation2 + $0x72] sm:$0xff]
  %v926 = vld [vmem:[#allocation2 + $0x7a] sm:$0xff]
  %v927 = vld [vmem:[#allocation2 + $0x82] sm:$0xff]
  %v928 = vld [vmem:[#allocation2 + $0x8a] sm:$0xff]
  %v929 = vld [vmem:[#allocation2 + $0x92] sm:$0xff]
  %v930 = vld [vmem:[#allocation2 + $0x9a] sm:$0xff]
  %v931 = vld [vmem:[#allocation2 + $0xa2] sm:$0xff]
  %v932 = vld [vmem:[#allocation2 + $0xaa] sm:$0xff]
  %v933 = vld [vmem:[#allocation2 + $0xb2] sm:$0xff]
  %v934 = vld [vmem:[#allocation2 + $0xba] sm:$0xff]
  %v935 = vld [vmem:[#allocation2 + $0xc2] sm:$0xff]
  %v936 = vld [vmem:[#allocation2 + $0xca] sm:$0xff]
  %v937 = vld [vmem:[#allocation2 + $0xd2] sm:$0xff]
  %v938 = vld [vmem:[#allocation2 + $0xda] sm:$0xff]
  %v939 = vld [vmem:[#allocation2 + $0xe2] sm:$0xff]
  %v940 = vld [vmem:[#allocation2 + $0xea] sm:$0xff]
  %v941 = vld [vmem:[#allocation2 + $0xf2] sm:$0xff]
  %v942 = vld [vmem:[#allocation2 + $0xfa] sm:$0xff]
  %s943 = scalar_lea.vmem %s1, 384
  %v944 = vld [vmem:[%s943] sm:$0xff]
  %v945 = vld [vmem:[%s943 + $0x8] sm:$0xff]
  %v946 = vld [vmem:[%s943 + $0x10] sm:$0xff]
  %v947 = vld [vmem:[%s943 + $0x18] sm:$0xff]
  %v948 = vld [vmem:[%s943 + $0x20] sm:$0xff]
  %v949 = vld [vmem:[%s943 + $0x28] sm:$0xff]
  %v950 = vld [vmem:[%s943 + $0x30] sm:$0xff]
  %v951 = vld [vmem:[%s943 + $0x38] sm:$0xff]
  %v952 = vld [vmem:[%s943 + $0x40] sm:$0xff]
  %v953 = vld [vmem:[%s943 + $0x48] sm:$0xff]
  %v954 = vld [vmem:[%s943 + $0x50] sm:$0xff]
  %v955 = vld [vmem:[%s943 + $0x58] sm:$0xff]
  %v956 = vld [vmem:[%s943 + $0x60] sm:$0xff]
  %v957 = vld [vmem:[%s943 + $0x68] sm:$0xff]
  %v958 = vld [vmem:[%s943 + $0x70] sm:$0xff]
  %v959 = vld [vmem:[%s943 + $0x78] sm:$0xff]
  %v960 = vld [vmem:[%s943 + $0x80] sm:$0xff]
  %v961 = vld [vmem:[%s943 + $0x88] sm:$0xff]
  %v962 = vld [vmem:[%s943 + $0x90] sm:$0xff]
  %v963 = vld [vmem:[%s943 + $0x98] sm:$0xff]
  %v964 = vld [vmem:[%s943 + $0xa0] sm:$0xff]
  %v965 = vld [vmem:[%s943 + $0xa8] sm:$0xff]
  %v966 = vld [vmem:[%s943 + $0xb0] sm:$0xff]
  %v967 = vld [vmem:[%s943 + $0xb8] sm:$0xff]
  %v969 = vsel %vm58, %v911, 0
  %v972 = vsel %vm58, %v912, 0
  %v975 = vsel %vm58, %v913, 0
  %v978 = vsel %vm58, %v914, 0
  %v981 = vsel %vm58, %v915, 0
  %v984 = vsel %vm58, %v916, 0
  %v987 = vsel %vm58, %v917, 0
  %v990 = vsel %vm58, %v918, 0
  %v993 = vsel %vm58, %v919, 0
  %v996 = vsel %vm58, %v920, 0
  %v999 = vsel %vm58, %v921, 0
  %v1002 = vsel %vm58, %v922, 0
  %v1005 = vsel %vm58, %v923, 0
  %v1008 = vsel %vm58, %v924, 0
  %v1011 = vsel %vm58, %v925, 0
  %v1014 = vsel %vm58, %v926, 0
  %v1017 = vsel %vm58, %v927, 0
  %v1020 = vsel %vm58, %v928, 0
  %v1023 = vsel %vm58, %v929, 0
  %v1026 = vsel %vm58, %v930, 0
  %v1029 = vsel %vm58, %v931, 0
  %v1032 = vsel %vm58, %v932, 0
  %v1035 = vsel %vm58, %v933, 0
  %v1038 = vsel %vm58, %v934, 0
  %v1041 = vsel %vm58, %v935, 0
  %v1044 = vsel %vm58, %v936, 0
  %v1047 = vsel %vm58, %v937, 0
  %v1050 = vsel %vm58, %v938, 0
  %v1053 = vsel %vm58, %v939, 0
  %v1056 = vsel %vm58, %v940, 0
  %v1059 = vsel %vm58, %v941, 0
  %v1062 = vsel %vm58, %v942, 0
  %1064 = vmatprep.subr.mxu0 %v945
  %1065 = vmatpush1.msra.mxu0 %v944
  %1066 = vmatprep.subr.mxu0 %v947
  %1067 = vmatpush1.msra.mxu0 %v946
  %1068 = vmatprep.subr.mxu0 %v949
  %1069 = vmatpush1.msra.mxu0 %v948
  %1070 = vmatprep.subr.mxu0 %v951
  %1071 = vmatpush1.msra.mxu0 %v950
  %1072 = vmatprep.subr.mxu0 %v953
  %1073 = vmatpush1.msra.mxu0 %v952
  %1074 = vmatprep.subr.mxu0 %v955
  %1075 = vmatpush1.msra.mxu0 %v954
  %1076 = vmatprep.subr.mxu0 %v957
  %1077 = vmatpush1.msra.mxu0 %v956
  %1078 = vmatprep.subr.mxu0 %v959
  %1079 = vmatpush1.msra.mxu0 %v958
  %1080 = vmatprep.subr.mxu0 %v961
  %1081 = vmatpush1.msra.mxu0 %v960
  %1082 = vmatprep.subr.mxu0 %v963
  %1083 = vmatpush1.msra.mxu0 %v962
  %1084 = vmatprep.subr.mxu0 %v965
  %1085 = vmatpush1.msra.mxu0 %v964
  %1086 = vmatprep.subr.mxu0 %v967
  %1087 = vmatpush1.msra.mxu0 %v966
  %1088 = vmatprep.subr.mxu0 0.0
  %1089 = vmatpush1.msra.mxu0 0.0
  %1090 = vmatprep.subr.mxu0 0.0
  %1091 = vmatpush1.msra.mxu0 0.0
  %1092 = vmatprep.subr.mxu0 0.0
  %1093 = vmatpush1.msra.mxu0 0.0
  %1094 = vmatprep.subr.mxu0 0.0
  %1095 = vmatpush1.msra.mxu0 0.0
  %1096 = vmatprep.subr.mxu0 0.0
  %1097 = vmatpush1.msra.mxu0 0.0
  %1098 = vmatprep.subr.mxu0 0.0
  %1099 = vmatpush1.msra.mxu0 0.0
  %1100 = vmatprep.subr.mxu0 0.0
  %1101 = vmatpush1.msra.mxu0 0.0
  %1102 = vmatprep.subr.mxu0 0.0
  %1103 = vmatpush1.msra.mxu0 0.0
  %1104 = vmatprep.subr.mxu0 0.0
  %1105 = vmatpush1.msra.mxu0 0.0
  %1106 = vmatprep.subr.mxu0 0.0
  %1107 = vmatpush1.msra.mxu0 0.0
  %1108 = vmatprep.subr.mxu0 0.0
  %1109 = vmatpush1.msra.mxu0 0.0
  %1110 = vmatprep.subr.mxu0 0.0
  %1111 = vmatpush1.msra.mxu0 0.0
  %1112 = vmatprep.subr.mxu0 0.0
  %1113 = vmatpush1.msra.mxu0 0.0
  %1114 = vmatprep.subr.mxu0 0.0
  %1115 = vmatpush1.msra.mxu0 0.0
  %1116 = vmatprep.subr.mxu0 0.0
  %1117 = vmatpush1.msra.mxu0 0.0
  %1118 = vmatprep.subr.mxu0 0.0
  %1119 = vmatpush1.msra.mxu0 0.0
  %1120 = vmatprep.subr.mxu0 0.0
  %1121 = vmatpush1.msra.mxu0 0.0
  %1122 = vmatprep.subr.mxu0 0.0
  %1123 = vmatpush1.msra.mxu0 0.0
  %1124 = vmatprep.subr.mxu0 0.0
  %1125 = vmatpush1.msra.mxu0 0.0
  %1126 = vmatprep.subr.mxu0 0.0
  %1127 = vmatpush1.msra.mxu0 0.0
  %1128 = vmatprep.mubr.f32.mxu0 0.0
  %1129 = vmatmul.mubr.f32.gmra.mrb[0].mxu0 %v969
  %v1130 = vpop.f32.mrb[0].mxu0
  %v1131 = vadd.f32 0.0, %v1130
  %v1132 = vpop.f32.mrb[0].mxu0
  %v1133 = vadd.f32 0.0, %v1132
  %1134 = vmatprep.mubr.f32.mxu0 0.0
  %1135 = vmatmul.mubr.f32.gmra.mrb[0].mxu0 %v972
  %v1136 = vpop.f32.mrb[0].mxu0
  %v1137 = vadd.f32 0.0, %v1136
  %v1138 = vpop.f32.mrb[0].mxu0
  %v1139 = vadd.f32 0.0, %v1138
  %1140 = vmatprep.mubr.f32.mxu0 0.0
  %1141 = vmatmul.mubr.f32.gmra.mrb[0].mxu0 %v975
  %v1142 = vpop.f32.mrb[0].mxu0
  %v1143 = vadd.f32 0.0, %v1142
  %v1144 = vpop.f32.mrb[0].mxu0
  %v1145 = vadd.f32 0.0, %v1144
  %1146 = vmatprep.mubr.f32.mxu0 0.0
  %1147 = vmatmul.mubr.f32.gmra.mrb[0].mxu0 %v978
  %v1148 = vpop.f32.mrb[0].mxu0
  %v1149 = vadd.f32 0.0, %v1148
  %v1150 = vpop.f32.mrb[0].mxu0
  %v1151 = vadd.f32 0.0, %v1150
  %1152 = vmatprep.mubr.f32.mxu0 0.0
  %1153 = vmatmul.mubr.f32.gmra.mrb[0].mxu0 %v981
  %v1154 = vpop.f32.mrb[0].mxu0
  %v1155 = vadd.f32 0.0, %v1154
  %v1156 = vpop.f32.mrb[0].mxu0
  %v1157 = vadd.f32 0.0, %v1156
  %1158 = vmatprep.mubr.f32.mxu0 0.0
  %1159 = vmatmul.mubr.f32.gmra.mrb[0].mxu0 %v984
  %v1160 = vpop.f32.mrb[0].mxu0
  %v1161 = vadd.f32 0.0, %v1160
  %v1162 = vpop.f32.mrb[0].mxu0
  %v1163 = vadd.f32 0.0, %v1162
  %1164 = vmatprep.mubr.f32.mxu0 0.0
  %1165 = vmatmul.mubr.f32.gmra.mrb[0].mxu0 %v987
  %v1166 = vpop.f32.mrb[0].mxu0
  %v1167 = vadd.f32 0.0, %v1166
  %v1168 = vpop.f32.mrb[0].mxu0
  %v1169 = vadd.f32 0.0, %v1168
  %1170 = vmatprep.mubr.f32.mxu0 0.0
  %1171 = vmatmul.mubr.f32.gmra.mrb[0].mxu0 %v990
  %v1172 = vpop.f32.mrb[0].mxu0
  %v1173 = vadd.f32 0.0, %v1172
  %v1174 = vpop.f32.mrb[0].mxu0
  %v1175 = vadd.f32 0.0, %v1174
  %1176 = vmatprep.mubr.f32.mxu0 0.0
  %1177 = vmatmul.mubr.f32.gmra.mrb[0].mxu0 %v993
  %v1178 = vpop.f32.mrb[0].mxu0
  %v1179 = vadd.f32 0.0, %v1178
  %v1180 = vpop.f32.mrb[0].mxu0
  %v1181 = vadd.f32 0.0, %v1180
  %1182 = vmatprep.mubr.f32.mxu0 0.0
  %1183 = vmatmul.mubr.f32.gmra.mrb[0].mxu0 %v996
  %v1184 = vpop.f32.mrb[0].mxu0
  %v1185 = vadd.f32 0.0, %v1184
  %v1186 = vpop.f32.mrb[0].mxu0
  %v1187 = vadd.f32 0.0, %v1186
  %1188 = vmatprep.mubr.f32.mxu0 0.0
  %1189 = vmatmul.mubr.f32.gmra.mrb[0].mxu0 %v999
  %v1190 = vpop.f32.mrb[0].mxu0
  %v1191 = vadd.f32 0.0, %v1190
  %v1192 = vpop.f32.mrb[0].mxu0
  %v1193 = vadd.f32 0.0, %v1192
  %1194 = vmatprep.mubr.f32.mxu0 0.0
  %1195 = vmatmul.mubr.f32.gmra.mrb[0].mxu0 %v1002
  %v1196 = vpop.f32.mrb[0].mxu0
  %v1197 = vadd.f32 0.0, %v1196
  %v1198 = vpop.f32.mrb[0].mxu0
  %v1199 = vadd.f32 0.0, %v1198
  %1200 = vmatprep.mubr.f32.mxu0 0.0
  %1201 = vmatmul.mubr.f32.gmra.mrb[0].mxu0 %v1005
  %v1202 = vpop.f32.mrb[0].mxu0
  %v1203 = vadd.f32 0.0, %v1202
  %v1204 = vpop.f32.mrb[0].mxu0
  %v1205 = vadd.f32 0.0, %v1204
  %1206 = vmatprep.mubr.f32.mxu0 0.0
  %1207 = vmatmul.mubr.f32.gmra.mrb[0].mxu0 %v1008
  %v1208 = vpop.f32.mrb[0].mxu0
  %v1209 = vadd.f32 0.0, %v1208
  %v1210 = vpop.f32.mrb[0].mxu0
  %v1211 = vadd.f32 0.0, %v1210
  %1212 = vmatprep.mubr.f32.mxu0 0.0
  %1213 = vmatmul.mubr.f32.gmra.mrb[0].mxu0 %v1011
  %v1214 = vpop.f32.mrb[0].mxu0
  %v1215 = vadd.f32 0.0, %v1214
  %v1216 = vpop.f32.mrb[0].mxu0
  %v1217 = vadd.f32 0.0, %v1216
  %1218 = vmatprep.mubr.f32.mxu0 0.0
  %1219 = vmatmul.mubr.f32.gmra.mrb[0].mxu0 %v1014
  %v1220 = vpop.f32.mrb[0].mxu0
  %v1221 = vadd.f32 0.0, %v1220
  %v1222 = vpop.f32.mrb[0].mxu0
  %v1223 = vadd.f32 0.0, %v1222
  %1224 = vmatprep.mubr.f32.mxu0 0.0
  %1225 = vmatmul.mubr.f32.gmra.mrb[0].mxu0 %v1017
  %v1226 = vpop.f32.mrb[0].mxu0
  %v1227 = vadd.f32 0.0, %v1226
  %v1228 = vpop.f32.mrb[0].mxu0
  %v1229 = vadd.f32 0.0, %v1228
  %1230 = vmatprep.mubr.f32.mxu0 0.0
  %1231 = vmatmul.mubr.f32.gmra.mrb[0].mxu0 %v1020
  %v1232 = vpop.f32.mrb[0].mxu0
  %v1233 = vadd.f32 0.0, %v1232
  %v1234 = vpop.f32.mrb[0].mxu0
  %v1235 = vadd.f32 0.0, %v1234
  %1236 = vmatprep.mubr.f32.mxu0 0.0
  %1237 = vmatmul.mubr.f32.gmra.mrb[0].mxu0 %v1023
  %v1238 = vpop.f32.mrb[0].mxu0
  %v1239 = vadd.f32 0.0, %v1238
  %v1240 = vpop.f32.mrb[0].mxu0
  %v1241 = vadd.f32 0.0, %v1240
  %1242 = vmatprep.mubr.f32.mxu0 0.0
  %1243 = vmatmul.mubr.f32.gmra.mrb[0].mxu0 %v1026
  %v1244 = vpop.f32.mrb[0].mxu0
  %v1245 = vadd.f32 0.0, %v1244
  %v1246 = vpop.f32.mrb[0].mxu0
  %v1247 = vadd.f32 0.0, %v1246
  %1248 = vmatprep.mubr.f32.mxu0 0.0
  %1249 = vmatmul.mubr.f32.gmra.mrb[0].mxu0 %v1029
  %v1250 = vpop.f32.mrb[0].mxu0
  %v1251 = vadd.f32 0.0, %v1250
  %v1252 = vpop.f32.mrb[0].mxu0
  %v1253 = vadd.f32 0.0, %v1252
  %1254 = vmatprep.mubr.f32.mxu0 0.0
  %1255 = vmatmul.mubr.f32.gmra.mrb[0].mxu0 %v1032
  %v1256 = vpop.f32.mrb[0].mxu0
  %v1257 = vadd.f32 0.0, %v1256
  %v1258 = vpop.f32.mrb[0].mxu0
  %v1259 = vadd.f32 0.0, %v1258
  %1260 = vmatprep.mubr.f32.mxu0 0.0
  %1261 = vmatmul.mubr.f32.gmra.mrb[0].mxu0 %v1035
  %v1262 = vpop.f32.mrb[0].mxu0
  %v1263 = vadd.f32 0.0, %v1262
  %v1264 = vpop.f32.mrb[0].mxu0
  %v1265 = vadd.f32 0.0, %v1264
  %1266 = vmatprep.mubr.f32.mxu0 0.0
  %1267 = vmatmul.mubr.f32.gmra.mrb[0].mxu0 %v1038
  %v1268 = vpop.f32.mrb[0].mxu0
  %v1269 = vadd.f32 0.0, %v1268
  %v1270 = vpop.f32.mrb[0].mxu0
  %v1271 = vadd.f32 0.0, %v1270
  %1272 = vmatprep.mubr.f32.mxu0 0.0
  %1273 = vmatmul.mubr.f32.gmra.mrb[0].mxu0 %v1041
  %v1274 = vpop.f32.mrb[0].mxu0
  %v1275 = vadd.f32 0.0, %v1274
  %v1276 = vpop.f32.mrb[0].mxu0
  %v1277 = vadd.f32 0.0, %v1276
  %1278 = vmatprep.mubr.f32.mxu0 0.0
  %1279 = vmatmul.mubr.f32.gmra.mrb[0].mxu0 %v1044
  %v1280 = vpop.f32.mrb[0].mxu0
  %v1281 = vadd.f32 0.0, %v1280
  %v1282 = vpop.f32.mrb[0].mxu0
  %v1283 = vadd.f32 0.0, %v1282
  %1284 = vmatprep.mubr.f32.mxu0 0.0
  %1285 = vmatmul.mubr.f32.gmra.mrb[0].mxu0 %v1047
  %v1286 = vpop.f32.mrb[0].mxu0
  %v1287 = vadd.f32 0.0, %v1286
  %v1288 = vpop.f32.mrb[0].mxu0
  %v1289 = vadd.f32 0.0, %v1288
  %1290 = vmatprep.mubr.f32.mxu0 0.0
  %1291 = vmatmul.mubr.f32.gmra.mrb[0].mxu0 %v1050
  %v1292 = vpop.f32.mrb[0].mxu0
  %v1293 = vadd.f32 0.0, %v1292
  %v1294 = vpop.f32.mrb[0].mxu0
  %v1295 = vadd.f32 0.0, %v1294
  %1296 = vmatprep.mubr.f32.mxu0 0.0
  %1297 = vmatmul.mubr.f32.gmra.mrb[0].mxu0 %v1053
  %v1298 = vpop.f32.mrb[0].mxu0
  %v1299 = vadd.f32 0.0, %v1298
  %v1300 = vpop.f32.mrb[0].mxu0
  %v1301 = vadd.f32 0.0, %v1300
  %1302 = vmatprep.mubr.f32.mxu0 0.0
  %1303 = vmatmul.mubr.f32.gmra.mrb[0].mxu0 %v1056
  %v1304 = vpop.f32.mrb[0].mxu0
  %v1305 = vadd.f32 0.0, %v1304
  %v1306 = vpop.f32.mrb[0].mxu0
  %v1307 = vadd.f32 0.0, %v1306
  %1308 = vmatprep.mubr.f32.mxu0 0.0
  %1309 = vmatmul.mubr.f32.gmra.mrb[0].mxu0 %v1059
  %v1310 = vpop.f32.mrb[0].mxu0
  %v1311 = vadd.f32 0.0, %v1310
  %v1312 = vpop.f32.mrb[0].mxu0
  %v1313 = vadd.f32 0.0, %v1312
  %1314 = vmatprep.mubr.f32.mxu0 0.0
  %1315 = vmatmul.mubr.f32.gmra.mrb[0].mxu0 %v1062
  %v1316 = vpop.f32.mrb[0].mxu0
  %v1317 = vadd.f32 0.0, %v1316
  %v1318 = vpop.f32.mrb[0].mxu0
  %v1319 = vadd.f32 0.0, %v1318
  %1320 = vdwg.mxu0
  %v1321 = vadd.f32 %v721, %v1131
  %v1322 = vadd.f32 %v723, %v1133
  %v1323 = vadd.f32 %v727, %v1137
  %v1324 = vadd.f32 %v729, %v1139
  %v1325 = vadd.f32 %v733, %v1143
  %v1326 = vadd.f32 %v735, %v1145
  %v1327 = vadd.f32 %v739, %v1149
  %v1328 = vadd.f32 %v741, %v1151
  %v1329 = vadd.f32 %v745, %v1155
  %v1330 = vadd.f32 %v747, %v1157
  %v1331 = vadd.f32 %v751, %v1161
  %v1332 = vadd.f32 %v753, %v1163
  %v1333 = vadd.f32 %v757, %v1167
  %v1334 = vadd.f32 %v759, %v1169
  %v1335 = vadd.f32 %v763, %v1173
  %v1336 = vadd.f32 %v765, %v1175
  %v1337 = vadd.f32 %v769, %v1179
  %v1338 = vadd.f32 %v771, %v1181
  %v1339 = vadd.f32 %v775, %v1185
  %v1340 = vadd.f32 %v777, %v1187
  %v1341 = vadd.f32 %v781, %v1191
  %v1342 = vadd.f32 %v783, %v1193
  %v1343 = vadd.f32 %v787, %v1197
  %v1344 = vadd.f32 %v789, %v1199
  %v1345 = vadd.f32 %v793, %v1203
  %v1346 = vadd.f32 %v795, %v1205
  %v1347 = vadd.f32 %v799, %v1209
  %v1348 = vadd.f32 %v801, %v1211
  %v1349 = vadd.f32 %v805, %v1215
  %v1350 = vadd.f32 %v807, %v1217
  %v1351 = vadd.f32 %v811, %v1221
  %v1352 = vadd.f32 %v813, %v1223
  %v1353 = vadd.f32 %v817, %v1227
  %v1354 = vadd.f32 %v819, %v1229
  %v1355 = vadd.f32 %v823, %v1233
  %v1356 = vadd.f32 %v825, %v1235
  %v1357 = vadd.f32 %v829, %v1239
  %v1358 = vadd.f32 %v831, %v1241
  %v1359 = vadd.f32 %v835, %v1245
  %v1360 = vadd.f32 %v837, %v1247
  %v1361 = vadd.f32 %v841, %v1251
  %v1362 = vadd.f32 %v843, %v1253
  %v1363 = vadd.f32 %v847, %v1257
  %v1364 = vadd.f32 %v849, %v1259
  %v1365 = vadd.f32 %v853, %v1263
  %v1366 = vadd.f32 %v855, %v1265
  %v1367 = vadd.f32 %v859, %v1269
  %v1368 = vadd.f32 %v861, %v1271
  %v1369 = vadd.f32 %v865, %v1275
  %v1370 = vadd.f32 %v867, %v1277
  %v1371 = vadd.f32 %v871, %v1281
  %v1372 = vadd.f32 %v873, %v1283
  %v1373 = vadd.f32 %v877, %v1287
  %v1374 = vadd.f32 %v879, %v1289
  %v1375 = vadd.f32 %v883, %v1293
  %v1376 = vadd.f32 %v885, %v1295
  %v1377 = vadd.f32 %v889, %v1299
  %v1378 = vadd.f32 %v891, %v1301
  %v1379 = vadd.f32 %v895, %v1305
  %v1380 = vadd.f32 %v897, %v1307
  %v1381 = vadd.f32 %v901, %v1311
  %v1382 = vadd.f32 %v903, %v1313
  %v1383 = vadd.f32 %v907, %v1317
  %v1384 = vadd.f32 %v909, %v1319
  %v1385 = vld [vmem:[#allocation2 + $0x3] sm:$0xff]
  %v1386 = vld [vmem:[#allocation2 + $0xb] sm:$0xff]
  %v1387 = vld [vmem:[#allocation2 + $0x13] sm:$0xff]
  %v1388 = vld [vmem:[#allocation2 + $0x1b] sm:$0xff]
  %v1389 = vld [vmem:[#allocation2 + $0x23] sm:$0xff]
  %v1390 = vld [vmem:[#allocation2 + $0x2b] sm:$0xff]
  %v1391 = vld [vmem:[#allocation2 + $0x33] sm:$0xff]
  %v1392 = vld [vmem:[#allocation2 + $0x3b] sm:$0xff]
  %v1393 = vld [vmem:[#allocation2 + $0x43] sm:$0xff]
  %v1394 = vld [vmem:[#allocation2 + $0x4b] sm:$0xff]
  %v1395 = vld [vmem:[#allocation2 + $0x53] sm:$0xff]
  %v1396 = vld [vmem:[#allocation2 + $0x5b] sm:$0xff]
  %v1397 = vld [vmem:[#allocation2 + $0x63] sm:$0xff]
  %v1398 = vld [vmem:[#allocation2 + $0x6b] sm:$0xff]
  %v1399 = vld [vmem:[#allocation2 + $0x73] sm:$0xff]
  %v1400 = vld [vmem:[#allocation2 + $0x7b] sm:$0xff]
  %v1401 = vld [vmem:[#allocation2 + $0x83] sm:$0xff]
  %v1402 = vld [vmem:[#allocation2 + $0x8b] sm:$0xff]
  %v1403 = vld [vmem:[#allocation2 + $0x93] sm:$0xff]
  %v1404 = vld [vmem:[#allocation2 + $0x9b] sm:$0xff]
  %v1405 = vld [vmem:[#allocation2 + $0xa3] sm:$0xff]
  %v1406 = vld [vmem:[#allocation2 + $0xab] sm:$0xff]
  %v1407 = vld [vmem:[#allocation2 + $0xb3] sm:$0xff]
  %v1408 = vld [vmem:[#allocation2 + $0xbb] sm:$0xff]
  %v1409 = vld [vmem:[#allocation2 + $0xc3] sm:$0xff]
  %v1410 = vld [vmem:[#allocation2 + $0xcb] sm:$0xff]
  %v1411 = vld [vmem:[#allocation2 + $0xd3] sm:$0xff]
  %v1412 = vld [vmem:[#allocation2 + $0xdb] sm:$0xff]
  %v1413 = vld [vmem:[#allocation2 + $0xe3] sm:$0xff]
  %v1414 = vld [vmem:[#allocation2 + $0xeb] sm:$0xff]
  %v1415 = vld [vmem:[#allocation2 + $0xf3] sm:$0xff]
  %v1416 = vld [vmem:[#allocation2 + $0xfb] sm:$0xff]
  %s1417 = scalar_lea.vmem %s1, 576
  %v1418 = vld [vmem:[%s1417] sm:$0xff]
  %v1419 = vld [vmem:[%s1417 + $0x8] sm:$0xff]
  %v1420 = vld [vmem:[%s1417 + $0x10] sm:$0xff]
  %v1421 = vld [vmem:[%s1417 + $0x18] sm:$0xff]
  %v1422 = vld [vmem:[%s1417 + $0x20] sm:$0xff]
  %v1423 = vld [vmem:[%s1417 + $0x28] sm:$0xff]
  %v1424 = vld [vmem:[%s1417 + $0x30] sm:$0xff]
  %v1425 = vld [vmem:[%s1417 + $0x38] sm:$0xff]
  %v1426 = vld [vmem:[%s1417 + $0x40] sm:$0xff]
  %v1427 = vld [vmem:[%s1417 + $0x48] sm:$0xff]
  %v1428 = vld [vmem:[%s1417 + $0x50] sm:$0xff]
  %v1429 = vld [vmem:[%s1417 + $0x58] sm:$0xff]
  %v1430 = vld [vmem:[%s1417 + $0x60] sm:$0xff]
  %v1431 = vld [vmem:[%s1417 + $0x68] sm:$0xff]
  %v1432 = vld [vmem:[%s1417 + $0x70] sm:$0xff]
  %v1433 = vld [vmem:[%s1417 + $0x78] sm:$0xff]
  %v1434 = vld [vmem:[%s1417 + $0x80] sm:$0xff]
  %v1435 = vld [vmem:[%s1417 + $0x88] sm:$0xff]
  %v1436 = vld [vmem:[%s1417 + $0x90] sm:$0xff]
  %v1437 = vld [vmem:[%s1417 + $0x98] sm:$0xff]
  %v1438 = vld [vmem:[%s1417 + $0xa0] sm:$0xff]
  %v1439 = vld [vmem:[%s1417 + $0xa8] sm:$0xff]
  %v1440 = vld [vmem:[%s1417 + $0xb0] sm:$0xff]
  %v1441 = vld [vmem:[%s1417 + $0xb8] sm:$0xff]
  %v1443 = vsel %vm58, %v1385, 0
  %v1446 = vsel %vm58, %v1386, 0
  %v1449 = vsel %vm58, %v1387, 0
  %v1452 = vsel %vm58, %v1388, 0
  %v1455 = vsel %vm58, %v1389, 0
  %v1458 = vsel %vm58, %v1390, 0
  %v1461 = vsel %vm58, %v1391, 0
  %v1464 = vsel %vm58, %v1392, 0
  %v1467 = vsel %vm58, %v1393, 0
  %v1470 = vsel %vm58, %v1394, 0
  %v1473 = vsel %vm58, %v1395, 0
  %v1476 = vsel %vm58, %v1396, 0
  %v1479 = vsel %vm58, %v1397, 0
  %v1482 = vsel %vm58, %v1398, 0
  %v1485 = vsel %vm58, %v1399, 0
  %v1488 = vsel %vm58, %v1400, 0
  %v1491 = vsel %vm58, %v1401, 0
  %v1494 = vsel %vm58, %v1402, 0
  %v1497 = vsel %vm58, %v1403, 0
  %v1500 = vsel %vm58, %v1404, 0
  %v1503 = vsel %vm58, %v1405, 0
  %v1506 = vsel %vm58, %v1406, 0
  %v1509 = vsel %vm58, %v1407, 0
  %v1512 = vsel %vm58, %v1408, 0
  %v1515 = vsel %vm58, %v1409, 0
  %v1518 = vsel %vm58, %v1410, 0
  %v1521 = vsel %vm58, %v1411, 0
  %v1524 = vsel %vm58, %v1412, 0
  %v1527 = vsel %vm58, %v1413, 0
  %v1530 = vsel %vm58, %v1414, 0
  %v1533 = vsel %vm58, %v1415, 0
  %v1536 = vsel %vm58, %v1416, 0
  %1538 = vmatprep.subr.mxu0 %v1419
  %1539 = vmatpush1.msra.mxu0 %v1418
  %1540 = vmatprep.subr.mxu0 %v1421
  %1541 = vmatpush1.msra.mxu0 %v1420
  %1542 = vmatprep.subr.mxu0 %v1423
  %1543 = vmatpush1.msra.mxu0 %v1422
  %1544 = vmatprep.subr.mxu0 %v1425
  %1545 = vmatpush1.msra.mxu0 %v1424
  %1546 = vmatprep.subr.mxu0 %v1427
  %1547 = vmatpush1.msra.mxu0 %v1426
  %1548 = vmatprep.subr.mxu0 %v1429
  %1549 = vmatpush1.msra.mxu0 %v1428
  %1550 = vmatprep.subr.mxu0 %v1431
  %1551 = vmatpush1.msra.mxu0 %v1430
  %1552 = vmatprep.subr.mxu0 %v1433
  %1553 = vmatpush1.msra.mxu0 %v1432
  %1554 = vmatprep.subr.mxu0 %v1435
  %1555 = vmatpush1.msra.mxu0 %v1434
  %1556 = vmatprep.subr.mxu0 %v1437
  %1557 = vmatpush1.msra.mxu0 %v1436
  %1558 = vmatprep.subr.mxu0 %v1439
  %1559 = vmatpush1.msra.mxu0 %v1438
  %1560 = vmatprep.subr.mxu0 %v1441
  %1561 = vmatpush1.msra.mxu0 %v1440
  %1562 = vmatprep.subr.mxu0 0.0
  %1563 = vmatpush1.msra.mxu0 0.0
  %1564 = vmatprep.subr.mxu0 0.0
  %1565 = vmatpush1.msra.mxu0 0.0
  %1566 = vmatprep.subr.mxu0 0.0
  %1567 = vmatpush1.msra.mxu0 0.0
  %1568 = vmatprep.subr.mxu0 0.0
  %1569 = vmatpush1.msra.mxu0 0.0
  %1570 = vmatprep.subr.mxu0 0.0
  %1571 = vmatpush1.msra.mxu0 0.0
  %1572 = vmatprep.subr.mxu0 0.0
  %1573 = vmatpush1.msra.mxu0 0.0
  %1574 = vmatprep.subr.mxu0 0.0
  %1575 = vmatpush1.msra.mxu0 0.0
  %1576 = vmatprep.subr.mxu0 0.0
  %1577 = vmatpush1.msra.mxu0 0.0
  %1578 = vmatprep.subr.mxu0 0.0
  %1579 = vmatpush1.msra.mxu0 0.0
  %1580 = vmatprep.subr.mxu0 0.0
  %1581 = vmatpush1.msra.mxu0 0.0
  %1582 = vmatprep.subr.mxu0 0.0
  %1583 = vmatpush1.msra.mxu0 0.0
  %1584 = vmatprep.subr.mxu0 0.0
  %1585 = vmatpush1.msra.mxu0 0.0
  %1586 = vmatprep.subr.mxu0 0.0
  %1587 = vmatpush1.msra.mxu0 0.0
  %1588 = vmatprep.subr.mxu0 0.0
  %1589 = vmatpush1.msra.mxu0 0.0
  %1590 = vmatprep.subr.mxu0 0.0
  %1591 = vmatpush1.msra.mxu0 0.0
  %1592 = vmatprep.subr.mxu0 0.0
  %1593 = vmatpush1.msra.mxu0 0.0
  %1594 = vmatprep.subr.mxu0 0.0
  %1595 = vmatpush1.msra.mxu0 0.0
  %1596 = vmatprep.subr.mxu0 0.0
  %1597 = vmatpush1.msra.mxu0 0.0
  %1598 = vmatprep.subr.mxu0 0.0
  %1599 = vmatpush1.msra.mxu0 0.0
  %1600 = vmatprep.subr.mxu0 0.0
  %1601 = vmatpush1.msra.mxu0 0.0
  %1602 = vmatprep.mubr.f32.mxu0 0.0
  %1603 = vmatmul.mubr.f32.gmra.mrb[0].mxu0 %v1443
  %v1604 = vpop.f32.mrb[0].mxu0
  %v1605 = vadd.f32 0.0, %v1604
  %v1606 = vpop.f32.mrb[0].mxu0
  %v1607 = vadd.f32 0.0, %v1606
  %1608 = vmatprep.mubr.f32.mxu0 0.0
  %1609 = vmatmul.mubr.f32.gmra.mrb[0].mxu0 %v1446
  %v1610 = vpop.f32.mrb[0].mxu0
  %v1611 = vadd.f32 0.0, %v1610
  %v1612 = vpop.f32.mrb[0].mxu0
  %v1613 = vadd.f32 0.0, %v1612
  %1614 = vmatprep.mubr.f32.mxu0 0.0
  %1615 = vmatmul.mubr.f32.gmra.mrb[0].mxu0 %v1449
  %v1616 = vpop.f32.mrb[0].mxu0
  %v1617 = vadd.f32 0.0, %v1616
  %v1618 = vpop.f32.mrb[0].mxu0
  %v1619 = vadd.f32 0.0, %v1618
  %1620 = vmatprep.mubr.f32.mxu0 0.0
  %1621 = vmatmul.mubr.f32.gmra.mrb[0].mxu0 %v1452
  %v1622 = vpop.f32.mrb[0].mxu0
  %v1623 = vadd.f32 0.0, %v1622
  %v1624 = vpop.f32.mrb[0].mxu0
  %v1625 = vadd.f32 0.0, %v1624
  %1626 = vmatprep.mubr.f32.mxu0 0.0
  %1627 = vmatmul.mubr.f32.gmra.mrb[0].mxu0 %v1455
  %v1628 = vpop.f32.mrb[0].mxu0
  %v1629 = vadd.f32 0.0, %v1628
  %v1630 = vpop.f32.mrb[0].mxu0
  %v1631 = vadd.f32 0.0, %v1630
  %1632 = vmatprep.mubr.f32.mxu0 0.0
  %1633 = vmatmul.mubr.f32.gmra.mrb[0].mxu0 %v1458
  %v1634 = vpop.f32.mrb[0].mxu0
  %v1635 = vadd.f32 0.0, %v1634
  %v1636 = vpop.f32.mrb[0].mxu0
  %v1637 = vadd.f32 0.0, %v1636
  %1638 = vmatprep.mubr.f32.mxu0 0.0
  %1639 = vmatmul.mubr.f32.gmra.mrb[0].mxu0 %v1461
  %v1640 = vpop.f32.mrb[0].mxu0
  %v1641 = vadd.f32 0.0, %v1640
  %v1642 = vpop.f32.mrb[0].mxu0
  %v1643 = vadd.f32 0.0, %v1642
  %1644 = vmatprep.mubr.f32.mxu0 0.0
  %1645 = vmatmul.mubr.f32.gmra.mrb[0].mxu0 %v1464
  %v1646 = vpop.f32.mrb[0].mxu0
  %v1647 = vadd.f32 0.0, %v1646
  %v1648 = vpop.f32.mrb[0].mxu0
  %v1649 = vadd.f32 0.0, %v1648
  %1650 = vmatprep.mubr.f32.mxu0 0.0
  %1651 = vmatmul.mubr.f32.gmra.mrb[0].mxu0 %v1467
  %v1652 = vpop.f32.mrb[0].mxu0
  %v1653 = vadd.f32 0.0, %v1652
  %v1654 = vpop.f32.mrb[0].mxu0
  %v1655 = vadd.f32 0.0, %v1654
  %1656 = vmatprep.mubr.f32.mxu0 0.0
  %1657 = vmatmul.mubr.f32.gmra.mrb[0].mxu0 %v1470
  %v1658 = vpop.f32.mrb[0].mxu0
  %v1659 = vadd.f32 0.0, %v1658
  %v1660 = vpop.f32.mrb[0].mxu0
  %v1661 = vadd.f32 0.0, %v1660
  %1662 = vmatprep.mubr.f32.mxu0 0.0
  %1663 = vmatmul.mubr.f32.gmra.mrb[0].mxu0 %v1473
  %v1664 = vpop.f32.mrb[0].mxu0
  %v1665 = vadd.f32 0.0, %v1664
  %v1666 = vpop.f32.mrb[0].mxu0
  %v1667 = vadd.f32 0.0, %v1666
  %1668 = vmatprep.mubr.f32.mxu0 0.0
  %1669 = vmatmul.mubr.f32.gmra.mrb[0].mxu0 %v1476
  %v1670 = vpop.f32.mrb[0].mxu0
  %v1671 = vadd.f32 0.0, %v1670
  %v1672 = vpop.f32.mrb[0].mxu0
  %v1673 = vadd.f32 0.0, %v1672
  %1674 = vmatprep.mubr.f32.mxu0 0.0
  %1675 = vmatmul.mubr.f32.gmra.mrb[0].mxu0 %v1479
  %v1676 = vpop.f32.mrb[0].mxu0
  %v1677 = vadd.f32 0.0, %v1676
  %v1678 = vpop.f32.mrb[0].mxu0
  %v1679 = vadd.f32 0.0, %v1678
  %1680 = vmatprep.mubr.f32.mxu0 0.0
  %1681 = vmatmul.mubr.f32.gmra.mrb[0].mxu0 %v1482
  %v1682 = vpop.f32.mrb[0].mxu0
  %v1683 = vadd.f32 0.0, %v1682
  %v1684 = vpop.f32.mrb[0].mxu0
  %v1685 = vadd.f32 0.0, %v1684
  %1686 = vmatprep.mubr.f32.mxu0 0.0
  %1687 = vmatmul.mubr.f32.gmra.mrb[0].mxu0 %v1485
  %v1688 = vpop.f32.mrb[0].mxu0
  %v1689 = vadd.f32 0.0, %v1688
  %v1690 = vpop.f32.mrb[0].mxu0
  %v1691 = vadd.f32 0.0, %v1690
  %1692 = vmatprep.mubr.f32.mxu0 0.0
  %1693 = vmatmul.mubr.f32.gmra.mrb[0].mxu0 %v1488
  %v1694 = vpop.f32.mrb[0].mxu0
  %v1695 = vadd.f32 0.0, %v1694
  %v1696 = vpop.f32.mrb[0].mxu0
  %v1697 = vadd.f32 0.0, %v1696
  %1698 = vmatprep.mubr.f32.mxu0 0.0
  %1699 = vmatmul.mubr.f32.gmra.mrb[0].mxu0 %v1491
  %v1700 = vpop.f32.mrb[0].mxu0
  %v1701 = vadd.f32 0.0, %v1700
  %v1702 = vpop.f32.mrb[0].mxu0
  %v1703 = vadd.f32 0.0, %v1702
  %1704 = vmatprep.mubr.f32.mxu0 0.0
  %1705 = vmatmul.mubr.f32.gmra.mrb[0].mxu0 %v1494
  %v1706 = vpop.f32.mrb[0].mxu0
  %v1707 = vadd.f32 0.0, %v1706
  %v1708 = vpop.f32.mrb[0].mxu0
  %v1709 = vadd.f32 0.0, %v1708
  %1710 = vmatprep.mubr.f32.mxu0 0.0
  %1711 = vmatmul.mubr.f32.gmra.mrb[0].mxu0 %v1497
  %v1712 = vpop.f32.mrb[0].mxu0
  %v1713 = vadd.f32 0.0, %v1712
  %v1714 = vpop.f32.mrb[0].mxu0
  %v1715 = vadd.f32 0.0, %v1714
  %1716 = vmatprep.mubr.f32.mxu0 0.0
  %1717 = vmatmul.mubr.f32.gmra.mrb[0].mxu0 %v1500
  %v1718 = vpop.f32.mrb[0].mxu0
  %v1719 = vadd.f32 0.0, %v1718
  %v1720 = vpop.f32.mrb[0].mxu0
  %v1721 = vadd.f32 0.0, %v1720
  %1722 = vmatprep.mubr.f32.mxu0 0.0
  %1723 = vmatmul.mubr.f32.gmra.mrb[0].mxu0 %v1503
  %v1724 = vpop.f32.mrb[0].mxu0
  %v1725 = vadd.f32 0.0, %v1724
  %v1726 = vpop.f32.mrb[0].mxu0
  %v1727 = vadd.f32 0.0, %v1726
  %1728 = vmatprep.mubr.f32.mxu0 0.0
  %1729 = vmatmul.mubr.f32.gmra.mrb[0].mxu0 %v1506
  %v1730 = vpop.f32.mrb[0].mxu0
  %v1731 = vadd.f32 0.0, %v1730
  %v1732 = vpop.f32.mrb[0].mxu0
  %v1733 = vadd.f32 0.0, %v1732
  %1734 = vmatprep.mubr.f32.mxu0 0.0
  %1735 = vmatmul.mubr.f32.gmra.mrb[0].mxu0 %v1509
  %v1736 = vpop.f32.mrb[0].mxu0
  %v1737 = vadd.f32 0.0, %v1736
  %v1738 = vpop.f32.mrb[0].mxu0
  %v1739 = vadd.f32 0.0, %v1738
  %1740 = vmatprep.mubr.f32.mxu0 0.0
  %1741 = vmatmul.mubr.f32.gmra.mrb[0].mxu0 %v1512
  %v1742 = vpop.f32.mrb[0].mxu0
  %v1743 = vadd.f32 0.0, %v1742
  %v1744 = vpop.f32.mrb[0].mxu0
  %v1745 = vadd.f32 0.0, %v1744
  %1746 = vmatprep.mubr.f32.mxu0 0.0
  %1747 = vmatmul.mubr.f32.gmra.mrb[0].mxu0 %v1515
  %v1748 = vpop.f32.mrb[0].mxu0
  %v1749 = vadd.f32 0.0, %v1748
  %v1750 = vpop.f32.mrb[0].mxu0
  %v1751 = vadd.f32 0.0, %v1750
  %1752 = vmatprep.mubr.f32.mxu0 0.0
  %1753 = vmatmul.mubr.f32.gmra.mrb[0].mxu0 %v1518
  %v1754 = vpop.f32.mrb[0].mxu0
  %v1755 = vadd.f32 0.0, %v1754
  %v1756 = vpop.f32.mrb[0].mxu0
  %v1757 = vadd.f32 0.0, %v1756
  %1758 = vmatprep.mubr.f32.mxu0 0.0
  %1759 = vmatmul.mubr.f32.gmra.mrb[0].mxu0 %v1521
  %v1760 = vpop.f32.mrb[0].mxu0
  %v1761 = vadd.f32 0.0, %v1760
  %v1762 = vpop.f32.mrb[0].mxu0
  %v1763 = vadd.f32 0.0, %v1762
  %1764 = vmatprep.mubr.f32.mxu0 0.0
  %1765 = vmatmul.mubr.f32.gmra.mrb[0].mxu0 %v1524
  %v1766 = vpop.f32.mrb[0].mxu0
  %v1767 = vadd.f32 0.0, %v1766
  %v1768 = vpop.f32.mrb[0].mxu0
  %v1769 = vadd.f32 0.0, %v1768
  %1770 = vmatprep.mubr.f32.mxu0 0.0
  %1771 = vmatmul.mubr.f32.gmra.mrb[0].mxu0 %v1527
  %v1772 = vpop.f32.mrb[0].mxu0
  %v1773 = vadd.f32 0.0, %v1772
  %v1774 = vpop.f32.mrb[0].mxu0
  %v1775 = vadd.f32 0.0, %v1774
  %1776 = vmatprep.mubr.f32.mxu0 0.0
  %1777 = vmatmul.mubr.f32.gmra.mrb[0].mxu0 %v1530
  %v1778 = vpop.f32.mrb[0].mxu0
  %v1779 = vadd.f32 0.0, %v1778
  %v1780 = vpop.f32.mrb[0].mxu0
  %v1781 = vadd.f32 0.0, %v1780
  %1782 = vmatprep.mubr.f32.mxu0 0.0
  %1783 = vmatmul.mubr.f32.gmra.mrb[0].mxu0 %v1533
  %v1784 = vpop.f32.mrb[0].mxu0
  %v1785 = vadd.f32 0.0, %v1784
  %v1786 = vpop.f32.mrb[0].mxu0
  %v1787 = vadd.f32 0.0, %v1786
  %1788 = vmatprep.mubr.f32.mxu0 0.0
  %1789 = vmatmul.mubr.f32.gmra.mrb[0].mxu0 %v1536
  %v1790 = vpop.f32.mrb[0].mxu0
  %v1791 = vadd.f32 0.0, %v1790
  %v1792 = vpop.f32.mrb[0].mxu0
  %v1793 = vadd.f32 0.0, %v1792
  %1794 = vdwg.mxu0
  %v1795 = vadd.f32 %v1321, %v1605
  %v1796 = vadd.f32 %v1322, %v1607
  %v1797 = vadd.f32 %v1323, %v1611
  %v1798 = vadd.f32 %v1324, %v1613
  %v1799 = vadd.f32 %v1325, %v1617
  %v1800 = vadd.f32 %v1326, %v1619
  %v1801 = vadd.f32 %v1327, %v1623
  %v1802 = vadd.f32 %v1328, %v1625
  %v1803 = vadd.f32 %v1329, %v1629
  %v1804 = vadd.f32 %v1330, %v1631
  %v1805 = vadd.f32 %v1331, %v1635
  %v1806 = vadd.f32 %v1332, %v1637
  %v1807 = vadd.f32 %v1333, %v1641
  %v1808 = vadd.f32 %v1334, %v1643
  %v1809 = vadd.f32 %v1335, %v1647
  %v1810 = vadd.f32 %v1336, %v1649
  %v1811 = vadd.f32 %v1337, %v1653
  %v1812 = vadd.f32 %v1338, %v1655
  %v1813 = vadd.f32 %v1339, %v1659
  %v1814 = vadd.f32 %v1340, %v1661
  %v1815 = vadd.f32 %v1341, %v1665
  %v1816 = vadd.f32 %v1342, %v1667
  %v1817 = vadd.f32 %v1343, %v1671
  %v1818 = vadd.f32 %v1344, %v1673
  %v1819 = vadd.f32 %v1345, %v1677
  %v1820 = vadd.f32 %v1346, %v1679
  %v1821 = vadd.f32 %v1347, %v1683
  %v1822 = vadd.f32 %v1348, %v1685
  %v1823 = vadd.f32 %v1349, %v1689
  %v1824 = vadd.f32 %v1350, %v1691
  %v1825 = vadd.f32 %v1351, %v1695
  %v1826 = vadd.f32 %v1352, %v1697
  %v1827 = vadd.f32 %v1353, %v1701
  %v1828 = vadd.f32 %v1354, %v1703
  %v1829 = vadd.f32 %v1355, %v1707
  %v1830 = vadd.f32 %v1356, %v1709
  %v1831 = vadd.f32 %v1357, %v1713
  %v1832 = vadd.f32 %v1358, %v1715
  %v1833 = vadd.f32 %v1359, %v1719
  %v1834 = vadd.f32 %v1360, %v1721
  %v1835 = vadd.f32 %v1361, %v1725
  %v1836 = vadd.f32 %v1362, %v1727
  %v1837 = vadd.f32 %v1363, %v1731
  %v1838 = vadd.f32 %v1364, %v1733
  %v1839 = vadd.f32 %v1365, %v1737
  %v1840 = vadd.f32 %v1366, %v1739
  %v1841 = vadd.f32 %v1367, %v1743
  %v1842 = vadd.f32 %v1368, %v1745
  %v1843 = vadd.f32 %v1369, %v1749
  %v1844 = vadd.f32 %v1370, %v1751
  %v1845 = vadd.f32 %v1371, %v1755
  %v1846 = vadd.f32 %v1372, %v1757
  %v1847 = vadd.f32 %v1373, %v1761
  %v1848 = vadd.f32 %v1374, %v1763
  %v1849 = vadd.f32 %v1375, %v1767
  %v1850 = vadd.f32 %v1376, %v1769
  %v1851 = vadd.f32 %v1377, %v1773
  %v1852 = vadd.f32 %v1378, %v1775
  %v1853 = vadd.f32 %v1379, %v1779
  %v1854 = vadd.f32 %v1380, %v1781
  %v1855 = vadd.f32 %v1381, %v1785
  %v1856 = vadd.f32 %v1382, %v1787
  %v1857 = vadd.f32 %v1383, %v1791
  %v1858 = vadd.f32 %v1384, %v1793
  %v1859 = vld [vmem:[#allocation2 + $0x4] sm:$0xff]
  %v1860 = vld [vmem:[#allocation2 + $0xc] sm:$0xff]
  %v1861 = vld [vmem:[#allocation2 + $0x14] sm:$0xff]
  %v1862 = vld [vmem:[#allocation2 + $0x1c] sm:$0xff]
  %v1863 = vld [vmem:[#allocation2 + $0x24] sm:$0xff]
  %v1864 = vld [vmem:[#allocation2 + $0x2c] sm:$0xff]
  %v1865 = vld [vmem:[#allocation2 + $0x34] sm:$0xff]
  %v1866 = vld [vmem:[#allocation2 + $0x3c] sm:$0xff]
  %v1867 = vld [vmem:[#allocation2 + $0x44] sm:$0xff]
  %v1868 = vld [vmem:[#allocation2 + $0x4c] sm:$0xff]
  %v1869 = vld [vmem:[#allocation2 + $0x54] sm:$0xff]
  %v1870 = vld [vmem:[#allocation2 + $0x5c] sm:$0xff]
  %v1871 = vld [vmem:[#allocation2 + $0x64] sm:$0xff]
  %v1872 = vld [vmem:[#allocation2 + $0x6c] sm:$0xff]
  %v1873 = vld [vmem:[#allocation2 + $0x74] sm:$0xff]
  %v1874 = vld [vmem:[#allocation2 + $0x7c] sm:$0xff]
  %v1875 = vld [vmem:[#allocation2 + $0x84] sm:$0xff]
  %v1876 = vld [vmem:[#allocation2 + $0x8c] sm:$0xff]
  %v1877 = vld [vmem:[#allocation2 + $0x94] sm:$0xff]
  %v1878 = vld [vmem:[#allocation2 + $0x9c] sm:$0xff]
  %v1879 = vld [vmem:[#allocation2 + $0xa4] sm:$0xff]
  %v1880 = vld [vmem:[#allocation2 + $0xac] sm:$0xff]
  %v1881 = vld [vmem:[#allocation2 + $0xb4] sm:$0xff]
  %v1882 = vld [vmem:[#allocation2 + $0xbc] sm:$0xff]
  %v1883 = vld [vmem:[#allocation2 + $0xc4] sm:$0xff]
  %v1884 = vld [vmem:[#allocation2 + $0xcc] sm:$0xff]
  %v1885 = vld [vmem:[#allocation2 + $0xd4] sm:$0xff]
  %v1886 = vld [vmem:[#allocation2 + $0xdc] sm:$0xff]
  %v1887 = vld [vmem:[#allocation2 + $0xe4] sm:$0xff]
  %v1888 = vld [vmem:[#allocation2 + $0xec] sm:$0xff]
  %v1889 = vld [vmem:[#allocation2 + $0xf4] sm:$0xff]
  %v1890 = vld [vmem:[#allocation2 + $0xfc] sm:$0xff]
  %s1891 = scalar_lea.vmem %s1, 768
  %v1892 = vld [vmem:[%s1891] sm:$0xff]
  %v1893 = vld [vmem:[%s1891 + $0x8] sm:$0xff]
  %v1894 = vld [vmem:[%s1891 + $0x10] sm:$0xff]
  %v1895 = vld [vmem:[%s1891 + $0x18] sm:$0xff]
  %v1896 = vld [vmem:[%s1891 + $0x20] sm:$0xff]
  %v1897 = vld [vmem:[%s1891 + $0x28] sm:$0xff]
  %v1898 = vld [vmem:[%s1891 + $0x30] sm:$0xff]
  %v1899 = vld [vmem:[%s1891 + $0x38] sm:$0xff]
  %v1900 = vld [vmem:[%s1891 + $0x40] sm:$0xff]
  %v1901 = vld [vmem:[%s1891 + $0x48] sm:$0xff]
  %v1902 = vld [vmem:[%s1891 + $0x50] sm:$0xff]
  %v1903 = vld [vmem:[%s1891 + $0x58] sm:$0xff]
  %v1904 = vld [vmem:[%s1891 + $0x60] sm:$0xff]
  %v1905 = vld [vmem:[%s1891 + $0x68] sm:$0xff]
  %v1906 = vld [vmem:[%s1891 + $0x70] sm:$0xff]
  %v1907 = vld [vmem:[%s1891 + $0x78] sm:$0xff]
  %v1908 = vld [vmem:[%s1891 + $0x80] sm:$0xff]
  %v1909 = vld [vmem:[%s1891 + $0x88] sm:$0xff]
  %v1910 = vld [vmem:[%s1891 + $0x90] sm:$0xff]
  %v1911 = vld [vmem:[%s1891 + $0x98] sm:$0xff]
  %v1912 = vld [vmem:[%s1891 + $0xa0] sm:$0xff]
  %v1913 = vld [vmem:[%s1891 + $0xa8] sm:$0xff]
  %v1914 = vld [vmem:[%s1891 + $0xb0] sm:$0xff]
  %v1915 = vld [vmem:[%s1891 + $0xb8] sm:$0xff]
  %v1917 = vsel %vm58, %v1859, 0
  %v1920 = vsel %vm58, %v1860, 0
  %v1923 = vsel %vm58, %v1861, 0
  %v1926 = vsel %vm58, %v1862, 0
  %v1929 = vsel %vm58, %v1863, 0
  %v1932 = vsel %vm58, %v1864, 0
  %v1935 = vsel %vm58, %v1865, 0
  %v1938 = vsel %vm58, %v1866, 0
  %v1941 = vsel %vm58, %v1867, 0
  %v1944 = vsel %vm58, %v1868, 0
  %v1947 = vsel %vm58, %v1869, 0
  %v1950 = vsel %vm58, %v1870, 0
  %v1953 = vsel %vm58, %v1871, 0
  %v1956 = vsel %vm58, %v1872, 0
  %v1959 = vsel %vm58, %v1873, 0
  %v1962 = vsel %vm58, %v1874, 0
  %v1965 = vsel %vm58, %v1875, 0
  %v1968 = vsel %vm58, %v1876, 0
  %v1971 = vsel %vm58, %v1877, 0
  %v1974 = vsel %vm58, %v1878, 0
  %v1977 = vsel %vm58, %v1879, 0
  %v1980 = vsel %vm58, %v1880, 0
  %v1983 = vsel %vm58, %v1881, 0
  %v1986 = vsel %vm58, %v1882, 0
  %v1989 = vsel %vm58, %v1883, 0
  %v1992 = vsel %vm58, %v1884, 0
  %v1995 = vsel %vm58, %v1885, 0
  %v1998 = vsel %vm58, %v1886, 0
  %v2001 = vsel %vm58, %v1887, 0
  %v2004 = vsel %vm58, %v1888, 0
  %v2007 = vsel %vm58, %v1889, 0
  %v2010 = vsel %vm58, %v1890, 0
  %2012 = vmatprep.subr.mxu0 %v1893
  %2013 = vmatpush1.msra.mxu0 %v1892
  %2014 = vmatprep.subr.mxu0 %v1895
  %2015 = vmatpush1.msra.mxu0 %v1894
  %2016 = vmatprep.subr.mxu0 %v1897
  %2017 = vmatpush1.msra.mxu0 %v1896
  %2018 = vmatprep.subr.mxu0 %v1899
  %2019 = vmatpush1.msra.mxu0 %v1898
  %2020 = vmatprep.subr.mxu0 %v1901
  %2021 = vmatpush1.msra.mxu0 %v1900
  %2022 = vmatprep.subr.mxu0 %v1903
  %2023 = vmatpush1.msra.mxu0 %v1902
  %2024 = vmatprep.subr.mxu0 %v1905
  %2025 = vmatpush1.msra.mxu0 %v1904
  %2026 = vmatprep.subr.mxu0 %v1907
  %2027 = vmatpush1.msra.mxu0 %v1906
  %2028 = vmatprep.subr.mxu0 %v1909
  %2029 = vmatpush1.msra.mxu0 %v1908
  %2030 = vmatprep.subr.mxu0 %v1911
  %2031 = vmatpush1.msra.mxu0 %v1910
  %2032 = vmatprep.subr.mxu0 %v1913
  %2033 = vmatpush1.msra.mxu0 %v1912
  %2034 = vmatprep.subr.mxu0 %v1915
  %2035 = vmatpush1.msra.mxu0 %v1914
  %2036 = vmatprep.subr.mxu0 0.0
  %2037 = vmatpush1.msra.mxu0 0.0
  %2038 = vmatprep.subr.mxu0 0.0
  %2039 = vmatpush1.msra.mxu0 0.0
  %2040 = vmatprep.subr.mxu0 0.0
  %2041 = vmatpush1.msra.mxu0 0.0
  %2042 = vmatprep.subr.mxu0 0.0
  %2043 = vmatpush1.msra.mxu0 0.0
  %2044 = vmatprep.subr.mxu0 0.0
  %2045 = vmatpush1.msra.mxu0 0.0
  %2046 = vmatprep.subr.mxu0 0.0
  %2047 = vmatpush1.msra.mxu0 0.0
  %2048 = vmatprep.subr.mxu0 0.0
  %2049 = vmatpush1.msra.mxu0 0.0
  %2050 = vmatprep.subr.mxu0 0.0
  %2051 = vmatpush1.msra.mxu0 0.0
  %2052 = vmatprep.subr.mxu0 0.0
  %2053 = vmatpush1.msra.mxu0 0.0
  %2054 = vmatprep.subr.mxu0 0.0
  %2055 = vmatpush1.msra.mxu0 0.0
  %2056 = vmatprep.subr.mxu0 0.0
  %2057 = vmatpush1.msra.mxu0 0.0
  %2058 = vmatprep.subr.mxu0 0.0
  %2059 = vmatpush1.msra.mxu0 0.0
  %2060 = vmatprep.subr.mxu0 0.0
  %2061 = vmatpush1.msra.mxu0 0.0
  %2062 = vmatprep.subr.mxu0 0.0
  %2063 = vmatpush1.msra.mxu0 0.0
  %2064 = vmatprep.subr.mxu0 0.0
  %2065 = vmatpush1.msra.mxu0 0.0
  %2066 = vmatprep.subr.mxu0 0.0
  %2067 = vmatpush1.msra.mxu0 0.0
  %2068 = vmatprep.subr.mxu0 0.0
  %2069 = vmatpush1.msra.mxu0 0.0
  %2070 = vmatprep.subr.mxu0 0.0
  %2071 = vmatpush1.msra.mxu0 0.0
  %2072 = vmatprep.subr.mxu0 0.0
  %2073 = vmatpush1.msra.mxu0 0.0
  %2074 = vmatprep.subr.mxu0 0.0
  %2075 = vmatpush1.msra.mxu0 0.0
  %2076 = vmatprep.mubr.f32.mxu0 0.0
  %2077 = vmatmul.mubr.f32.gmra.mrb[0].mxu0 %v1917
  %v2078 = vpop.f32.mrb[0].mxu0
  %v2079 = vadd.f32 0.0, %v2078
  %v2080 = vpop.f32.mrb[0].mxu0
  %v2081 = vadd.f32 0.0, %v2080
  %2082 = vmatprep.mubr.f32.mxu0 0.0
  %2083 = vmatmul.mubr.f32.gmra.mrb[0].mxu0 %v1920
  %v2084 = vpop.f32.mrb[0].mxu0
  %v2085 = vadd.f32 0.0, %v2084
  %v2086 = vpop.f32.mrb[0].mxu0
  %v2087 = vadd.f32 0.0, %v2086
  %2088 = vmatprep.mubr.f32.mxu0 0.0
  %2089 = vmatmul.mubr.f32.gmra.mrb[0].mxu0 %v1923
  %v2090 = vpop.f32.mrb[0].mxu0
  %v2091 = vadd.f32 0.0, %v2090
  %v2092 = vpop.f32.mrb[0].mxu0
  %v2093 = vadd.f32 0.0, %v2092
  %2094 = vmatprep.mubr.f32.mxu0 0.0
  %2095 = vmatmul.mubr.f32.gmra.mrb[0].mxu0 %v1926
  %v2096 = vpop.f32.mrb[0].mxu0
  %v2097 = vadd.f32 0.0, %v2096
  %v2098 = vpop.f32.mrb[0].mxu0
  %v2099 = vadd.f32 0.0, %v2098
  %2100 = vmatprep.mubr.f32.mxu0 0.0
  %2101 = vmatmul.mubr.f32.gmra.mrb[0].mxu0 %v1929
  %v2102 = vpop.f32.mrb[0].mxu0
  %v2103 = vadd.f32 0.0, %v2102
  %v2104 = vpop.f32.mrb[0].mxu0
  %v2105 = vadd.f32 0.0, %v2104
  %2106 = vmatprep.mubr.f32.mxu0 0.0
  %2107 = vmatmul.mubr.f32.gmra.mrb[0].mxu0 %v1932
  %v2108 = vpop.f32.mrb[0].mxu0
  %v2109 = vadd.f32 0.0, %v2108
  %v2110 = vpop.f32.mrb[0].mxu0
  %v2111 = vadd.f32 0.0, %v2110
  %2112 = vmatprep.mubr.f32.mxu0 0.0
  %2113 = vmatmul.mubr.f32.gmra.mrb[0].mxu0 %v1935
  %v2114 = vpop.f32.mrb[0].mxu0
  %v2115 = vadd.f32 0.0, %v2114
  %v2116 = vpop.f32.mrb[0].mxu0
  %v2117 = vadd.f32 0.0, %v2116
  %2118 = vmatprep.mubr.f32.mxu0 0.0
  %2119 = vmatmul.mubr.f32.gmra.mrb[0].mxu0 %v1938
  %v2120 = vpop.f32.mrb[0].mxu0
  %v2121 = vadd.f32 0.0, %v2120
  %v2122 = vpop.f32.mrb[0].mxu0
  %v2123 = vadd.f32 0.0, %v2122
  %2124 = vmatprep.mubr.f32.mxu0 0.0
  %2125 = vmatmul.mubr.f32.gmra.mrb[0].mxu0 %v1941
  %v2126 = vpop.f32.mrb[0].mxu0
  %v2127 = vadd.f32 0.0, %v2126
  %v2128 = vpop.f32.mrb[0].mxu0
  %v2129 = vadd.f32 0.0, %v2128
  %2130 = vmatprep.mubr.f32.mxu0 0.0
  %2131 = vmatmul.mubr.f32.gmra.mrb[0].mxu0 %v1944
  %v2132 = vpop.f32.mrb[0].mxu0
  %v2133 = vadd.f32 0.0, %v2132
  %v2134 = vpop.f32.mrb[0].mxu0
  %v2135 = vadd.f32 0.0, %v2134
  %2136 = vmatprep.mubr.f32.mxu0 0.0
  %2137 = vmatmul.mubr.f32.gmra.mrb[0].mxu0 %v1947
  %v2138 = vpop.f32.mrb[0].mxu0
  %v2139 = vadd.f32 0.0, %v2138
  %v2140 = vpop.f32.mrb[0].mxu0
  %v2141 = vadd.f32 0.0, %v2140
  %2142 = vmatprep.mubr.f32.mxu0 0.0
  %2143 = vmatmul.mubr.f32.gmra.mrb[0].mxu0 %v1950
  %v2144 = vpop.f32.mrb[0].mxu0
  %v2145 = vadd.f32 0.0, %v2144
  %v2146 = vpop.f32.mrb[0].mxu0
  %v2147 = vadd.f32 0.0, %v2146
  %2148 = vmatprep.mubr.f32.mxu0 0.0
  %2149 = vmatmul.mubr.f32.gmra.mrb[0].mxu0 %v1953
  %v2150 = vpop.f32.mrb[0].mxu0
  %v2151 = vadd.f32 0.0, %v2150
  %v2152 = vpop.f32.mrb[0].mxu0
  %v2153 = vadd.f32 0.0, %v2152
  %2154 = vmatprep.mubr.f32.mxu0 0.0
  %2155 = vmatmul.mubr.f32.gmra.mrb[0].mxu0 %v1956
  %v2156 = vpop.f32.mrb[0].mxu0
  %v2157 = vadd.f32 0.0, %v2156
  %v2158 = vpop.f32.mrb[0].mxu0
  %v2159 = vadd.f32 0.0, %v2158
  %2160 = vmatprep.mubr.f32.mxu0 0.0
  %2161 = vmatmul.mubr.f32.gmra.mrb[0].mxu0 %v1959
  %v2162 = vpop.f32.mrb[0].mxu0
  %v2163 = vadd.f32 0.0, %v2162
  %v2164 = vpop.f32.mrb[0].mxu0
  %v2165 = vadd.f32 0.0, %v2164
  %2166 = vmatprep.mubr.f32.mxu0 0.0
  %2167 = vmatmul.mubr.f32.gmra.mrb[0].mxu0 %v1962
  %v2168 = vpop.f32.mrb[0].mxu0
  %v2169 = vadd.f32 0.0, %v2168
  %v2170 = vpop.f32.mrb[0].mxu0
  %v2171 = vadd.f32 0.0, %v2170
  %2172 = vmatprep.mubr.f32.mxu0 0.0
  %2173 = vmatmul.mubr.f32.gmra.mrb[0].mxu0 %v1965
  %v2174 = vpop.f32.mrb[0].mxu0
  %v2175 = vadd.f32 0.0, %v2174
  %v2176 = vpop.f32.mrb[0].mxu0
  %v2177 = vadd.f32 0.0, %v2176
  %2178 = vmatprep.mubr.f32.mxu0 0.0
  %2179 = vmatmul.mubr.f32.gmra.mrb[0].mxu0 %v1968
  %v2180 = vpop.f32.mrb[0].mxu0
  %v2181 = vadd.f32 0.0, %v2180
  %v2182 = vpop.f32.mrb[0].mxu0
  %v2183 = vadd.f32 0.0, %v2182
  %2184 = vmatprep.mubr.f32.mxu0 0.0
  %2185 = vmatmul.mubr.f32.gmra.mrb[0].mxu0 %v1971
  %v2186 = vpop.f32.mrb[0].mxu0
  %v2187 = vadd.f32 0.0, %v2186
  %v2188 = vpop.f32.mrb[0].mxu0
  %v2189 = vadd.f32 0.0, %v2188
  %2190 = vmatprep.mubr.f32.mxu0 0.0
  %2191 = vmatmul.mubr.f32.gmra.mrb[0].mxu0 %v1974
  %v2192 = vpop.f32.mrb[0].mxu0
  %v2193 = vadd.f32 0.0, %v2192
  %v2194 = vpop.f32.mrb[0].mxu0
  %v2195 = vadd.f32 0.0, %v2194
  %2196 = vmatprep.mubr.f32.mxu0 0.0
  %2197 = vmatmul.mubr.f32.gmra.mrb[0].mxu0 %v1977
  %v2198 = vpop.f32.mrb[0].mxu0
  %v2199 = vadd.f32 0.0, %v2198
  %v2200 = vpop.f32.mrb[0].mxu0
  %v2201 = vadd.f32 0.0, %v2200
  %2202 = vmatprep.mubr.f32.mxu0 0.0
  %2203 = vmatmul.mubr.f32.gmra.mrb[0].mxu0 %v1980
  %v2204 = vpop.f32.mrb[0].mxu0
  %v2205 = vadd.f32 0.0, %v2204
  %v2206 = vpop.f32.mrb[0].mxu0
  %v2207 = vadd.f32 0.0, %v2206
  %2208 = vmatprep.mubr.f32.mxu0 0.0
  %2209 = vmatmul.mubr.f32.gmra.mrb[0].mxu0 %v1983
  %v2210 = vpop.f32.mrb[0].mxu0
  %v2211 = vadd.f32 0.0, %v2210
  %v2212 = vpop.f32.mrb[0].mxu0
  %v2213 = vadd.f32 0.0, %v2212
  %2214 = vmatprep.mubr.f32.mxu0 0.0
  %2215 = vmatmul.mubr.f32.gmra.mrb[0].mxu0 %v1986
  %v2216 = vpop.f32.mrb[0].mxu0
  %v2217 = vadd.f32 0.0, %v2216
  %v2218 = vpop.f32.mrb[0].mxu0
  %v2219 = vadd.f32 0.0, %v2218
  %2220 = vmatprep.mubr.f32.mxu0 0.0
  %2221 = vmatmul.mubr.f32.gmra.mrb[0].mxu0 %v1989
  %v2222 = vpop.f32.mrb[0].mxu0
  %v2223 = vadd.f32 0.0, %v2222
  %v2224 = vpop.f32.mrb[0].mxu0
  %v2225 = vadd.f32 0.0, %v2224
  %2226 = vmatprep.mubr.f32.mxu0 0.0
  %2227 = vmatmul.mubr.f32.gmra.mrb[0].mxu0 %v1992
  %v2228 = vpop.f32.mrb[0].mxu0
  %v2229 = vadd.f32 0.0, %v2228
  %v2230 = vpop.f32.mrb[0].mxu0
  %v2231 = vadd.f32 0.0, %v2230
  %2232 = vmatprep.mubr.f32.mxu0 0.0
  %2233 = vmatmul.mubr.f32.gmra.mrb[0].mxu0 %v1995
  %v2234 = vpop.f32.mrb[0].mxu0
  %v2235 = vadd.f32 0.0, %v2234
  %v2236 = vpop.f32.mrb[0].mxu0
  %v2237 = vadd.f32 0.0, %v2236
  %2238 = vmatprep.mubr.f32.mxu0 0.0
  %2239 = vmatmul.mubr.f32.gmra.mrb[0].mxu0 %v1998
  %v2240 = vpop.f32.mrb[0].mxu0
  %v2241 = vadd.f32 0.0, %v2240
  %v2242 = vpop.f32.mrb[0].mxu0
  %v2243 = vadd.f32 0.0, %v2242
  %2244 = vmatprep.mubr.f32.mxu0 0.0
  %2245 = vmatmul.mubr.f32.gmra.mrb[0].mxu0 %v2001
  %v2246 = vpop.f32.mrb[0].mxu0
  %v2247 = vadd.f32 0.0, %v2246
  %v2248 = vpop.f32.mrb[0].mxu0
  %v2249 = vadd.f32 0.0, %v2248
  %2250 = vmatprep.mubr.f32.mxu0 0.0
  %2251 = vmatmul.mubr.f32.gmra.mrb[0].mxu0 %v2004
  %v2252 = vpop.f32.mrb[0].mxu0
  %v2253 = vadd.f32 0.0, %v2252
  %v2254 = vpop.f32.mrb[0].mxu0
  %v2255 = vadd.f32 0.0, %v2254
  %2256 = vmatprep.mubr.f32.mxu0 0.0
  %2257 = vmatmul.mubr.f32.gmra.mrb[0].mxu0 %v2007
  %v2258 = vpop.f32.mrb[0].mxu0
  %v2259 = vadd.f32 0.0, %v2258
  %v2260 = vpop.f32.mrb[0].mxu0
  %v2261 = vadd.f32 0.0, %v2260
  %2262 = vmatprep.mubr.f32.mxu0 0.0
  %2263 = vmatmul.mubr.f32.gmra.mrb[0].mxu0 %v2010
  %v2264 = vpop.f32.mrb[0].mxu0
  %v2265 = vadd.f32 0.0, %v2264
  %v2266 = vpop.f32.mrb[0].mxu0
  %v2267 = vadd.f32 0.0, %v2266
  %2268 = vdwg.mxu0
  %v2269 = vadd.f32 %v1795, %v2079
  %v2270 = vadd.f32 %v1796, %v2081
  %v2271 = vadd.f32 %v1797, %v2085
  %v2272 = vadd.f32 %v1798, %v2087
  %v2273 = vadd.f32 %v1799, %v2091
  %v2274 = vadd.f32 %v1800, %v2093
  %v2275 = vadd.f32 %v1801, %v2097
  %v2276 = vadd.f32 %v1802, %v2099
  %v2277 = vadd.f32 %v1803, %v2103
  %v2278 = vadd.f32 %v1804, %v2105
  %v2279 = vadd.f32 %v1805, %v2109
  %v2280 = vadd.f32 %v1806, %v2111
  %v2281 = vadd.f32 %v1807, %v2115
  %v2282 = vadd.f32 %v1808, %v2117
  %v2283 = vadd.f32 %v1809, %v2121
  %v2284 = vadd.f32 %v1810, %v2123
  %v2285 = vadd.f32 %v1811, %v2127
  %v2286 = vadd.f32 %v1812, %v2129
  %v2287 = vadd.f32 %v1813, %v2133
  %v2288 = vadd.f32 %v1814, %v2135
  %v2289 = vadd.f32 %v1815, %v2139
  %v2290 = vadd.f32 %v1816, %v2141
  %v2291 = vadd.f32 %v1817, %v2145
  %v2292 = vadd.f32 %v1818, %v2147
  %v2293 = vadd.f32 %v1819, %v2151
  %v2294 = vadd.f32 %v1820, %v2153
  %v2295 = vadd.f32 %v1821, %v2157
  %v2296 = vadd.f32 %v1822, %v2159
  %v2297 = vadd.f32 %v1823, %v2163
  %v2298 = vadd.f32 %v1824, %v2165
  %v2299 = vadd.f32 %v1825, %v2169
  %v2300 = vadd.f32 %v1826, %v2171
  %v2301 = vadd.f32 %v1827, %v2175
  %v2302 = vadd.f32 %v1828, %v2177
  %v2303 = vadd.f32 %v1829, %v2181
  %v2304 = vadd.f32 %v1830, %v2183
  %v2305 = vadd.f32 %v1831, %v2187
  %v2306 = vadd.f32 %v1832, %v2189
  %v2307 = vadd.f32 %v1833, %v2193
  %v2308 = vadd.f32 %v1834, %v2195
  %v2309 = vadd.f32 %v1835, %v2199
  %v2310 = vadd.f32 %v1836, %v2201
  %v2311 = vadd.f32 %v1837, %v2205
  %v2312 = vadd.f32 %v1838, %v2207
  %v2313 = vadd.f32 %v1839, %v2211
  %v2314 = vadd.f32 %v1840, %v2213
  %v2315 = vadd.f32 %v1841, %v2217
  %v2316 = vadd.f32 %v1842, %v2219
  %v2317 = vadd.f32 %v1843, %v2223
  %v2318 = vadd.f32 %v1844, %v2225
  %v2319 = vadd.f32 %v1845, %v2229
  %v2320 = vadd.f32 %v1846, %v2231
  %v2321 = vadd.f32 %v1847, %v2235
  %v2322 = vadd.f32 %v1848, %v2237
  %v2323 = vadd.f32 %v1849, %v2241
  %v2324 = vadd.f32 %v1850, %v2243
  %v2325 = vadd.f32 %v1851, %v2247
  %v2326 = vadd.f32 %v1852, %v2249
  %v2327 = vadd.f32 %v1853, %v2253
  %v2328 = vadd.f32 %v1854, %v2255
  %v2329 = vadd.f32 %v1855, %v2259
  %v2330 = vadd.f32 %v1856, %v2261
  %v2331 = vadd.f32 %v1857, %v2265
  %v2332 = vadd.f32 %v1858, %v2267
  %v2333 = vld [vmem:[%s2] sm:$0x3]
  %v2335 = vlaneseq
  %v2336 = vshrl.u32 %v2335, 7
  %v2337 = vsub.s32 0, %v2336
  %v2338 = vrot.slane %v2333, %v2337
  %v2339 = vlaneseq
  %v2340 = vshrl.u32 %v2339, 7
  %v2341 = vsub.s32 1, %v2340
  %v2342 = vrot.slane %v2333, %v2341
  %v2345 = vadd.f32 %v2269, %v2338
  %v2346 = vadd.f32 %v2270, %v2342
  %v2347 = vadd.f32 %v2271, %v2338
  %v2348 = vadd.f32 %v2272, %v2342
  %v2349 = vadd.f32 %v2273, %v2338
  %v2350 = vadd.f32 %v2274, %v2342
  %v2351 = vadd.f32 %v2275, %v2338
  %v2352 = vadd.f32 %v2276, %v2342
  %v2353 = vadd.f32 %v2277, %v2338
  %v2354 = vadd.f32 %v2278, %v2342
  %v2355 = vadd.f32 %v2279, %v2338
  %v2356 = vadd.f32 %v2280, %v2342
  %v2357 = vadd.f32 %v2281, %v2338
  %v2358 = vadd.f32 %v2282, %v2342
  %v2359 = vadd.f32 %v2283, %v2338
  %v2360 = vadd.f32 %v2284, %v2342
  %v2361 = vadd.f32 %v2285, %v2338
  %v2362 = vadd.f32 %v2286, %v2342
  %v2363 = vadd.f32 %v2287, %v2338
  %v2364 = vadd.f32 %v2288, %v2342
  %v2365 = vadd.f32 %v2289, %v2338
  %v2366 = vadd.f32 %v2290, %v2342
  %v2367 = vadd.f32 %v2291, %v2338
  %v2368 = vadd.f32 %v2292, %v2342
  %v2369 = vadd.f32 %v2293, %v2338
  %v2370 = vadd.f32 %v2294, %v2342
  %v2371 = vadd.f32 %v2295, %v2338
  %v2372 = vadd.f32 %v2296, %v2342
  %v2373 = vadd.f32 %v2297, %v2338
  %v2374 = vadd.f32 %v2298, %v2342
  %v2375 = vadd.f32 %v2299, %v2338
  %v2376 = vadd.f32 %v2300, %v2342
  %v2377 = vadd.f32 %v2301, %v2338
  %v2378 = vadd.f32 %v2302, %v2342
  %v2379 = vadd.f32 %v2303, %v2338
  %v2380 = vadd.f32 %v2304, %v2342
  %v2381 = vadd.f32 %v2305, %v2338
  %v2382 = vadd.f32 %v2306, %v2342
  %v2383 = vadd.f32 %v2307, %v2338
  %v2384 = vadd.f32 %v2308, %v2342
  %v2385 = vadd.f32 %v2309, %v2338
  %v2386 = vadd.f32 %v2310, %v2342
  %v2387 = vadd.f32 %v2311, %v2338
  %v2388 = vadd.f32 %v2312, %v2342
  %v2389 = vadd.f32 %v2313, %v2338
  %v2390 = vadd.f32 %v2314, %v2342
  %v2391 = vadd.f32 %v2315, %v2338
  %v2392 = vadd.f32 %v2316, %v2342
  %v2393 = vadd.f32 %v2317, %v2338
  %v2394 = vadd.f32 %v2318, %v2342
  %v2395 = vadd.f32 %v2319, %v2338
  %v2396 = vadd.f32 %v2320, %v2342
  %v2397 = vadd.f32 %v2321, %v2338
  %v2398 = vadd.f32 %v2322, %v2342
  %v2399 = vadd.f32 %v2323, %v2338
  %v2400 = vadd.f32 %v2324, %v2342
  %v2401 = vadd.f32 %v2325, %v2338
  %v2402 = vadd.f32 %v2326, %v2342
  %v2403 = vadd.f32 %v2327, %v2338
  %v2404 = vadd.f32 %v2328, %v2342
  %v2405 = vadd.f32 %v2329, %v2338
  %v2406 = vadd.f32 %v2330, %v2342
  %v2407 = vadd.f32 %v2331, %v2338
  %v2408 = vadd.f32 %v2332, %v2342
  %v2409 = vmax.f32 %v2345, 0.0
  %v2410 = vmax.f32 %v2346, 0.0
  %v2411 = vmax.f32 %v2347, 0.0
  %v2412 = vmax.f32 %v2348, 0.0
  %v2413 = vmax.f32 %v2349, 0.0
  %v2414 = vmax.f32 %v2350, 0.0
  %v2415 = vmax.f32 %v2351, 0.0
  %v2416 = vmax.f32 %v2352, 0.0
  %v2417 = vmax.f32 %v2353, 0.0
  %v2418 = vmax.f32 %v2354, 0.0
  %v2419 = vmax.f32 %v2355, 0.0
  %v2420 = vmax.f32 %v2356, 0.0
  %v2421 = vmax.f32 %v2357, 0.0
  %v2422 = vmax.f32 %v2358, 0.0
  %v2423 = vmax.f32 %v2359, 0.0
  %v2424 = vmax.f32 %v2360, 0.0
  %v2425 = vmax.f32 %v2361, 0.0
  %v2426 = vmax.f32 %v2362, 0.0
  %v2427 = vmax.f32 %v2363, 0.0
  %v2428 = vmax.f32 %v2364, 0.0
  %v2429 = vmax.f32 %v2365, 0.0
  %v2430 = vmax.f32 %v2366, 0.0
  %v2431 = vmax.f32 %v2367, 0.0
  %v2432 = vmax.f32 %v2368, 0.0
  %v2433 = vmax.f32 %v2369, 0.0
  %v2434 = vmax.f32 %v2370, 0.0
  %v2435 = vmax.f32 %v2371, 0.0
  %v2436 = vmax.f32 %v2372, 0.0
  %v2437 = vmax.f32 %v2373, 0.0
  %v2438 = vmax.f32 %v2374, 0.0
  %v2439 = vmax.f32 %v2375, 0.0
  %v2440 = vmax.f32 %v2376, 0.0
  %v2441 = vmax.f32 %v2377, 0.0
  %v2442 = vmax.f32 %v2378, 0.0
  %v2443 = vmax.f32 %v2379, 0.0
  %v2444 = vmax.f32 %v2380, 0.0
  %v2445 = vmax.f32 %v2381, 0.0
  %v2446 = vmax.f32 %v2382, 0.0
  %v2447 = vmax.f32 %v2383, 0.0
  %v2448 = vmax.f32 %v2384, 0.0
  %v2449 = vmax.f32 %v2385, 0.0
  %v2450 = vmax.f32 %v2386, 0.0
  %v2451 = vmax.f32 %v2387, 0.0
  %v2452 = vmax.f32 %v2388, 0.0
  %v2453 = vmax.f32 %v2389, 0.0
  %v2454 = vmax.f32 %v2390, 0.0
  %v2455 = vmax.f32 %v2391, 0.0
  %v2456 = vmax.f32 %v2392, 0.0
  %v2457 = vmax.f32 %v2393, 0.0
  %v2458 = vmax.f32 %v2394, 0.0
  %v2459 = vmax.f32 %v2395, 0.0
  %v2460 = vmax.f32 %v2396, 0.0
  %v2461 = vmax.f32 %v2397, 0.0
  %v2462 = vmax.f32 %v2398, 0.0
  %v2463 = vmax.f32 %v2399, 0.0
  %v2464 = vmax.f32 %v2400, 0.0
  %v2465 = vmax.f32 %v2401, 0.0
  %v2466 = vmax.f32 %v2402, 0.0
  %v2467 = vmax.f32 %v2403, 0.0
  %v2468 = vmax.f32 %v2404, 0.0
  %v2469 = vmax.f32 %v2405, 0.0
  %v2470 = vmax.f32 %v2406, 0.0
  %v2471 = vmax.f32 %v2407, 0.0
  %v2472 = vmax.f32 %v2408, 0.0
  %v2473 = vld [vmem:[%s3] sm:$0xff]
  %v2474 = vld [vmem:[%s3 + $0x8] sm:$0xff]
  %v2475 = vld [vmem:[%s3 + $0x10] sm:$0xff]
  %v2476 = vld [vmem:[%s3 + $0x18] sm:$0xff]
  %v2477 = vld [vmem:[%s3 + $0x20] sm:$0xff]
  %v2478 = vld [vmem:[%s3 + $0x28] sm:$0xff]
  %v2479 = vld [vmem:[%s3 + $0x30] sm:$0xff]
  %v2480 = vld [vmem:[%s3 + $0x38] sm:$0xff]
  %v2481 = vld [vmem:[%s3 + $0x40] sm:$0xff]
  %v2482 = vld [vmem:[%s3 + $0x48] sm:$0xff]
  %v2483 = vld [vmem:[%s3 + $0x50] sm:$0xff]
  %v2484 = vld [vmem:[%s3 + $0x58] sm:$0xff]
  %v2485 = vld [vmem:[%s3 + $0x60] sm:$0xff]
  %v2486 = vld [vmem:[%s3 + $0x68] sm:$0xff]
  %v2487 = vld [vmem:[%s3 + $0x70] sm:$0xff]
  %v2488 = vld [vmem:[%s3 + $0x78] sm:$0xff]
  %v2489 = vld [vmem:[%s3 + $0x80] sm:$0xff]
  %v2490 = vld [vmem:[%s3 + $0x88] sm:$0xff]
  %v2491 = vld [vmem:[%s3 + $0x90] sm:$0xff]
  %v2492 = vld [vmem:[%s3 + $0x98] sm:$0xff]
  %v2493 = vld [vmem:[%s3 + $0xa0] sm:$0xff]
  %vm2494 = vcmask 326656
  %v2496 = vsel %vm2494, %v2410, 0
  %v2499 = vsel %vm2494, %v2412, 0
  %v2502 = vsel %vm2494, %v2414, 0
  %v2505 = vsel %vm2494, %v2416, 0
  %v2508 = vsel %vm2494, %v2418, 0
  %v2511 = vsel %vm2494, %v2420, 0
  %v2514 = vsel %vm2494, %v2422, 0
  %v2517 = vsel %vm2494, %v2424, 0
  %v2520 = vsel %vm2494, %v2426, 0
  %v2523 = vsel %vm2494, %v2428, 0
  %v2526 = vsel %vm2494, %v2430, 0
  %v2529 = vsel %vm2494, %v2432, 0
  %v2532 = vsel %vm2494, %v2434, 0
  %v2535 = vsel %vm2494, %v2436, 0
  %v2538 = vsel %vm2494, %v2438, 0
  %v2541 = vsel %vm2494, %v2440, 0
  %v2544 = vsel %vm2494, %v2442, 0
  %v2547 = vsel %vm2494, %v2444, 0
  %v2550 = vsel %vm2494, %v2446, 0
  %v2553 = vsel %vm2494, %v2448, 0
  %v2556 = vsel %vm2494, %v2450, 0
  %v2559 = vsel %vm2494, %v2452, 0
  %v2562 = vsel %vm2494, %v2454, 0
  %v2565 = vsel %vm2494, %v2456, 0
  %v2568 = vsel %vm2494, %v2458, 0
  %v2571 = vsel %vm2494, %v2460, 0
  %v2574 = vsel %vm2494, %v2462, 0
  %v2577 = vsel %vm2494, %v2464, 0
  %v2580 = vsel %vm2494, %v2466, 0
  %v2583 = vsel %vm2494, %v2468, 0
  %v2586 = vsel %vm2494, %v2470, 0
  %v2589 = vsel %vm2494, %v2472, 0
  %2591 = vmatprep.subr.mxu0 0.0
  %2592 = vmatpush1.msra.mxu0 %v2473
  %2593 = vmatprep.subr.mxu0 0.0
  %2594 = vmatpush1.msra.mxu0 %v2474
  %2595 = vmatprep.subr.mxu0 0.0
  %2596 = vmatpush1.msra.mxu0 %v2475
  %2597 = vmatprep.subr.mxu0 0.0
  %2598 = vmatpush1.msra.mxu0 %v2476
  %2599 = vmatprep.subr.mxu0 0.0
  %2600 = vmatpush1.msra.mxu0 %v2477
  %2601 = vmatprep.subr.mxu0 0.0
  %2602 = vmatpush1.msra.mxu0 %v2478
  %2603 = vmatprep.subr.mxu0 0.0
  %2604 = vmatpush1.msra.mxu0 %v2479
  %2605 = vmatprep.subr.mxu0 0.0
  %2606 = vmatpush1.msra.mxu0 %v2480
  %2607 = vmatprep.subr.mxu0 0.0
  %2608 = vmatpush1.msra.mxu0 %v2481
  %2609 = vmatprep.subr.mxu0 0.0
  %2610 = vmatpush1.msra.mxu0 %v2482
  %2611 = vmatprep.subr.mxu0 0.0
  %2612 = vmatpush1.msra.mxu0 %v2483
  %2613 = vmatprep.subr.mxu0 0.0
  %2614 = vmatpush1.msra.mxu0 %v2484
  %2615 = vmatprep.subr.mxu0 0.0
  %2616 = vmatpush1.msra.mxu0 %v2485
  %2617 = vmatprep.subr.mxu0 0.0
  %2618 = vmatpush1.msra.mxu0 %v2486
  %2619 = vmatprep.subr.mxu0 0.0
  %2620 = vmatpush1.msra.mxu0 %v2487
  %2621 = vmatprep.subr.mxu0 0.0
  %2622 = vmatpush1.msra.mxu0 %v2488
  %2623 = vmatprep.subr.mxu0 0.0
  %2624 = vmatpush1.msra.mxu0 %v2489
  %2625 = vmatprep.subr.mxu0 0.0
  %2626 = vmatpush1.msra.mxu0 %v2490
  %2627 = vmatprep.subr.mxu0 0.0
  %2628 = vmatpush1.msra.mxu0 %v2491
  %2629 = vmatprep.subr.mxu0 0.0
  %2630 = vmatpush1.msra.mxu0 %v2492
  %2631 = vmatprep.subr.mxu0 0.0
  %2632 = vmatpush1.msra.mxu0 %v2493
  %2633 = vmatprep.subr.mxu0 0.0
  %2634 = vmatpush1.msra.mxu0 0.0
  %2635 = vmatprep.subr.mxu0 0.0
  %2636 = vmatpush1.msra.mxu0 0.0
  %2637 = vmatprep.subr.mxu0 0.0
  %2638 = vmatpush1.msra.mxu0 0.0
  %2639 = vmatprep.subr.mxu0 0.0
  %2640 = vmatpush1.msra.mxu0 0.0
  %2641 = vmatprep.subr.mxu0 0.0
  %2642 = vmatpush1.msra.mxu0 0.0
  %2643 = vmatprep.subr.mxu0 0.0
  %2644 = vmatpush1.msra.mxu0 0.0
  %2645 = vmatprep.subr.mxu0 0.0
  %2646 = vmatpush1.msra.mxu0 0.0
  %2647 = vmatprep.subr.mxu0 0.0
  %2648 = vmatpush1.msra.mxu0 0.0
  %2649 = vmatprep.subr.mxu0 0.0
  %2650 = vmatpush1.msra.mxu0 0.0
  %2651 = vmatprep.subr.mxu0 0.0
  %2652 = vmatpush1.msra.mxu0 0.0
  %2653 = vmatprep.subr.mxu0 0.0
  %2654 = vmatpush1.msra.mxu0 0.0
  %2655 = vmatprep.mubr.f32.mxu0 %v2496
  %2656 = vmatmul.mubr.f32.gmra.mrb[0].mxu0 %v2409
  %v2657 = vpop.f32.mrb[0].mxu0
  %v2658 = vadd.f32 0.0, %v2657
  %v2659 = vpop.f32.mrb[0].mxu0
  %2660 = vmatprep.mubr.f32.mxu0 %v2499
  %2661 = vmatmul.mubr.f32.gmra.mrb[0].mxu0 %v2411
  %v2662 = vpop.f32.mrb[0].mxu0
  %v2663 = vadd.f32 0.0, %v2662
  %v2664 = vpop.f32.mrb[0].mxu0
  %2665 = vmatprep.mubr.f32.mxu0 %v2502
  %2666 = vmatmul.mubr.f32.gmra.mrb[0].mxu0 %v2413
  %v2667 = vpop.f32.mrb[0].mxu0
  %v2668 = vadd.f32 0.0, %v2667
  %v2669 = vpop.f32.mrb[0].mxu0
  %2670 = vmatprep.mubr.f32.mxu0 %v2505
  %2671 = vmatmul.mubr.f32.gmra.mrb[0].mxu0 %v2415
  %v2672 = vpop.f32.mrb[0].mxu0
  %v2673 = vadd.f32 0.0, %v2672
  %v2674 = vpop.f32.mrb[0].mxu0
  %2675 = vmatprep.mubr.f32.mxu0 %v2508
  %2676 = vmatmul.mubr.f32.gmra.mrb[0].mxu0 %v2417
  %v2677 = vpop.f32.mrb[0].mxu0
  %v2678 = vadd.f32 0.0, %v2677
  %v2679 = vpop.f32.mrb[0].mxu0
  %2680 = vmatprep.mubr.f32.mxu0 %v2511
  %2681 = vmatmul.mubr.f32.gmra.mrb[0].mxu0 %v2419
  %v2682 = vpop.f32.mrb[0].mxu0
  %v2683 = vadd.f32 0.0, %v2682
  %v2684 = vpop.f32.mrb[0].mxu0
  %2685 = vmatprep.mubr.f32.mxu0 %v2514
  %2686 = vmatmul.mubr.f32.gmra.mrb[0].mxu0 %v2421
  %v2687 = vpop.f32.mrb[0].mxu0
  %v2688 = vadd.f32 0.0, %v2687
  %v2689 = vpop.f32.mrb[0].mxu0
  %2690 = vmatprep.mubr.f32.mxu0 %v2517
  %2691 = vmatmul.mubr.f32.gmra.mrb[0].mxu0 %v2423
  %v2692 = vpop.f32.mrb[0].mxu0
  %v2693 = vadd.f32 0.0, %v2692
  %v2694 = vpop.f32.mrb[0].mxu0
  %2695 = vmatprep.mubr.f32.mxu0 %v2520
  %2696 = vmatmul.mubr.f32.gmra.mrb[0].mxu0 %v2425
  %v2697 = vpop.f32.mrb[0].mxu0
  %v2698 = vadd.f32 0.0, %v2697
  %v2699 = vpop.f32.mrb[0].mxu0
  %2700 = vmatprep.mubr.f32.mxu0 %v2523
  %2701 = vmatmul.mubr.f32.gmra.mrb[0].mxu0 %v2427
  %v2702 = vpop.f32.mrb[0].mxu0
  %v2703 = vadd.f32 0.0, %v2702
  %v2704 = vpop.f32.mrb[0].mxu0
  %2705 = vmatprep.mubr.f32.mxu0 %v2526
  %2706 = vmatmul.mubr.f32.gmra.mrb[0].mxu0 %v2429
  %v2707 = vpop.f32.mrb[0].mxu0
  %v2708 = vadd.f32 0.0, %v2707
  %v2709 = vpop.f32.mrb[0].mxu0
  %2710 = vmatprep.mubr.f32.mxu0 %v2529
  %2711 = vmatmul.mubr.f32.gmra.mrb[0].mxu0 %v2431
  %v2712 = vpop.f32.mrb[0].mxu0
  %v2713 = vadd.f32 0.0, %v2712
  %v2714 = vpop.f32.mrb[0].mxu0
  %2715 = vmatprep.mubr.f32.mxu0 %v2532
  %2716 = vmatmul.mubr.f32.gmra.mrb[0].mxu0 %v2433
  %v2717 = vpop.f32.mrb[0].mxu0
  %v2718 = vadd.f32 0.0, %v2717
  %v2719 = vpop.f32.mrb[0].mxu0
  %2720 = vmatprep.mubr.f32.mxu0 %v2535
  %2721 = vmatmul.mubr.f32.gmra.mrb[0].mxu0 %v2435
  %v2722 = vpop.f32.mrb[0].mxu0
  %v2723 = vadd.f32 0.0, %v2722
  %v2724 = vpop.f32.mrb[0].mxu0
  %2725 = vmatprep.mubr.f32.mxu0 %v2538
  %2726 = vmatmul.mubr.f32.gmra.mrb[0].mxu0 %v2437
  %v2727 = vpop.f32.mrb[0].mxu0
  %v2728 = vadd.f32 0.0, %v2727
  %v2729 = vpop.f32.mrb[0].mxu0
  %2730 = vmatprep.mubr.f32.mxu0 %v2541
  %2731 = vmatmul.mubr.f32.gmra.mrb[0].mxu0 %v2439
  %v2732 = vpop.f32.mrb[0].mxu0
  %v2733 = vadd.f32 0.0, %v2732
  %v2734 = vpop.f32.mrb[0].mxu0
  %2735 = vmatprep.mubr.f32.mxu0 %v2544
  %2736 = vmatmul.mubr.f32.gmra.mrb[0].mxu0 %v2441
  %v2737 = vpop.f32.mrb[0].mxu0
  %v2738 = vadd.f32 0.0, %v2737
  %v2739 = vpop.f32.mrb[0].mxu0
  %2740 = vmatprep.mubr.f32.mxu0 %v2547
  %2741 = vmatmul.mubr.f32.gmra.mrb[0].mxu0 %v2443
  %v2742 = vpop.f32.mrb[0].mxu0
  %v2743 = vadd.f32 0.0, %v2742
  %v2744 = vpop.f32.mrb[0].mxu0
  %2745 = vmatprep.mubr.f32.mxu0 %v2550
  %2746 = vmatmul.mubr.f32.gmra.mrb[0].mxu0 %v2445
  %v2747 = vpop.f32.mrb[0].mxu0
  %v2748 = vadd.f32 0.0, %v2747
  %v2749 = vpop.f32.mrb[0].mxu0
  %2750 = vmatprep.mubr.f32.mxu0 %v2553
  %2751 = vmatmul.mubr.f32.gmra.mrb[0].mxu0 %v2447
  %v2752 = vpop.f32.mrb[0].mxu0
  %v2753 = vadd.f32 0.0, %v2752
  %v2754 = vpop.f32.mrb[0].mxu0
  %2755 = vmatprep.mubr.f32.mxu0 %v2556
  %2756 = vmatmul.mubr.f32.gmra.mrb[0].mxu0 %v2449
  %v2757 = vpop.f32.mrb[0].mxu0
  %v2758 = vadd.f32 0.0, %v2757
  %v2759 = vpop.f32.mrb[0].mxu0
  %2760 = vmatprep.mubr.f32.mxu0 %v2559
  %2761 = vmatmul.mubr.f32.gmra.mrb[0].mxu0 %v2451
  %v2762 = vpop.f32.mrb[0].mxu0
  %v2763 = vadd.f32 0.0, %v2762
  %v2764 = vpop.f32.mrb[0].mxu0
  %2765 = vmatprep.mubr.f32.mxu0 %v2562
  %2766 = vmatmul.mubr.f32.gmra.mrb[0].mxu0 %v2453
  %v2767 = vpop.f32.mrb[0].mxu0
  %v2768 = vadd.f32 0.0, %v2767
  %v2769 = vpop.f32.mrb[0].mxu0
  %2770 = vmatprep.mubr.f32.mxu0 %v2565
  %2771 = vmatmul.mubr.f32.gmra.mrb[0].mxu0 %v2455
  %v2772 = vpop.f32.mrb[0].mxu0
  %v2773 = vadd.f32 0.0, %v2772
  %v2774 = vpop.f32.mrb[0].mxu0
  %2775 = vmatprep.mubr.f32.mxu0 %v2568
  %2776 = vmatmul.mubr.f32.gmra.mrb[0].mxu0 %v2457
  %v2777 = vpop.f32.mrb[0].mxu0
  %v2778 = vadd.f32 0.0, %v2777
  %v2779 = vpop.f32.mrb[0].mxu0
  %2780 = vmatprep.mubr.f32.mxu0 %v2571
  %2781 = vmatmul.mubr.f32.gmra.mrb[0].mxu0 %v2459
  %v2782 = vpop.f32.mrb[0].mxu0
  %v2783 = vadd.f32 0.0, %v2782
  %v2784 = vpop.f32.mrb[0].mxu0
  %2785 = vmatprep.mubr.f32.mxu0 %v2574
  %2786 = vmatmul.mubr.f32.gmra.mrb[0].mxu0 %v2461
  %v2787 = vpop.f32.mrb[0].mxu0
  %v2788 = vadd.f32 0.0, %v2787
  %v2789 = vpop.f32.mrb[0].mxu0
  %2790 = vmatprep.mubr.f32.mxu0 %v2577
  %2791 = vmatmul.mubr.f32.gmra.mrb[0].mxu0 %v2463
  %v2792 = vpop.f32.mrb[0].mxu0
  %v2793 = vadd.f32 0.0, %v2792
  %v2794 = vpop.f32.mrb[0].mxu0
  %2795 = vmatprep.mubr.f32.mxu0 %v2580
  %2796 = vmatmul.mubr.f32.gmra.mrb[0].mxu0 %v2465
  %v2797 = vpop.f32.mrb[0].mxu0
  %v2798 = vadd.f32 0.0, %v2797
  %v2799 = vpop.f32.mrb[0].mxu0
  %2800 = vmatprep.mubr.f32.mxu0 %v2583
  %2801 = vmatmul.mubr.f32.gmra.mrb[0].mxu0 %v2467
  %v2802 = vpop.f32.mrb[0].mxu0
  %v2803 = vadd.f32 0.0, %v2802
  %v2804 = vpop.f32.mrb[0].mxu0
  %2805 = vmatprep.mubr.f32.mxu0 %v2586
  %2806 = vmatmul.mubr.f32.gmra.mrb[0].mxu0 %v2469
  %v2807 = vpop.f32.mrb[0].mxu0
  %v2808 = vadd.f32 0.0, %v2807
  %v2809 = vpop.f32.mrb[0].mxu0
  %2810 = vmatprep.mubr.f32.mxu0 %v2589
  %2811 = vmatmul.mubr.f32.gmra.mrb[0].mxu0 %v2471
  %v2812 = vpop.f32.mrb[0].mxu0
  %v2813 = vadd.f32 0.0, %v2812
  %v2814 = vpop.f32.mrb[0].mxu0
  %2815 = vdwg.mxu0
  %s2816 = scalar_lea.vmem %s3, 168
  %v2817 = vld [vmem:[%s2816] sm:$0xff]
  %v2818 = vld [vmem:[%s2816 + $0x8] sm:$0xff]
  %v2819 = vld [vmem:[%s2816 + $0x10] sm:$0xff]
  %v2820 = vld [vmem:[%s2816 + $0x18] sm:$0xff]
  %v2821 = vld [vmem:[%s2816 + $0x20] sm:$0xff]
  %v2822 = vld [vmem:[%s2816 + $0x28] sm:$0xff]
  %v2823 = vld [vmem:[%s2816 + $0x30] sm:$0xff]
  %v2824 = vld [vmem:[%s2816 + $0x38] sm:$0xff]
  %v2825 = vld [vmem:[%s2816 + $0x40] sm:$0xff]
  %v2826 = vld [vmem:[%s2816 + $0x48] sm:$0xff]
  %v2827 = vld [vmem:[%s2816 + $0x50] sm:$0xff]
  %v2828 = vld [vmem:[%s2816 + $0x58] sm:$0xff]
  %v2829 = vld [vmem:[%s2816 + $0x60] sm:$0xff]
  %v2830 = vld [vmem:[%s2816 + $0x68] sm:$0xff]
  %v2831 = vld [vmem:[%s2816 + $0x70] sm:$0xff]
  %v2832 = vld [vmem:[%s2816 + $0x78] sm:$0xff]
  %v2833 = vld [vmem:[%s2816 + $0x80] sm:$0xff]
  %v2834 = vld [vmem:[%s2816 + $0x88] sm:$0xff]
  %v2835 = vld [vmem:[%s2816 + $0x90] sm:$0xff]
  %v2836 = vld [vmem:[%s2816 + $0x98] sm:$0xff]
  %v2837 = vld [vmem:[%s2816 + $0xa0] sm:$0xff]
  %2838 = vmatprep.subr.mxu0 0.0
  %2839 = vmatpush1.msra.mxu0 %v2817
  %2840 = vmatprep.subr.mxu0 0.0
  %2841 = vmatpush1.msra.mxu0 %v2818
  %2842 = vmatprep.subr.mxu0 0.0
  %2843 = vmatpush1.msra.mxu0 %v2819
  %2844 = vmatprep.subr.mxu0 0.0
  %2845 = vmatpush1.msra.mxu0 %v2820
  %2846 = vmatprep.subr.mxu0 0.0
  %2847 = vmatpush1.msra.mxu0 %v2821
  %2848 = vmatprep.subr.mxu0 0.0
  %2849 = vmatpush1.msra.mxu0 %v2822
  %2850 = vmatprep.subr.mxu0 0.0
  %2851 = vmatpush1.msra.mxu0 %v2823
  %2852 = vmatprep.subr.mxu0 0.0
  %2853 = vmatpush1.msra.mxu0 %v2824
  %2854 = vmatprep.subr.mxu0 0.0
  %2855 = vmatpush1.msra.mxu0 %v2825
  %2856 = vmatprep.subr.mxu0 0.0
  %2857 = vmatpush1.msra.mxu0 %v2826
  %2858 = vmatprep.subr.mxu0 0.0
  %2859 = vmatpush1.msra.mxu0 %v2827
  %2860 = vmatprep.subr.mxu0 0.0
  %2861 = vmatpush1.msra.mxu0 %v2828
  %2862 = vmatprep.subr.mxu0 0.0
  %2863 = vmatpush1.msra.mxu0 %v2829
  %2864 = vmatprep.subr.mxu0 0.0
  %2865 = vmatpush1.msra.mxu0 %v2830
  %2866 = vmatprep.subr.mxu0 0.0
  %2867 = vmatpush1.msra.mxu0 %v2831
  %2868 = vmatprep.subr.mxu0 0.0
  %2869 = vmatpush1.msra.mxu0 %v2832
  %2870 = vmatprep.subr.mxu0 0.0
  %2871 = vmatpush1.msra.mxu0 %v2833
  %2872 = vmatprep.subr.mxu0 0.0
  %2873 = vmatpush1.msra.mxu0 %v2834
  %2874 = vmatprep.subr.mxu0 0.0
  %2875 = vmatpush1.msra.mxu0 %v2835
  %2876 = vmatprep.subr.mxu0 0.0
  %2877 = vmatpush1.msra.mxu0 %v2836
  %2878 = vmatprep.subr.mxu0 0.0
  %2879 = vmatpush1.msra.mxu0 %v2837
  %2880 = vmatprep.subr.mxu0 0.0
  %2881 = vmatpush1.msra.mxu0 0.0
  %2882 = vmatprep.subr.mxu0 0.0
  %2883 = vmatpush1.msra.mxu0 0.0
  %2884 = vmatprep.subr.mxu0 0.0
  %2885 = vmatpush1.msra.mxu0 0.0
  %2886 = vmatprep.subr.mxu0 0.0
  %2887 = vmatpush1.msra.mxu0 0.0
  %2888 = vmatprep.subr.mxu0 0.0
  %2889 = vmatpush1.msra.mxu0 0.0
  %2890 = vmatprep.subr.mxu0 0.0
  %2891 = vmatpush1.msra.mxu0 0.0
  %2892 = vmatprep.subr.mxu0 0.0
  %2893 = vmatpush1.msra.mxu0 0.0
  %2894 = vmatprep.subr.mxu0 0.0
  %2895 = vmatpush1.msra.mxu0 0.0
  %2896 = vmatprep.subr.mxu0 0.0
  %2897 = vmatpush1.msra.mxu0 0.0
  %2898 = vmatprep.subr.mxu0 0.0
  %2899 = vmatpush1.msra.mxu0 0.0
  %2900 = vmatprep.subr.mxu0 0.0
  %2901 = vmatpush1.msra.mxu0 0.0
  %2902 = vmatprep.mubr.f32.mxu0 %v2496
  %2903 = vmatmul.mubr.f32.gmra.mrb[0].mxu0 %v2409
  %v2904 = vpop.f32.mrb[0].mxu0
  %v2905 = vadd.f32 0.0, %v2904
  %v2906 = vpop.f32.mrb[0].mxu0
  %2907 = vmatprep.mubr.f32.mxu0 %v2499
  %2908 = vmatmul.mubr.f32.gmra.mrb[0].mxu0 %v2411
  %v2909 = vpop.f32.mrb[0].mxu0
  %v2910 = vadd.f32 0.0, %v2909
  %v2911 = vpop.f32.mrb[0].mxu0
  %2912 = vmatprep.mubr.f32.mxu0 %v2502
  %2913 = vmatmul.mubr.f32.gmra.mrb[0].mxu0 %v2413
  %v2914 = vpop.f32.mrb[0].mxu0
  %v2915 = vadd.f32 0.0, %v2914
  %v2916 = vpop.f32.mrb[0].mxu0
  %2917 = vmatprep.mubr.f32.mxu0 %v2505
  %2918 = vmatmul.mubr.f32.gmra.mrb[0].mxu0 %v2415
  %v2919 = vpop.f32.mrb[0].mxu0
  %v2920 = vadd.f32 0.0, %v2919
  %v2921 = vpop.f32.mrb[0].mxu0
  %2922 = vmatprep.mubr.f32.mxu0 %v2508
  %2923 = vmatmul.mubr.f32.gmra.mrb[0].mxu0 %v2417
  %v2924 = vpop.f32.mrb[0].mxu0
  %v2925 = vadd.f32 0.0, %v2924
  %v2926 = vpop.f32.mrb[0].mxu0
  %2927 = vmatprep.mubr.f32.mxu0 %v2511
  %2928 = vmatmul.mubr.f32.gmra.mrb[0].mxu0 %v2419
  %v2929 = vpop.f32.mrb[0].mxu0
  %v2930 = vadd.f32 0.0, %v2929
  %v2931 = vpop.f32.mrb[0].mxu0
  %2932 = vmatprep.mubr.f32.mxu0 %v2514
  %2933 = vmatmul.mubr.f32.gmra.mrb[0].mxu0 %v2421
  %v2934 = vpop.f32.mrb[0].mxu0
  %v2935 = vadd.f32 0.0, %v2934
  %v2936 = vpop.f32.mrb[0].mxu0
  %2937 = vmatprep.mubr.f32.mxu0 %v2517
  %2938 = vmatmul.mubr.f32.gmra.mrb[0].mxu0 %v2423
  %v2939 = vpop.f32.mrb[0].mxu0
  %v2940 = vadd.f32 0.0, %v2939
  %v2941 = vpop.f32.mrb[0].mxu0
  %2942 = vmatprep.mubr.f32.mxu0 %v2520
  %2943 = vmatmul.mubr.f32.gmra.mrb[0].mxu0 %v2425
  %v2944 = vpop.f32.mrb[0].mxu0
  %v2945 = vadd.f32 0.0, %v2944
  %v2946 = vpop.f32.mrb[0].mxu0
  %2947 = vmatprep.mubr.f32.mxu0 %v2523
  %2948 = vmatmul.mubr.f32.gmra.mrb[0].mxu0 %v2427
  %v2949 = vpop.f32.mrb[0].mxu0
  %v2950 = vadd.f32 0.0, %v2949
  %v2951 = vpop.f32.mrb[0].mxu0
  %2952 = vmatprep.mubr.f32.mxu0 %v2526
  %2953 = vmatmul.mubr.f32.gmra.mrb[0].mxu0 %v2429
  %v2954 = vpop.f32.mrb[0].mxu0
  %v2955 = vadd.f32 0.0, %v2954
  %v2956 = vpop.f32.mrb[0].mxu0
  %2957 = vmatprep.mubr.f32.mxu0 %v2529
  %2958 = vmatmul.mubr.f32.gmra.mrb[0].mxu0 %v2431
  %v2959 = vpop.f32.mrb[0].mxu0
  %v2960 = vadd.f32 0.0, %v2959
  %v2961 = vpop.f32.mrb[0].mxu0
  %2962 = vmatprep.mubr.f32.mxu0 %v2532
  %2963 = vmatmul.mubr.f32.gmra.mrb[0].mxu0 %v2433
  %v2964 = vpop.f32.mrb[0].mxu0
  %v2965 = vadd.f32 0.0, %v2964
  %v2966 = vpop.f32.mrb[0].mxu0
  %2967 = vmatprep.mubr.f32.mxu0 %v2535
  %2968 = vmatmul.mubr.f32.gmra.mrb[0].mxu0 %v2435
  %v2969 = vpop.f32.mrb[0].mxu0
  %v2970 = vadd.f32 0.0, %v2969
  %v2971 = vpop.f32.mrb[0].mxu0
  %2972 = vmatprep.mubr.f32.mxu0 %v2538
  %2973 = vmatmul.mubr.f32.gmra.mrb[0].mxu0 %v2437
  %v2974 = vpop.f32.mrb[0].mxu0
  %v2975 = vadd.f32 0.0, %v2974
  %v2976 = vpop.f32.mrb[0].mxu0
  %2977 = vmatprep.mubr.f32.mxu0 %v2541
  %2978 = vmatmul.mubr.f32.gmra.mrb[0].mxu0 %v2439
  %v2979 = vpop.f32.mrb[0].mxu0
  %v2980 = vadd.f32 0.0, %v2979
  %v2981 = vpop.f32.mrb[0].mxu0
  %2982 = vmatprep.mubr.f32.mxu0 %v2544
  %2983 = vmatmul.mubr.f32.gmra.mrb[0].mxu0 %v2441
  %v2984 = vpop.f32.mrb[0].mxu0
  %v2985 = vadd.f32 0.0, %v2984
  %v2986 = vpop.f32.mrb[0].mxu0
  %2987 = vmatprep.mubr.f32.mxu0 %v2547
  %2988 = vmatmul.mubr.f32.gmra.mrb[0].mxu0 %v2443
  %v2989 = vpop.f32.mrb[0].mxu0
  %v2990 = vadd.f32 0.0, %v2989
  %v2991 = vpop.f32.mrb[0].mxu0
  %2992 = vmatprep.mubr.f32.mxu0 %v2550
  %2993 = vmatmul.mubr.f32.gmra.mrb[0].mxu0 %v2445
  %v2994 = vpop.f32.mrb[0].mxu0
  %v2995 = vadd.f32 0.0, %v2994
  %v2996 = vpop.f32.mrb[0].mxu0
  %2997 = vmatprep.mubr.f32.mxu0 %v2553
  %2998 = vmatmul.mubr.f32.gmra.mrb[0].mxu0 %v2447
  %v2999 = vpop.f32.mrb[0].mxu0
  %v3000 = vadd.f32 0.0, %v2999
  %v3001 = vpop.f32.mrb[0].mxu0
  %3002 = vmatprep.mubr.f32.mxu0 %v2556
  %3003 = vmatmul.mubr.f32.gmra.mrb[0].mxu0 %v2449
  %v3004 = vpop.f32.mrb[0].mxu0
  %v3005 = vadd.f32 0.0, %v3004
  %v3006 = vpop.f32.mrb[0].mxu0
  %3007 = vmatprep.mubr.f32.mxu0 %v2559
  %3008 = vmatmul.mubr.f32.gmra.mrb[0].mxu0 %v2451
  %v3009 = vpop.f32.mrb[0].mxu0
  %v3010 = vadd.f32 0.0, %v3009
  %v3011 = vpop.f32.mrb[0].mxu0
  %3012 = vmatprep.mubr.f32.mxu0 %v2562
  %3013 = vmatmul.mubr.f32.gmra.mrb[0].mxu0 %v2453
  %v3014 = vpop.f32.mrb[0].mxu0
  %v3015 = vadd.f32 0.0, %v3014
  %v3016 = vpop.f32.mrb[0].mxu0
  %3017 = vmatprep.mubr.f32.mxu0 %v2565
  %3018 = vmatmul.mubr.f32.gmra.mrb[0].mxu0 %v2455
  %v3019 = vpop.f32.mrb[0].mxu0
  %v3020 = vadd.f32 0.0, %v3019
  %v3021 = vpop.f32.mrb[0].mxu0
  %3022 = vmatprep.mubr.f32.mxu0 %v2568
  %3023 = vmatmul.mubr.f32.gmra.mrb[0].mxu0 %v2457
  %v3024 = vpop.f32.mrb[0].mxu0
  %v3025 = vadd.f32 0.0, %v3024
  %v3026 = vpop.f32.mrb[0].mxu0
  %3027 = vmatprep.mubr.f32.mxu0 %v2571
  %3028 = vmatmul.mubr.f32.gmra.mrb[0].mxu0 %v2459
  %v3029 = vpop.f32.mrb[0].mxu0
  %v3030 = vadd.f32 0.0, %v3029
  %v3031 = vpop.f32.mrb[0].mxu0
  %3032 = vmatprep.mubr.f32.mxu0 %v2574
  %3033 = vmatmul.mubr.f32.gmra.mrb[0].mxu0 %v2461
  %v3034 = vpop.f32.mrb[0].mxu0
  %v3035 = vadd.f32 0.0, %v3034
  %v3036 = vpop.f32.mrb[0].mxu0
  %3037 = vmatprep.mubr.f32.mxu0 %v2577
  %3038 = vmatmul.mubr.f32.gmra.mrb[0].mxu0 %v2463
  %v3039 = vpop.f32.mrb[0].mxu0
  %v3040 = vadd.f32 0.0, %v3039
  %v3041 = vpop.f32.mrb[0].mxu0
  %3042 = vmatprep.mubr.f32.mxu0 %v2580
  %3043 = vmatmul.mubr.f32.gmra.mrb[0].mxu0 %v2465
  %v3044 = vpop.f32.mrb[0].mxu0
  %v3045 = vadd.f32 0.0, %v3044
  %v3046 = vpop.f32.mrb[0].mxu0
  %3047 = vmatprep.mubr.f32.mxu0 %v2583
  %3048 = vmatmul.mubr.f32.gmra.mrb[0].mxu0 %v2467
  %v3049 = vpop.f32.mrb[0].mxu0
  %v3050 = vadd.f32 0.0, %v3049
  %v3051 = vpop.f32.mrb[0].mxu0
  %3052 = vmatprep.mubr.f32.mxu0 %v2586
  %3053 = vmatmul.mubr.f32.gmra.mrb[0].mxu0 %v2469
  %v3054 = vpop.f32.mrb[0].mxu0
  %v3055 = vadd.f32 0.0, %v3054
  %v3056 = vpop.f32.mrb[0].mxu0
  %3057 = vmatprep.mubr.f32.mxu0 %v2589
  %3058 = vmatmul.mubr.f32.gmra.mrb[0].mxu0 %v2471
  %v3059 = vpop.f32.mrb[0].mxu0
  %v3060 = vadd.f32 0.0, %v3059
  %v3061 = vpop.f32.mrb[0].mxu0
  %3062 = vdwg.mxu0
  %v3063 = vmax.f32 %v2658, %v2905
  %v3064 = vmax.f32 %v2663, %v2910
  %v3065 = vmax.f32 %v2668, %v2915
  %v3066 = vmax.f32 %v2673, %v2920
  %v3067 = vmax.f32 %v2678, %v2925
  %v3068 = vmax.f32 %v2683, %v2930
  %v3069 = vmax.f32 %v2688, %v2935
  %v3070 = vmax.f32 %v2693, %v2940
  %v3071 = vmax.f32 %v2698, %v2945
  %v3072 = vmax.f32 %v2703, %v2950
  %v3073 = vmax.f32 %v2708, %v2955
  %v3074 = vmax.f32 %v2713, %v2960
  %v3075 = vmax.f32 %v2718, %v2965
  %v3076 = vmax.f32 %v2723, %v2970
  %v3077 = vmax.f32 %v2728, %v2975
  %v3078 = vmax.f32 %v2733, %v2980
  %v3079 = vmax.f32 %v2738, %v2985
  %v3080 = vmax.f32 %v2743, %v2990
  %v3081 = vmax.f32 %v2748, %v2995
  %v3082 = vmax.f32 %v2753, %v3000
  %v3083 = vmax.f32 %v2758, %v3005
  %v3084 = vmax.f32 %v2763, %v3010
  %v3085 = vmax.f32 %v2768, %v3015
  %v3086 = vmax.f32 %v2773, %v3020
  %v3087 = vmax.f32 %v2778, %v3025
  %v3088 = vmax.f32 %v2783, %v3030
  %v3089 = vmax.f32 %v2788, %v3035
  %v3090 = vmax.f32 %v2793, %v3040
  %v3091 = vmax.f32 %v2798, %v3045
  %v3092 = vmax.f32 %v2803, %v3050
  %v3093 = vmax.f32 %v2808, %v3055
  %v3094 = vmax.f32 %v2813, %v3060
  %3095 = vst.msk [vmem:[#allocation2] sm:$0xff] %vm58, %v3063
  %3096 = vst.msk [vmem:[#allocation2 + $0x8] sm:$0xff] %vm58, %v3064
  %3097 = vst.msk [vmem:[#allocation2 + $0x10] sm:$0xff] %vm58, %v3065
  %3098 = vst.msk [vmem:[#allocation2 + $0x18] sm:$0xff] %vm58, %v3066
  %3099 = vst.msk [vmem:[#allocation2 + $0x20] sm:$0xff] %vm58, %v3067
  %3100 = vst.msk [vmem:[#allocation2 + $0x28] sm:$0xff] %vm58, %v3068
  %3101 = vst.msk [vmem:[#allocation2 + $0x30] sm:$0xff] %vm58, %v3069
  %3102 = vst.msk [vmem:[#allocation2 + $0x38] sm:$0xff] %vm58, %v3070
  %3103 = vst.msk [vmem:[#allocation2 + $0x40] sm:$0xff] %vm58, %v3071
  %3104 = vst.msk [vmem:[#allocation2 + $0x48] sm:$0xff] %vm58, %v3072
  %3105 = vst.msk [vmem:[#allocation2 + $0x50] sm:$0xff] %vm58, %v3073
  %3106 = vst.msk [vmem:[#allocation2 + $0x58] sm:$0xff] %vm58, %v3074
  %3107 = vst.msk [vmem:[#allocation2 + $0x60] sm:$0xff] %vm58, %v3075
  %3108 = vst.msk [vmem:[#allocation2 + $0x68] sm:$0xff] %vm58, %v3076
  %3109 = vst.msk [vmem:[#allocation2 + $0x70] sm:$0xff] %vm58, %v3077
  %3110 = vst.msk [vmem:[#allocation2 + $0x78] sm:$0xff] %vm58, %v3078
  %3111 = vst.msk [vmem:[#allocation2 + $0x80] sm:$0xff] %vm58, %v3079
  %3112 = vst.msk [vmem:[#allocation2 + $0x88] sm:$0xff] %vm58, %v3080
  %3113 = vst.msk [vmem:[#allocation2 + $0x90] sm:$0xff] %vm58, %v3081
  %3114 = vst.msk [vmem:[#allocation2 + $0x98] sm:$0xff] %vm58, %v3082
  %3115 = vst.msk [vmem:[#allocation2 + $0xa0] sm:$0xff] %vm58, %v3083
  %3116 = vst.msk [vmem:[#allocation2 + $0xa8] sm:$0xff] %vm58, %v3084
  %3117 = vst.msk [vmem:[#allocation2 + $0xb0] sm:$0xff] %vm58, %v3085
  %3118 = vst.msk [vmem:[#allocation2 + $0xb8] sm:$0xff] %vm58, %v3086
  %3119 = vst.msk [vmem:[#allocation2 + $0xc0] sm:$0xff] %vm58, %v3087
  %3120 = vst.msk [vmem:[#allocation2 + $0xc8] sm:$0xff] %vm58, %v3088
  %3121 = vst.msk [vmem:[#allocation2 + $0xd0] sm:$0xff] %vm58, %v3089
  %3122 = vst.msk [vmem:[#allocation2 + $0xd8] sm:$0xff] %vm58, %v3090
  %3123 = vst.msk [vmem:[#allocation2 + $0xe0] sm:$0xff] %vm58, %v3091
  %3124 = vst.msk [vmem:[#allocation2 + $0xe8] sm:$0xff] %vm58, %v3092
  %3125 = vst.msk [vmem:[#allocation2 + $0xf0] sm:$0xff] %vm58, %v3093
  %3126 = vst.msk [vmem:[#allocation2 + $0xf8] sm:$0xff] %vm58, %v3094
  %v3127 = vld [vmem:[#allocation2] ss:$2 sm:$0xff]
  %s3128 = scalar_lea.vmem [#allocation2], 16
  %v3129 = vld [vmem:[%s3128] ss:$2 sm:$0xff]
  %s3130 = scalar_lea.vmem [#allocation2], 32
  %v3131 = vld [vmem:[%s3130] ss:$2 sm:$0xff]
  %s3132 = scalar_lea.vmem [#allocation2], 48
  %v3133 = vld [vmem:[%s3132] ss:$2 sm:$0xff]
  %s3134 = scalar_lea.vmem [#allocation2], 64
  %v3135 = vld [vmem:[%s3134] ss:$2 sm:$0xff]
  %s3136 = scalar_lea.vmem [#allocation2], 80
  %v3137 = vld [vmem:[%s3136] ss:$2 sm:$0xff]
  %s3138 = scalar_lea.vmem [#allocation2], 96
  %v3139 = vld [vmem:[%s3138] ss:$2 sm:$0xff]
  %s3140 = scalar_lea.vmem [#allocation2], 112
  %v3141 = vld [vmem:[%s3140] ss:$2 sm:$0xff]
  %s3142 = scalar_lea.vmem [#allocation2], 128
  %v3143 = vld [vmem:[%s3142] ss:$2 sm:$0xff]
  %s3144 = scalar_lea.vmem [#allocation2], 144
  %v3145 = vld [vmem:[%s3144] ss:$2 sm:$0xff]
  %s3146 = scalar_lea.vmem [#allocation2], 160
  %v3147 = vld [vmem:[%s3146] ss:$2 sm:$0xff]
  %s3148 = scalar_lea.vmem [#allocation2], 176
  %v3149 = vld [vmem:[%s3148] ss:$2 sm:$0xff]
  %s3150 = scalar_lea.vmem [#allocation2], 192
  %v3151 = vld [vmem:[%s3150] ss:$2 sm:$0xff]
  %s3152 = scalar_lea.vmem [#allocation2], 208
  %v3153 = vld [vmem:[%s3152] ss:$2 sm:$0xff]
  %s3154 = scalar_lea.vmem [#allocation2], 224
  %v3155 = vld [vmem:[%s3154] ss:$2 sm:$0xff]
  %s3156 = scalar_lea.vmem [#allocation2], 240
  %v3157 = vld [vmem:[%s3156] ss:$2 sm:$0xff]
  %s3158 = scalar_lea.vmem [#allocation2], 1
  %v3159 = vld [vmem:[%s3158] ss:$2 sm:$0xff]
  %s3160 = scalar_lea.vmem [#allocation2], 17
  %v3161 = vld [vmem:[%s3160] ss:$2 sm:$0xff]
  %s3162 = scalar_lea.vmem [#allocation2], 33
  %v3163 = vld [vmem:[%s3162] ss:$2 sm:$0xff]
  %s3164 = scalar_lea.vmem [#allocation2], 49
  %v3165 = vld [vmem:[%s3164] ss:$2 sm:$0xff]
  %s3166 = scalar_lea.vmem [#allocation2], 65
  %v3167 = vld [vmem:[%s3166] ss:$2 sm:$0xff]
  %s3168 = scalar_lea.vmem [#allocation2], 81
  %v3169 = vld [vmem:[%s3168] ss:$2 sm:$0xff]
  %s3170 = scalar_lea.vmem [#allocation2], 97
  %v3171 = vld [vmem:[%s3170] ss:$2 sm:$0xff]
  %s3172 = scalar_lea.vmem [#allocation2], 113
  %v3173 = vld [vmem:[%s3172] ss:$2 sm:$0xff]
  %s3174 = scalar_lea.vmem [#allocation2], 129
  %v3175 = vld [vmem:[%s3174] ss:$2 sm:$0xff]
  %s3176 = scalar_lea.vmem [#allocation2], 145
  %v3177 = vld [vmem:[%s3176] ss:$2 sm:$0xff]
  %s3178 = scalar_lea.vmem [#allocation2], 161
  %v3179 = vld [vmem:[%s3178] ss:$2 sm:$0xff]
  %s3180 = scalar_lea.vmem [#allocation2], 177
  %v3181 = vld [vmem:[%s3180] ss:$2 sm:$0xff]
  %s3182 = scalar_lea.vmem [#allocation2], 193
  %v3183 = vld [vmem:[%s3182] ss:$2 sm:$0xff]
  %s3184 = scalar_lea.vmem [#allocation2], 209
  %v3185 = vld [vmem:[%s3184] ss:$2 sm:$0xff]
  %s3186 = scalar_lea.vmem [#allocation2], 225
  %v3187 = vld [vmem:[%s3186] ss:$2 sm:$0xff]
  %s3188 = scalar_lea.vmem [#allocation2], 241
  %v3189 = vld [vmem:[%s3188] ss:$2 sm:$0xff]
  %v3190 = vmax.f32 %v3127, %v3159
  %v3191 = vmax.f32 %v3129, %v3161
  %v3192 = vmax.f32 %v3131, %v3163
  %v3193 = vmax.f32 %v3133, %v3165
  %v3194 = vmax.f32 %v3135, %v3167
  %v3195 = vmax.f32 %v3137, %v3169
  %v3196 = vmax.f32 %v3139, %v3171
  %v3197 = vmax.f32 %v3141, %v3173
  %v3198 = vmax.f32 %v3143, %v3175
  %v3199 = vmax.f32 %v3145, %v3177
  %v3200 = vmax.f32 %v3147, %v3179
  %v3201 = vmax.f32 %v3149, %v3181
  %v3202 = vmax.f32 %v3151, %v3183
  %v3203 = vmax.f32 %v3153, %v3185
  %v3204 = vmax.f32 %v3155, %v3187
  %v3205 = vmax.f32 %v3157, %v3189
  %3206 = vst.msk [vmem:[#allocation3] sm:$0xff] %vm58, %v3190
  %3207 = vst.msk [vmem:[#allocation3 + $0x8] sm:$0xff] %vm58, %v3191
  %3208 = vst.msk [vmem:[#allocation3 + $0x10] sm:$0xff] %vm58, %v3192
  %3209 = vst.msk [vmem:[#allocation3 + $0x18] sm:$0xff] %vm58, %v3193
  %3210 = vst.msk [vmem:[#allocation3 + $0x20] sm:$0xff] %vm58, %v3194
  %3211 = vst.msk [vmem:[#allocation3 + $0x28] sm:$0xff] %vm58, %v3195
  %3212 = vst.msk [vmem:[#allocation3 + $0x30] sm:$0xff] %vm58, %v3196
  %3213 = vst.msk [vmem:[#allocation3 + $0x38] sm:$0xff] %vm58, %v3197
  %3214 = vst.msk [vmem:[#allocation3 + $0x40] sm:$0xff] %vm58, %v3198
  %3215 = vst.msk [vmem:[#allocation3 + $0x48] sm:$0xff] %vm58, %v3199
  %3216 = vst.msk [vmem:[#allocation3 + $0x50] sm:$0xff] %vm58, %v3200
  %3217 = vst.msk [vmem:[#allocation3 + $0x58] sm:$0xff] %vm58, %v3201
  %3218 = vst.msk [vmem:[#allocation3 + $0x60] sm:$0xff] %vm58, %v3202
  %3219 = vst.msk [vmem:[#allocation3 + $0x68] sm:$0xff] %vm58, %v3203
  %3220 = vst.msk [vmem:[#allocation3 + $0x70] sm:$0xff] %vm58, %v3204
  %3221 = vst.msk [vmem:[#allocation3 + $0x78] sm:$0xff] %vm58, %v3205
  %3222 = vst.msk [vmem:[#allocation3 + $0x80] sm:$0xff] %vm58, 0.0
  %v3223 = vld [vmem:[#allocation3] sm:$0xff]
  %v3224 = vld [vmem:[#allocation3 + $0x8] sm:$0xff]
  %v3225 = vld [vmem:[#allocation3 + $0x10] sm:$0xff]
  %v3226 = vld [vmem:[#allocation3 + $0x18] sm:$0xff]
  %v3227 = vld [vmem:[#allocation3 + $0x20] sm:$0xff]
  %v3228 = vld [vmem:[#allocation3 + $0x28] sm:$0xff]
  %v3229 = vld [vmem:[#allocation3 + $0x30] sm:$0xff]
  %v3230 = vld [vmem:[#allocation3 + $0x38] sm:$0xff]
  %v3231 = vld [vmem:[#allocation3 + $0x40] sm:$0xff]
  %v3232 = vld [vmem:[#allocation3 + $0x48] sm:$0xff]
  %v3233 = vld [vmem:[#allocation3 + $0x50] sm:$0xff]
  %v3234 = vld [vmem:[#allocation3 + $0x58] sm:$0xff]
  %v3235 = vld [vmem:[#allocation3 + $0x60] sm:$0xff]
  %v3236 = vld [vmem:[#allocation3 + $0x68] sm:$0xff]
  %v3237 = vld [vmem:[#allocation3 + $0x70] sm:$0xff]
  %v3238 = vld [vmem:[#allocation3 + $0x78] sm:$0xff]
  %v3239 = vld [vmem:[%s4] sm:$0xff]
  %v3240 = vld [vmem:[%s4 + $0x8] sm:$0xff]
  %v3241 = vld [vmem:[%s4 + $0x10] sm:$0xff]
  %v3242 = vld [vmem:[%s4 + $0x18] sm:$0xff]
  %v3243 = vld [vmem:[%s4 + $0x20] sm:$0xff]
  %v3244 = vld [vmem:[%s4 + $0x28] sm:$0xff]
  %v3245 = vld [vmem:[%s4 + $0x30] sm:$0xff]
  %v3246 = vld [vmem:[%s4 + $0x38] sm:$0xff]
  %v3247 = vld [vmem:[%s4 + $0x40] sm:$0xff]
  %v3248 = vld [vmem:[%s4 + $0x48] sm:$0xff]
  %v3249 = vld [vmem:[%s4 + $0x50] sm:$0xff]
  %v3250 = vld [vmem:[%s4 + $0x58] sm:$0xff]
  %v3251 = vld [vmem:[%s4 + $0x60] sm:$0xff]
  %v3252 = vld [vmem:[%s4 + $0x68] sm:$0xff]
  %v3253 = vld [vmem:[%s4 + $0x70] sm:$0xff]
  %v3254 = vld [vmem:[%s4 + $0x78] sm:$0xff]
  %v3255 = vld [vmem:[%s4 + $0x80] sm:$0xff]
  %v3256 = vld [vmem:[%s4 + $0x88] sm:$0xff]
  %v3257 = vld [vmem:[%s4 + $0x90] sm:$0xff]
  %v3258 = vld [vmem:[%s4 + $0x98] sm:$0xff]
  %v3259 = vld [vmem:[%s4 + $0xa0] sm:$0xff]
  %v3260 = vld [vmem:[%s4 + $0xa8] sm:$0xff]
  %v3261 = vld [vmem:[%s4 + $0xb0] sm:$0xff]
  %v3262 = vld [vmem:[%s4 + $0xb8] sm:$0xff]
  %v3263 = vld [vmem:[#allocation3 + $0x1] sm:$0xff]
  %v3264 = vld [vmem:[#allocation3 + $0x9] sm:$0xff]
  %v3265 = vld [vmem:[#allocation3 + $0x11] sm:$0xff]
  %v3266 = vld [vmem:[#allocation3 + $0x19] sm:$0xff]
  %v3267 = vld [vmem:[#allocation3 + $0x21] sm:$0xff]
  %v3268 = vld [vmem:[#allocation3 + $0x29] sm:$0xff]
  %v3269 = vld [vmem:[#allocation3 + $0x31] sm:$0xff]
  %v3270 = vld [vmem:[#allocation3 + $0x39] sm:$0xff]
  %v3271 = vld [vmem:[#allocation3 + $0x41] sm:$0xff]
  %v3272 = vld [vmem:[#allocation3 + $0x49] sm:$0xff]
  %v3273 = vld [vmem:[#allocation3 + $0x51] sm:$0xff]
  %v3274 = vld [vmem:[#allocation3 + $0x59] sm:$0xff]
  %v3275 = vld [vmem:[#allocation3 + $0x61] sm:$0xff]
  %v3276 = vld [vmem:[#allocation3 + $0x69] sm:$0xff]
  %v3277 = vld [vmem:[#allocation3 + $0x71] sm:$0xff]
  %v3278 = vld [vmem:[#allocation3 + $0x79] sm:$0xff]
  %s3279 = scalar_lea.vmem %s4, 192
  %v3280 = vld [vmem:[%s3279] sm:$0xff]
  %v3281 = vld [vmem:[%s3279 + $0x8] sm:$0xff]
  %v3282 = vld [vmem:[%s3279 + $0x10] sm:$0xff]
  %v3283 = vld [vmem:[%s3279 + $0x18] sm:$0xff]
  %v3284 = vld [vmem:[%s3279 + $0x20] sm:$0xff]
  %v3285 = vld [vmem:[%s3279 + $0x28] sm:$0xff]
  %v3286 = vld [vmem:[%s3279 + $0x30] sm:$0xff]
  %v3287 = vld [vmem:[%s3279 + $0x38] sm:$0xff]
  %v3288 = vld [vmem:[%s3279 + $0x40] sm:$0xff]
  %v3289 = vld [vmem:[%s3279 + $0x48] sm:$0xff]
  %v3290 = vld [vmem:[%s3279 + $0x50] sm:$0xff]
  %v3291 = vld [vmem:[%s3279 + $0x58] sm:$0xff]
  %v3292 = vld [vmem:[%s3279 + $0x60] sm:$0xff]
  %v3293 = vld [vmem:[%s3279 + $0x68] sm:$0xff]
  %v3294 = vld [vmem:[%s3279 + $0x70] sm:$0xff]
  %v3295 = vld [vmem:[%s3279 + $0x78] sm:$0xff]
  %v3296 = vld [vmem:[%s3279 + $0x80] sm:$0xff]
  %v3297 = vld [vmem:[%s3279 + $0x88] sm:$0xff]
  %v3298 = vld [vmem:[%s3279 + $0x90] sm:$0xff]
  %v3299 = vld [vmem:[%s3279 + $0x98] sm:$0xff]
  %v3300 = vld [vmem:[%s3279 + $0xa0] sm:$0xff]
  %v3301 = vld [vmem:[%s3279 + $0xa8] sm:$0xff]
  %v3302 = vld [vmem:[%s3279 + $0xb0] sm:$0xff]
  %v3303 = vld [vmem:[%s3279 + $0xb8] sm:$0xff]
  %v3305 = vsel %vm58, %v3263, 0
  %v3308 = vsel %vm58, %v3264, 0
  %v3311 = vsel %vm58, %v3265, 0
  %v3314 = vsel %vm58, %v3266, 0
  %v3317 = vsel %vm58, %v3267, 0
  %v3320 = vsel %vm58, %v3268, 0
  %v3323 = vsel %vm58, %v3269, 0
  %v3326 = vsel %vm58, %v3270, 0
  %v3329 = vsel %vm58, %v3271, 0
  %v3332 = vsel %vm58, %v3272, 0
  %v3335 = vsel %vm58, %v3273, 0
  %v3338 = vsel %vm58, %v3274, 0
  %v3341 = vsel %vm58, %v3275, 0
  %v3344 = vsel %vm58, %v3276, 0
  %v3347 = vsel %vm58, %v3277, 0
  %v3350 = vsel %vm58, %v3278, 0
  %3352 = vmatprep.subr.mxu0 %v3281
  %3353 = vmatpush1.msra.mxu0 %v3280
  %3354 = vmatprep.subr.mxu0 %v3283
  %3355 = vmatpush1.msra.mxu0 %v3282
  %3356 = vmatprep.subr.mxu0 %v3285
  %3357 = vmatpush1.msra.mxu0 %v3284
  %3358 = vmatprep.subr.mxu0 %v3287
  %3359 = vmatpush1.msra.mxu0 %v3286
  %3360 = vmatprep.subr.mxu0 %v3289
  %3361 = vmatpush1.msra.mxu0 %v3288
  %3362 = vmatprep.subr.mxu0 %v3291
  %3363 = vmatpush1.msra.mxu0 %v3290
  %3364 = vmatprep.subr.mxu0 %v3293
  %3365 = vmatpush1.msra.mxu0 %v3292
  %3366 = vmatprep.subr.mxu0 %v3295
  %3367 = vmatpush1.msra.mxu0 %v3294
  %3368 = vmatprep.subr.mxu0 %v3297
  %3369 = vmatpush1.msra.mxu0 %v3296
  %3370 = vmatprep.subr.mxu0 %v3299
  %3371 = vmatpush1.msra.mxu0 %v3298
  %3372 = vmatprep.subr.mxu0 %v3301
  %3373 = vmatpush1.msra.mxu0 %v3300
  %3374 = vmatprep.subr.mxu0 %v3303
  %3375 = vmatpush1.msra.mxu0 %v3302
  %3376 = vmatprep.subr.mxu0 0.0
  %3377 = vmatpush1.msra.mxu0 0.0
  %3378 = vmatprep.subr.mxu0 0.0
  %3379 = vmatpush1.msra.mxu0 0.0
  %3380 = vmatprep.subr.mxu0 0.0
  %3381 = vmatpush1.msra.mxu0 0.0
  %3382 = vmatprep.subr.mxu0 0.0
  %3383 = vmatpush1.msra.mxu0 0.0
  %3384 = vmatprep.subr.mxu0 0.0
  %3385 = vmatpush1.msra.mxu0 0.0
  %3386 = vmatprep.subr.mxu0 0.0
  %3387 = vmatpush1.msra.mxu0 0.0
  %3388 = vmatprep.subr.mxu0 0.0
  %3389 = vmatpush1.msra.mxu0 0.0
  %3390 = vmatprep.subr.mxu0 0.0
  %3391 = vmatpush1.msra.mxu0 0.0
  %3392 = vmatprep.subr.mxu0 0.0
  %3393 = vmatpush1.msra.mxu0 0.0
  %3394 = vmatprep.subr.mxu0 0.0
  %3395 = vmatpush1.msra.mxu0 0.0
  %3396 = vmatprep.subr.mxu0 0.0
  %3397 = vmatpush1.msra.mxu0 0.0
  %3398 = vmatprep.subr.mxu0 0.0
  %3399 = vmatpush1.msra.mxu0 0.0
  %3400 = vmatprep.subr.mxu0 0.0
  %3401 = vmatpush1.msra.mxu0 0.0
  %3402 = vmatprep.subr.mxu0 0.0
  %3403 = vmatpush1.msra.mxu0 0.0
  %3404 = vmatprep.subr.mxu0 0.0
  %3405 = vmatpush1.msra.mxu0 0.0
  %3406 = vmatprep.subr.mxu0 0.0
  %3407 = vmatpush1.msra.mxu0 0.0
  %3408 = vmatprep.subr.mxu0 0.0
  %3409 = vmatpush1.msra.mxu0 0.0
  %3410 = vmatprep.subr.mxu0 0.0
  %3411 = vmatpush1.msra.mxu0 0.0
  %3412 = vmatprep.subr.mxu0 0.0
  %3413 = vmatpush1.msra.mxu0 0.0
  %3414 = vmatprep.subr.mxu0 0.0
  %3415 = vmatpush1.msra.mxu0 0.0
  %3416 = vmatprep.mubr.f32.mxu0 0.0
  %3417 = vmatmul.mubr.f32.gmra.mrb[0].mxu0 %v3305
  %v3418 = vpop.f32.mrb[0].mxu0
  %v3419 = vadd.f32 0.0, %v3418
  %v3420 = vpop.f32.mrb[0].mxu0
  %v3421 = vadd.f32 0.0, %v3420
  %3422 = vmatprep.mubr.f32.mxu0 0.0
  %3423 = vmatmul.mubr.f32.gmra.mrb[0].mxu0 %v3308
  %v3424 = vpop.f32.mrb[0].mxu0
  %v3425 = vadd.f32 0.0, %v3424
  %v3426 = vpop.f32.mrb[0].mxu0
  %v3427 = vadd.f32 0.0, %v3426
  %3428 = vmatprep.mubr.f32.mxu0 0.0
  %3429 = vmatmul.mubr.f32.gmra.mrb[0].mxu0 %v3311
  %v3430 = vpop.f32.mrb[0].mxu0
  %v3431 = vadd.f32 0.0, %v3430
  %v3432 = vpop.f32.mrb[0].mxu0
  %v3433 = vadd.f32 0.0, %v3432
  %3434 = vmatprep.mubr.f32.mxu0 0.0
  %3435 = vmatmul.mubr.f32.gmra.mrb[0].mxu0 %v3314
  %v3436 = vpop.f32.mrb[0].mxu0
  %v3437 = vadd.f32 0.0, %v3436
  %v3438 = vpop.f32.mrb[0].mxu0
  %v3439 = vadd.f32 0.0, %v3438
  %3440 = vmatprep.mubr.f32.mxu0 0.0
  %3441 = vmatmul.mubr.f32.gmra.mrb[0].mxu0 %v3317
  %v3442 = vpop.f32.mrb[0].mxu0
  %v3443 = vadd.f32 0.0, %v3442
  %v3444 = vpop.f32.mrb[0].mxu0
  %v3445 = vadd.f32 0.0, %v3444
  %3446 = vmatprep.mubr.f32.mxu0 0.0
  %3447 = vmatmul.mubr.f32.gmra.mrb[0].mxu0 %v3320
  %v3448 = vpop.f32.mrb[0].mxu0
  %v3449 = vadd.f32 0.0, %v3448
  %v3450 = vpop.f32.mrb[0].mxu0
  %v3451 = vadd.f32 0.0, %v3450
  %3452 = vmatprep.mubr.f32.mxu0 0.0
  %3453 = vmatmul.mubr.f32.gmra.mrb[0].mxu0 %v3323
  %v3454 = vpop.f32.mrb[0].mxu0
  %v3455 = vadd.f32 0.0, %v3454
  %v3456 = vpop.f32.mrb[0].mxu0
  %v3457 = vadd.f32 0.0, %v3456
  %3458 = vmatprep.mubr.f32.mxu0 0.0
  %3459 = vmatmul.mubr.f32.gmra.mrb[0].mxu0 %v3326
  %v3460 = vpop.f32.mrb[0].mxu0
  %v3461 = vadd.f32 0.0, %v3460
  %v3462 = vpop.f32.mrb[0].mxu0
  %v3463 = vadd.f32 0.0, %v3462
  %3464 = vmatprep.mubr.f32.mxu0 0.0
  %3465 = vmatmul.mubr.f32.gmra.mrb[0].mxu0 %v3329
  %v3466 = vpop.f32.mrb[0].mxu0
  %v3467 = vadd.f32 0.0, %v3466
  %v3468 = vpop.f32.mrb[0].mxu0
  %v3469 = vadd.f32 0.0, %v3468
  %3470 = vmatprep.mubr.f32.mxu0 0.0
  %3471 = vmatmul.mubr.f32.gmra.mrb[0].mxu0 %v3332
  %v3472 = vpop.f32.mrb[0].mxu0
  %v3473 = vadd.f32 0.0, %v3472
  %v3474 = vpop.f32.mrb[0].mxu0
  %v3475 = vadd.f32 0.0, %v3474
  %3476 = vmatprep.mubr.f32.mxu0 0.0
  %3477 = vmatmul.mubr.f32.gmra.mrb[0].mxu0 %v3335
  %v3478 = vpop.f32.mrb[0].mxu0
  %v3479 = vadd.f32 0.0, %v3478
  %v3480 = vpop.f32.mrb[0].mxu0
  %v3481 = vadd.f32 0.0, %v3480
  %3482 = vmatprep.mubr.f32.mxu0 0.0
  %3483 = vmatmul.mubr.f32.gmra.mrb[0].mxu0 %v3338
  %v3484 = vpop.f32.mrb[0].mxu0
  %v3485 = vadd.f32 0.0, %v3484
  %v3486 = vpop.f32.mrb[0].mxu0
  %v3487 = vadd.f32 0.0, %v3486
  %3488 = vmatprep.mubr.f32.mxu0 0.0
  %3489 = vmatmul.mubr.f32.gmra.mrb[0].mxu0 %v3341
  %v3490 = vpop.f32.mrb[0].mxu0
  %v3491 = vadd.f32 0.0, %v3490
  %v3492 = vpop.f32.mrb[0].mxu0
  %v3493 = vadd.f32 0.0, %v3492
  %3494 = vmatprep.mubr.f32.mxu0 0.0
  %3495 = vmatmul.mubr.f32.gmra.mrb[0].mxu0 %v3344
  %v3496 = vpop.f32.mrb[0].mxu0
  %v3497 = vadd.f32 0.0, %v3496
  %v3498 = vpop.f32.mrb[0].mxu0
  %v3499 = vadd.f32 0.0, %v3498
  %3500 = vmatprep.mubr.f32.mxu0 0.0
  %3501 = vmatmul.mubr.f32.gmra.mrb[0].mxu0 %v3347
  %v3502 = vpop.f32.mrb[0].mxu0
  %v3503 = vadd.f32 0.0, %v3502
  %v3504 = vpop.f32.mrb[0].mxu0
  %v3505 = vadd.f32 0.0, %v3504
  %3506 = vmatprep.mubr.f32.mxu0 0.0
  %3507 = vmatmul.mubr.f32.gmra.mrb[0].mxu0 %v3350
  %v3508 = vpop.f32.mrb[0].mxu0
  %v3509 = vadd.f32 0.0, %v3508
  %v3510 = vpop.f32.mrb[0].mxu0
  %v3511 = vadd.f32 0.0, %v3510
  %3512 = vdwg.mxu0
  %v3514 = vsel %vm58, %v3223, 0
  %v3517 = vsel %vm58, %v3224, 0
  %v3520 = vsel %vm58, %v3225, 0
  %v3523 = vsel %vm58, %v3226, 0
  %v3526 = vsel %vm58, %v3227, 0
  %v3529 = vsel %vm58, %v3228, 0
  %v3532 = vsel %vm58, %v3229, 0
  %v3535 = vsel %vm58, %v3230, 0
  %v3538 = vsel %vm58, %v3231, 0
  %v3541 = vsel %vm58, %v3232, 0
  %v3544 = vsel %vm58, %v3233, 0
  %v3547 = vsel %vm58, %v3234, 0
  %v3550 = vsel %vm58, %v3235, 0
  %v3553 = vsel %vm58, %v3236, 0
  %v3556 = vsel %vm58, %v3237, 0
  %v3559 = vsel %vm58, %v3238, 0
  %3561 = vmatprep.subr.mxu0 %v3240
  %3562 = vmatpush1.msra.mxu0 %v3239
  %3563 = vmatprep.subr.mxu0 %v3242
  %3564 = vmatpush1.msra.mxu0 %v3241
  %3565 = vmatprep.subr.mxu0 %v3244
  %3566 = vmatpush1.msra.mxu0 %v3243
  %3567 = vmatprep.subr.mxu0 %v3246
  %3568 = vmatpush1.msra.mxu0 %v3245
  %3569 = vmatprep.subr.mxu0 %v3248
  %3570 = vmatpush1.msra.mxu0 %v3247
  %3571 = vmatprep.subr.mxu0 %v3250
  %3572 = vmatpush1.msra.mxu0 %v3249
  %3573 = vmatprep.subr.mxu0 %v3252
  %3574 = vmatpush1.msra.mxu0 %v3251
  %3575 = vmatprep.subr.mxu0 %v3254
  %3576 = vmatpush1.msra.mxu0 %v3253
  %3577 = vmatprep.subr.mxu0 %v3256
  %3578 = vmatpush1.msra.mxu0 %v3255
  %3579 = vmatprep.subr.mxu0 %v3258
  %3580 = vmatpush1.msra.mxu0 %v3257
  %3581 = vmatprep.subr.mxu0 %v3260
  %3582 = vmatpush1.msra.mxu0 %v3259
  %3583 = vmatprep.subr.mxu0 %v3262
  %3584 = vmatpush1.msra.mxu0 %v3261
  %3585 = vmatprep.subr.mxu0 0.0
  %3586 = vmatpush1.msra.mxu0 0.0
  %3587 = vmatprep.subr.mxu0 0.0
  %3588 = vmatpush1.msra.mxu0 0.0
  %3589 = vmatprep.subr.mxu0 0.0
  %3590 = vmatpush1.msra.mxu0 0.0
  %3591 = vmatprep.subr.mxu0 0.0
  %3592 = vmatpush1.msra.mxu0 0.0
  %3593 = vmatprep.subr.mxu0 0.0
  %3594 = vmatpush1.msra.mxu0 0.0
  %3595 = vmatprep.subr.mxu0 0.0
  %3596 = vmatpush1.msra.mxu0 0.0
  %3597 = vmatprep.subr.mxu0 0.0
  %3598 = vmatpush1.msra.mxu0 0.0
  %3599 = vmatprep.subr.mxu0 0.0
  %3600 = vmatpush1.msra.mxu0 0.0
  %3601 = vmatprep.subr.mxu0 0.0
  %3602 = vmatpush1.msra.mxu0 0.0
  %3603 = vmatprep.subr.mxu0 0.0
  %3604 = vmatpush1.msra.mxu0 0.0
  %3605 = vmatprep.subr.mxu0 0.0
  %3606 = vmatpush1.msra.mxu0 0.0
  %3607 = vmatprep.subr.mxu0 0.0
  %3608 = vmatpush1.msra.mxu0 0.0
  %3609 = vmatprep.subr.mxu0 0.0
  %3610 = vmatpush1.msra.mxu0 0.0
  %3611 = vmatprep.subr.mxu0 0.0
  %3612 = vmatpush1.msra.mxu0 0.0
  %3613 = vmatprep.subr.mxu0 0.0
  %3614 = vmatpush1.msra.mxu0 0.0
  %3615 = vmatprep.subr.mxu0 0.0
  %3616 = vmatpush1.msra.mxu0 0.0
  %3617 = vmatprep.subr.mxu0 0.0
  %3618 = vmatpush1.msra.mxu0 0.0
  %3619 = vmatprep.subr.mxu0 0.0
  %3620 = vmatpush1.msra.mxu0 0.0
  %3621 = vmatprep.subr.mxu0 0.0
  %3622 = vmatpush1.msra.mxu0 0.0
  %3623 = vmatprep.subr.mxu0 0.0
  %3624 = vmatpush1.msra.mxu0 0.0
  %3625 = vmatprep.mubr.f32.mxu0 0.0
  %3626 = vmatmul.mubr.f32.gmra.mrb[0].mxu0 %v3514
  %v3627 = vpop.f32.mrb[0].mxu0
  %v3628 = vadd.f32 %v3419, %v3627
  %v3629 = vpop.f32.mrb[0].mxu0
  %v3630 = vadd.f32 %v3421, %v3629
  %3631 = vmatprep.mubr.f32.mxu0 0.0
  %3632 = vmatmul.mubr.f32.gmra.mrb[0].mxu0 %v3517
  %v3633 = vpop.f32.mrb[0].mxu0
  %v3634 = vadd.f32 %v3425, %v3633
  %v3635 = vpop.f32.mrb[0].mxu0
  %v3636 = vadd.f32 %v3427, %v3635
  %3637 = vmatprep.mubr.f32.mxu0 0.0
  %3638 = vmatmul.mubr.f32.gmra.mrb[0].mxu0 %v3520
  %v3639 = vpop.f32.mrb[0].mxu0
  %v3640 = vadd.f32 %v3431, %v3639
  %v3641 = vpop.f32.mrb[0].mxu0
  %v3642 = vadd.f32 %v3433, %v3641
  %3643 = vmatprep.mubr.f32.mxu0 0.0
  %3644 = vmatmul.mubr.f32.gmra.mrb[0].mxu0 %v3523
  %v3645 = vpop.f32.mrb[0].mxu0
  %v3646 = vadd.f32 %v3437, %v3645
  %v3647 = vpop.f32.mrb[0].mxu0
  %v3648 = vadd.f32 %v3439, %v3647
  %3649 = vmatprep.mubr.f32.mxu0 0.0
  %3650 = vmatmul.mubr.f32.gmra.mrb[0].mxu0 %v3526
  %v3651 = vpop.f32.mrb[0].mxu0
  %v3652 = vadd.f32 %v3443, %v3651
  %v3653 = vpop.f32.mrb[0].mxu0
  %v3654 = vadd.f32 %v3445, %v3653
  %3655 = vmatprep.mubr.f32.mxu0 0.0
  %3656 = vmatmul.mubr.f32.gmra.mrb[0].mxu0 %v3529
  %v3657 = vpop.f32.mrb[0].mxu0
  %v3658 = vadd.f32 %v3449, %v3657
  %v3659 = vpop.f32.mrb[0].mxu0
  %v3660 = vadd.f32 %v3451, %v3659
  %3661 = vmatprep.mubr.f32.mxu0 0.0
  %3662 = vmatmul.mubr.f32.gmra.mrb[0].mxu0 %v3532
  %v3663 = vpop.f32.mrb[0].mxu0
  %v3664 = vadd.f32 %v3455, %v3663
  %v3665 = vpop.f32.mrb[0].mxu0
  %v3666 = vadd.f32 %v3457, %v3665
  %3667 = vmatprep.mubr.f32.mxu0 0.0
  %3668 = vmatmul.mubr.f32.gmra.mrb[0].mxu0 %v3535
  %v3669 = vpop.f32.mrb[0].mxu0
  %v3670 = vadd.f32 %v3461, %v3669
  %v3671 = vpop.f32.mrb[0].mxu0
  %v3672 = vadd.f32 %v3463, %v3671
  %3673 = vmatprep.mubr.f32.mxu0 0.0
  %3674 = vmatmul.mubr.f32.gmra.mrb[0].mxu0 %v3538
  %v3675 = vpop.f32.mrb[0].mxu0
  %v3676 = vadd.f32 %v3467, %v3675
  %v3677 = vpop.f32.mrb[0].mxu0
  %v3678 = vadd.f32 %v3469, %v3677
  %3679 = vmatprep.mubr.f32.mxu0 0.0
  %3680 = vmatmul.mubr.f32.gmra.mrb[0].mxu0 %v3541
  %v3681 = vpop.f32.mrb[0].mxu0
  %v3682 = vadd.f32 %v3473, %v3681
  %v3683 = vpop.f32.mrb[0].mxu0
  %v3684 = vadd.f32 %v3475, %v3683
  %3685 = vmatprep.mubr.f32.mxu0 0.0
  %3686 = vmatmul.mubr.f32.gmra.mrb[0].mxu0 %v3544
  %v3687 = vpop.f32.mrb[0].mxu0
  %v3688 = vadd.f32 %v3479, %v3687
  %v3689 = vpop.f32.mrb[0].mxu0
  %v3690 = vadd.f32 %v3481, %v3689
  %3691 = vmatprep.mubr.f32.mxu0 0.0
  %3692 = vmatmul.mubr.f32.gmra.mrb[0].mxu0 %v3547
  %v3693 = vpop.f32.mrb[0].mxu0
  %v3694 = vadd.f32 %v3485, %v3693
  %v3695 = vpop.f32.mrb[0].mxu0
  %v3696 = vadd.f32 %v3487, %v3695
  %3697 = vmatprep.mubr.f32.mxu0 0.0
  %3698 = vmatmul.mubr.f32.gmra.mrb[0].mxu0 %v3550
  %v3699 = vpop.f32.mrb[0].mxu0
  %v3700 = vadd.f32 %v3491, %v3699
  %v3701 = vpop.f32.mrb[0].mxu0
  %v3702 = vadd.f32 %v3493, %v3701
  %3703 = vmatprep.mubr.f32.mxu0 0.0
  %3704 = vmatmul.mubr.f32.gmra.mrb[0].mxu0 %v3553
  %v3705 = vpop.f32.mrb[0].mxu0
  %v3706 = vadd.f32 %v3497, %v3705
  %v3707 = vpop.f32.mrb[0].mxu0
  %v3708 = vadd.f32 %v3499, %v3707
  %3709 = vmatprep.mubr.f32.mxu0 0.0
  %3710 = vmatmul.mubr.f32.gmra.mrb[0].mxu0 %v3556
  %v3711 = vpop.f32.mrb[0].mxu0
  %v3712 = vadd.f32 %v3503, %v3711
  %v3713 = vpop.f32.mrb[0].mxu0
  %v3714 = vadd.f32 %v3505, %v3713
  %3715 = vmatprep.mubr.f32.mxu0 0.0
  %3716 = vmatmul.mubr.f32.gmra.mrb[0].mxu0 %v3559
  %v3717 = vpop.f32.mrb[0].mxu0
  %v3718 = vadd.f32 %v3509, %v3717
  %v3719 = vpop.f32.mrb[0].mxu0
  %v3720 = vadd.f32 %v3511, %v3719
  %3721 = vdwg.mxu0
  %v3722 = vld [vmem:[#allocation3 + $0x2] sm:$0xff]
  %v3723 = vld [vmem:[#allocation3 + $0xa] sm:$0xff]
  %v3724 = vld [vmem:[#allocation3 + $0x12] sm:$0xff]
  %v3725 = vld [vmem:[#allocation3 + $0x1a] sm:$0xff]
  %v3726 = vld [vmem:[#allocation3 + $0x22] sm:$0xff]
  %v3727 = vld [vmem:[#allocation3 + $0x2a] sm:$0xff]
  %v3728 = vld [vmem:[#allocation3 + $0x32] sm:$0xff]
  %v3729 = vld [vmem:[#allocation3 + $0x3a] sm:$0xff]
  %v3730 = vld [vmem:[#allocation3 + $0x42] sm:$0xff]
  %v3731 = vld [vmem:[#allocation3 + $0x4a] sm:$0xff]
  %v3732 = vld [vmem:[#allocation3 + $0x52] sm:$0xff]
  %v3733 = vld [vmem:[#allocation3 + $0x5a] sm:$0xff]
  %v3734 = vld [vmem:[#allocation3 + $0x62] sm:$0xff]
  %v3735 = vld [vmem:[#allocation3 + $0x6a] sm:$0xff]
  %v3736 = vld [vmem:[#allocation3 + $0x72] sm:$0xff]
  %v3737 = vld [vmem:[#allocation3 + $0x7a] sm:$0xff]
  %s3738 = scalar_lea.vmem %s4, 384
  %v3739 = vld [vmem:[%s3738] sm:$0xff]
  %v3740 = vld [vmem:[%s3738 + $0x8] sm:$0xff]
  %v3741 = vld [vmem:[%s3738 + $0x10] sm:$0xff]
  %v3742 = vld [vmem:[%s3738 + $0x18] sm:$0xff]
  %v3743 = vld [vmem:[%s3738 + $0x20] sm:$0xff]
  %v3744 = vld [vmem:[%s3738 + $0x28] sm:$0xff]
  %v3745 = vld [vmem:[%s3738 + $0x30] sm:$0xff]
  %v3746 = vld [vmem:[%s3738 + $0x38] sm:$0xff]
  %v3747 = vld [vmem:[%s3738 + $0x40] sm:$0xff]
  %v3748 = vld [vmem:[%s3738 + $0x48] sm:$0xff]
  %v3749 = vld [vmem:[%s3738 + $0x50] sm:$0xff]
  %v3750 = vld [vmem:[%s3738 + $0x58] sm:$0xff]
  %v3751 = vld [vmem:[%s3738 + $0x60] sm:$0xff]
  %v3752 = vld [vmem:[%s3738 + $0x68] sm:$0xff]
  %v3753 = vld [vmem:[%s3738 + $0x70] sm:$0xff]
  %v3754 = vld [vmem:[%s3738 + $0x78] sm:$0xff]
  %v3755 = vld [vmem:[%s3738 + $0x80] sm:$0xff]
  %v3756 = vld [vmem:[%s3738 + $0x88] sm:$0xff]
  %v3757 = vld [vmem:[%s3738 + $0x90] sm:$0xff]
  %v3758 = vld [vmem:[%s3738 + $0x98] sm:$0xff]
  %v3759 = vld [vmem:[%s3738 + $0xa0] sm:$0xff]
  %v3760 = vld [vmem:[%s3738 + $0xa8] sm:$0xff]
  %v3761 = vld [vmem:[%s3738 + $0xb0] sm:$0xff]
  %v3762 = vld [vmem:[%s3738 + $0xb8] sm:$0xff]
  %v3764 = vsel %vm58, %v3722, 0
  %v3767 = vsel %vm58, %v3723, 0
  %v3770 = vsel %vm58, %v3724, 0
  %v3773 = vsel %vm58, %v3725, 0
  %v3776 = vsel %vm58, %v3726, 0
  %v3779 = vsel %vm58, %v3727, 0
  %v3782 = vsel %vm58, %v3728, 0
  %v3785 = vsel %vm58, %v3729, 0
  %v3788 = vsel %vm58, %v3730, 0
  %v3791 = vsel %vm58, %v3731, 0
  %v3794 = vsel %vm58, %v3732, 0
  %v3797 = vsel %vm58, %v3733, 0
  %v3800 = vsel %vm58, %v3734, 0
  %v3803 = vsel %vm58, %v3735, 0
  %v3806 = vsel %vm58, %v3736, 0
  %v3809 = vsel %vm58, %v3737, 0
  %3811 = vmatprep.subr.mxu0 %v3740
  %3812 = vmatpush1.msra.mxu0 %v3739
  %3813 = vmatprep.subr.mxu0 %v3742
  %3814 = vmatpush1.msra.mxu0 %v3741
  %3815 = vmatprep.subr.mxu0 %v3744
  %3816 = vmatpush1.msra.mxu0 %v3743
  %3817 = vmatprep.subr.mxu0 %v3746
  %3818 = vmatpush1.msra.mxu0 %v3745
  %3819 = vmatprep.subr.mxu0 %v3748
  %3820 = vmatpush1.msra.mxu0 %v3747
  %3821 = vmatprep.subr.mxu0 %v3750
  %3822 = vmatpush1.msra.mxu0 %v3749
  %3823 = vmatprep.subr.mxu0 %v3752
  %3824 = vmatpush1.msra.mxu0 %v3751
  %3825 = vmatprep.subr.mxu0 %v3754
  %3826 = vmatpush1.msra.mxu0 %v3753
  %3827 = vmatprep.subr.mxu0 %v3756
  %3828 = vmatpush1.msra.mxu0 %v3755
  %3829 = vmatprep.subr.mxu0 %v3758
  %3830 = vmatpush1.msra.mxu0 %v3757
  %3831 = vmatprep.subr.mxu0 %v3760
  %3832 = vmatpush1.msra.mxu0 %v3759
  %3833 = vmatprep.subr.mxu0 %v3762
  %3834 = vmatpush1.msra.mxu0 %v3761
  %3835 = vmatprep.subr.mxu0 0.0
  %3836 = vmatpush1.msra.mxu0 0.0
  %3837 = vmatprep.subr.mxu0 0.0
  %3838 = vmatpush1.msra.mxu0 0.0
  %3839 = vmatprep.subr.mxu0 0.0
  %3840 = vmatpush1.msra.mxu0 0.0
  %3841 = vmatprep.subr.mxu0 0.0
  %3842 = vmatpush1.msra.mxu0 0.0
  %3843 = vmatprep.subr.mxu0 0.0
  %3844 = vmatpush1.msra.mxu0 0.0
  %3845 = vmatprep.subr.mxu0 0.0
  %3846 = vmatpush1.msra.mxu0 0.0
  %3847 = vmatprep.subr.mxu0 0.0
  %3848 = vmatpush1.msra.mxu0 0.0
  %3849 = vmatprep.subr.mxu0 0.0
  %3850 = vmatpush1.msra.mxu0 0.0
  %3851 = vmatprep.subr.mxu0 0.0
  %3852 = vmatpush1.msra.mxu0 0.0
  %3853 = vmatprep.subr.mxu0 0.0
  %3854 = vmatpush1.msra.mxu0 0.0
  %3855 = vmatprep.subr.mxu0 0.0
  %3856 = vmatpush1.msra.mxu0 0.0
  %3857 = vmatprep.subr.mxu0 0.0
  %3858 = vmatpush1.msra.mxu0 0.0
  %3859 = vmatprep.subr.mxu0 0.0
  %3860 = vmatpush1.msra.mxu0 0.0
  %3861 = vmatprep.subr.mxu0 0.0
  %3862 = vmatpush1.msra.mxu0 0.0
  %3863 = vmatprep.subr.mxu0 0.0
  %3864 = vmatpush1.msra.mxu0 0.0
  %3865 = vmatprep.subr.mxu0 0.0
  %3866 = vmatpush1.msra.mxu0 0.0
  %3867 = vmatprep.subr.mxu0 0.0
  %3868 = vmatpush1.msra.mxu0 0.0
  %3869 = vmatprep.subr.mxu0 0.0
  %3870 = vmatpush1.msra.mxu0 0.0
  %3871 = vmatprep.subr.mxu0 0.0
  %3872 = vmatpush1.msra.mxu0 0.0
  %3873 = vmatprep.subr.mxu0 0.0
  %3874 = vmatpush1.msra.mxu0 0.0
  %3875 = vmatprep.mubr.f32.mxu0 0.0
  %3876 = vmatmul.mubr.f32.gmra.mrb[0].mxu0 %v3764
  %v3877 = vpop.f32.mrb[0].mxu0
  %v3878 = vadd.f32 0.0, %v3877
  %v3879 = vpop.f32.mrb[0].mxu0
  %v3880 = vadd.f32 0.0, %v3879
  %3881 = vmatprep.mubr.f32.mxu0 0.0
  %3882 = vmatmul.mubr.f32.gmra.mrb[0].mxu0 %v3767
  %v3883 = vpop.f32.mrb[0].mxu0
  %v3884 = vadd.f32 0.0, %v3883
  %v3885 = vpop.f32.mrb[0].mxu0
  %v3886 = vadd.f32 0.0, %v3885
  %3887 = vmatprep.mubr.f32.mxu0 0.0
  %3888 = vmatmul.mubr.f32.gmra.mrb[0].mxu0 %v3770
  %v3889 = vpop.f32.mrb[0].mxu0
  %v3890 = vadd.f32 0.0, %v3889
  %v3891 = vpop.f32.mrb[0].mxu0
  %v3892 = vadd.f32 0.0, %v3891
  %3893 = vmatprep.mubr.f32.mxu0 0.0
  %3894 = vmatmul.mubr.f32.gmra.mrb[0].mxu0 %v3773
  %v3895 = vpop.f32.mrb[0].mxu0
  %v3896 = vadd.f32 0.0, %v3895
  %v3897 = vpop.f32.mrb[0].mxu0
  %v3898 = vadd.f32 0.0, %v3897
  %3899 = vmatprep.mubr.f32.mxu0 0.0
  %3900 = vmatmul.mubr.f32.gmra.mrb[0].mxu0 %v3776
  %v3901 = vpop.f32.mrb[0].mxu0
  %v3902 = vadd.f32 0.0, %v3901
  %v3903 = vpop.f32.mrb[0].mxu0
  %v3904 = vadd.f32 0.0, %v3903
  %3905 = vmatprep.mubr.f32.mxu0 0.0
  %3906 = vmatmul.mubr.f32.gmra.mrb[0].mxu0 %v3779
  %v3907 = vpop.f32.mrb[0].mxu0
  %v3908 = vadd.f32 0.0, %v3907
  %v3909 = vpop.f32.mrb[0].mxu0
  %v3910 = vadd.f32 0.0, %v3909
  %3911 = vmatprep.mubr.f32.mxu0 0.0
  %3912 = vmatmul.mubr.f32.gmra.mrb[0].mxu0 %v3782
  %v3913 = vpop.f32.mrb[0].mxu0
  %v3914 = vadd.f32 0.0, %v3913
  %v3915 = vpop.f32.mrb[0].mxu0
  %v3916 = vadd.f32 0.0, %v3915
  %3917 = vmatprep.mubr.f32.mxu0 0.0
  %3918 = vmatmul.mubr.f32.gmra.mrb[0].mxu0 %v3785
  %v3919 = vpop.f32.mrb[0].mxu0
  %v3920 = vadd.f32 0.0, %v3919
  %v3921 = vpop.f32.mrb[0].mxu0
  %v3922 = vadd.f32 0.0, %v3921
  %3923 = vmatprep.mubr.f32.mxu0 0.0
  %3924 = vmatmul.mubr.f32.gmra.mrb[0].mxu0 %v3788
  %v3925 = vpop.f32.mrb[0].mxu0
  %v3926 = vadd.f32 0.0, %v3925
  %v3927 = vpop.f32.mrb[0].mxu0
  %v3928 = vadd.f32 0.0, %v3927
  %3929 = vmatprep.mubr.f32.mxu0 0.0
  %3930 = vmatmul.mubr.f32.gmra.mrb[0].mxu0 %v3791
  %v3931 = vpop.f32.mrb[0].mxu0
  %v3932 = vadd.f32 0.0, %v3931
  %v3933 = vpop.f32.mrb[0].mxu0
  %v3934 = vadd.f32 0.0, %v3933
  %3935 = vmatprep.mubr.f32.mxu0 0.0
  %3936 = vmatmul.mubr.f32.gmra.mrb[0].mxu0 %v3794
  %v3937 = vpop.f32.mrb[0].mxu0
  %v3938 = vadd.f32 0.0, %v3937
  %v3939 = vpop.f32.mrb[0].mxu0
  %v3940 = vadd.f32 0.0, %v3939
  %3941 = vmatprep.mubr.f32.mxu0 0.0
  %3942 = vmatmul.mubr.f32.gmra.mrb[0].mxu0 %v3797
  %v3943 = vpop.f32.mrb[0].mxu0
  %v3944 = vadd.f32 0.0, %v3943
  %v3945 = vpop.f32.mrb[0].mxu0
  %v3946 = vadd.f32 0.0, %v3945
  %3947 = vmatprep.mubr.f32.mxu0 0.0
  %3948 = vmatmul.mubr.f32.gmra.mrb[0].mxu0 %v3800
  %v3949 = vpop.f32.mrb[0].mxu0
  %v3950 = vadd.f32 0.0, %v3949
  %v3951 = vpop.f32.mrb[0].mxu0
  %v3952 = vadd.f32 0.0, %v3951
  %3953 = vmatprep.mubr.f32.mxu0 0.0
  %3954 = vmatmul.mubr.f32.gmra.mrb[0].mxu0 %v3803
  %v3955 = vpop.f32.mrb[0].mxu0
  %v3956 = vadd.f32 0.0, %v3955
  %v3957 = vpop.f32.mrb[0].mxu0
  %v3958 = vadd.f32 0.0, %v3957
  %3959 = vmatprep.mubr.f32.mxu0 0.0
  %3960 = vmatmul.mubr.f32.gmra.mrb[0].mxu0 %v3806
  %v3961 = vpop.f32.mrb[0].mxu0
  %v3962 = vadd.f32 0.0, %v3961
  %v3963 = vpop.f32.mrb[0].mxu0
  %v3964 = vadd.f32 0.0, %v3963
  %3965 = vmatprep.mubr.f32.mxu0 0.0
  %3966 = vmatmul.mubr.f32.gmra.mrb[0].mxu0 %v3809
  %v3967 = vpop.f32.mrb[0].mxu0
  %v3968 = vadd.f32 0.0, %v3967
  %v3969 = vpop.f32.mrb[0].mxu0
  %v3970 = vadd.f32 0.0, %v3969
  %3971 = vdwg.mxu0
  %v3972 = vadd.f32 %v3628, %v3878
  %v3973 = vadd.f32 %v3630, %v3880
  %v3974 = vadd.f32 %v3634, %v3884
  %v3975 = vadd.f32 %v3636, %v3886
  %v3976 = vadd.f32 %v3640, %v3890
  %v3977 = vadd.f32 %v3642, %v3892
  %v3978 = vadd.f32 %v3646, %v3896
  %v3979 = vadd.f32 %v3648, %v3898
  %v3980 = vadd.f32 %v3652, %v3902
  %v3981 = vadd.f32 %v3654, %v3904
  %v3982 = vadd.f32 %v3658, %v3908
  %v3983 = vadd.f32 %v3660, %v3910
  %v3984 = vadd.f32 %v3664, %v3914
  %v3985 = vadd.f32 %v3666, %v3916
  %v3986 = vadd.f32 %v3670, %v3920
  %v3987 = vadd.f32 %v3672, %v3922
  %v3988 = vadd.f32 %v3676, %v3926
  %v3989 = vadd.f32 %v3678, %v3928
  %v3990 = vadd.f32 %v3682, %v3932
  %v3991 = vadd.f32 %v3684, %v3934
  %v3992 = vadd.f32 %v3688, %v3938
  %v3993 = vadd.f32 %v3690, %v3940
  %v3994 = vadd.f32 %v3694, %v3944
  %v3995 = vadd.f32 %v3696, %v3946
  %v3996 = vadd.f32 %v3700, %v3950
  %v3997 = vadd.f32 %v3702, %v3952
  %v3998 = vadd.f32 %v3706, %v3956
  %v3999 = vadd.f32 %v3708, %v3958
  %v4000 = vadd.f32 %v3712, %v3962
  %v4001 = vadd.f32 %v3714, %v3964
  %v4002 = vadd.f32 %v3718, %v3968
  %v4003 = vadd.f32 %v3720, %v3970
  %v4004 = vld [vmem:[#allocation3 + $0x3] sm:$0xff]
  %v4005 = vld [vmem:[#allocation3 + $0xb] sm:$0xff]
  %v4006 = vld [vmem:[#allocation3 + $0x13] sm:$0xff]
  %v4007 = vld [vmem:[#allocation3 + $0x1b] sm:$0xff]
  %v4008 = vld [vmem:[#allocation3 + $0x23] sm:$0xff]
  %v4009 = vld [vmem:[#allocation3 + $0x2b] sm:$0xff]
  %v4010 = vld [vmem:[#allocation3 + $0x33] sm:$0xff]
  %v4011 = vld [vmem:[#allocation3 + $0x3b] sm:$0xff]
  %v4012 = vld [vmem:[#allocation3 + $0x43] sm:$0xff]
  %v4013 = vld [vmem:[#allocation3 + $0x4b] sm:$0xff]
  %v4014 = vld [vmem:[#allocation3 + $0x53] sm:$0xff]
  %v4015 = vld [vmem:[#allocation3 + $0x5b] sm:$0xff]
  %v4016 = vld [vmem:[#allocation3 + $0x63] sm:$0xff]
  %v4017 = vld [vmem:[#allocation3 + $0x6b] sm:$0xff]
  %v4018 = vld [vmem:[#allocation3 + $0x73] sm:$0xff]
  %v4019 = vld [vmem:[#allocation3 + $0x7b] sm:$0xff]
  %s4020 = scalar_lea.vmem %s4, 576
  %v4021 = vld [vmem:[%s4020] sm:$0xff]
  %v4022 = vld [vmem:[%s4020 + $0x8] sm:$0xff]
  %v4023 = vld [vmem:[%s4020 + $0x10] sm:$0xff]
  %v4024 = vld [vmem:[%s4020 + $0x18] sm:$0xff]
  %v4025 = vld [vmem:[%s4020 + $0x20] sm:$0xff]
  %v4026 = vld [vmem:[%s4020 + $0x28] sm:$0xff]
  %v4027 = vld [vmem:[%s4020 + $0x30] sm:$0xff]
  %v4028 = vld [vmem:[%s4020 + $0x38] sm:$0xff]
  %v4029 = vld [vmem:[%s4020 + $0x40] sm:$0xff]
  %v4030 = vld [vmem:[%s4020 + $0x48] sm:$0xff]
  %v4031 = vld [vmem:[%s4020 + $0x50] sm:$0xff]
  %v4032 = vld [vmem:[%s4020 + $0x58] sm:$0xff]
  %v4033 = vld [vmem:[%s4020 + $0x60] sm:$0xff]
  %v4034 = vld [vmem:[%s4020 + $0x68] sm:$0xff]
  %v4035 = vld [vmem:[%s4020 + $0x70] sm:$0xff]
  %v4036 = vld [vmem:[%s4020 + $0x78] sm:$0xff]
  %v4037 = vld [vmem:[%s4020 + $0x80] sm:$0xff]
  %v4038 = vld [vmem:[%s4020 + $0x88] sm:$0xff]
  %v4039 = vld [vmem:[%s4020 + $0x90] sm:$0xff]
  %v4040 = vld [vmem:[%s4020 + $0x98] sm:$0xff]
  %v4041 = vld [vmem:[%s4020 + $0xa0] sm:$0xff]
  %v4042 = vld [vmem:[%s4020 + $0xa8] sm:$0xff]
  %v4043 = vld [vmem:[%s4020 + $0xb0] sm:$0xff]
  %v4044 = vld [vmem:[%s4020 + $0xb8] sm:$0xff]
  %v4046 = vsel %vm58, %v4004, 0
  %v4049 = vsel %vm58, %v4005, 0
  %v4052 = vsel %vm58, %v4006, 0
  %v4055 = vsel %vm58, %v4007, 0
  %v4058 = vsel %vm58, %v4008, 0
  %v4061 = vsel %vm58, %v4009, 0
  %v4064 = vsel %vm58, %v4010, 0
  %v4067 = vsel %vm58, %v4011, 0
  %v4070 = vsel %vm58, %v4012, 0
  %v4073 = vsel %vm58, %v4013, 0
  %v4076 = vsel %vm58, %v4014, 0
  %v4079 = vsel %vm58, %v4015, 0
  %v4082 = vsel %vm58, %v4016, 0
  %v4085 = vsel %vm58, %v4017, 0
  %v4088 = vsel %vm58, %v4018, 0
  %v4091 = vsel %vm58, %v4019, 0
  %4093 = vmatprep.subr.mxu0 %v4022
  %4094 = vmatpush1.msra.mxu0 %v4021
  %4095 = vmatprep.subr.mxu0 %v4024
  %4096 = vmatpush1.msra.mxu0 %v4023
  %4097 = vmatprep.subr.mxu0 %v4026
  %4098 = vmatpush1.msra.mxu0 %v4025
  %4099 = vmatprep.subr.mxu0 %v4028
  %4100 = vmatpush1.msra.mxu0 %v4027
  %4101 = vmatprep.subr.mxu0 %v4030
  %4102 = vmatpush1.msra.mxu0 %v4029
  %4103 = vmatprep.subr.mxu0 %v4032
  %4104 = vmatpush1.msra.mxu0 %v4031
  %4105 = vmatprep.subr.mxu0 %v4034
  %4106 = vmatpush1.msra.mxu0 %v4033
  %4107 = vmatprep.subr.mxu0 %v4036
  %4108 = vmatpush1.msra.mxu0 %v4035
  %4109 = vmatprep.subr.mxu0 %v4038
  %4110 = vmatpush1.msra.mxu0 %v4037
  %4111 = vmatprep.subr.mxu0 %v4040
  %4112 = vmatpush1.msra.mxu0 %v4039
  %4113 = vmatprep.subr.mxu0 %v4042
  %4114 = vmatpush1.msra.mxu0 %v4041
  %4115 = vmatprep.subr.mxu0 %v4044
  %4116 = vmatpush1.msra.mxu0 %v4043
  %4117 = vmatprep.subr.mxu0 0.0
  %4118 = vmatpush1.msra.mxu0 0.0
  %4119 = vmatprep.subr.mxu0 0.0
  %4120 = vmatpush1.msra.mxu0 0.0
  %4121 = vmatprep.subr.mxu0 0.0
  %4122 = vmatpush1.msra.mxu0 0.0
  %4123 = vmatprep.subr.mxu0 0.0
  %4124 = vmatpush1.msra.mxu0 0.0
  %4125 = vmatprep.subr.mxu0 0.0
  %4126 = vmatpush1.msra.mxu0 0.0
  %4127 = vmatprep.subr.mxu0 0.0
  %4128 = vmatpush1.msra.mxu0 0.0
  %4129 = vmatprep.subr.mxu0 0.0
  %4130 = vmatpush1.msra.mxu0 0.0
  %4131 = vmatprep.subr.mxu0 0.0
  %4132 = vmatpush1.msra.mxu0 0.0
  %4133 = vmatprep.subr.mxu0 0.0
  %4134 = vmatpush1.msra.mxu0 0.0
  %4135 = vmatprep.subr.mxu0 0.0
  %4136 = vmatpush1.msra.mxu0 0.0
  %4137 = vmatprep.subr.mxu0 0.0
  %4138 = vmatpush1.msra.mxu0 0.0
  %4139 = vmatprep.subr.mxu0 0.0
  %4140 = vmatpush1.msra.mxu0 0.0
  %4141 = vmatprep.subr.mxu0 0.0
  %4142 = vmatpush1.msra.mxu0 0.0
  %4143 = vmatprep.subr.mxu0 0.0
  %4144 = vmatpush1.msra.mxu0 0.0
  %4145 = vmatprep.subr.mxu0 0.0
  %4146 = vmatpush1.msra.mxu0 0.0
  %4147 = vmatprep.subr.mxu0 0.0
  %4148 = vmatpush1.msra.mxu0 0.0
  %4149 = vmatprep.subr.mxu0 0.0
  %4150 = vmatpush1.msra.mxu0 0.0
  %4151 = vmatprep.subr.mxu0 0.0
  %4152 = vmatpush1.msra.mxu0 0.0
  %4153 = vmatprep.subr.mxu0 0.0
  %4154 = vmatpush1.msra.mxu0 0.0
  %4155 = vmatprep.subr.mxu0 0.0
  %4156 = vmatpush1.msra.mxu0 0.0
  %4157 = vmatprep.mubr.f32.mxu0 0.0
  %4158 = vmatmul.mubr.f32.gmra.mrb[0].mxu0 %v4046
  %v4159 = vpop.f32.mrb[0].mxu0
  %v4160 = vadd.f32 0.0, %v4159
  %v4161 = vpop.f32.mrb[0].mxu0
  %v4162 = vadd.f32 0.0, %v4161
  %4163 = vmatprep.mubr.f32.mxu0 0.0
  %4164 = vmatmul.mubr.f32.gmra.mrb[0].mxu0 %v4049
  %v4165 = vpop.f32.mrb[0].mxu0
  %v4166 = vadd.f32 0.0, %v4165
  %v4167 = vpop.f32.mrb[0].mxu0
  %v4168 = vadd.f32 0.0, %v4167
  %4169 = vmatprep.mubr.f32.mxu0 0.0
  %4170 = vmatmul.mubr.f32.gmra.mrb[0].mxu0 %v4052
  %v4171 = vpop.f32.mrb[0].mxu0
  %v4172 = vadd.f32 0.0, %v4171
  %v4173 = vpop.f32.mrb[0].mxu0
  %v4174 = vadd.f32 0.0, %v4173
  %4175 = vmatprep.mubr.f32.mxu0 0.0
  %4176 = vmatmul.mubr.f32.gmra.mrb[0].mxu0 %v4055
  %v4177 = vpop.f32.mrb[0].mxu0
  %v4178 = vadd.f32 0.0, %v4177
  %v4179 = vpop.f32.mrb[0].mxu0
  %v4180 = vadd.f32 0.0, %v4179
  %4181 = vmatprep.mubr.f32.mxu0 0.0
  %4182 = vmatmul.mubr.f32.gmra.mrb[0].mxu0 %v4058
  %v4183 = vpop.f32.mrb[0].mxu0
  %v4184 = vadd.f32 0.0, %v4183
  %v4185 = vpop.f32.mrb[0].mxu0
  %v4186 = vadd.f32 0.0, %v4185
  %4187 = vmatprep.mubr.f32.mxu0 0.0
  %4188 = vmatmul.mubr.f32.gmra.mrb[0].mxu0 %v4061
  %v4189 = vpop.f32.mrb[0].mxu0
  %v4190 = vadd.f32 0.0, %v4189
  %v4191 = vpop.f32.mrb[0].mxu0
  %v4192 = vadd.f32 0.0, %v4191
  %4193 = vmatprep.mubr.f32.mxu0 0.0
  %4194 = vmatmul.mubr.f32.gmra.mrb[0].mxu0 %v4064
  %v4195 = vpop.f32.mrb[0].mxu0
  %v4196 = vadd.f32 0.0, %v4195
  %v4197 = vpop.f32.mrb[0].mxu0
  %v4198 = vadd.f32 0.0, %v4197
  %4199 = vmatprep.mubr.f32.mxu0 0.0
  %4200 = vmatmul.mubr.f32.gmra.mrb[0].mxu0 %v4067
  %v4201 = vpop.f32.mrb[0].mxu0
  %v4202 = vadd.f32 0.0, %v4201
  %v4203 = vpop.f32.mrb[0].mxu0
  %v4204 = vadd.f32 0.0, %v4203
  %4205 = vmatprep.mubr.f32.mxu0 0.0
  %4206 = vmatmul.mubr.f32.gmra.mrb[0].mxu0 %v4070
  %v4207 = vpop.f32.mrb[0].mxu0
  %v4208 = vadd.f32 0.0, %v4207
  %v4209 = vpop.f32.mrb[0].mxu0
  %v4210 = vadd.f32 0.0, %v4209
  %4211 = vmatprep.mubr.f32.mxu0 0.0
  %4212 = vmatmul.mubr.f32.gmra.mrb[0].mxu0 %v4073
  %v4213 = vpop.f32.mrb[0].mxu0
  %v4214 = vadd.f32 0.0, %v4213
  %v4215 = vpop.f32.mrb[0].mxu0
  %v4216 = vadd.f32 0.0, %v4215
  %4217 = vmatprep.mubr.f32.mxu0 0.0
  %4218 = vmatmul.mubr.f32.gmra.mrb[0].mxu0 %v4076
  %v4219 = vpop.f32.mrb[0].mxu0
  %v4220 = vadd.f32 0.0, %v4219
  %v4221 = vpop.f32.mrb[0].mxu0
  %v4222 = vadd.f32 0.0, %v4221
  %4223 = vmatprep.mubr.f32.mxu0 0.0
  %4224 = vmatmul.mubr.f32.gmra.mrb[0].mxu0 %v4079
  %v4225 = vpop.f32.mrb[0].mxu0
  %v4226 = vadd.f32 0.0, %v4225
  %v4227 = vpop.f32.mrb[0].mxu0
  %v4228 = vadd.f32 0.0, %v4227
  %4229 = vmatprep.mubr.f32.mxu0 0.0
  %4230 = vmatmul.mubr.f32.gmra.mrb[0].mxu0 %v4082
  %v4231 = vpop.f32.mrb[0].mxu0
  %v4232 = vadd.f32 0.0, %v4231
  %v4233 = vpop.f32.mrb[0].mxu0
  %v4234 = vadd.f32 0.0, %v4233
  %4235 = vmatprep.mubr.f32.mxu0 0.0
  %4236 = vmatmul.mubr.f32.gmra.mrb[0].mxu0 %v4085
  %v4237 = vpop.f32.mrb[0].mxu0
  %v4238 = vadd.f32 0.0, %v4237
  %v4239 = vpop.f32.mrb[0].mxu0
  %v4240 = vadd.f32 0.0, %v4239
  %4241 = vmatprep.mubr.f32.mxu0 0.0
  %4242 = vmatmul.mubr.f32.gmra.mrb[0].mxu0 %v4088
  %v4243 = vpop.f32.mrb[0].mxu0
  %v4244 = vadd.f32 0.0, %v4243
  %v4245 = vpop.f32.mrb[0].mxu0
  %v4246 = vadd.f32 0.0, %v4245
  %4247 = vmatprep.mubr.f32.mxu0 0.0
  %4248 = vmatmul.mubr.f32.gmra.mrb[0].mxu0 %v4091
  %v4249 = vpop.f32.mrb[0].mxu0
  %v4250 = vadd.f32 0.0, %v4249
  %v4251 = vpop.f32.mrb[0].mxu0
  %v4252 = vadd.f32 0.0, %v4251
  %4253 = vdwg.mxu0
  %v4254 = vadd.f32 %v3972, %v4160
  %v4255 = vadd.f32 %v3973, %v4162
  %v4256 = vadd.f32 %v3974, %v4166
  %v4257 = vadd.f32 %v3975, %v4168
  %v4258 = vadd.f32 %v3976, %v4172
  %v4259 = vadd.f32 %v3977, %v4174
  %v4260 = vadd.f32 %v3978, %v4178
  %v4261 = vadd.f32 %v3979, %v4180
  %v4262 = vadd.f32 %v3980, %v4184
  %v4263 = vadd.f32 %v3981, %v4186
  %v4264 = vadd.f32 %v3982, %v4190
  %v4265 = vadd.f32 %v3983, %v4192
  %v4266 = vadd.f32 %v3984, %v4196
  %v4267 = vadd.f32 %v3985, %v4198
  %v4268 = vadd.f32 %v3986, %v4202
  %v4269 = vadd.f32 %v3987, %v4204
  %v4270 = vadd.f32 %v3988, %v4208
  %v4271 = vadd.f32 %v3989, %v4210
  %v4272 = vadd.f32 %v3990, %v4214
  %v4273 = vadd.f32 %v3991, %v4216
  %v4274 = vadd.f32 %v3992, %v4220
  %v4275 = vadd.f32 %v3993, %v4222
  %v4276 = vadd.f32 %v3994, %v4226
  %v4277 = vadd.f32 %v3995, %v4228
  %v4278 = vadd.f32 %v3996, %v4232
  %v4279 = vadd.f32 %v3997, %v4234
  %v4280 = vadd.f32 %v3998, %v4238
  %v4281 = vadd.f32 %v3999, %v4240
  %v4282 = vadd.f32 %v4000, %v4244
  %v4283 = vadd.f32 %v4001, %v4246
  %v4284 = vadd.f32 %v4002, %v4250
  %v4285 = vadd.f32 %v4003, %v4252
  %v4286 = vld [vmem:[#allocation3 + $0x4] sm:$0xff]
  %v4287 = vld [vmem:[#allocation3 + $0xc] sm:$0xff]
  %v4288 = vld [vmem:[#allocation3 + $0x14] sm:$0xff]
  %v4289 = vld [vmem:[#allocation3 + $0x1c] sm:$0xff]
  %v4290 = vld [vmem:[#allocation3 + $0x24] sm:$0xff]
  %v4291 = vld [vmem:[#allocation3 + $0x2c] sm:$0xff]
  %v4292 = vld [vmem:[#allocation3 + $0x34] sm:$0xff]
  %v4293 = vld [vmem:[#allocation3 + $0x3c] sm:$0xff]
  %v4294 = vld [vmem:[#allocation3 + $0x44] sm:$0xff]
  %v4295 = vld [vmem:[#allocation3 + $0x4c] sm:$0xff]
  %v4296 = vld [vmem:[#allocation3 + $0x54] sm:$0xff]
  %v4297 = vld [vmem:[#allocation3 + $0x5c] sm:$0xff]
  %v4298 = vld [vmem:[#allocation3 + $0x64] sm:$0xff]
  %v4299 = vld [vmem:[#allocation3 + $0x6c] sm:$0xff]
  %v4300 = vld [vmem:[#allocation3 + $0x74] sm:$0xff]
  %v4301 = vld [vmem:[#allocation3 + $0x7c] sm:$0xff]
  %s4302 = scalar_lea.vmem %s4, 768
  %v4303 = vld [vmem:[%s4302] sm:$0xff]
  %v4304 = vld [vmem:[%s4302 + $0x8] sm:$0xff]
  %v4305 = vld [vmem:[%s4302 + $0x10] sm:$0xff]
  %v4306 = vld [vmem:[%s4302 + $0x18] sm:$0xff]
  %v4307 = vld [vmem:[%s4302 + $0x20] sm:$0xff]
  %v4308 = vld [vmem:[%s4302 + $0x28] sm:$0xff]
  %v4309 = vld [vmem:[%s4302 + $0x30] sm:$0xff]
  %v4310 = vld [vmem:[%s4302 + $0x38] sm:$0xff]
  %v4311 = vld [vmem:[%s4302 + $0x40] sm:$0xff]
  %v4312 = vld [vmem:[%s4302 + $0x48] sm:$0xff]
  %v4313 = vld [vmem:[%s4302 + $0x50] sm:$0xff]
  %v4314 = vld [vmem:[%s4302 + $0x58] sm:$0xff]
  %v4315 = vld [vmem:[%s4302 + $0x60] sm:$0xff]
  %v4316 = vld [vmem:[%s4302 + $0x68] sm:$0xff]
  %v4317 = vld [vmem:[%s4302 + $0x70] sm:$0xff]
  %v4318 = vld [vmem:[%s4302 + $0x78] sm:$0xff]
  %v4319 = vld [vmem:[%s4302 + $0x80] sm:$0xff]
  %v4320 = vld [vmem:[%s4302 + $0x88] sm:$0xff]
  %v4321 = vld [vmem:[%s4302 + $0x90] sm:$0xff]
  %v4322 = vld [vmem:[%s4302 + $0x98] sm:$0xff]
  %v4323 = vld [vmem:[%s4302 + $0xa0] sm:$0xff]
  %v4324 = vld [vmem:[%s4302 + $0xa8] sm:$0xff]
  %v4325 = vld [vmem:[%s4302 + $0xb0] sm:$0xff]
  %v4326 = vld [vmem:[%s4302 + $0xb8] sm:$0xff]
  %v4328 = vsel %vm58, %v4286, 0
  %v4331 = vsel %vm58, %v4287, 0
  %v4334 = vsel %vm58, %v4288, 0
  %v4337 = vsel %vm58, %v4289, 0
  %v4340 = vsel %vm58, %v4290, 0
  %v4343 = vsel %vm58, %v4291, 0
  %v4346 = vsel %vm58, %v4292, 0
  %v4349 = vsel %vm58, %v4293, 0
  %v4352 = vsel %vm58, %v4294, 0
  %v4355 = vsel %vm58, %v4295, 0
  %v4358 = vsel %vm58, %v4296, 0
  %v4361 = vsel %vm58, %v4297, 0
  %v4364 = vsel %vm58, %v4298, 0
  %v4367 = vsel %vm58, %v4299, 0
  %v4370 = vsel %vm58, %v4300, 0
  %v4373 = vsel %vm58, %v4301, 0
  %4375 = vmatprep.subr.mxu0 %v4304
  %4376 = vmatpush1.msra.mxu0 %v4303
  %4377 = vmatprep.subr.mxu0 %v4306
  %4378 = vmatpush1.msra.mxu0 %v4305
  %4379 = vmatprep.subr.mxu0 %v4308
  %4380 = vmatpush1.msra.mxu0 %v4307
  %4381 = vmatprep.subr.mxu0 %v4310
  %4382 = vmatpush1.msra.mxu0 %v4309
  %4383 = vmatprep.subr.mxu0 %v4312
  %4384 = vmatpush1.msra.mxu0 %v4311
  %4385 = vmatprep.subr.mxu0 %v4314
  %4386 = vmatpush1.msra.mxu0 %v4313
  %4387 = vmatprep.subr.mxu0 %v4316
  %4388 = vmatpush1.msra.mxu0 %v4315
  %4389 = vmatprep.subr.mxu0 %v4318
  %4390 = vmatpush1.msra.mxu0 %v4317
  %4391 = vmatprep.subr.mxu0 %v4320
  %4392 = vmatpush1.msra.mxu0 %v4319
  %4393 = vmatprep.subr.mxu0 %v4322
  %4394 = vmatpush1.msra.mxu0 %v4321
  %4395 = vmatprep.subr.mxu0 %v4324
  %4396 = vmatpush1.msra.mxu0 %v4323
  %4397 = vmatprep.subr.mxu0 %v4326
  %4398 = vmatpush1.msra.mxu0 %v4325
  %4399 = vmatprep.subr.mxu0 0.0
  %4400 = vmatpush1.msra.mxu0 0.0
  %4401 = vmatprep.subr.mxu0 0.0
  %4402 = vmatpush1.msra.mxu0 0.0
  %4403 = vmatprep.subr.mxu0 0.0
  %4404 = vmatpush1.msra.mxu0 0.0
  %4405 = vmatprep.subr.mxu0 0.0
  %4406 = vmatpush1.msra.mxu0 0.0
  %4407 = vmatprep.subr.mxu0 0.0
  %4408 = vmatpush1.msra.mxu0 0.0
  %4409 = vmatprep.subr.mxu0 0.0
  %4410 = vmatpush1.msra.mxu0 0.0
  %4411 = vmatprep.subr.mxu0 0.0
  %4412 = vmatpush1.msra.mxu0 0.0
  %4413 = vmatprep.subr.mxu0 0.0
  %4414 = vmatpush1.msra.mxu0 0.0
  %4415 = vmatprep.subr.mxu0 0.0
  %4416 = vmatpush1.msra.mxu0 0.0
  %4417 = vmatprep.subr.mxu0 0.0
  %4418 = vmatpush1.msra.mxu0 0.0
  %4419 = vmatprep.subr.mxu0 0.0
  %4420 = vmatpush1.msra.mxu0 0.0
  %4421 = vmatprep.subr.mxu0 0.0
  %4422 = vmatpush1.msra.mxu0 0.0
  %4423 = vmatprep.subr.mxu0 0.0
  %4424 = vmatpush1.msra.mxu0 0.0
  %4425 = vmatprep.subr.mxu0 0.0
  %4426 = vmatpush1.msra.mxu0 0.0
  %4427 = vmatprep.subr.mxu0 0.0
  %4428 = vmatpush1.msra.mxu0 0.0
  %4429 = vmatprep.subr.mxu0 0.0
  %4430 = vmatpush1.msra.mxu0 0.0
  %4431 = vmatprep.subr.mxu0 0.0
  %4432 = vmatpush1.msra.mxu0 0.0
  %4433 = vmatprep.subr.mxu0 0.0
  %4434 = vmatpush1.msra.mxu0 0.0
  %4435 = vmatprep.subr.mxu0 0.0
  %4436 = vmatpush1.msra.mxu0 0.0
  %4437 = vmatprep.subr.mxu0 0.0
  %4438 = vmatpush1.msra.mxu0 0.0
  %4439 = vmatprep.mubr.f32.mxu0 0.0
  %4440 = vmatmul.mubr.f32.gmra.mrb[0].mxu0 %v4328
  %v4441 = vpop.f32.mrb[0].mxu0
  %v4442 = vadd.f32 0.0, %v4441
  %v4443 = vpop.f32.mrb[0].mxu0
  %v4444 = vadd.f32 0.0, %v4443
  %4445 = vmatprep.mubr.f32.mxu0 0.0
  %4446 = vmatmul.mubr.f32.gmra.mrb[0].mxu0 %v4331
  %v4447 = vpop.f32.mrb[0].mxu0
  %v4448 = vadd.f32 0.0, %v4447
  %v4449 = vpop.f32.mrb[0].mxu0
  %v4450 = vadd.f32 0.0, %v4449
  %4451 = vmatprep.mubr.f32.mxu0 0.0
  %4452 = vmatmul.mubr.f32.gmra.mrb[0].mxu0 %v4334
  %v4453 = vpop.f32.mrb[0].mxu0
  %v4454 = vadd.f32 0.0, %v4453
  %v4455 = vpop.f32.mrb[0].mxu0
  %v4456 = vadd.f32 0.0, %v4455
  %4457 = vmatprep.mubr.f32.mxu0 0.0
  %4458 = vmatmul.mubr.f32.gmra.mrb[0].mxu0 %v4337
  %v4459 = vpop.f32.mrb[0].mxu0
  %v4460 = vadd.f32 0.0, %v4459
  %v4461 = vpop.f32.mrb[0].mxu0
  %v4462 = vadd.f32 0.0, %v4461
  %4463 = vmatprep.mubr.f32.mxu0 0.0
  %4464 = vmatmul.mubr.f32.gmra.mrb[0].mxu0 %v4340
  %v4465 = vpop.f32.mrb[0].mxu0
  %v4466 = vadd.f32 0.0, %v4465
  %v4467 = vpop.f32.mrb[0].mxu0
  %v4468 = vadd.f32 0.0, %v4467
  %4469 = vmatprep.mubr.f32.mxu0 0.0
  %4470 = vmatmul.mubr.f32.gmra.mrb[0].mxu0 %v4343
  %v4471 = vpop.f32.mrb[0].mxu0
  %v4472 = vadd.f32 0.0, %v4471
  %v4473 = vpop.f32.mrb[0].mxu0
  %v4474 = vadd.f32 0.0, %v4473
  %4475 = vmatprep.mubr.f32.mxu0 0.0
  %4476 = vmatmul.mubr.f32.gmra.mrb[0].mxu0 %v4346
  %v4477 = vpop.f32.mrb[0].mxu0
  %v4478 = vadd.f32 0.0, %v4477
  %v4479 = vpop.f32.mrb[0].mxu0
  %v4480 = vadd.f32 0.0, %v4479
  %4481 = vmatprep.mubr.f32.mxu0 0.0
  %4482 = vmatmul.mubr.f32.gmra.mrb[0].mxu0 %v4349
  %v4483 = vpop.f32.mrb[0].mxu0
  %v4484 = vadd.f32 0.0, %v4483
  %v4485 = vpop.f32.mrb[0].mxu0
  %v4486 = vadd.f32 0.0, %v4485
  %4487 = vmatprep.mubr.f32.mxu0 0.0
  %4488 = vmatmul.mubr.f32.gmra.mrb[0].mxu0 %v4352
  %v4489 = vpop.f32.mrb[0].mxu0
  %v4490 = vadd.f32 0.0, %v4489
  %v4491 = vpop.f32.mrb[0].mxu0
  %v4492 = vadd.f32 0.0, %v4491
  %4493 = vmatprep.mubr.f32.mxu0 0.0
  %4494 = vmatmul.mubr.f32.gmra.mrb[0].mxu0 %v4355
  %v4495 = vpop.f32.mrb[0].mxu0
  %v4496 = vadd.f32 0.0, %v4495
  %v4497 = vpop.f32.mrb[0].mxu0
  %v4498 = vadd.f32 0.0, %v4497
  %4499 = vmatprep.mubr.f32.mxu0 0.0
  %4500 = vmatmul.mubr.f32.gmra.mrb[0].mxu0 %v4358
  %v4501 = vpop.f32.mrb[0].mxu0
  %v4502 = vadd.f32 0.0, %v4501
  %v4503 = vpop.f32.mrb[0].mxu0
  %v4504 = vadd.f32 0.0, %v4503
  %4505 = vmatprep.mubr.f32.mxu0 0.0
  %4506 = vmatmul.mubr.f32.gmra.mrb[0].mxu0 %v4361
  %v4507 = vpop.f32.mrb[0].mxu0
  %v4508 = vadd.f32 0.0, %v4507
  %v4509 = vpop.f32.mrb[0].mxu0
  %v4510 = vadd.f32 0.0, %v4509
  %4511 = vmatprep.mubr.f32.mxu0 0.0
  %4512 = vmatmul.mubr.f32.gmra.mrb[0].mxu0 %v4364
  %v4513 = vpop.f32.mrb[0].mxu0
  %v4514 = vadd.f32 0.0, %v4513
  %v4515 = vpop.f32.mrb[0].mxu0
  %v4516 = vadd.f32 0.0, %v4515
  %4517 = vmatprep.mubr.f32.mxu0 0.0
  %4518 = vmatmul.mubr.f32.gmra.mrb[0].mxu0 %v4367
  %v4519 = vpop.f32.mrb[0].mxu0
  %v4520 = vadd.f32 0.0, %v4519
  %v4521 = vpop.f32.mrb[0].mxu0
  %v4522 = vadd.f32 0.0, %v4521
  %4523 = vmatprep.mubr.f32.mxu0 0.0
  %4524 = vmatmul.mubr.f32.gmra.mrb[0].mxu0 %v4370
  %v4525 = vpop.f32.mrb[0].mxu0
  %v4526 = vadd.f32 0.0, %v4525
  %v4527 = vpop.f32.mrb[0].mxu0
  %v4528 = vadd.f32 0.0, %v4527
  %4529 = vmatprep.mubr.f32.mxu0 0.0
  %4530 = vmatmul.mubr.f32.gmra.mrb[0].mxu0 %v4373
  %v4531 = vpop.f32.mrb[0].mxu0
  %v4532 = vadd.f32 0.0, %v4531
  %v4533 = vpop.f32.mrb[0].mxu0
  %v4534 = vadd.f32 0.0, %v4533
  %4535 = vdwg.mxu0
  %v4536 = vadd.f32 %v4254, %v4442
  %v4537 = vadd.f32 %v4255, %v4444
  %v4538 = vadd.f32 %v4256, %v4448
  %v4539 = vadd.f32 %v4257, %v4450
  %v4540 = vadd.f32 %v4258, %v4454
  %v4541 = vadd.f32 %v4259, %v4456
  %v4542 = vadd.f32 %v4260, %v4460
  %v4543 = vadd.f32 %v4261, %v4462
  %v4544 = vadd.f32 %v4262, %v4466
  %v4545 = vadd.f32 %v4263, %v4468
  %v4546 = vadd.f32 %v4264, %v4472
  %v4547 = vadd.f32 %v4265, %v4474
  %v4548 = vadd.f32 %v4266, %v4478
  %v4549 = vadd.f32 %v4267, %v4480
  %v4550 = vadd.f32 %v4268, %v4484
  %v4551 = vadd.f32 %v4269, %v4486
  %v4552 = vadd.f32 %v4270, %v4490
  %v4553 = vadd.f32 %v4271, %v4492
  %v4554 = vadd.f32 %v4272, %v4496
  %v4555 = vadd.f32 %v4273, %v4498
  %v4556 = vadd.f32 %v4274, %v4502
  %v4557 = vadd.f32 %v4275, %v4504
  %v4558 = vadd.f32 %v4276, %v4508
  %v4559 = vadd.f32 %v4277, %v4510
  %v4560 = vadd.f32 %v4278, %v4514
  %v4561 = vadd.f32 %v4279, %v4516
  %v4562 = vadd.f32 %v4280, %v4520
  %v4563 = vadd.f32 %v4281, %v4522
  %v4564 = vadd.f32 %v4282, %v4526
  %v4565 = vadd.f32 %v4283, %v4528
  %v4566 = vadd.f32 %v4284, %v4532
  %v4567 = vadd.f32 %v4285, %v4534
  %v4568 = vld [vmem:[%s5] sm:$0x3]
  %v4570 = vlaneseq
  %v4571 = vshrl.u32 %v4570, 7
  %v4572 = vsub.s32 0, %v4571
  %v4573 = vrot.slane %v4568, %v4572
  %v4574 = vlaneseq
  %v4575 = vshrl.u32 %v4574, 7
  %v4576 = vsub.s32 1, %v4575
  %v4577 = vrot.slane %v4568, %v4576
  %v4580 = vadd.f32 %v4536, %v4573
  %v4581 = vadd.f32 %v4537, %v4577
  %v4582 = vadd.f32 %v4538, %v4573
  %v4583 = vadd.f32 %v4539, %v4577
  %v4584 = vadd.f32 %v4540, %v4573
  %v4585 = vadd.f32 %v4541, %v4577
  %v4586 = vadd.f32 %v4542, %v4573
  %v4587 = vadd.f32 %v4543, %v4577
  %v4588 = vadd.f32 %v4544, %v4573
  %v4589 = vadd.f32 %v4545, %v4577
  %v4590 = vadd.f32 %v4546, %v4573
  %v4591 = vadd.f32 %v4547, %v4577
  %v4592 = vadd.f32 %v4548, %v4573
  %v4593 = vadd.f32 %v4549, %v4577
  %v4594 = vadd.f32 %v4550, %v4573
  %v4595 = vadd.f32 %v4551, %v4577
  %v4596 = vadd.f32 %v4552, %v4573
  %v4597 = vadd.f32 %v4553, %v4577
  %v4598 = vadd.f32 %v4554, %v4573
  %v4599 = vadd.f32 %v4555, %v4577
  %v4600 = vadd.f32 %v4556, %v4573
  %v4601 = vadd.f32 %v4557, %v4577
  %v4602 = vadd.f32 %v4558, %v4573
  %v4603 = vadd.f32 %v4559, %v4577
  %v4604 = vadd.f32 %v4560, %v4573
  %v4605 = vadd.f32 %v4561, %v4577
  %v4606 = vadd.f32 %v4562, %v4573
  %v4607 = vadd.f32 %v4563, %v4577
  %v4608 = vadd.f32 %v4564, %v4573
  %v4609 = vadd.f32 %v4565, %v4577
  %v4610 = vadd.f32 %v4566, %v4573
  %v4611 = vadd.f32 %v4567, %v4577
  %v4612 = vmax.f32 %v4580, 0.0
  %v4613 = vmax.f32 %v4581, 0.0
  %v4614 = vmax.f32 %v4582, 0.0
  %v4615 = vmax.f32 %v4583, 0.0
  %v4616 = vmax.f32 %v4584, 0.0
  %v4617 = vmax.f32 %v4585, 0.0
  %v4618 = vmax.f32 %v4586, 0.0
  %v4619 = vmax.f32 %v4587, 0.0
  %v4620 = vmax.f32 %v4588, 0.0
  %v4621 = vmax.f32 %v4589, 0.0
  %v4622 = vmax.f32 %v4590, 0.0
  %v4623 = vmax.f32 %v4591, 0.0
  %v4624 = vmax.f32 %v4592, 0.0
  %v4625 = vmax.f32 %v4593, 0.0
  %v4626 = vmax.f32 %v4594, 0.0
  %v4627 = vmax.f32 %v4595, 0.0
  %v4628 = vmax.f32 %v4596, 0.0
  %v4629 = vmax.f32 %v4597, 0.0
  %v4630 = vmax.f32 %v4598, 0.0
  %v4631 = vmax.f32 %v4599, 0.0
  %v4632 = vmax.f32 %v4600, 0.0
  %v4633 = vmax.f32 %v4601, 0.0
  %v4634 = vmax.f32 %v4602, 0.0
  %v4635 = vmax.f32 %v4603, 0.0
  %v4636 = vmax.f32 %v4604, 0.0
  %v4637 = vmax.f32 %v4605, 0.0
  %v4638 = vmax.f32 %v4606, 0.0
  %v4639 = vmax.f32 %v4607, 0.0
  %v4640 = vmax.f32 %v4608, 0.0
  %v4641 = vmax.f32 %v4609, 0.0
  %v4642 = vmax.f32 %v4610, 0.0
  %v4643 = vmax.f32 %v4611, 0.0
  %v4644 = vld [vmem:[%s6] sm:$0xff]
  %v4645 = vld [vmem:[%s6 + $0x8] sm:$0xff]
  %v4646 = vld [vmem:[%s6 + $0x10] sm:$0xff]
  %v4647 = vld [vmem:[%s6 + $0x18] sm:$0xff]
  %v4648 = vld [vmem:[%s6 + $0x20] sm:$0xff]
  %v4649 = vld [vmem:[%s6 + $0x28] sm:$0xff]
  %v4650 = vld [vmem:[%s6 + $0x30] sm:$0xff]
  %v4651 = vld [vmem:[%s6 + $0x38] sm:$0xff]
  %v4652 = vld [vmem:[%s6 + $0x40] sm:$0xff]
  %v4653 = vld [vmem:[%s6 + $0x48] sm:$0xff]
  %v4654 = vld [vmem:[%s6 + $0x50] sm:$0xff]
  %v4655 = vld [vmem:[%s6 + $0x58] sm:$0xff]
  %v4656 = vld [vmem:[%s6 + $0x60] sm:$0xff]
  %v4657 = vld [vmem:[%s6 + $0x68] sm:$0xff]
  %v4658 = vld [vmem:[%s6 + $0x70] sm:$0xff]
  %v4659 = vld [vmem:[%s6 + $0x78] sm:$0xff]
  %v4660 = vld [vmem:[%s6 + $0x80] sm:$0xff]
  %v4661 = vld [vmem:[%s6 + $0x88] sm:$0xff]
  %v4662 = vld [vmem:[%s6 + $0x90] sm:$0xff]
  %v4663 = vld [vmem:[%s6 + $0x98] sm:$0xff]
  %vm4664 = vcmask 261120
  %v4666 = vsel %vm4664, %v4613, 0
  %v4669 = vsel %vm4664, %v4615, 0
  %v4672 = vsel %vm4664, %v4617, 0
  %v4675 = vsel %vm4664, %v4619, 0
  %v4678 = vsel %vm4664, %v4621, 0
  %v4681 = vsel %vm4664, %v4623, 0
  %v4684 = vsel %vm4664, %v4625, 0
  %v4687 = vsel %vm4664, %v4627, 0
  %v4690 = vsel %vm4664, %v4629, 0
  %v4693 = vsel %vm4664, %v4631, 0
  %v4696 = vsel %vm4664, %v4633, 0
  %v4699 = vsel %vm4664, %v4635, 0
  %v4702 = vsel %vm4664, %v4637, 0
  %v4705 = vsel %vm4664, %v4639, 0
  %v4708 = vsel %vm4664, %v4641, 0
  %v4711 = vsel %vm4664, %v4643, 0
  %4713 = vmatprep.subr.mxu0 0.0
  %4714 = vmatpush1.msra.mxu0 %v4644
  %4715 = vmatprep.subr.mxu0 0.0
  %4716 = vmatpush1.msra.mxu0 %v4645
  %4717 = vmatprep.subr.mxu0 0.0
  %4718 = vmatpush1.msra.mxu0 %v4646
  %4719 = vmatprep.subr.mxu0 0.0
  %4720 = vmatpush1.msra.mxu0 %v4647
  %4721 = vmatprep.subr.mxu0 0.0
  %4722 = vmatpush1.msra.mxu0 %v4648
  %4723 = vmatprep.subr.mxu0 0.0
  %4724 = vmatpush1.msra.mxu0 %v4649
  %4725 = vmatprep.subr.mxu0 0.0
  %4726 = vmatpush1.msra.mxu0 %v4650
  %4727 = vmatprep.subr.mxu0 0.0
  %4728 = vmatpush1.msra.mxu0 %v4651
  %4729 = vmatprep.subr.mxu0 0.0
  %4730 = vmatpush1.msra.mxu0 %v4652
  %4731 = vmatprep.subr.mxu0 0.0
  %4732 = vmatpush1.msra.mxu0 %v4653
  %4733 = vmatprep.subr.mxu0 0.0
  %4734 = vmatpush1.msra.mxu0 %v4654
  %4735 = vmatprep.subr.mxu0 0.0
  %4736 = vmatpush1.msra.mxu0 %v4655
  %4737 = vmatprep.subr.mxu0 0.0
  %4738 = vmatpush1.msra.mxu0 %v4656
  %4739 = vmatprep.subr.mxu0 0.0
  %4740 = vmatpush1.msra.mxu0 %v4657
  %4741 = vmatprep.subr.mxu0 0.0
  %4742 = vmatpush1.msra.mxu0 %v4658
  %4743 = vmatprep.subr.mxu0 0.0
  %4744 = vmatpush1.msra.mxu0 %v4659
  %4745 = vmatprep.subr.mxu0 0.0
  %4746 = vmatpush1.msra.mxu0 %v4660
  %4747 = vmatprep.subr.mxu0 0.0
  %4748 = vmatpush1.msra.mxu0 %v4661
  %4749 = vmatprep.subr.mxu0 0.0
  %4750 = vmatpush1.msra.mxu0 %v4662
  %4751 = vmatprep.subr.mxu0 0.0
  %4752 = vmatpush1.msra.mxu0 %v4663
  %4753 = vmatprep.subr.mxu0 0.0
  %4754 = vmatpush1.msra.mxu0 0.0
  %4755 = vmatprep.subr.mxu0 0.0
  %4756 = vmatpush1.msra.mxu0 0.0
  %4757 = vmatprep.subr.mxu0 0.0
  %4758 = vmatpush1.msra.mxu0 0.0
  %4759 = vmatprep.subr.mxu0 0.0
  %4760 = vmatpush1.msra.mxu0 0.0
  %4761 = vmatprep.subr.mxu0 0.0
  %4762 = vmatpush1.msra.mxu0 0.0
  %4763 = vmatprep.subr.mxu0 0.0
  %4764 = vmatpush1.msra.mxu0 0.0
  %4765 = vmatprep.subr.mxu0 0.0
  %4766 = vmatpush1.msra.mxu0 0.0
  %4767 = vmatprep.subr.mxu0 0.0
  %4768 = vmatpush1.msra.mxu0 0.0
  %4769 = vmatprep.subr.mxu0 0.0
  %4770 = vmatpush1.msra.mxu0 0.0
  %4771 = vmatprep.subr.mxu0 0.0
  %4772 = vmatpush1.msra.mxu0 0.0
  %4773 = vmatprep.subr.mxu0 0.0
  %4774 = vmatpush1.msra.mxu0 0.0
  %4775 = vmatprep.subr.mxu0 0.0
  %4776 = vmatpush1.msra.mxu0 0.0
  %4777 = vmatprep.mubr.f32.mxu0 %v4666
  %4778 = vmatmul.mubr.f32.gmra.mrb[0].mxu0 %v4612
  %v4779 = vpop.f32.mrb[0].mxu0
  %v4780 = vadd.f32 0.0, %v4779
  %v4781 = vpop.f32.mrb[0].mxu0
  %4782 = vmatprep.mubr.f32.mxu0 %v4669
  %4783 = vmatmul.mubr.f32.gmra.mrb[0].mxu0 %v4614
  %v4784 = vpop.f32.mrb[0].mxu0
  %v4785 = vadd.f32 0.0, %v4784
  %v4786 = vpop.f32.mrb[0].mxu0
  %4787 = vmatprep.mubr.f32.mxu0 %v4672
  %4788 = vmatmul.mubr.f32.gmra.mrb[0].mxu0 %v4616
  %v4789 = vpop.f32.mrb[0].mxu0
  %v4790 = vadd.f32 0.0, %v4789
  %v4791 = vpop.f32.mrb[0].mxu0
  %4792 = vmatprep.mubr.f32.mxu0 %v4675
  %4793 = vmatmul.mubr.f32.gmra.mrb[0].mxu0 %v4618
  %v4794 = vpop.f32.mrb[0].mxu0
  %v4795 = vadd.f32 0.0, %v4794
  %v4796 = vpop.f32.mrb[0].mxu0
  %4797 = vmatprep.mubr.f32.mxu0 %v4678
  %4798 = vmatmul.mubr.f32.gmra.mrb[0].mxu0 %v4620
  %v4799 = vpop.f32.mrb[0].mxu0
  %v4800 = vadd.f32 0.0, %v4799
  %v4801 = vpop.f32.mrb[0].mxu0
  %4802 = vmatprep.mubr.f32.mxu0 %v4681
  %4803 = vmatmul.mubr.f32.gmra.mrb[0].mxu0 %v4622
  %v4804 = vpop.f32.mrb[0].mxu0
  %v4805 = vadd.f32 0.0, %v4804
  %v4806 = vpop.f32.mrb[0].mxu0
  %4807 = vmatprep.mubr.f32.mxu0 %v4684
  %4808 = vmatmul.mubr.f32.gmra.mrb[0].mxu0 %v4624
  %v4809 = vpop.f32.mrb[0].mxu0
  %v4810 = vadd.f32 0.0, %v4809
  %v4811 = vpop.f32.mrb[0].mxu0
  %4812 = vmatprep.mubr.f32.mxu0 %v4687
  %4813 = vmatmul.mubr.f32.gmra.mrb[0].mxu0 %v4626
  %v4814 = vpop.f32.mrb[0].mxu0
  %v4815 = vadd.f32 0.0, %v4814
  %v4816 = vpop.f32.mrb[0].mxu0
  %4817 = vmatprep.mubr.f32.mxu0 %v4690
  %4818 = vmatmul.mubr.f32.gmra.mrb[0].mxu0 %v4628
  %v4819 = vpop.f32.mrb[0].mxu0
  %v4820 = vadd.f32 0.0, %v4819
  %v4821 = vpop.f32.mrb[0].mxu0
  %4822 = vmatprep.mubr.f32.mxu0 %v4693
  %4823 = vmatmul.mubr.f32.gmra.mrb[0].mxu0 %v4630
  %v4824 = vpop.f32.mrb[0].mxu0
  %v4825 = vadd.f32 0.0, %v4824
  %v4826 = vpop.f32.mrb[0].mxu0
  %4827 = vmatprep.mubr.f32.mxu0 %v4696
  %4828 = vmatmul.mubr.f32.gmra.mrb[0].mxu0 %v4632
  %v4829 = vpop.f32.mrb[0].mxu0
  %v4830 = vadd.f32 0.0, %v4829
  %v4831 = vpop.f32.mrb[0].mxu0
  %4832 = vmatprep.mubr.f32.mxu0 %v4699
  %4833 = vmatmul.mubr.f32.gmra.mrb[0].mxu0 %v4634
  %v4834 = vpop.f32.mrb[0].mxu0
  %v4835 = vadd.f32 0.0, %v4834
  %v4836 = vpop.f32.mrb[0].mxu0
  %4837 = vmatprep.mubr.f32.mxu0 %v4702
  %4838 = vmatmul.mubr.f32.gmra.mrb[0].mxu0 %v4636
  %v4839 = vpop.f32.mrb[0].mxu0
  %v4840 = vadd.f32 0.0, %v4839
  %v4841 = vpop.f32.mrb[0].mxu0
  %4842 = vmatprep.mubr.f32.mxu0 %v4705
  %4843 = vmatmul.mubr.f32.gmra.mrb[0].mxu0 %v4638
  %v4844 = vpop.f32.mrb[0].mxu0
  %v4845 = vadd.f32 0.0, %v4844
  %v4846 = vpop.f32.mrb[0].mxu0
  %4847 = vmatprep.mubr.f32.mxu0 %v4708
  %4848 = vmatmul.mubr.f32.gmra.mrb[0].mxu0 %v4640
  %v4849 = vpop.f32.mrb[0].mxu0
  %v4850 = vadd.f32 0.0, %v4849
  %v4851 = vpop.f32.mrb[0].mxu0
  %4852 = vmatprep.mubr.f32.mxu0 %v4711
  %4853 = vmatmul.mubr.f32.gmra.mrb[0].mxu0 %v4642
  %v4854 = vpop.f32.mrb[0].mxu0
  %v4855 = vadd.f32 0.0, %v4854
  %v4856 = vpop.f32.mrb[0].mxu0
  %4857 = vdwg.mxu0
  %s4858 = scalar_lea.vmem %s6, 160
  %v4859 = vld [vmem:[%s4858] sm:$0xff]
  %v4860 = vld [vmem:[%s4858 + $0x8] sm:$0xff]
  %v4861 = vld [vmem:[%s4858 + $0x10] sm:$0xff]
  %v4862 = vld [vmem:[%s4858 + $0x18] sm:$0xff]
  %v4863 = vld [vmem:[%s4858 + $0x20] sm:$0xff]
  %v4864 = vld [vmem:[%s4858 + $0x28] sm:$0xff]
  %v4865 = vld [vmem:[%s4858 + $0x30] sm:$0xff]
  %v4866 = vld [vmem:[%s4858 + $0x38] sm:$0xff]
  %v4867 = vld [vmem:[%s4858 + $0x40] sm:$0xff]
  %v4868 = vld [vmem:[%s4858 + $0x48] sm:$0xff]
  %v4869 = vld [vmem:[%s4858 + $0x50] sm:$0xff]
  %v4870 = vld [vmem:[%s4858 + $0x58] sm:$0xff]
  %v4871 = vld [vmem:[%s4858 + $0x60] sm:$0xff]
  %v4872 = vld [vmem:[%s4858 + $0x68] sm:$0xff]
  %v4873 = vld [vmem:[%s4858 + $0x70] sm:$0xff]
  %v4874 = vld [vmem:[%s4858 + $0x78] sm:$0xff]
  %v4875 = vld [vmem:[%s4858 + $0x80] sm:$0xff]
  %v4876 = vld [vmem:[%s4858 + $0x88] sm:$0xff]
  %v4877 = vld [vmem:[%s4858 + $0x90] sm:$0xff]
  %v4878 = vld [vmem:[%s4858 + $0x98] sm:$0xff]
  %4879 = vmatprep.subr.mxu0 0.0
  %4880 = vmatpush1.msra.mxu0 %v4859
  %4881 = vmatprep.subr.mxu0 0.0
  %4882 = vmatpush1.msra.mxu0 %v4860
  %4883 = vmatprep.subr.mxu0 0.0
  %4884 = vmatpush1.msra.mxu0 %v4861
  %4885 = vmatprep.subr.mxu0 0.0
  %4886 = vmatpush1.msra.mxu0 %v4862
  %4887 = vmatprep.subr.mxu0 0.0
  %4888 = vmatpush1.msra.mxu0 %v4863
  %4889 = vmatprep.subr.mxu0 0.0
  %4890 = vmatpush1.msra.mxu0 %v4864
  %4891 = vmatprep.subr.mxu0 0.0
  %4892 = vmatpush1.msra.mxu0 %v4865
  %4893 = vmatprep.subr.mxu0 0.0
  %4894 = vmatpush1.msra.mxu0 %v4866
  %4895 = vmatprep.subr.mxu0 0.0
  %4896 = vmatpush1.msra.mxu0 %v4867
  %4897 = vmatprep.subr.mxu0 0.0
  %4898 = vmatpush1.msra.mxu0 %v4868
  %4899 = vmatprep.subr.mxu0 0.0
  %4900 = vmatpush1.msra.mxu0 %v4869
  %4901 = vmatprep.subr.mxu0 0.0
  %4902 = vmatpush1.msra.mxu0 %v4870
  %4903 = vmatprep.subr.mxu0 0.0
  %4904 = vmatpush1.msra.mxu0 %v4871
  %4905 = vmatprep.subr.mxu0 0.0
  %4906 = vmatpush1.msra.mxu0 %v4872
  %4907 = vmatprep.subr.mxu0 0.0
  %4908 = vmatpush1.msra.mxu0 %v4873
  %4909 = vmatprep.subr.mxu0 0.0
  %4910 = vmatpush1.msra.mxu0 %v4874
  %4911 = vmatprep.subr.mxu0 0.0
  %4912 = vmatpush1.msra.mxu0 %v4875
  %4913 = vmatprep.subr.mxu0 0.0
  %4914 = vmatpush1.msra.mxu0 %v4876
  %4915 = vmatprep.subr.mxu0 0.0
  %4916 = vmatpush1.msra.mxu0 %v4877
  %4917 = vmatprep.subr.mxu0 0.0
  %4918 = vmatpush1.msra.mxu0 %v4878
  %4919 = vmatprep.subr.mxu0 0.0
  %4920 = vmatpush1.msra.mxu0 0.0
  %4921 = vmatprep.subr.mxu0 0.0
  %4922 = vmatpush1.msra.mxu0 0.0
  %4923 = vmatprep.subr.mxu0 0.0
  %4924 = vmatpush1.msra.mxu0 0.0
  %4925 = vmatprep.subr.mxu0 0.0
  %4926 = vmatpush1.msra.mxu0 0.0
  %4927 = vmatprep.subr.mxu0 0.0
  %4928 = vmatpush1.msra.mxu0 0.0
  %4929 = vmatprep.subr.mxu0 0.0
  %4930 = vmatpush1.msra.mxu0 0.0
  %4931 = vmatprep.subr.mxu0 0.0
  %4932 = vmatpush1.msra.mxu0 0.0
  %4933 = vmatprep.subr.mxu0 0.0
  %4934 = vmatpush1.msra.mxu0 0.0
  %4935 = vmatprep.subr.mxu0 0.0
  %4936 = vmatpush1.msra.mxu0 0.0
  %4937 = vmatprep.subr.mxu0 0.0
  %4938 = vmatpush1.msra.mxu0 0.0
  %4939 = vmatprep.subr.mxu0 0.0
  %4940 = vmatpush1.msra.mxu0 0.0
  %4941 = vmatprep.subr.mxu0 0.0
  %4942 = vmatpush1.msra.mxu0 0.0
  %4943 = vmatprep.mubr.f32.mxu0 %v4666
  %4944 = vmatmul.mubr.f32.gmra.mrb[0].mxu0 %v4612
  %v4945 = vpop.f32.mrb[0].mxu0
  %v4946 = vadd.f32 0.0, %v4945
  %v4947 = vpop.f32.mrb[0].mxu0
  %4948 = vmatprep.mubr.f32.mxu0 %v4669
  %4949 = vmatmul.mubr.f32.gmra.mrb[0].mxu0 %v4614
  %v4950 = vpop.f32.mrb[0].mxu0
  %v4951 = vadd.f32 0.0, %v4950
  %v4952 = vpop.f32.mrb[0].mxu0
  %4953 = vmatprep.mubr.f32.mxu0 %v4672
  %4954 = vmatmul.mubr.f32.gmra.mrb[0].mxu0 %v4616
  %v4955 = vpop.f32.mrb[0].mxu0
  %v4956 = vadd.f32 0.0, %v4955
  %v4957 = vpop.f32.mrb[0].mxu0
  %4958 = vmatprep.mubr.f32.mxu0 %v4675
  %4959 = vmatmul.mubr.f32.gmra.mrb[0].mxu0 %v4618
  %v4960 = vpop.f32.mrb[0].mxu0
  %v4961 = vadd.f32 0.0, %v4960
  %v4962 = vpop.f32.mrb[0].mxu0
  %4963 = vmatprep.mubr.f32.mxu0 %v4678
  %4964 = vmatmul.mubr.f32.gmra.mrb[0].mxu0 %v4620
  %v4965 = vpop.f32.mrb[0].mxu0
  %v4966 = vadd.f32 0.0, %v4965
  %v4967 = vpop.f32.mrb[0].mxu0
  %4968 = vmatprep.mubr.f32.mxu0 %v4681
  %4969 = vmatmul.mubr.f32.gmra.mrb[0].mxu0 %v4622
  %v4970 = vpop.f32.mrb[0].mxu0
  %v4971 = vadd.f32 0.0, %v4970
  %v4972 = vpop.f32.mrb[0].mxu0
  %4973 = vmatprep.mubr.f32.mxu0 %v4684
  %4974 = vmatmul.mubr.f32.gmra.mrb[0].mxu0 %v4624
  %v4975 = vpop.f32.mrb[0].mxu0
  %v4976 = vadd.f32 0.0, %v4975
  %v4977 = vpop.f32.mrb[0].mxu0
  %4978 = vmatprep.mubr.f32.mxu0 %v4687
  %4979 = vmatmul.mubr.f32.gmra.mrb[0].mxu0 %v4626
  %v4980 = vpop.f32.mrb[0].mxu0
  %v4981 = vadd.f32 0.0, %v4980
  %v4982 = vpop.f32.mrb[0].mxu0
  %4983 = vmatprep.mubr.f32.mxu0 %v4690
  %4984 = vmatmul.mubr.f32.gmra.mrb[0].mxu0 %v4628
  %v4985 = vpop.f32.mrb[0].mxu0
  %v4986 = vadd.f32 0.0, %v4985
  %v4987 = vpop.f32.mrb[0].mxu0
  %4988 = vmatprep.mubr.f32.mxu0 %v4693
  %4989 = vmatmul.mubr.f32.gmra.mrb[0].mxu0 %v4630
  %v4990 = vpop.f32.mrb[0].mxu0
  %v4991 = vadd.f32 0.0, %v4990
  %v4992 = vpop.f32.mrb[0].mxu0
  %4993 = vmatprep.mubr.f32.mxu0 %v4696
  %4994 = vmatmul.mubr.f32.gmra.mrb[0].mxu0 %v4632
  %v4995 = vpop.f32.mrb[0].mxu0
  %v4996 = vadd.f32 0.0, %v4995
  %v4997 = vpop.f32.mrb[0].mxu0
  %4998 = vmatprep.mubr.f32.mxu0 %v4699
  %4999 = vmatmul.mubr.f32.gmra.mrb[0].mxu0 %v4634
  %v5000 = vpop.f32.mrb[0].mxu0
  %v5001 = vadd.f32 0.0, %v5000
  %v5002 = vpop.f32.mrb[0].mxu0
  %5003 = vmatprep.mubr.f32.mxu0 %v4702
  %5004 = vmatmul.mubr.f32.gmra.mrb[0].mxu0 %v4636
  %v5005 = vpop.f32.mrb[0].mxu0
  %v5006 = vadd.f32 0.0, %v5005
  %v5007 = vpop.f32.mrb[0].mxu0
  %5008 = vmatprep.mubr.f32.mxu0 %v4705
  %5009 = vmatmul.mubr.f32.gmra.mrb[0].mxu0 %v4638
  %v5010 = vpop.f32.mrb[0].mxu0
  %v5011 = vadd.f32 0.0, %v5010
  %v5012 = vpop.f32.mrb[0].mxu0
  %5013 = vmatprep.mubr.f32.mxu0 %v4708
  %5014 = vmatmul.mubr.f32.gmra.mrb[0].mxu0 %v4640
  %v5015 = vpop.f32.mrb[0].mxu0
  %v5016 = vadd.f32 0.0, %v5015
  %v5017 = vpop.f32.mrb[0].mxu0
  %5018 = vmatprep.mubr.f32.mxu0 %v4711
  %5019 = vmatmul.mubr.f32.gmra.mrb[0].mxu0 %v4642
  %v5020 = vpop.f32.mrb[0].mxu0
  %v5021 = vadd.f32 0.0, %v5020
  %v5022 = vpop.f32.mrb[0].mxu0
  %5023 = vdwg.mxu0
  %v5024 = vmax.f32 %v4780, %v4946
  %v5025 = vmax.f32 %v4785, %v4951
  %v5026 = vmax.f32 %v4790, %v4956
  %v5027 = vmax.f32 %v4795, %v4961
  %v5028 = vmax.f32 %v4800, %v4966
  %v5029 = vmax.f32 %v4805, %v4971
  %v5030 = vmax.f32 %v4810, %v4976
  %v5031 = vmax.f32 %v4815, %v4981
  %v5032 = vmax.f32 %v4820, %v4986
  %v5033 = vmax.f32 %v4825, %v4991
  %v5034 = vmax.f32 %v4830, %v4996
  %v5035 = vmax.f32 %v4835, %v5001
  %v5036 = vmax.f32 %v4840, %v5006
  %v5037 = vmax.f32 %v4845, %v5011
  %v5038 = vmax.f32 %v4850, %v5016
  %v5039 = vmax.f32 %v4855, %v5021
  %5040 = vst [vmem:[#allocation4] sm:$0xff] %v5024
  %5041 = vst [vmem:[#allocation4 + $0x8] sm:$0xff] %v5025
  %5042 = vst [vmem:[#allocation4 + $0x10] sm:$0xff] %v5026
  %5043 = vst [vmem:[#allocation4 + $0x18] sm:$0xff] %v5027
  %5044 = vst [vmem:[#allocation4 + $0x20] sm:$0xff] %v5028
  %5045 = vst [vmem:[#allocation4 + $0x28] sm:$0xff] %v5029
  %5046 = vst [vmem:[#allocation4 + $0x30] sm:$0xff] %v5030
  %5047 = vst [vmem:[#allocation4 + $0x38] sm:$0xff] %v5031
  %5048 = vst [vmem:[#allocation4 + $0x40] sm:$0xff] %v5032
  %5049 = vst [vmem:[#allocation4 + $0x48] sm:$0xff] %v5033
  %5050 = vst [vmem:[#allocation4 + $0x50] sm:$0xff] %v5034
  %5051 = vst [vmem:[#allocation4 + $0x58] sm:$0xff] %v5035
  %5052 = vst [vmem:[#allocation4 + $0x60] sm:$0xff] %v5036
  %5053 = vst [vmem:[#allocation4 + $0x68] sm:$0xff] %v5037
  %5054 = vst [vmem:[#allocation4 + $0x70] sm:$0xff] %v5038
  %5055 = vst [vmem:[#allocation4 + $0x78] sm:$0xff] %v5039
  %v5056 = vld [vmem:[#allocation4] ss:$2 sm:$0xff]
  %s5057 = scalar_lea.vmem [#allocation4], 16
  %v5058 = vld [vmem:[%s5057] ss:$2 sm:$0xff]
  %s5059 = scalar_lea.vmem [#allocation4], 32
  %v5060 = vld [vmem:[%s5059] ss:$2 sm:$0xff]
  %s5061 = scalar_lea.vmem [#allocation4], 48
  %v5062 = vld [vmem:[%s5061] ss:$2 sm:$0xff]
  %s5063 = scalar_lea.vmem [#allocation4], 64
  %v5064 = vld [vmem:[%s5063] ss:$2 sm:$0xff]
  %s5065 = scalar_lea.vmem [#allocation4], 80
  %v5066 = vld [vmem:[%s5065] ss:$2 sm:$0xff]
  %s5067 = scalar_lea.vmem [#allocation4], 96
  %v5068 = vld [vmem:[%s5067] ss:$2 sm:$0xff]
  %s5069 = scalar_lea.vmem [#allocation4], 112
  %v5070 = vld [vmem:[%s5069] ss:$2 sm:$0xff]
  %s5071 = scalar_lea.vmem [#allocation4], 1
  %v5072 = vld [vmem:[%s5071] ss:$2 sm:$0xff]
  %s5073 = scalar_lea.vmem [#allocation4], 17
  %v5074 = vld [vmem:[%s5073] ss:$2 sm:$0xff]
  %s5075 = scalar_lea.vmem [#allocation4], 33
  %v5076 = vld [vmem:[%s5075] ss:$2 sm:$0xff]
  %s5077 = scalar_lea.vmem [#allocation4], 49
  %v5078 = vld [vmem:[%s5077] ss:$2 sm:$0xff]
  %s5079 = scalar_lea.vmem [#allocation4], 65
  %v5080 = vld [vmem:[%s5079] ss:$2 sm:$0xff]
  %s5081 = scalar_lea.vmem [#allocation4], 81
  %v5082 = vld [vmem:[%s5081] ss:$2 sm:$0xff]
  %s5083 = scalar_lea.vmem [#allocation4], 97
  %v5084 = vld [vmem:[%s5083] ss:$2 sm:$0xff]
  %s5085 = scalar_lea.vmem [#allocation4], 113
  %v5086 = vld [vmem:[%s5085] ss:$2 sm:$0xff]
  %v5087 = vmax.f32 %v5056, %v5072
  %v5088 = vmax.f32 %v5058, %v5074
  %v5089 = vmax.f32 %v5060, %v5076
  %v5090 = vmax.f32 %v5062, %v5078
  %v5091 = vmax.f32 %v5064, %v5080
  %v5092 = vmax.f32 %v5066, %v5082
  %v5093 = vmax.f32 %v5068, %v5084
  %v5094 = vmax.f32 %v5070, %v5086
  %v5095 = vlaneseq
  %v5096 = vshrl.u32 %v5095, 7
  %v5097 = vadd.s32 %v5096, 8
  %v5098 = vadd.s32 %v5096, 16
  %v5099 = vadd.s32 %v5096, 24
  %v5100 = vadd.s32 %v5096, 32
  %v5101 = vadd.s32 %v5096, 40
  %v5102 = vadd.s32 %v5096, 48
  %v5103 = vadd.s32 %v5096, 56
  %vm5104 = vcmp.lt.s32.totalorder %v5096, 0
  %v5105 = vsub.s32 0, %v5096
  %v5106 = vsel %vm5104, %v5105, %v5096
  %v5107 = vshrl.u32 %v5106, 3
  %v5108 = vand.u32 %v5106, 7
  %v5109 = vsub.s32 0, %v5108
  %v5110 = vsel %vm5104, %v5109, %v5108
  %vm5111 = vcmp.lt.s32.totalorder %v5097, 0
  %v5112 = vsub.s32 0, %v5097
  %v5113 = vsel %vm5111, %v5112, %v5097
  %v5114 = vshrl.u32 %v5113, 3
  %v5115 = vand.u32 %v5113, 7
  %v5116 = vsub.s32 0, %v5115
  %v5117 = vsel %vm5111, %v5116, %v5115
  %vm5118 = vcmp.lt.s32.totalorder %v5098, 0
  %v5119 = vsub.s32 0, %v5098
  %v5120 = vsel %vm5118, %v5119, %v5098
  %v5121 = vshrl.u32 %v5120, 3
  %v5122 = vand.u32 %v5120, 7
  %v5123 = vsub.s32 0, %v5122
  %v5124 = vsel %vm5118, %v5123, %v5122
  %vm5125 = vcmp.lt.s32.totalorder %v5099, 0
  %v5126 = vsub.s32 0, %v5099
  %v5127 = vsel %vm5125, %v5126, %v5099
  %v5128 = vshrl.u32 %v5127, 3
  %v5129 = vand.u32 %v5127, 7
  %v5130 = vsub.s32 0, %v5129
  %v5131 = vsel %vm5125, %v5130, %v5129
  %vm5132 = vcmp.lt.s32.totalorder %v5100, 0
  %v5133 = vsub.s32 0, %v5100
  %v5134 = vsel %vm5132, %v5133, %v5100
  %v5135 = vshrl.u32 %v5134, 3
  %v5136 = vand.u32 %v5134, 7
  %v5137 = vsub.s32 0, %v5136
  %v5138 = vsel %vm5132, %v5137, %v5136
  %vm5139 = vcmp.lt.s32.totalorder %v5101, 0
  %v5140 = vsub.s32 0, %v5101
  %v5141 = vsel %vm5139, %v5140, %v5101
  %v5142 = vshrl.u32 %v5141, 3
  %v5143 = vand.u32 %v5141, 7
  %v5144 = vsub.s32 0, %v5143
  %v5145 = vsel %vm5139, %v5144, %v5143
  %vm5146 = vcmp.lt.s32.totalorder %v5102, 0
  %v5147 = vsub.s32 0, %v5102
  %v5148 = vsel %vm5146, %v5147, %v5102
  %v5149 = vshrl.u32 %v5148, 3
  %v5150 = vand.u32 %v5148, 7
  %v5151 = vsub.s32 0, %v5150
  %v5152 = vsel %vm5146, %v5151, %v5150
  %vm5153 = vcmp.lt.s32.totalorder %v5103, 0
  %v5154 = vsub.s32 0, %v5103
  %v5155 = vsel %vm5153, %v5154, %v5103
  %v5156 = vshrl.u32 %v5155, 3
  %v5157 = vand.u32 %v5155, 7
  %v5158 = vsub.s32 0, %v5157
  %v5159 = vsel %vm5153, %v5158, %v5157
  %vm5160 = vcmp.ne.s32.totalorder %v5110, 0
  %vm5161 = vcmp.ne.s32.totalorder %v5117, 0
  %vm5162 = vcmp.ne.s32.totalorder %v5124, 0
  %vm5163 = vcmp.ne.s32.totalorder %v5131, 0
  %vm5164 = vcmp.ne.s32.totalorder %v5138, 0
  %vm5165 = vcmp.ne.s32.totalorder %v5145, 0
  %vm5166 = vcmp.ne.s32.totalorder %v5152, 0
  %vm5167 = vcmp.ne.s32.totalorder %v5159, 0
  %vm5168 = vcmp.lt.s32.totalorder %v5110, 0
  %vm5169 = vcmp.lt.s32.totalorder %v5117, 0
  %vm5170 = vcmp.lt.s32.totalorder %v5124, 0
  %vm5171 = vcmp.lt.s32.totalorder %v5131, 0
  %vm5172 = vcmp.lt.s32.totalorder %v5138, 0
  %vm5173 = vcmp.lt.s32.totalorder %v5145, 0
  %vm5174 = vcmp.lt.s32.totalorder %v5152, 0
  %vm5175 = vcmp.lt.s32.totalorder %v5159, 0
  %vm5176 = vmand %vm5168, %vm5160
  %vm5177 = vmand %vm5169, %vm5161
  %vm5178 = vmand %vm5170, %vm5162
  %vm5179 = vmand %vm5171, %vm5163
  %vm5180 = vmand %vm5172, %vm5164
  %vm5181 = vmand %vm5173, %vm5165
  %vm5182 = vmand %vm5174, %vm5166
  %vm5183 = vmand %vm5175, %vm5167
  %v5184 = vadd.s32 %v5110, 8
  %v5185 = vadd.s32 %v5117, 8
  %v5186 = vadd.s32 %v5124, 8
  %v5187 = vadd.s32 %v5131, 8
  %v5188 = vadd.s32 %v5138, 8
  %v5189 = vadd.s32 %v5145, 8
  %v5190 = vadd.s32 %v5152, 8
  %v5191 = vadd.s32 %v5159, 8
  %v5192 = vsel %vm5176, %v5184, %v5110
  %v5193 = vsel %vm5177, %v5185, %v5117
  %v5194 = vsel %vm5178, %v5186, %v5124
  %v5195 = vsel %vm5179, %v5187, %v5131
  %v5196 = vsel %vm5180, %v5188, %v5138
  %v5197 = vsel %vm5181, %v5189, %v5145
  %v5198 = vsel %vm5182, %v5190, %v5152
  %v5199 = vsel %vm5183, %v5191, %v5159
  %vm5200 = vcmp.lt.s32.totalorder %v5192, 5
  %vm5201 = vcmp.lt.s32.totalorder %v5193, 5
  %vm5202 = vcmp.lt.s32.totalorder %v5194, 5
  %vm5203 = vcmp.lt.s32.totalorder %v5195, 5
  %vm5204 = vcmp.lt.s32.totalorder %v5196, 5
  %vm5205 = vcmp.lt.s32.totalorder %v5197, 5
  %vm5206 = vcmp.lt.s32.totalorder %v5198, 5
  %vm5207 = vcmp.lt.s32.totalorder %v5199, 5
  %v5208 = vsel %vm5200, 1, 0
  %v5209 = vsel %vm5201, 1, 0
  %v5210 = vsel %vm5202, 1, 0
  %v5211 = vsel %vm5203, 1, 0
  %v5212 = vsel %vm5204, 1, 0
  %v5213 = vsel %vm5205, 1, 0
  %v5214 = vsel %vm5206, 1, 0
  %v5215 = vsel %vm5207, 1, 0
  %vm5216 = vcmp.eq.s32.totalorder %v5208, 1
  %vm5217 = vcmp.eq.s32.totalorder %v5209, 1
  %vm5218 = vcmp.eq.s32.totalorder %v5210, 1
  %vm5219 = vcmp.eq.s32.totalorder %v5211, 1
  %vm5220 = vcmp.eq.s32.totalorder %v5212, 1
  %vm5221 = vcmp.eq.s32.totalorder %v5213, 1
  %vm5222 = vcmp.eq.s32.totalorder %v5214, 1
  %vm5223 = vcmp.eq.s32.totalorder %v5215, 1
  %v5224 = vsel %vm5216, %v5087, 0.0
  %v5225 = vsel %vm5217, %v5088, 0.0
  %v5226 = vsel %vm5218, %v5089, 0.0
  %v5227 = vsel %vm5219, %v5090, 0.0
  %v5228 = vsel %vm5220, %v5091, 0.0
  %v5229 = vsel %vm5221, %v5092, 0.0
  %v5230 = vsel %vm5222, %v5093, 0.0
  %v5231 = vsel %vm5223, %v5094, 0.0
  %5232 = vst [vmem:[%s7] sm:$0xff] %v5224
  %5233 = vst [vmem:[%s7 + $0x8] sm:$0xff] %v5225
  %5234 = vst [vmem:[%s7 + $0x10] sm:$0xff] %v5226
  %5235 = vst [vmem:[%s7 + $0x18] sm:$0xff] %v5227
  %5236 = vst [vmem:[%s7 + $0x20] sm:$0xff] %v5228
  %5237 = vst [vmem:[%s7 + $0x28] sm:$0xff] %v5229
  %5238 = vst [vmem:[%s7 + $0x30] sm:$0xff] %v5230
  %5239 = vst [vmem:[%s7 + $0x38] sm:$0xff] %v5231
  // Predicated region
  $region30: #{net_forward.2} parent=0 // pred_check
    _
  $region31: #{net_forward.2} parent=0 // pred_check_branch
    %5241 = sbr.rel (0) target = $region33
  $region32: #{net_forward.2} parent=0 // pred_region
    _
  $region33: #{net_forward.2} parent=0 // pred_fallthru
    _
  // Predicated region
  $region34: #{net_forward.2} parent=0 // pred_check
    _
  $region35: #{net_forward.2} parent=0 // pred_check_branch
    %5243 = sbr.rel (0) target = $region37
  $region36: #{net_forward.2} parent=0 // pred_region
    _
  $region37: #{net_forward.2} parent=0 // pred_fallthru
    _

</llo_original>
